<compile_context>
chip_gen: v7x
topology: tpu7x:2x2x1
jax: 0.10.0
libtpu: 0.0.40
codegen_flags: <defaults>
</compile_context>

<pallas_src>
import functools

import jax
import jax.numpy as jnp
from jax import lax
from jax.experimental import pallas as pl
from jax.experimental.pallas import tpu as pltpu


def _round_up(n, m):
    return ((n + m - 1) // m) * m


def _preact_block_kernel(x_ref, s1_ref, b1_ref, w1_ref, s2_ref, b2_ref,
                         w2_ref, *rest, H, W, C1, C2, stride, has_shortcut):
    if has_shortcut:
        wsc_ref, out_ref, pad1_ref, pad2_ref = rest
    else:
        out_ref, pad1_ref, pad2_ref = rest
        wsc_ref = None

    Ho = (H + 2 - 3) // stride + 1
    Wo = (W + 2 - 3) // stride + 1

    # ---- one-time halo zeroing (scratch persists across the sequential grid;
    #      the interior is fully overwritten every step) ----
    @pl.when(pl.program_id(0) == 0)
    def _zero_halos():
        pad1_ref[0:1, :, :] = jnp.zeros((1, W + 2, C1), jnp.bfloat16)
        pad1_ref[H + 1:H + 2, :, :] = jnp.zeros((1, W + 2, C1), jnp.bfloat16)
        pad1_ref[:, 0:1, :] = jnp.zeros((H + 2, 1, C1), jnp.bfloat16)
        pad1_ref[:, W + 1:W + 2, :] = jnp.zeros((H + 2, 1, C1), jnp.bfloat16)
        pad2_ref[0:1, :, :] = jnp.zeros((1, Wo + 2, C2), jnp.bfloat16)
        pad2_ref[Ho + 1:Ho + 2, :, :] = jnp.zeros((1, Wo + 2, C2), jnp.bfloat16)
        pad2_ref[:, 0:1, :] = jnp.zeros((Ho + 2, 1, C2), jnp.bfloat16)
        pad2_ref[:, Wo + 1:Wo + 2, :] = jnp.zeros((Ho + 2, 1, C2), jnp.bfloat16)

    # ---- BN1 (folded scale/bias) + ReLU in f32 (VPU); input arrives as bf16 ----
    x = x_ref[0].astype(jnp.float32)                          # (H, W, C1)
    h1 = jnp.maximum(x * s1_ref[...] + b1_ref[...], 0.0)      # (H, W, C1) f32

    # interior of the padded h1 buffer (bf16 MXU operand)
    pad1_ref[1:H + 1, 1:W + 1, :] = h1.astype(jnp.bfloat16)

    # ---- shortcut branch (identity of h1, or 1x1 conv w/ stride) ----
    if has_shortcut:
        if stride == 1:
            hs = h1.astype(jnp.bfloat16).reshape(Ho * Wo, C1)
        else:
            hs = pad1_ref[pl.ds(1, Ho, stride=stride),
                          pl.ds(1, Wo, stride=stride), :].reshape(Ho * Wo, C1)
        sc = jnp.dot(hs, wsc_ref[...], preferred_element_type=jnp.float32)
    else:
        sc = h1.reshape(Ho * Wo, C2)                          # C1 == C2, stride == 1

    # ---- conv1: 3x3 / stride / pad=1 as nine accumulating tap matmuls ----
    acc1 = None
    for kh in range(3):
        for kw in range(3):
            if stride == 1:
                tap = pad1_ref[kh:kh + Ho, kw:kw + Wo, :]
            else:
                tap = pad1_ref[pl.ds(kh, Ho, stride=stride),
                               pl.ds(kw, Wo, stride=stride), :]
            p = jnp.dot(tap.reshape(Ho * Wo, C1), w1_ref[kh, kw],
                        preferred_element_type=jnp.float32)
            acc1 = p if acc1 is None else acc1 + p            # (Ho*Wo, C2) f32

    # ---- BN2 (folded) + ReLU ----
    h2 = jnp.maximum(acc1 * s2_ref[...] + b2_ref[...], 0.0)   # (Ho*Wo, C2) f32

    # interior of the padded h2 buffer
    pad2_ref[1:Ho + 1, 1:Wo + 1, :] = h2.reshape(Ho, Wo, C2).astype(jnp.bfloat16)

    # ---- conv2: 3x3 / 1 / pad=1, same tap-wise accumulation ----
    acc2 = None
    for kh in range(3):
        for kw in range(3):
            tap = pad2_ref[kh:kh + Ho, kw:kw + Wo, :]
            p = jnp.dot(tap.reshape(Ho * Wo, C2), w2_ref[kh, kw],
                        preferred_element_type=jnp.float32)
            acc2 = p if acc2 is None else acc2 + p            # (Ho*Wo, C2) f32

    # ---- residual add + lane-dense writeback (C2 is a multiple of 128) ----
    out = acc2 + sc
    out_ref[0] = out.reshape(Ho, Wo, C2).astype(out_ref.dtype)


def preact_block_pallas(x_nchw, params, *, stride=1):
    N, Cin, H, W = x_nchw.shape
    w1 = params["w1"]                                   # (3, 3, Cin, Cout) HWIO
    Cout = w1.shape[-1]
    has_shortcut = (stride != 1) or (Cin != Cout)

    C1 = _round_up(Cin, 128)                            # lane-dense channel pads
    C2 = _round_up(Cout, 128)

    eps = 1e-5
    s1 = params["bn1_gamma"] / jnp.sqrt(params["bn1_var"] + eps)
    b1 = params["bn1_beta"] - params["bn1_mean"] * s1
    s2 = params["bn2_gamma"] / jnp.sqrt(params["bn2_var"] + eps)
    b2 = params["bn2_beta"] - params["bn2_mean"] * s2

    def pad1d(v, n):
        return jnp.pad(v, (0, n - v.shape[0])).reshape(1, n).astype(jnp.float32)

    s1p, b1p = pad1d(s1, C1), pad1d(b1, C1)
    s2p, b2p = pad1d(s2, C2), pad1d(b2, C2)

    # Weights: pad channels, cast to bf16, keep HWIO so the kernel slices one
    # (C, Cout) tap slab per matmul (no K flattening / im2col needed).
    w1p = jnp.pad(w1, ((0, 0), (0, 0), (0, C1 - Cin), (0, C2 - Cout)))
    w1p = w1p.astype(jnp.bfloat16)                                  # (3,3,C1,C2)
    w2p = jnp.pad(params["w2"], ((0, 0), (0, 0), (0, C2 - Cout), (0, C2 - Cout)))
    w2p = w2p.astype(jnp.bfloat16)                                  # (3,3,C2,C2)

    # Input: NCHW -> NHWC, zero-pad channels, bf16 for the HBM->VMEM DMA.
    x = jnp.transpose(x_nchw, (0, 2, 3, 1))
    x = jnp.pad(x, ((0, 0), (0, 0), (0, 0), (0, C1 - Cin))).astype(jnp.bfloat16)

    Ho = (H + 2 - 3) // stride + 1
    Wo = (W + 2 - 3) // stride + 1

    inputs = [x, s1p, b1p, w1p, s2p, b2p, w2p]
    # NOTE: weight / BN-scale specs are grid-invariant (constant index_map);
    # single-buffer them with pipeline_mode=pl.Buffered(1) on VMEM-tight parts.
    in_specs = [
        pl.BlockSpec((1, H, W, C1), lambda n: (n, 0, 0, 0)),
        pl.BlockSpec((1, C1), lambda n: (0, 0)),
        pl.BlockSpec((1, C1), lambda n: (0, 0)),
        pl.BlockSpec((3, 3, C1, C2), lambda n: (0, 0, 0, 0)),
        pl.BlockSpec((1, C2), lambda n: (0, 0)),
        pl.BlockSpec((1, C2), lambda n: (0, 0)),
        pl.BlockSpec((3, 3, C2, C2), lambda n: (0, 0, 0, 0)),
    ]
    if has_shortcut:
        wscp = jnp.pad(params["wsc"], ((0, C1 - Cin), (0, C2 - Cout)))
        inputs.append(wscp.astype(jnp.bfloat16))
        in_specs.append(pl.BlockSpec((C1, C2), lambda n: (0, 0)))

    kernel = functools.partial(_preact_block_kernel, H=H, W=W, C1=C1, C2=C2,
                               stride=stride, has_shortcut=has_shortcut)

    out_nhwc = pl.pallas_call(
        kernel,
        out_shape=jax.ShapeDtypeStruct((N, Ho, Wo, C2), jnp.float32),
        grid_spec=pltpu.PrefetchScalarGridSpec(
            num_scalar_prefetch=0,
            grid=(N,),
            in_specs=in_specs,
            out_specs=pl.BlockSpec((1, Ho, Wo, C2), lambda n: (n, 0, 0, 0)),
            scratch_shapes=[
                pltpu.VMEM((H + 2, W + 2, C1), jnp.bfloat16),     # padded h1
                pltpu.VMEM((Ho + 2, Wo + 2, C2), jnp.bfloat16),   # padded h2
            ]),
        # "arbitrary": the one-time halo init relies on sequential grid
        # traversal of a single per-core scratch (see header note).
        compiler_params=pltpu.CompilerParams(
            dimension_semantics=("arbitrary",),
            vmem_limit_bytes=64 * 1024 * 1024),
    )(*inputs)

    return jnp.transpose(out_nhwc[..., :Cout], (0, 3, 1, 2))      # NHWC -> NCHW


def ref_forward(x_nchw, params, *, stride=1):
    """Pure-JAX f32 reference (same eval-mode BN semantics), NCHW boundary."""
    N, Cin, H, W = x_nchw.shape
    Cout = params["w1"].shape[-1]
    has_shortcut = (stride != 1) or (Cin != Cout)
    eps = 1e-5
    s1 = params["bn1_gamma"] / jnp.sqrt(params["bn1_var"] + eps)
    b1 = params["bn1_beta"] - params["bn1_mean"] * s1
    s2 = params["bn2_gamma"] / jnp.sqrt(params["bn2_var"] + eps)
    b2 = params["bn2_beta"] - params["bn2_mean"] * s2

    dn = ("NHWC", "HWIO", "NHWC")
    x = jnp.transpose(x_nchw, (0, 2, 3, 1)).astype(jnp.float32)
    h1 = jnp.maximum(x * s1 + b1, 0.0)
    if has_shortcut:
        wsc4 = params["wsc"].reshape(1, 1, Cin, Cout)
        sc = lax.conv_general_dilated(h1, wsc4, (stride, stride), "VALID",
                                      dimension_numbers=dn)
    else:
        sc = h1                                 # module adds relu(bn1(x)) here
    c1 = lax.conv_general_dilated(h1, params["w1"], (stride, stride),
                                  [(1, 1), (1, 1)], dimension_numbers=dn)
    h2 = jnp.maximum(c1 * s2 + b2, 0.0)
    c2 = lax.conv_general_dilated(h2, params["w2"], (1, 1),
                                  [(1, 1), (1, 1)], dimension_numbers=dn)
    out = c2 + sc
    return jnp.transpose(out, (0, 3, 1, 2))


def _make_params(key, Cin, planes, *, with_shortcut):
    k1, k2, k3 = jax.random.split(key, 3)
    p = {
        "bn1_gamma": 1.0 + 0.10 * jnp.arange(Cin, dtype=jnp.float32),
        "bn1_beta":  0.05 * jnp.arange(Cin, dtype=jnp.float32),
        "bn1_mean":  0.01 * jnp.arange(Cin, dtype=jnp.float32),
        "bn1_var":   1.0 + 0.02 * jnp.arange(Cin, dtype=jnp.float32),
        "bn2_gamma": 1.0 - 0.05 * jnp.arange(planes, dtype=jnp.float32),
        "bn2_beta": -0.02 * jnp.arange(planes, dtype=jnp.float32),
        "bn2_mean":  0.03 * jnp.arange(planes, dtype=jnp.float32),
        "bn2_var":   1.0 + 0.01 * jnp.arange(planes, dtype=jnp.float32),
        "w1":  0.1 * jax.random.normal(k1, (3, 3, Cin, planes), jnp.float32),
        "w2":  0.1 * jax.random.normal(k2, (3, 3, planes, planes), jnp.float32),
    }
    if with_shortcut:
        p["wsc"] = 0.1 * jax.random.normal(k3, (Cin, planes), jnp.float32)
    return p


if __name__ == "__main__":
    key = jax.random.PRNGKey(0)
    kA, kB, kxA, kxB = jax.random.split(key, 4)

    # bf16 input DMA + bf16 MXU operands vs. a pure-f32 reference: ~1e-2-level
    # max-abs rounding is expected; a real indexing/halo bug would be O(1).
    TOL = 5e-2

    # Case A: channel-changing block -> exercises the 1x1-conv shortcut path.
    N, Cin, H, W, planes, stride = 2, 4, 16, 16, 8, 1
    paramsA = _make_params(kA, Cin, planes, with_shortcut=True)
    xA = jax.random.normal(kxA, (N, Cin, H, W), jnp.float32)
    outA = jax.block_until_ready(preact_block_pallas(xA, paramsA, stride=stride))
    refA = ref_forward(xA, paramsA, stride=stride)
    assert outA.shape == refA.shape, (outA.shape, refA.shape)
    errA = float(jnp.max(jnp.abs(outA - refA)))
    assert errA < TOL, f"shortcut path max abs error {errA}"

    # Case B: identity-shortcut path (stride 1, Cin == planes).
    CinB = planes
    paramsB = _make_params(kB, CinB, planes, with_shortcut=False)
    xB = jax.random.normal(kxB, (N, CinB, H, W), jnp.float32)
    outB = jax.block_until_ready(preact_block_pallas(xB, paramsB, stride=1))
    refB = ref_forward(xB, paramsB, stride=1)
    assert outB.shape == refB.shape, (outB.shape, refB.shape)
    errB = float(jnp.max(jnp.abs(outB - refB)))
    assert errB < TOL, f"identity path max abs error {errB}"

    print("KERNEL_OK")
</pallas_src>

<mosaic_0001>
module attributes {stable_mosaic.version = 11 : i64} {
  func.func @_preact_block_kernel(%arg0: i32, %arg1: memref<1x16x16x128xbf16, #tpu.memory_space<vmem>>, %arg2: memref<1x128xf32, #tpu.memory_space<vmem>>, %arg3: memref<1x128xf32, #tpu.memory_space<vmem>>, %arg4: memref<3x3x128x128xbf16, #tpu.memory_space<vmem>>, %arg5: memref<1x128xf32, #tpu.memory_space<vmem>>, %arg6: memref<1x128xf32, #tpu.memory_space<vmem>>, %arg7: memref<3x3x128x128xbf16, #tpu.memory_space<vmem>>, %arg8: memref<128x128xbf16, #tpu.memory_space<vmem>>, %arg9: memref<1x16x16x128xf32, #tpu.memory_space<vmem>>, %arg10: memref<18x18x128xbf16, #tpu.memory_space<vmem>>, %arg11: memref<18x18x128xbf16, #tpu.memory_space<vmem>>) attributes {dimension_semantics = [#tpu.dimension_semantics<arbitrary>], iteration_bounds = array<i64: 2>, scalar_prefetch = 0 : i64, scratch_operands = 2 : i64, tpu.core_type = #tpu.core_type<tc>, window_params = [{transform_indices = @transform_0, window_bounds = array<i64: 1, 16, 16, 128>}, {pipeline_mode = #tpu.pipeline_mode<synchronous>, transform_indices = @transform_1, window_bounds = array<i64: 1, 128>}, {pipeline_mode = #tpu.pipeline_mode<synchronous>, transform_indices = @transform_2, window_bounds = array<i64: 1, 128>}, {pipeline_mode = #tpu.pipeline_mode<synchronous>, transform_indices = @transform_3, window_bounds = array<i64: 3, 3, 128, 128>}, {pipeline_mode = #tpu.pipeline_mode<synchronous>, transform_indices = @transform_4, window_bounds = array<i64: 1, 128>}, {pipeline_mode = #tpu.pipeline_mode<synchronous>, transform_indices = @transform_5, window_bounds = array<i64: 1, 128>}, {pipeline_mode = #tpu.pipeline_mode<synchronous>, transform_indices = @transform_6, window_bounds = array<i64: 3, 3, 128, 128>}, {pipeline_mode = #tpu.pipeline_mode<synchronous>, transform_indices = @transform_7, window_bounds = array<i64: 128, 128>}, {transform_indices = @transform_8, window_bounds = array<i64: 1, 16, 16, 128>}]} {
    %c0_i32 = arith.constant 0 : i32
    %0 = arith.cmpi eq, %arg0, %c0_i32 : i32
    %1 = arith.extui %0 : i1 to i32
    %c0_i32_0 = arith.constant 0 : i32
    %2 = arith.cmpi ne, %1, %c0_i32_0 : i32
    scf.if %2 {
      %cst_168 = arith.constant 0.000000e+00 : bf16
      %144 = vector.broadcast %cst_168 : bf16 to vector<1x18x128xbf16>
      %c0_169 = arith.constant 0 : index
      %c0_170 = arith.constant 0 : index
      %c0_171 = arith.constant 0 : index
      %145 = vector.load %arg10[%c0_169, %c0_170, %c0_171] : memref<18x18x128xbf16, #tpu.memory_space<vmem>>, vector<1x18x128xbf16>
      tpu.vector_store %arg10[%c0_169, %c0_170, %c0_171], %144 {strides = array<i32>} : memref<18x18x128xbf16, #tpu.memory_space<vmem>>, vector<1x18x128xbf16>,
      %cst_172 = arith.constant 0.000000e+00 : bf16
      %146 = vector.broadcast %cst_172 : bf16 to vector<1x18x128xbf16>
      %c17 = arith.constant 17 : index
      %c0_173 = arith.constant 0 : index
      %c0_174 = arith.constant 0 : index
      %147 = vector.load %arg10[%c17, %c0_173, %c0_174] : memref<18x18x128xbf16, #tpu.memory_space<vmem>>, vector<1x18x128xbf16>
      tpu.vector_store %arg10[%c17, %c0_173, %c0_174], %146 {strides = array<i32>} : memref<18x18x128xbf16, #tpu.memory_space<vmem>>, vector<1x18x128xbf16>,
      %cst_175 = arith.constant 0.000000e+00 : bf16
      %148 = vector.broadcast %cst_175 : bf16 to vector<18x1x128xbf16>
      %c0_176 = arith.constant 0 : index
      %c0_177 = arith.constant 0 : index
      %c0_178 = arith.constant 0 : index
      %149 = vector.load %arg10[%c0_176, %c0_177, %c0_178] : memref<18x18x128xbf16, #tpu.memory_space<vmem>>, vector<18x1x128xbf16>
      tpu.vector_store %arg10[%c0_176, %c0_177, %c0_178], %148 {strides = array<i32>} : memref<18x18x128xbf16, #tpu.memory_space<vmem>>, vector<18x1x128xbf16>,
      %cst_179 = arith.constant 0.000000e+00 : bf16
      %150 = vector.broadcast %cst_179 : bf16 to vector<18x1x128xbf16>
      %c0_180 = arith.constant 0 : index
      %c17_181 = arith.constant 17 : index
      %c0_182 = arith.constant 0 : index
      %151 = vector.load %arg10[%c0_180, %c17_181, %c0_182] : memref<18x18x128xbf16, #tpu.memory_space<vmem>>, vector<18x1x128xbf16>
      tpu.vector_store %arg10[%c0_180, %c17_181, %c0_182], %150 {strides = array<i32>} : memref<18x18x128xbf16, #tpu.memory_space<vmem>>, vector<18x1x128xbf16>,
      %cst_183 = arith.constant 0.000000e+00 : bf16
      %152 = vector.broadcast %cst_183 : bf16 to vector<1x18x128xbf16>
      %c0_184 = arith.constant 0 : index
      %c0_185 = arith.constant 0 : index
      %c0_186 = arith.constant 0 : index
      %153 = vector.load %arg11[%c0_184, %c0_185, %c0_186] : memref<18x18x128xbf16, #tpu.memory_space<vmem>>, vector<1x18x128xbf16>
      tpu.vector_store %arg11[%c0_184, %c0_185, %c0_186], %152 {strides = array<i32>} : memref<18x18x128xbf16, #tpu.memory_space<vmem>>, vector<1x18x128xbf16>,
      %cst_187 = arith.constant 0.000000e+00 : bf16
      %154 = vector.broadcast %cst_187 : bf16 to vector<1x18x128xbf16>
      %c17_188 = arith.constant 17 : index
      %c0_189 = arith.constant 0 : index
      %c0_190 = arith.constant 0 : index
      %155 = vector.load %arg11[%c17_188, %c0_189, %c0_190] : memref<18x18x128xbf16, #tpu.memory_space<vmem>>, vector<1x18x128xbf16>
      tpu.vector_store %arg11[%c17_188, %c0_189, %c0_190], %154 {strides = array<i32>} : memref<18x18x128xbf16, #tpu.memory_space<vmem>>, vector<1x18x128xbf16>,
      %cst_191 = arith.constant 0.000000e+00 : bf16
      %156 = vector.broadcast %cst_191 : bf16 to vector<18x1x128xbf16>
      %c0_192 = arith.constant 0 : index
      %c0_193 = arith.constant 0 : index
      %c0_194 = arith.constant 0 : index
      %157 = vector.load %arg11[%c0_192, %c0_193, %c0_194] : memref<18x18x128xbf16, #tpu.memory_space<vmem>>, vector<18x1x128xbf16>
      tpu.vector_store %arg11[%c0_192, %c0_193, %c0_194], %156 {strides = array<i32>} : memref<18x18x128xbf16, #tpu.memory_space<vmem>>, vector<18x1x128xbf16>,
      %cst_195 = arith.constant 0.000000e+00 : bf16
      %158 = vector.broadcast %cst_195 : bf16 to vector<18x1x128xbf16>
      %c0_196 = arith.constant 0 : index
      %c17_197 = arith.constant 17 : index
      %c0_198 = arith.constant 0 : index
      %159 = vector.load %arg11[%c0_196, %c17_197, %c0_198] : memref<18x18x128xbf16, #tpu.memory_space<vmem>>, vector<18x1x128xbf16>
      tpu.vector_store %arg11[%c0_196, %c17_197, %c0_198], %158 {strides = array<i32>} : memref<18x18x128xbf16, #tpu.memory_space<vmem>>, vector<18x1x128xbf16>,
    } else {
    }
    %c0 = arith.constant 0 : index
    %c0_1 = arith.constant 0 : index
    %c0_2 = arith.constant 0 : index
    %c0_3 = arith.constant 0 : index
    %3 = vector.load %arg1[%c0, %c0_1, %c0_2, %c0_3] : memref<1x16x16x128xbf16, #tpu.memory_space<vmem>>, vector<1x16x16x128xbf16>
    %4 = vector.shape_cast %3 : vector<1x16x16x128xbf16> to vector<16x16x128xbf16>
    %5 = arith.extf %4 : vector<16x16x128xbf16> to vector<16x16x128xf32>
    %c0_4 = arith.constant 0 : index
    %c0_5 = arith.constant 0 : index
    %6 = vector.load %arg2[%c0_4, %c0_5] : memref<1x128xf32, #tpu.memory_space<vmem>>, vector<1x128xf32>
    %7 = vector.shape_cast %6 : vector<1x128xf32> to vector<1x1x128xf32>
    %8 = vector.broadcast %7 : vector<1x1x128xf32> to vector<16x16x128xf32>
    %9 = arith.mulf %5, %8 : vector<16x16x128xf32>
    %c0_6 = arith.constant 0 : index
    %c0_7 = arith.constant 0 : index
    %10 = vector.load %arg3[%c0_6, %c0_7] : memref<1x128xf32, #tpu.memory_space<vmem>>, vector<1x128xf32>
    %11 = vector.shape_cast %10 : vector<1x128xf32> to vector<1x1x128xf32>
    %12 = vector.broadcast %11 : vector<1x1x128xf32> to vector<16x16x128xf32>
    %13 = arith.addf %9, %12 : vector<16x16x128xf32>
    %cst = arith.constant 0.000000e+00 : f32
    %14 = vector.broadcast %cst : f32 to vector<16x16x128xf32>
    %15 = arith.maximumf %13, %14 : vector<16x16x128xf32>
    %16 = arith.truncf %15 : vector<16x16x128xf32> to vector<16x16x128xbf16>
    %c1 = arith.constant 1 : index
    %c1_8 = arith.constant 1 : index
    %c0_9 = arith.constant 0 : index
    %17 = vector.load %arg10[%c1, %c1_8, %c0_9] : memref<18x18x128xbf16, #tpu.memory_space<vmem>>, vector<16x16x128xbf16>
    tpu.vector_store %arg10[%c1, %c1_8, %c0_9], %16 {strides = array<i32>} : memref<18x18x128xbf16, #tpu.memory_space<vmem>>, vector<16x16x128xbf16>,
    %18 = arith.truncf %15 : vector<16x16x128xf32> to vector<16x16x128xbf16>
    %19 = vector.shape_cast %18 : vector<16x16x128xbf16> to vector<256x128xbf16>
    %c0_10 = arith.constant 0 : index
    %c0_11 = arith.constant 0 : index
    %20 = vector.load %arg8[%c0_10, %c0_11] : memref<128x128xbf16, #tpu.memory_space<vmem>>, vector<128x128xbf16>
    %cst_12 = arith.constant dense<0.000000e+00> : vector<256x128xf32>
    %21 = tpu.matmul %19, %20, %cst_12 {dimension_numbers = #tpu.dot_dimension_numbers<[1], [0], [0], [1], [0, 0, 1, 1], [], []>} : vector<256x128xbf16>, vector<128x128xbf16>, vector<256x128xf32> -> vector<256x128xf32>
    %c0_13 = arith.constant 0 : index
    %c0_14 = arith.constant 0 : index
    %c0_15 = arith.constant 0 : index
    %22 = vector.load %arg10[%c0_13, %c0_14, %c0_15] : memref<18x18x128xbf16, #tpu.memory_space<vmem>>, vector<16x16x128xbf16>
    %23 = vector.shape_cast %22 : vector<16x16x128xbf16> to vector<256x128xbf16>
    %c0_16 = arith.constant 0 : index
    %c0_17 = arith.constant 0 : index
    %c0_18 = arith.constant 0 : index
    %c0_19 = arith.constant 0 : index
    %24 = vector.load %arg4[%c0_16, %c0_17, %c0_18, %c0_19] : memref<3x3x128x128xbf16, #tpu.memory_space<vmem>>, vector<1x1x128x128xbf16>
    %25 = vector.shape_cast %24 : vector<1x1x128x128xbf16> to vector<128x128xbf16>
    %cst_20 = arith.constant dense<0.000000e+00> : vector<256x128xf32>
    %26 = tpu.matmul %23, %25, %cst_20 {dimension_numbers = #tpu.dot_dimension_numbers<[1], [0], [0], [1], [0, 0, 1, 1], [], []>} : vector<256x128xbf16>, vector<128x128xbf16>, vector<256x128xf32> -> vector<256x128xf32>
    %c0_21 = arith.constant 0 : index
    %c1_22 = arith.constant 1 : index
    %c0_23 = arith.constant 0 : index
    %27 = vector.load %arg10[%c0_21, %c1_22, %c0_23] : memref<18x18x128xbf16, #tpu.memory_space<vmem>>, vector<16x16x128xbf16>
    %28 = vector.shape_cast %27 : vector<16x16x128xbf16> to vector<256x128xbf16>
    %c0_24 = arith.constant 0 : index
    %c1_25 = arith.constant 1 : index
    %c0_26 = arith.constant 0 : index
    %c0_27 = arith.constant 0 : index
    %29 = vector.load %arg4[%c0_24, %c1_25, %c0_26, %c0_27] : memref<3x3x128x128xbf16, #tpu.memory_space<vmem>>, vector<1x1x128x128xbf16>
    %30 = vector.shape_cast %29 : vector<1x1x128x128xbf16> to vector<128x128xbf16>
    %cst_28 = arith.constant dense<0.000000e+00> : vector<256x128xf32>
    %31 = tpu.matmul %28, %30, %cst_28 {dimension_numbers = #tpu.dot_dimension_numbers<[1], [0], [0], [1], [0, 0, 1, 1], [], []>} : vector<256x128xbf16>, vector<128x128xbf16>, vector<256x128xf32> -> vector<256x128xf32>
    %32 = arith.addf %26, %31 : vector<256x128xf32>
    %c0_29 = arith.constant 0 : index
    %c2 = arith.constant 2 : index
    %c0_30 = arith.constant 0 : index
    %33 = vector.load %arg10[%c0_29, %c2, %c0_30] : memref<18x18x128xbf16, #tpu.memory_space<vmem>>, vector<16x16x128xbf16>
    %34 = vector.shape_cast %33 : vector<16x16x128xbf16> to vector<256x128xbf16>
    %c0_31 = arith.constant 0 : index
    %c2_32 = arith.constant 2 : index
    %c0_33 = arith.constant 0 : index
    %c0_34 = arith.constant 0 : index
    %35 = vector.load %arg4[%c0_31, %c2_32, %c0_33, %c0_34] : memref<3x3x128x128xbf16, #tpu.memory_space<vmem>>, vector<1x1x128x128xbf16>
    %36 = vector.shape_cast %35 : vector<1x1x128x128xbf16> to vector<128x128xbf16>
    %cst_35 = arith.constant dense<0.000000e+00> : vector<256x128xf32>
    %37 = tpu.matmul %34, %36, %cst_35 {dimension_numbers = #tpu.dot_dimension_numbers<[1], [0], [0], [1], [0, 0, 1, 1], [], []>} : vector<256x128xbf16>, vector<128x128xbf16>, vector<256x128xf32> -> vector<256x128xf32>
    %38 = arith.addf %32, %37 : vector<256x128xf32>
    %c1_36 = arith.constant 1 : index
    %c0_37 = arith.constant 0 : index
    %c0_38 = arith.constant 0 : index
    %39 = vector.load %arg10[%c1_36, %c0_37, %c0_38] : memref<18x18x128xbf16, #tpu.memory_space<vmem>>, vector<16x16x128xbf16>
    %40 = vector.shape_cast %39 : vector<16x16x128xbf16> to vector<256x128xbf16>
    %c1_39 = arith.constant 1 : index
    %c0_40 = arith.constant 0 : index
    %c0_41 = arith.constant 0 : index
    %c0_42 = arith.constant 0 : index
    %41 = vector.load %arg4[%c1_39, %c0_40, %c0_41, %c0_42] : memref<3x3x128x128xbf16, #tpu.memory_space<vmem>>, vector<1x1x128x128xbf16>
    %42 = vector.shape_cast %41 : vector<1x1x128x128xbf16> to vector<128x128xbf16>
    %cst_43 = arith.constant dense<0.000000e+00> : vector<256x128xf32>
    %43 = tpu.matmul %40, %42, %cst_43 {dimension_numbers = #tpu.dot_dimension_numbers<[1], [0], [0], [1], [0, 0, 1, 1], [], []>} : vector<256x128xbf16>, vector<128x128xbf16>, vector<256x128xf32> -> vector<256x128xf32>
    %44 = arith.addf %38, %43 : vector<256x128xf32>
    %c1_44 = arith.constant 1 : index
    %c1_45 = arith.constant 1 : index
    %c0_46 = arith.constant 0 : index
    %45 = vector.load %arg10[%c1_44, %c1_45, %c0_46] : memref<18x18x128xbf16, #tpu.memory_space<vmem>>, vector<16x16x128xbf16>
    %46 = vector.shape_cast %45 : vector<16x16x128xbf16> to vector<256x128xbf16>
    %c1_47 = arith.constant 1 : index
    %c1_48 = arith.constant 1 : index
    %c0_49 = arith.constant 0 : index
    %c0_50 = arith.constant 0 : index
    %47 = vector.load %arg4[%c1_47, %c1_48, %c0_49, %c0_50] : memref<3x3x128x128xbf16, #tpu.memory_space<vmem>>, vector<1x1x128x128xbf16>
    %48 = vector.shape_cast %47 : vector<1x1x128x128xbf16> to vector<128x128xbf16>
    %cst_51 = arith.constant dense<0.000000e+00> : vector<256x128xf32>
    %49 = tpu.matmul %46, %48, %cst_51 {dimension_numbers = #tpu.dot_dimension_numbers<[1], [0], [0], [1], [0, 0, 1, 1], [], []>} : vector<256x128xbf16>, vector<128x128xbf16>, vector<256x128xf32> -> vector<256x128xf32>
    %50 = arith.addf %44, %49 : vector<256x128xf32>
    %c1_52 = arith.constant 1 : index
    %c2_53 = arith.constant 2 : index
    %c0_54 = arith.constant 0 : index
    %51 = vector.load %arg10[%c1_52, %c2_53, %c0_54] : memref<18x18x128xbf16, #tpu.memory_space<vmem>>, vector<16x16x128xbf16>
    %52 = vector.shape_cast %51 : vector<16x16x128xbf16> to vector<256x128xbf16>
    %c1_55 = arith.constant 1 : index
    %c2_56 = arith.constant 2 : index
    %c0_57 = arith.constant 0 : index
    %c0_58 = arith.constant 0 : index
    %53 = vector.load %arg4[%c1_55, %c2_56, %c0_57, %c0_58] : memref<3x3x128x128xbf16, #tpu.memory_space<vmem>>, vector<1x1x128x128xbf16>
    %54 = vector.shape_cast %53 : vector<1x1x128x128xbf16> to vector<128x128xbf16>
    %cst_59 = arith.constant dense<0.000000e+00> : vector<256x128xf32>
    %55 = tpu.matmul %52, %54, %cst_59 {dimension_numbers = #tpu.dot_dimension_numbers<[1], [0], [0], [1], [0, 0, 1, 1], [], []>} : vector<256x128xbf16>, vector<128x128xbf16>, vector<256x128xf32> -> vector<256x128xf32>
    %56 = arith.addf %50, %55 : vector<256x128xf32>
    %c2_60 = arith.constant 2 : index
    %c0_61 = arith.constant 0 : index
    %c0_62 = arith.constant 0 : index
    %57 = vector.load %arg10[%c2_60, %c0_61, %c0_62] : memref<18x18x128xbf16, #tpu.memory_space<vmem>>, vector<16x16x128xbf16>
    %58 = vector.shape_cast %57 : vector<16x16x128xbf16> to vector<256x128xbf16>
    %c2_63 = arith.constant 2 : index
    %c0_64 = arith.constant 0 : index
    %c0_65 = arith.constant 0 : index
    %c0_66 = arith.constant 0 : index
    %59 = vector.load %arg4[%c2_63, %c0_64, %c0_65, %c0_66] : memref<3x3x128x128xbf16, #tpu.memory_space<vmem>>, vector<1x1x128x128xbf16>
    %60 = vector.shape_cast %59 : vector<1x1x128x128xbf16> to vector<128x128xbf16>
    %cst_67 = arith.constant dense<0.000000e+00> : vector<256x128xf32>
    %61 = tpu.matmul %58, %60, %cst_67 {dimension_numbers = #tpu.dot_dimension_numbers<[1], [0], [0], [1], [0, 0, 1, 1], [], []>} : vector<256x128xbf16>, vector<128x128xbf16>, vector<256x128xf32> -> vector<256x128xf32>
    %62 = arith.addf %56, %61 : vector<256x128xf32>
    %c2_68 = arith.constant 2 : index
    %c1_69 = arith.constant 1 : index
    %c0_70 = arith.constant 0 : index
    %63 = vector.load %arg10[%c2_68, %c1_69, %c0_70] : memref<18x18x128xbf16, #tpu.memory_space<vmem>>, vector<16x16x128xbf16>
    %64 = vector.shape_cast %63 : vector<16x16x128xbf16> to vector<256x128xbf16>
    %c2_71 = arith.constant 2 : index
    %c1_72 = arith.constant 1 : index
    %c0_73 = arith.constant 0 : index
    %c0_74 = arith.constant 0 : index
    %65 = vector.load %arg4[%c2_71, %c1_72, %c0_73, %c0_74] : memref<3x3x128x128xbf16, #tpu.memory_space<vmem>>, vector<1x1x128x128xbf16>
    %66 = vector.shape_cast %65 : vector<1x1x128x128xbf16> to vector<128x128xbf16>
    %cst_75 = arith.constant dense<0.000000e+00> : vector<256x128xf32>
    %67 = tpu.matmul %64, %66, %cst_75 {dimension_numbers = #tpu.dot_dimension_numbers<[1], [0], [0], [1], [0, 0, 1, 1], [], []>} : vector<256x128xbf16>, vector<128x128xbf16>, vector<256x128xf32> -> vector<256x128xf32>
    %68 = arith.addf %62, %67 : vector<256x128xf32>
    %c2_76 = arith.constant 2 : index
    %c2_77 = arith.constant 2 : index
    %c0_78 = arith.constant 0 : index
    %69 = vector.load %arg10[%c2_76, %c2_77, %c0_78] : memref<18x18x128xbf16, #tpu.memory_space<vmem>>, vector<16x16x128xbf16>
    %70 = vector.shape_cast %69 : vector<16x16x128xbf16> to vector<256x128xbf16>
    %c2_79 = arith.constant 2 : index
    %c2_80 = arith.constant 2 : index
    %c0_81 = arith.constant 0 : index
    %c0_82 = arith.constant 0 : index
    %71 = vector.load %arg4[%c2_79, %c2_80, %c0_81, %c0_82] : memref<3x3x128x128xbf16, #tpu.memory_space<vmem>>, vector<1x1x128x128xbf16>
    %72 = vector.shape_cast %71 : vector<1x1x128x128xbf16> to vector<128x128xbf16>
    %cst_83 = arith.constant dense<0.000000e+00> : vector<256x128xf32>
    %73 = tpu.matmul %70, %72, %cst_83 {dimension_numbers = #tpu.dot_dimension_numbers<[1], [0], [0], [1], [0, 0, 1, 1], [], []>} : vector<256x128xbf16>, vector<128x128xbf16>, vector<256x128xf32> -> vector<256x128xf32>
    %74 = arith.addf %68, %73 : vector<256x128xf32>
    %c0_84 = arith.constant 0 : index
    %c0_85 = arith.constant 0 : index
    %75 = vector.load %arg5[%c0_84, %c0_85] : memref<1x128xf32, #tpu.memory_space<vmem>>, vector<1x128xf32>
    %76 = vector.broadcast %75 : vector<1x128xf32> to vector<256x128xf32>
    %77 = arith.mulf %74, %76 : vector<256x128xf32>
    %c0_86 = arith.constant 0 : index
    %c0_87 = arith.constant 0 : index
    %78 = vector.load %arg6[%c0_86, %c0_87] : memref<1x128xf32, #tpu.memory_space<vmem>>, vector<1x128xf32>
    %79 = vector.broadcast %78 : vector<1x128xf32> to vector<256x128xf32>
    %80 = arith.addf %77, %79 : vector<256x128xf32>
    %cst_88 = arith.constant 0.000000e+00 : f32
    %81 = vector.broadcast %cst_88 : f32 to vector<256x128xf32>
    %82 = arith.maximumf %80, %81 : vector<256x128xf32>
    %83 = vector.shape_cast %82 : vector<256x128xf32> to vector<16x16x128xf32>
    %84 = arith.truncf %83 : vector<16x16x128xf32> to vector<16x16x128xbf16>
    %c1_89 = arith.constant 1 : index
    %c1_90 = arith.constant 1 : index
    %c0_91 = arith.constant 0 : index
    %85 = vector.load %arg11[%c1_89, %c1_90, %c0_91] : memref<18x18x128xbf16, #tpu.memory_space<vmem>>, vector<16x16x128xbf16>
    tpu.vector_store %arg11[%c1_89, %c1_90, %c0_91], %84 {strides = array<i32>} : memref<18x18x128xbf16, #tpu.memory_space<vmem>>, vector<16x16x128xbf16>,
    %c0_92 = arith.constant 0 : index
    %c0_93 = arith.constant 0 : index
    %c0_94 = arith.constant 0 : index
    %86 = vector.load %arg11[%c0_92, %c0_93, %c0_94] : memref<18x18x128xbf16, #tpu.memory_space<vmem>>, vector<16x16x128xbf16>
    %87 = vector.shape_cast %86 : vector<16x16x128xbf16> to vector<256x128xbf16>
    %c0_95 = arith.constant 0 : index
    %c0_96 = arith.constant 0 : index
    %c0_97 = arith.constant 0 : index
    %c0_98 = arith.constant 0 : index
    %88 = vector.load %arg7[%c0_95, %c0_96, %c0_97, %c0_98] : memref<3x3x128x128xbf16, #tpu.memory_space<vmem>>, vector<1x1x128x128xbf16>
    %89 = vector.shape_cast %88 : vector<1x1x128x128xbf16> to vector<128x128xbf16>
    %cst_99 = arith.constant dense<0.000000e+00> : vector<256x128xf32>
    %90 = tpu.matmul %87, %89, %cst_99 {dimension_numbers = #tpu.dot_dimension_numbers<[1], [0], [0], [1], [0, 0, 1, 1], [], []>} : vector<256x128xbf16>, vector<128x128xbf16>, vector<256x128xf32> -> vector<256x128xf32>
    %c0_100 = arith.constant 0 : index
    %c1_101 = arith.constant 1 : index
    %c0_102 = arith.constant 0 : index
    %91 = vector.load %arg11[%c0_100, %c1_101, %c0_102] : memref<18x18x128xbf16, #tpu.memory_space<vmem>>, vector<16x16x128xbf16>
    %92 = vector.shape_cast %91 : vector<16x16x128xbf16> to vector<256x128xbf16>
    %c0_103 = arith.constant 0 : index
    %c1_104 = arith.constant 1 : index
    %c0_105 = arith.constant 0 : index
    %c0_106 = arith.constant 0 : index
    %93 = vector.load %arg7[%c0_103, %c1_104, %c0_105, %c0_106] : memref<3x3x128x128xbf16, #tpu.memory_space<vmem>>, vector<1x1x128x128xbf16>
    %94 = vector.shape_cast %93 : vector<1x1x128x128xbf16> to vector<128x128xbf16>
    %cst_107 = arith.constant dense<0.000000e+00> : vector<256x128xf32>
    %95 = tpu.matmul %92, %94, %cst_107 {dimension_numbers = #tpu.dot_dimension_numbers<[1], [0], [0], [1], [0, 0, 1, 1], [], []>} : vector<256x128xbf16>, vector<128x128xbf16>, vector<256x128xf32> -> vector<256x128xf32>
    %96 = arith.addf %90, %95 : vector<256x128xf32>
    %c0_108 = arith.constant 0 : index
    %c2_109 = arith.constant 2 : index
    %c0_110 = arith.constant 0 : index
    %97 = vector.load %arg11[%c0_108, %c2_109, %c0_110] : memref<18x18x128xbf16, #tpu.memory_space<vmem>>, vector<16x16x128xbf16>
    %98 = vector.shape_cast %97 : vector<16x16x128xbf16> to vector<256x128xbf16>
    %c0_111 = arith.constant 0 : index
    %c2_112 = arith.constant 2 : index
    %c0_113 = arith.constant 0 : index
    %c0_114 = arith.constant 0 : index
    %99 = vector.load %arg7[%c0_111, %c2_112, %c0_113, %c0_114] : memref<3x3x128x128xbf16, #tpu.memory_space<vmem>>, vector<1x1x128x128xbf16>
    %100 = vector.shape_cast %99 : vector<1x1x128x128xbf16> to vector<128x128xbf16>
    %cst_115 = arith.constant dense<0.000000e+00> : vector<256x128xf32>
    %101 = tpu.matmul %98, %100, %cst_115 {dimension_numbers = #tpu.dot_dimension_numbers<[1], [0], [0], [1], [0, 0, 1, 1], [], []>} : vector<256x128xbf16>, vector<128x128xbf16>, vector<256x128xf32> -> vector<256x128xf32>
    %102 = arith.addf %96, %101 : vector<256x128xf32>
    %c1_116 = arith.constant 1 : index
    %c0_117 = arith.constant 0 : index
    %c0_118 = arith.constant 0 : index
    %103 = vector.load %arg11[%c1_116, %c0_117, %c0_118] : memref<18x18x128xbf16, #tpu.memory_space<vmem>>, vector<16x16x128xbf16>
    %104 = vector.shape_cast %103 : vector<16x16x128xbf16> to vector<256x128xbf16>
    %c1_119 = arith.constant 1 : index
    %c0_120 = arith.constant 0 : index
    %c0_121 = arith.constant 0 : index
    %c0_122 = arith.constant 0 : index
    %105 = vector.load %arg7[%c1_119, %c0_120, %c0_121, %c0_122] : memref<3x3x128x128xbf16, #tpu.memory_space<vmem>>, vector<1x1x128x128xbf16>
    %106 = vector.shape_cast %105 : vector<1x1x128x128xbf16> to vector<128x128xbf16>
    %cst_123 = arith.constant dense<0.000000e+00> : vector<256x128xf32>
    %107 = tpu.matmul %104, %106, %cst_123 {dimension_numbers = #tpu.dot_dimension_numbers<[1], [0], [0], [1], [0, 0, 1, 1], [], []>} : vector<256x128xbf16>, vector<128x128xbf16>, vector<256x128xf32> -> vector<256x128xf32>
    %108 = arith.addf %102, %107 : vector<256x128xf32>
    %c1_124 = arith.constant 1 : index
    %c1_125 = arith.constant 1 : index
    %c0_126 = arith.constant 0 : index
    %109 = vector.load %arg11[%c1_124, %c1_125, %c0_126] : memref<18x18x128xbf16, #tpu.memory_space<vmem>>, vector<16x16x128xbf16>
    %110 = vector.shape_cast %109 : vector<16x16x128xbf16> to vector<256x128xbf16>
    %c1_127 = arith.constant 1 : index
    %c1_128 = arith.constant 1 : index
    %c0_129 = arith.constant 0 : index
    %c0_130 = arith.constant 0 : index
    %111 = vector.load %arg7[%c1_127, %c1_128, %c0_129, %c0_130] : memref<3x3x128x128xbf16, #tpu.memory_space<vmem>>, vector<1x1x128x128xbf16>
    %112 = vector.shape_cast %111 : vector<1x1x128x128xbf16> to vector<128x128xbf16>
    %cst_131 = arith.constant dense<0.000000e+00> : vector<256x128xf32>
    %113 = tpu.matmul %110, %112, %cst_131 {dimension_numbers = #tpu.dot_dimension_numbers<[1], [0], [0], [1], [0, 0, 1, 1], [], []>} : vector<256x128xbf16>, vector<128x128xbf16>, vector<256x128xf32> -> vector<256x128xf32>
    %114 = arith.addf %108, %113 : vector<256x128xf32>
    %c1_132 = arith.constant 1 : index
    %c2_133 = arith.constant 2 : index
    %c0_134 = arith.constant 0 : index
    %115 = vector.load %arg11[%c1_132, %c2_133, %c0_134] : memref<18x18x128xbf16, #tpu.memory_space<vmem>>, vector<16x16x128xbf16>
    %116 = vector.shape_cast %115 : vector<16x16x128xbf16> to vector<256x128xbf16>
    %c1_135 = arith.constant 1 : index
    %c2_136 = arith.constant 2 : index
    %c0_137 = arith.constant 0 : index
    %c0_138 = arith.constant 0 : index
    %117 = vector.load %arg7[%c1_135, %c2_136, %c0_137, %c0_138] : memref<3x3x128x128xbf16, #tpu.memory_space<vmem>>, vector<1x1x128x128xbf16>
    %118 = vector.shape_cast %117 : vector<1x1x128x128xbf16> to vector<128x128xbf16>
    %cst_139 = arith.constant dense<0.000000e+00> : vector<256x128xf32>
    %119 = tpu.matmul %116, %118, %cst_139 {dimension_numbers = #tpu.dot_dimension_numbers<[1], [0], [0], [1], [0, 0, 1, 1], [], []>} : vector<256x128xbf16>, vector<128x128xbf16>, vector<256x128xf32> -> vector<256x128xf32>
    %120 = arith.addf %114, %119 : vector<256x128xf32>
    %c2_140 = arith.constant 2 : index
    %c0_141 = arith.constant 0 : index
    %c0_142 = arith.constant 0 : index
    %121 = vector.load %arg11[%c2_140, %c0_141, %c0_142] : memref<18x18x128xbf16, #tpu.memory_space<vmem>>, vector<16x16x128xbf16>
    %122 = vector.shape_cast %121 : vector<16x16x128xbf16> to vector<256x128xbf16>
    %c2_143 = arith.constant 2 : index
    %c0_144 = arith.constant 0 : index
    %c0_145 = arith.constant 0 : index
    %c0_146 = arith.constant 0 : index
    %123 = vector.load %arg7[%c2_143, %c0_144, %c0_145, %c0_146] : memref<3x3x128x128xbf16, #tpu.memory_space<vmem>>, vector<1x1x128x128xbf16>
    %124 = vector.shape_cast %123 : vector<1x1x128x128xbf16> to vector<128x128xbf16>
    %cst_147 = arith.constant dense<0.000000e+00> : vector<256x128xf32>
    %125 = tpu.matmul %122, %124, %cst_147 {dimension_numbers = #tpu.dot_dimension_numbers<[1], [0], [0], [1], [0, 0, 1, 1], [], []>} : vector<256x128xbf16>, vector<128x128xbf16>, vector<256x128xf32> -> vector<256x128xf32>
    %126 = arith.addf %120, %125 : vector<256x128xf32>
    %c2_148 = arith.constant 2 : index
    %c1_149 = arith.constant 1 : index
    %c0_150 = arith.constant 0 : index
    %127 = vector.load %arg11[%c2_148, %c1_149, %c0_150] : memref<18x18x128xbf16, #tpu.memory_space<vmem>>, vector<16x16x128xbf16>
    %128 = vector.shape_cast %127 : vector<16x16x128xbf16> to vector<256x128xbf16>
    %c2_151 = arith.constant 2 : index
    %c1_152 = arith.constant 1 : index
    %c0_153 = arith.constant 0 : index
    %c0_154 = arith.constant 0 : index
    %129 = vector.load %arg7[%c2_151, %c1_152, %c0_153, %c0_154] : memref<3x3x128x128xbf16, #tpu.memory_space<vmem>>, vector<1x1x128x128xbf16>
    %130 = vector.shape_cast %129 : vector<1x1x128x128xbf16> to vector<128x128xbf16>
    %cst_155 = arith.constant dense<0.000000e+00> : vector<256x128xf32>
    %131 = tpu.matmul %128, %130, %cst_155 {dimension_numbers = #tpu.dot_dimension_numbers<[1], [0], [0], [1], [0, 0, 1, 1], [], []>} : vector<256x128xbf16>, vector<128x128xbf16>, vector<256x128xf32> -> vector<256x128xf32>
    %132 = arith.addf %126, %131 : vector<256x128xf32>
    %c2_156 = arith.constant 2 : index
    %c2_157 = arith.constant 2 : index
    %c0_158 = arith.constant 0 : index
    %133 = vector.load %arg11[%c2_156, %c2_157, %c0_158] : memref<18x18x128xbf16, #tpu.memory_space<vmem>>, vector<16x16x128xbf16>
    %134 = vector.shape_cast %133 : vector<16x16x128xbf16> to vector<256x128xbf16>
    %c2_159 = arith.constant 2 : index
    %c2_160 = arith.constant 2 : index
    %c0_161 = arith.constant 0 : index
    %c0_162 = arith.constant 0 : index
    %135 = vector.load %arg7[%c2_159, %c2_160, %c0_161, %c0_162] : memref<3x3x128x128xbf16, #tpu.memory_space<vmem>>, vector<1x1x128x128xbf16>
    %136 = vector.shape_cast %135 : vector<1x1x128x128xbf16> to vector<128x128xbf16>
    %cst_163 = arith.constant dense<0.000000e+00> : vector<256x128xf32>
    %137 = tpu.matmul %134, %136, %cst_163 {dimension_numbers = #tpu.dot_dimension_numbers<[1], [0], [0], [1], [0, 0, 1, 1], [], []>} : vector<256x128xbf16>, vector<128x128xbf16>, vector<256x128xf32> -> vector<256x128xf32>
    %138 = arith.addf %132, %137 : vector<256x128xf32>
    %139 = arith.addf %138, %21 : vector<256x128xf32>
    %140 = vector.shape_cast %139 : vector<256x128xf32> to vector<16x16x128xf32>
    %c0_164 = arith.constant 0 : index
    %c0_165 = arith.constant 0 : index
    %c0_166 = arith.constant 0 : index
    %c0_167 = arith.constant 0 : index
    %141 = vector.load %arg9[%c0_164, %c0_165, %c0_166, %c0_167] : memref<1x16x16x128xf32, #tpu.memory_space<vmem>>, vector<1x16x16x128xf32>
    %142 = vector.shape_cast %141 : vector<1x16x16x128xf32> to vector<16x16x128xf32>
    %143 = vector.shape_cast %140 : vector<16x16x128xf32> to vector<1x16x16x128xf32>
    tpu.vector_store %arg9[%c0_164, %c0_165, %c0_166, %c0_167], %143 {strides = array<i32>} : memref<1x16x16x128xf32, #tpu.memory_space<vmem>>, vector<1x16x16x128xf32>,
    return
  }
  func.func @transform_0(%arg0: i32) -> (i32, i32, i32, i32) {
    %c0_i32 = arith.constant 0 : i32
    %c0_i32_0 = arith.constant 0 : i32
    %c0_i32_1 = arith.constant 0 : i32
    %c0_i32_2 = arith.constant 0 : i32
    return %arg0, %c0_i32, %c0_i32_0, %c0_i32_1 : i32, i32, i32, i32
  }
  func.func @transform_1(%arg0: i32) -> (i32, i32) {
    %c0_i32 = arith.constant 0 : i32
    %c0_i32_0 = arith.constant 0 : i32
    %c0_i32_1 = arith.constant 0 : i32
    return %c0_i32, %c0_i32_0 : i32, i32
  }
  func.func @transform_2(%arg0: i32) -> (i32, i32) {
    %c0_i32 = arith.constant 0 : i32
    %c0_i32_0 = arith.constant 0 : i32
    %c0_i32_1 = arith.constant 0 : i32
    return %c0_i32, %c0_i32_0 : i32, i32
  }
  func.func @transform_3(%arg0: i32) -> (i32, i32, i32, i32) {
    %c0_i32 = arith.constant 0 : i32
    %c0_i32_0 = arith.constant 0 : i32
    %c0_i32_1 = arith.constant 0 : i32
    %c0_i32_2 = arith.constant 0 : i32
    %c0_i32_3 = arith.constant 0 : i32
    return %c0_i32, %c0_i32_0, %c0_i32_1, %c0_i32_2 : i32, i32, i32, i32
  }
  func.func @transform_4(%arg0: i32) -> (i32, i32) {
    %c0_i32 = arith.constant 0 : i32
    %c0_i32_0 = arith.constant 0 : i32
    %c0_i32_1 = arith.constant 0 : i32
    return %c0_i32, %c0_i32_0 : i32, i32
  }
  func.func @transform_5(%arg0: i32) -> (i32, i32) {
    %c0_i32 = arith.constant 0 : i32
    %c0_i32_0 = arith.constant 0 : i32
    %c0_i32_1 = arith.constant 0 : i32
    return %c0_i32, %c0_i32_0 : i32, i32
  }
  func.func @transform_6(%arg0: i32) -> (i32, i32, i32, i32) {
    %c0_i32 = arith.constant 0 : i32
    %c0_i32_0 = arith.constant 0 : i32
    %c0_i32_1 = arith.constant 0 : i32
    %c0_i32_2 = arith.constant 0 : i32
    %c0_i32_3 = arith.constant 0 : i32
    return %c0_i32, %c0_i32_0, %c0_i32_1, %c0_i32_2 : i32, i32, i32, i32
  }
  func.func @transform_7(%arg0: i32) -> (i32, i32) {
    %c0_i32 = arith.constant 0 : i32
    %c0_i32_0 = arith.constant 0 : i32
    %c0_i32_1 = arith.constant 0 : i32
    return %c0_i32, %c0_i32_0 : i32, i32
  }
  func.func @transform_8(%arg0: i32) -> (i32, i32, i32, i32) {
    %c0_i32 = arith.constant 0 : i32
    %c0_i32_0 = arith.constant 0 : i32
    %c0_i32_1 = arith.constant 0 : i32
    %c0_i32_2 = arith.constant 0 : i32
    return %arg0, %c0_i32, %c0_i32_0, %c0_i32_1 : i32, i32, i32, i32
  }
}

</mosaic_0001>

<llo_original>
// kernel: tpu_custom_call.1
$region0: #{tpu_custom_call.1}
  #allocation0 [shape = 'u32[]', space=smem, size = 0x4, offset = 0x4, fixed_abs, tag = 'smem constant byte address 0x4 - core index']
  #allocation1 [shape = 'u32[144,128]{1,0:T(1,128)}', space=vmem, size = 0x12000, scoped, tag = 'internal scratch']
  #allocation2 [shape = 'bf16[18,18,128]{2,1,0:T(8,128)(2,1)}', space=vmem, size = 0x1b000, scoped, tag = 'scratch operand']
  #allocation3 [shape = 'bf16[18,18,128]{2,1,0:T(8,128)(2,1)}', space=vmem, size = 0x1b000, scoped, tag = 'scratch operand']
  %s0 = inlined_call_operand.hbm [shape: bf16[2,16,16,128], index: 0, kind: input, shape index: {}]
  %s1 = inlined_call_operand.hbm [shape: f32[1,128], index: 1, kind: input, shape index: {}]
  %s2 = inlined_call_operand.hbm [shape: f32[1,128], index: 2, kind: input, shape index: {}]
  %s3 = inlined_call_operand.hbm [shape: bf16[3,3,128,128], index: 3, kind: input, shape index: {}]
  %s4 = inlined_call_operand.hbm [shape: f32[1,128], index: 4, kind: input, shape index: {}]
  %s5 = inlined_call_operand.hbm [shape: f32[1,128], index: 5, kind: input, shape index: {}]
  %s6 = inlined_call_operand.hbm [shape: bf16[3,3,128,128], index: 6, kind: input, shape index: {}]
  %s7 = inlined_call_operand.hbm [shape: bf16[128,128], index: 7, kind: input, shape index: {}]
  %s8 = inlined_call_operand.hbm [shape: f32[2,16,16,128], index: 8, kind: output, shape index: {}]
  %s9 = sld [smem:[#allocation0]]
  $region101: #{tpu_custom_call.1} parent=0
    _
  %s11 = ssub.s32 1, %s9
  %s12 = scalar_select 0, %s11, %s9
  $region1: #{tpu_custom_call.1} parent=0
    #allocation4 [shape = 'u8[131072]{0}', space=vmem, size = 0x20000, scoped, tag = 'input window, operand 0']
    #allocation5 [shape = 's32[2]{0}', space=sflag, size = 0x8, scoped, tag = 'scoped memory for tpu_custom_call.1']
    #allocation6 [shape = 's32[2]{0}', space=sflag, size = 0x8, scoped, tag = 'scoped memory for tpu_custom_call.1']
    #allocation7 [shape = 'u8[512]{0}', space=vmem, size = 0x400, scoped, tag = 'input window, operand 1, single buffered']
    #allocation8 [shape = 's32[1]{0}', space=sflag, size = 0x4, scoped, tag = 'scoped memory for tpu_custom_call.1']
    #allocation9 [shape = 'u8[512]{0}', space=vmem, size = 0x400, scoped, tag = 'input window, operand 2, single buffered']
    #allocation10 [shape = 'u8[294912]{0}', space=vmem, size = 0x48000, scoped, tag = 'input window, operand 3, single buffered']
    #allocation11 [shape = 's32[1]{0}', space=sflag, size = 0x4, scoped, tag = 'scoped memory for tpu_custom_call.1']
    #allocation12 [shape = 'u8[512]{0}', space=vmem, size = 0x400, scoped, tag = 'input window, operand 4, single buffered']
    #allocation13 [shape = 'u8[512]{0}', space=vmem, size = 0x400, scoped, tag = 'input window, operand 5, single buffered']
    #allocation14 [shape = 's32[1]{0}', space=sflag, size = 0x4, scoped, tag = 'scoped memory for tpu_custom_call.1']
    #allocation15 [shape = 'u8[294912]{0}', space=vmem, size = 0x48000, scoped, tag = 'input window, operand 6, single buffered']
    #allocation16 [shape = 'u8[32768]{0}', space=vmem, size = 0x8000, scoped, tag = 'input window, operand 7, single buffered']
    #allocation17 [shape = 's32[1]{0}', space=sflag, size = 0x4, scoped, tag = 'scoped memory for tpu_custom_call.1']
    #allocation18 [shape = 'u8[262144]{0}', space=vmem, size = 0x40000, scoped, tag = 'output window, operand 0']
    %13 = vsyncpa [#allocation5], 0
    %s14 = scalar_lea.sflag [#allocation5], 1
    %15 = vsyncpa %s14, 0
    %16 = vsyncpa [#allocation8], 0
    %17 = vsyncpa [#allocation11], 0
    %18 = vsyncpa [#allocation14], 0
    %19 = vsyncpa [#allocation17], 0
    %20 = vsyncpa [#allocation6], 0
    %s21 = scalar_lea.sflag [#allocation6], 1
    %22 = vsyncpa %s21, 0
    loop: start=0, step=1, limit=4
    $region2: #{tpu_custom_call.1} parent=1 // loop_pre_header
      _
    $region3: #{tpu_custom_call.1} parent=1 // loop_header
      %s24 = sphi 0, %s28
      %p25 = scmp.ge.s32.totalorder %s24, 4
      %s34 = sphi 0, %s36
      %s37 = sphi 0, %s34
      %s38 = sphi 0, %s37
      %s54 = sphi 0, %s38
      %s58 = sphi 0, %s58
      %s60 = sphi 0, %s58
      %s61 = sphi 0, %s60
      %s75 = sphi 0, %s61
      %s79 = sphi 0, %s79
      %s81 = sphi 0, %s79
      %s82 = sphi 0, %s81
      %s96 = sphi 0, %s82
      %s100 = sphi 0, %s100
      %s102 = sphi 0, %s100
      %s103 = sphi 0, %s102
      %s117 = sphi 0, %s103
      %s121 = sphi 0, %s121
      %s123 = sphi 0, %s121
      %s124 = sphi 0, %s123
      %s138 = sphi 0, %s124
      %s142 = sphi 0, %s142
      %s144 = sphi 0, %s142
      %s145 = sphi 0, %s144
      %s159 = sphi 0, %s145
      %s163 = sphi 0, %s163
      %s165 = sphi 0, %s163
      %s166 = sphi 0, %s165
      %s180 = sphi 0, %s166
      %s184 = sphi 0, %s184
      %s186 = sphi 0, %s184
      %s187 = sphi 0, %s186
      %s201 = sphi 0, %s187
      %s207 = sphi 0, %s209
      %s210 = sphi 0, %s207
      %s211 = sphi 0, %s210
      %s227 = sphi 0, %s211
    $region4: #{tpu_custom_call.1} parent=1 // loop_header_branch
      %27 = sbr.rel (%p25) target = $region8
    $region5: #{tpu_custom_call.1} parent=1 // loop_body
      %s29 = ssub.s32 %s24, 1
      %s30 = ssub.s32 %s24, 2
      %s31 = sadd.s32 %s24, 1
      %s32 = ssub.s32 %s24, %s31
      %p33 = scmp.eq.s32.totalorder %s32, 0
      %s35 = sadd.s32 %s34, 1
      %s36 = scalar_select %p33, %s34, %s35
      %p39 = pneg %p33
      %p40 = scmp.eq.s32.totalorder %s24, 1
      %p41 = por %p39, %p40
      %p42 = scmp.ne.s32.totalorder %s34, %s37
      %p43 = scmp.eq.s32.totalorder %s24, 0
      %p44 = por %p42, %p43
      %p45 = scmp.ne.s32.totalorder %s34, %s37
      %p46 = scmp.eq.s32.totalorder %s29, 1
      %p47 = por %p45, %p46
      %p48 = scmp.ne.s32.totalorder %s37, %s38
      %p49 = scmp.eq.s32.totalorder %s29, 0
      %p50 = por %p48, %p49
      %p51 = scmp.ne.s32.totalorder %s37, %s38
      %p52 = scmp.eq.s32.totalorder %s30, 1
      %p53 = por %p51, %p52
      %p55 = scmp.ne.s32.totalorder %s38, %s54
      %p56 = scmp.eq.s32.totalorder %s30, 0
      %p57 = por %p55, %p56
      %s59 = sadd.s32 %s58, 1
      %p62 = scmp.eq.s32.totalorder %s24, 1
      %p63 = scmp.ne.s32.totalorder %s58, %s60
      %p64 = scmp.eq.s32.totalorder %s24, 0
      %p65 = por %p63, %p64
      %p66 = scmp.ne.s32.totalorder %s58, %s60
      %p67 = scmp.eq.s32.totalorder %s29, 1
      %p68 = por %p66, %p67
      %p69 = scmp.ne.s32.totalorder %s60, %s61
      %p70 = scmp.eq.s32.totalorder %s29, 0
      %p71 = por %p69, %p70
      %p72 = scmp.ne.s32.totalorder %s60, %s61
      %p73 = scmp.eq.s32.totalorder %s30, 1
      %p74 = por %p72, %p73
      %p76 = scmp.ne.s32.totalorder %s61, %s75
      %p77 = scmp.eq.s32.totalorder %s30, 0
      %p78 = por %p76, %p77
      %s80 = sadd.s32 %s79, 1
      %p83 = scmp.eq.s32.totalorder %s24, 1
      %p84 = scmp.ne.s32.totalorder %s79, %s81
      %p85 = scmp.eq.s32.totalorder %s24, 0
      %p86 = por %p84, %p85
      %p87 = scmp.ne.s32.totalorder %s79, %s81
      %p88 = scmp.eq.s32.totalorder %s29, 1
      %p89 = por %p87, %p88
      %p90 = scmp.ne.s32.totalorder %s81, %s82
      %p91 = scmp.eq.s32.totalorder %s29, 0
      %p92 = por %p90, %p91
      %p93 = scmp.ne.s32.totalorder %s81, %s82
      %p94 = scmp.eq.s32.totalorder %s30, 1
      %p95 = por %p93, %p94
      %p97 = scmp.ne.s32.totalorder %s82, %s96
      %p98 = scmp.eq.s32.totalorder %s30, 0
      %p99 = por %p97, %p98
      %s101 = sadd.s32 %s100, 1
      %p104 = scmp.eq.s32.totalorder %s24, 1
      %p105 = scmp.ne.s32.totalorder %s100, %s102
      %p106 = scmp.eq.s32.totalorder %s24, 0
      %p107 = por %p105, %p106
      %p108 = scmp.ne.s32.totalorder %s100, %s102
      %p109 = scmp.eq.s32.totalorder %s29, 1
      %p110 = por %p108, %p109
      %p111 = scmp.ne.s32.totalorder %s102, %s103
      %p112 = scmp.eq.s32.totalorder %s29, 0
      %p113 = por %p111, %p112
      %p114 = scmp.ne.s32.totalorder %s102, %s103
      %p115 = scmp.eq.s32.totalorder %s30, 1
      %p116 = por %p114, %p115
      %p118 = scmp.ne.s32.totalorder %s103, %s117
      %p119 = scmp.eq.s32.totalorder %s30, 0
      %p120 = por %p118, %p119
      %s122 = sadd.s32 %s121, 1
      %p125 = scmp.eq.s32.totalorder %s24, 1
      %p126 = scmp.ne.s32.totalorder %s121, %s123
      %p127 = scmp.eq.s32.totalorder %s24, 0
      %p128 = por %p126, %p127
      %p129 = scmp.ne.s32.totalorder %s121, %s123
      %p130 = scmp.eq.s32.totalorder %s29, 1
      %p131 = por %p129, %p130
      %p132 = scmp.ne.s32.totalorder %s123, %s124
      %p133 = scmp.eq.s32.totalorder %s29, 0
      %p134 = por %p132, %p133
      %p135 = scmp.ne.s32.totalorder %s123, %s124
      %p136 = scmp.eq.s32.totalorder %s30, 1
      %p137 = por %p135, %p136
      %p139 = scmp.ne.s32.totalorder %s124, %s138
      %p140 = scmp.eq.s32.totalorder %s30, 0
      %p141 = por %p139, %p140
      %s143 = sadd.s32 %s142, 1
      %p146 = scmp.eq.s32.totalorder %s24, 1
      %p147 = scmp.ne.s32.totalorder %s142, %s144
      %p148 = scmp.eq.s32.totalorder %s24, 0
      %p149 = por %p147, %p148
      %p150 = scmp.ne.s32.totalorder %s142, %s144
      %p151 = scmp.eq.s32.totalorder %s29, 1
      %p152 = por %p150, %p151
      %p153 = scmp.ne.s32.totalorder %s144, %s145
      %p154 = scmp.eq.s32.totalorder %s29, 0
      %p155 = por %p153, %p154
      %p156 = scmp.ne.s32.totalorder %s144, %s145
      %p157 = scmp.eq.s32.totalorder %s30, 1
      %p158 = por %p156, %p157
      %p160 = scmp.ne.s32.totalorder %s145, %s159
      %p161 = scmp.eq.s32.totalorder %s30, 0
      %p162 = por %p160, %p161
      %s164 = sadd.s32 %s163, 1
      %p167 = scmp.eq.s32.totalorder %s24, 1
      %p168 = scmp.ne.s32.totalorder %s163, %s165
      %p169 = scmp.eq.s32.totalorder %s24, 0
      %p170 = por %p168, %p169
      %p171 = scmp.ne.s32.totalorder %s163, %s165
      %p172 = scmp.eq.s32.totalorder %s29, 1
      %p173 = por %p171, %p172
      %p174 = scmp.ne.s32.totalorder %s165, %s166
      %p175 = scmp.eq.s32.totalorder %s29, 0
      %p176 = por %p174, %p175
      %p177 = scmp.ne.s32.totalorder %s165, %s166
      %p178 = scmp.eq.s32.totalorder %s30, 1
      %p179 = por %p177, %p178
      %p181 = scmp.ne.s32.totalorder %s166, %s180
      %p182 = scmp.eq.s32.totalorder %s30, 0
      %p183 = por %p181, %p182
      %s185 = sadd.s32 %s184, 1
      %p188 = scmp.eq.s32.totalorder %s24, 1
      %p189 = scmp.ne.s32.totalorder %s184, %s186
      %p190 = scmp.eq.s32.totalorder %s24, 0
      %p191 = por %p189, %p190
      %p192 = scmp.ne.s32.totalorder %s184, %s186
      %p193 = scmp.eq.s32.totalorder %s29, 1
      %p194 = por %p192, %p193
      %p195 = scmp.ne.s32.totalorder %s186, %s187
      %p196 = scmp.eq.s32.totalorder %s29, 0
      %p197 = por %p195, %p196
      %p198 = scmp.ne.s32.totalorder %s186, %s187
      %p199 = scmp.eq.s32.totalorder %s30, 1
      %p200 = por %p198, %p199
      %p202 = scmp.ne.s32.totalorder %s187, %s201
      %p203 = scmp.eq.s32.totalorder %s30, 0
      %p204 = por %p202, %p203
      %s205 = ssub.s32 %s24, %s31
      %p206 = scmp.eq.s32.totalorder %s205, 0
      %s208 = sadd.s32 %s207, 1
      %s209 = scalar_select %p206, %s207, %s208
      %p212 = pneg %p206
      %p213 = scmp.eq.s32.totalorder %s24, 1
      %p214 = por %p212, %p213
      %p215 = scmp.ne.s32.totalorder %s207, %s210
      %p216 = scmp.eq.s32.totalorder %s24, 0
      %p217 = por %p215, %p216
      %p218 = scmp.ne.s32.totalorder %s207, %s210
      %p219 = scmp.eq.s32.totalorder %s29, 1
      %p220 = por %p218, %p219
      %p221 = scmp.ne.s32.totalorder %s210, %s211
      %p222 = scmp.eq.s32.totalorder %s29, 0
      %p223 = por %p221, %p222
      %p224 = scmp.ne.s32.totalorder %s210, %s211
      %p225 = scmp.eq.s32.totalorder %s30, 1
      %p226 = por %p224, %p225
      %p228 = scmp.ne.s32.totalorder %s211, %s227
      %p229 = scmp.eq.s32.totalorder %s30, 0
      %p230 = por %p228, %p229
      %p231 = scmp.le.s32.totalorder 1, %s24
      %p232 = scmp.lt.s32.totalorder %s24, 3
      %p233 = pnand %p231, %p232
      %p234 = pneg %p233
      // Predicated region
      $region9: #{tpu_custom_call.1} parent=5 // pred_check
        _
      $region10: #{tpu_custom_call.1} parent=5 // pred_check_branch
        %236 = sbr.rel (%p233) target = $region12
      $region11: #{tpu_custom_call.1} parent=5 // pred_region
        %s237 = ssub.s32 %s24, 1
        // Predicated region
        $region13: #{tpu_custom_call.1} parent=11 // pred_check
          %p238 = pneg %p71
        $region14: #{tpu_custom_call.1} parent=11 // pred_check_branch
          %240 = sbr.rel (%p238) target = $region16
        $region15: #{tpu_custom_call.1} parent=11 // pred_region
          %s242 = ssub.s32 16, 16
          %243 = vsyncadd [#allocation8], %s242
          %s245 = sshll.u32 [#allocation7], 4
          %s246 = int_to_ptr.vmem [resolvable:$true] %s245
          %248 = dma.hbm_to_vmem [thread:$0]  %s1, 16, %s246, [#allocation8]
        $region16: #{tpu_custom_call.1} parent=11 // pred_fallthru
          _
        // Predicated region
        $region17: #{tpu_custom_call.1} parent=11 // pred_check
          %p249 = pneg %p92
        $region18: #{tpu_custom_call.1} parent=11 // pred_check_branch
          %251 = sbr.rel (%p249) target = $region20
        $region19: #{tpu_custom_call.1} parent=11 // pred_region
          %s253 = ssub.s32 16, 16
          %254 = vsyncadd [#allocation8], %s253
          %s256 = sshll.u32 [#allocation9], 4
          %s257 = int_to_ptr.vmem [resolvable:$true] %s256
          %259 = dma.hbm_to_vmem [thread:$0]  %s2, 16, %s257, [#allocation8]
        $region20: #{tpu_custom_call.1} parent=11 // pred_fallthru
          _
        // Predicated region
        $region21: #{tpu_custom_call.1} parent=11 // pred_check
          %p260 = pneg %p113
        $region22: #{tpu_custom_call.1} parent=11 // pred_check_branch
          %262 = sbr.rel (%p260) target = $region24
        $region23: #{tpu_custom_call.1} parent=11 // pred_region
          %s264 = ssub.s32 9216, 9216
          %265 = vsyncadd [#allocation11], %s264
          %s266 = sshll.u32 [#allocation10], 4
          %s267 = int_to_ptr.vmem [resolvable:$true] %s266
          %272 = dma.hbm_to_vmem [thread:$0]  %s3, 9216, %s267, [#allocation11], 64, 64, 4
        $region24: #{tpu_custom_call.1} parent=11 // pred_fallthru
          _
        // Predicated region
        $region25: #{tpu_custom_call.1} parent=11 // pred_check
          %p273 = pneg %p134
        $region26: #{tpu_custom_call.1} parent=11 // pred_check_branch
          %275 = sbr.rel (%p273) target = $region28
        $region27: #{tpu_custom_call.1} parent=11 // pred_region
          %s277 = ssub.s32 16, 16
          %278 = vsyncadd [#allocation11], %s277
          %s280 = sshll.u32 [#allocation12], 4
          %s281 = int_to_ptr.vmem [resolvable:$true] %s280
          %283 = dma.hbm_to_vmem [thread:$0]  %s4, 16, %s281, [#allocation11]
        $region28: #{tpu_custom_call.1} parent=11 // pred_fallthru
          _
        // Predicated region
        $region29: #{tpu_custom_call.1} parent=11 // pred_check
          %p284 = pneg %p155
        $region30: #{tpu_custom_call.1} parent=11 // pred_check_branch
          %286 = sbr.rel (%p284) target = $region32
        $region31: #{tpu_custom_call.1} parent=11 // pred_region
          %s288 = ssub.s32 16, 16
          %289 = vsyncadd [#allocation14], %s288
          %s291 = sshll.u32 [#allocation13], 4
          %s292 = int_to_ptr.vmem [resolvable:$true] %s291
          %294 = dma.hbm_to_vmem [thread:$0]  %s5, 16, %s292, [#allocation14]
        $region32: #{tpu_custom_call.1} parent=11 // pred_fallthru
          _
        // Predicated region
        $region33: #{tpu_custom_call.1} parent=11 // pred_check
          %p295 = pneg %p176
        $region34: #{tpu_custom_call.1} parent=11 // pred_check_branch
          %297 = sbr.rel (%p295) target = $region36
        $region35: #{tpu_custom_call.1} parent=11 // pred_region
          %s299 = ssub.s32 9216, 9216
          %300 = vsyncadd [#allocation14], %s299
          %s301 = sshll.u32 [#allocation15], 4
          %s302 = int_to_ptr.vmem [resolvable:$true] %s301
          %307 = dma.hbm_to_vmem [thread:$0]  %s6, 9216, %s302, [#allocation14], 64, 64, 4
        $region36: #{tpu_custom_call.1} parent=11 // pred_fallthru
          _
        // Predicated region
        $region37: #{tpu_custom_call.1} parent=11 // pred_check
          %p308 = pneg %p197
        $region38: #{tpu_custom_call.1} parent=11 // pred_check_branch
          %310 = sbr.rel (%p308) target = $region40
        $region39: #{tpu_custom_call.1} parent=11 // pred_region
          %s312 = ssub.s32 1024, 1024
          %313 = vsyncadd [#allocation17], %s312
          %s314 = sshll.u32 [#allocation16], 4
          %s315 = int_to_ptr.vmem [resolvable:$true] %s314
          %320 = dma.hbm_to_vmem [thread:$0]  %s7, 1024, %s315, [#allocation17], 64, 64, 4
        $region40: #{tpu_custom_call.1} parent=11 // pred_fallthru
          _
      $region12: #{tpu_custom_call.1} parent=5 // pred_fallthru
        _
      %p321 = scmp.lt.s32.totalorder %s24, 2
      // Predicated region
      $region41: #{tpu_custom_call.1} parent=5 // pred_check
        %p322 = pneg %p321
      $region42: #{tpu_custom_call.1} parent=5 // pred_check_branch
        %324 = sbr.rel (%p322) target = $region44
      $region43: #{tpu_custom_call.1} parent=5 // pred_region
        // Predicated region
        $region45: #{tpu_custom_call.1} parent=43 // pred_check
          %p325 = pneg %p44
        $region46: #{tpu_custom_call.1} parent=43 // pred_check_branch
          %327 = sbr.rel (%p325) target = $region48
        $region47: #{tpu_custom_call.1} parent=43 // pred_region
          %s328 = sand.u32 %s34, 1
          %s329 = scalar_lea.sflag [#allocation5], %s328
          %s330 = sand.u32 %s34, 1
          %s331 = smul.addr %s330, 128
          %s332 = scalar_lea.vmem [#allocation4], %s331
          %s334 = ssub.s32 2048, 2048
          %335 = vsyncadd %s329, %s334
          %s336 = smul.addr %s24, 32
          %s337 = smul.addr %s336, 64
          %s338 = scalar_lea.hbm %s0, %s337
          %s339 = sshll.u32 %s332, 4
          %s340 = int_to_ptr.vmem [resolvable:$true] %s339
          %345 = dma.hbm_to_vmem [thread:$0]  %s338, 2048, %s340, %s329, 64, 64, 4
        $region48: #{tpu_custom_call.1} parent=43 // pred_fallthru
          _
      $region44: #{tpu_custom_call.1} parent=5 // pred_fallthru
        _
      %p346 = scmp.le.s32.totalorder 1, %s24
      %p347 = scmp.lt.s32.totalorder %s24, 3
      %p348 = pnand %p346, %p347
      %p349 = pneg %p348
      // Predicated region
      $region49: #{tpu_custom_call.1} parent=5 // pred_check
        _
      $region50: #{tpu_custom_call.1} parent=5 // pred_check_branch
        %351 = sbr.rel (%p348) target = $region52
      $region51: #{tpu_custom_call.1} parent=5 // pred_region
        %s352 = ssub.s32 %s24, 1
        %s353 = sand.u32 %s37, 1
        %s354 = scalar_lea.sflag [#allocation5], %s353
        %s355 = sand.u32 %s37, 1
        %s356 = smul.addr %s355, 128
        %s357 = scalar_lea.vmem [#allocation4], %s356
        // Predicated region
        $region53: #{tpu_custom_call.1} parent=51 // pred_check
          %p358 = pneg %p50
        $region54: #{tpu_custom_call.1} parent=51 // pred_check_branch
          %360 = sbr.rel (%p358) target = $region56
        $region55: #{tpu_custom_call.1} parent=51 // pred_region
          %361 = dma.done %s354, 2048
        $region56: #{tpu_custom_call.1} parent=51 // pred_fallthru
          _
        // Predicated region
        $region57: #{tpu_custom_call.1} parent=51 // pred_check
          %p362 = pneg %p71
        $region58: #{tpu_custom_call.1} parent=51 // pred_check_branch
          %364 = sbr.rel (%p362) target = $region60
        $region59: #{tpu_custom_call.1} parent=51 // pred_region
          %365 = dma.done [#allocation8], 16
        $region60: #{tpu_custom_call.1} parent=51 // pred_fallthru
          _
        // Predicated region
        $region61: #{tpu_custom_call.1} parent=51 // pred_check
          %p366 = pneg %p92
        $region62: #{tpu_custom_call.1} parent=51 // pred_check_branch
          %368 = sbr.rel (%p366) target = $region64
        $region63: #{tpu_custom_call.1} parent=51 // pred_region
          %369 = dma.done [#allocation8], 16
        $region64: #{tpu_custom_call.1} parent=51 // pred_fallthru
          _
        // Predicated region
        $region65: #{tpu_custom_call.1} parent=51 // pred_check
          %p370 = pneg %p113
        $region66: #{tpu_custom_call.1} parent=51 // pred_check_branch
          %372 = sbr.rel (%p370) target = $region68
        $region67: #{tpu_custom_call.1} parent=51 // pred_region
          %373 = dma.done [#allocation11], 9216
        $region68: #{tpu_custom_call.1} parent=51 // pred_fallthru
          _
        // Predicated region
        $region69: #{tpu_custom_call.1} parent=51 // pred_check
          %p374 = pneg %p134
        $region70: #{tpu_custom_call.1} parent=51 // pred_check_branch
          %376 = sbr.rel (%p374) target = $region72
        $region71: #{tpu_custom_call.1} parent=51 // pred_region
          %377 = dma.done [#allocation11], 16
        $region72: #{tpu_custom_call.1} parent=51 // pred_fallthru
          _
        // Predicated region
        $region73: #{tpu_custom_call.1} parent=51 // pred_check
          %p378 = pneg %p155
        $region74: #{tpu_custom_call.1} parent=51 // pred_check_branch
          %380 = sbr.rel (%p378) target = $region76
        $region75: #{tpu_custom_call.1} parent=51 // pred_region
          %381 = dma.done [#allocation14], 16
        $region76: #{tpu_custom_call.1} parent=51 // pred_fallthru
          _
        // Predicated region
        $region77: #{tpu_custom_call.1} parent=51 // pred_check
          %p382 = pneg %p176
        $region78: #{tpu_custom_call.1} parent=51 // pred_check_branch
          %384 = sbr.rel (%p382) target = $region80
        $region79: #{tpu_custom_call.1} parent=51 // pred_region
          %385 = dma.done [#allocation14], 9216
        $region80: #{tpu_custom_call.1} parent=51 // pred_fallthru
          _
        // Predicated region
        $region81: #{tpu_custom_call.1} parent=51 // pred_check
          %p386 = pneg %p197
        $region82: #{tpu_custom_call.1} parent=51 // pred_check_branch
          %388 = sbr.rel (%p386) target = $region84
        $region83: #{tpu_custom_call.1} parent=51 // pred_region
          %389 = dma.done [#allocation17], 1024
        $region84: #{tpu_custom_call.1} parent=51 // pred_fallthru
          _
        %s390 = sand.u32 %s37, 1
        %s391 = scalar_lea.sflag [#allocation5], %s390
        %s392 = sand.u32 %s37, 1
        %s393 = smul.addr %s392, 128
        %s394 = scalar_lea.vmem [#allocation4], %s393
        %p395 = pneg %p50
        %p396 = pneg %p47
        %p397 = pneg %p71
        %p398 = pneg %p68
        %p399 = pneg %p92
        %p400 = pneg %p89
        %p401 = pneg %p113
        %p402 = pneg %p110
        %p403 = pneg %p134
        %p404 = pneg %p131
        %p405 = pneg %p155
        %p406 = pneg %p152
        %p407 = pneg %p176
        %p408 = pneg %p173
        %p409 = pneg %p197
        %p410 = pneg %p194
        %p411 = pneg %p223
        %p412 = pneg %p220
        %s413 = sand.u32 %s210, 1
        %s414 = scalar_lea.sflag [#allocation6], %s413
        %s415 = sand.u32 %s210, 1
        %s416 = smul.addr %s415, 256
        %s417 = scalar_lea.vmem [#allocation18], %s416
        %p419 = scmp.eq.s32.totalorder %s29, 0
        // Predicated region
        $region85: #{tpu_custom_call.1} parent=51 // pred_check
          %p420 = pneg %p419
        $region86: #{tpu_custom_call.1} parent=51 // pred_check_branch
          %422 = sbr.rel (%p420) target = $region88
        $region87: #{tpu_custom_call.1} parent=51 // pred_region
          %423 = vst [vmem:[#allocation2] sm:$0xf] 0
          %424 = vst [vmem:[#allocation2 + $0x4] sm:$0xf] 0
          %425 = vst [vmem:[#allocation2 + $0x8] sm:$0x1] 0
          %s426 = scalar_lea.vmem [#allocation2], 204
          %427 = vst [vmem:[%s426] sm:$0xf] 0
          %428 = vst [vmem:[%s426 + $0x4] sm:$0xf] 0
          %429 = vst [vmem:[%s426 + $0x8] sm:$0x1] 0
          %vm430 = vcmask 1040384
          %vm431 = vsmask.f32 256
          %vm432 = vmand %vm430, %vm431
          %v433 = vld [vmem:[#allocation2] sm:$0x1]
          %v434 = vsel %vm432, 0, %v433
          %435 = vst [vmem:[#allocation2] sm:$0x1] %v434
          %v436 = vld [vmem:[#allocation2 + $0xc] sm:$0x1]
          %v437 = vsel %vm432, 0, %v436
          %438 = vst [vmem:[#allocation2 + $0xc] sm:$0x1] %v437
          %v439 = vld [vmem:[#allocation2 + $0x18] sm:$0x1]
          %v440 = vsel %vm432, 0, %v439
          %441 = vst [vmem:[#allocation2 + $0x18] sm:$0x1] %v440
          %v442 = vld [vmem:[#allocation2 + $0x24] sm:$0x1]
          %v443 = vsel %vm432, 0, %v442
          %444 = vst [vmem:[#allocation2 + $0x24] sm:$0x1] %v443
          %v445 = vld [vmem:[#allocation2 + $0x30] sm:$0x1]
          %v446 = vsel %vm432, 0, %v445
          %447 = vst [vmem:[#allocation2 + $0x30] sm:$0x1] %v446
          %v448 = vld [vmem:[#allocation2 + $0x3c] sm:$0x1]
          %v449 = vsel %vm432, 0, %v448
          %450 = vst [vmem:[#allocation2 + $0x3c] sm:$0x1] %v449
          %v451 = vld [vmem:[#allocation2 + $0x48] sm:$0x1]
          %v452 = vsel %vm432, 0, %v451
          %453 = vst [vmem:[#allocation2 + $0x48] sm:$0x1] %v452
          %v454 = vld [vmem:[#allocation2 + $0x54] sm:$0x1]
          %v455 = vsel %vm432, 0, %v454
          %456 = vst [vmem:[#allocation2 + $0x54] sm:$0x1] %v455
          %v457 = vld [vmem:[#allocation2 + $0x60] sm:$0x1]
          %v458 = vsel %vm432, 0, %v457
          %459 = vst [vmem:[#allocation2 + $0x60] sm:$0x1] %v458
          %v460 = vld [vmem:[#allocation2 + $0x6c] sm:$0x1]
          %v461 = vsel %vm432, 0, %v460
          %462 = vst [vmem:[#allocation2 + $0x6c] sm:$0x1] %v461
          %v463 = vld [vmem:[#allocation2 + $0x78] sm:$0x1]
          %v464 = vsel %vm432, 0, %v463
          %465 = vst [vmem:[#allocation2 + $0x78] sm:$0x1] %v464
          %v466 = vld [vmem:[#allocation2 + $0x84] sm:$0x1]
          %v467 = vsel %vm432, 0, %v466
          %468 = vst [vmem:[#allocation2 + $0x84] sm:$0x1] %v467
          %v469 = vld [vmem:[#allocation2 + $0x90] sm:$0x1]
          %v470 = vsel %vm432, 0, %v469
          %471 = vst [vmem:[#allocation2 + $0x90] sm:$0x1] %v470
          %v472 = vld [vmem:[#allocation2 + $0x9c] sm:$0x1]
          %v473 = vsel %vm432, 0, %v472
          %474 = vst [vmem:[#allocation2 + $0x9c] sm:$0x1] %v473
          %v475 = vld [vmem:[#allocation2 + $0xa8] sm:$0x1]
          %v476 = vsel %vm432, 0, %v475
          %477 = vst [vmem:[#allocation2 + $0xa8] sm:$0x1] %v476
          %v478 = vld [vmem:[#allocation2 + $0xb4] sm:$0x1]
          %v479 = vsel %vm432, 0, %v478
          %480 = vst [vmem:[#allocation2 + $0xb4] sm:$0x1] %v479
          %v481 = vld [vmem:[#allocation2 + $0xc0] sm:$0x1]
          %v482 = vsel %vm432, 0, %v481
          %483 = vst [vmem:[#allocation2 + $0xc0] sm:$0x1] %v482
          %v484 = vld [vmem:[#allocation2 + $0xcc] sm:$0x1]
          %v485 = vsel %vm432, 0, %v484
          %486 = vst [vmem:[#allocation2 + $0xcc] sm:$0x1] %v485
          %vm487 = vsmask.f32 7938
          %vm488 = vmand %vm430, %vm487
          %v489 = vld [vmem:[#allocation2 + $0x8] sm:$0x1]
          %v490 = vsel %vm488, 0, %v489
          %491 = vst [vmem:[#allocation2 + $0x8] sm:$0x1] %v490
          %v492 = vld [vmem:[#allocation2 + $0x14] sm:$0x1]
          %v493 = vsel %vm488, 0, %v492
          %494 = vst [vmem:[#allocation2 + $0x14] sm:$0x1] %v493
          %v495 = vld [vmem:[#allocation2 + $0x20] sm:$0x1]
          %v496 = vsel %vm488, 0, %v495
          %497 = vst [vmem:[#allocation2 + $0x20] sm:$0x1] %v496
          %v498 = vld [vmem:[#allocation2 + $0x2c] sm:$0x1]
          %v499 = vsel %vm488, 0, %v498
          %500 = vst [vmem:[#allocation2 + $0x2c] sm:$0x1] %v499
          %v501 = vld [vmem:[#allocation2 + $0x38] sm:$0x1]
          %v502 = vsel %vm488, 0, %v501
          %503 = vst [vmem:[#allocation2 + $0x38] sm:$0x1] %v502
          %v504 = vld [vmem:[#allocation2 + $0x44] sm:$0x1]
          %v505 = vsel %vm488, 0, %v504
          %506 = vst [vmem:[#allocation2 + $0x44] sm:$0x1] %v505
          %v507 = vld [vmem:[#allocation2 + $0x50] sm:$0x1]
          %v508 = vsel %vm488, 0, %v507
          %509 = vst [vmem:[#allocation2 + $0x50] sm:$0x1] %v508
          %v510 = vld [vmem:[#allocation2 + $0x5c] sm:$0x1]
          %v511 = vsel %vm488, 0, %v510
          %512 = vst [vmem:[#allocation2 + $0x5c] sm:$0x1] %v511
          %v513 = vld [vmem:[#allocation2 + $0x68] sm:$0x1]
          %v514 = vsel %vm488, 0, %v513
          %515 = vst [vmem:[#allocation2 + $0x68] sm:$0x1] %v514
          %v516 = vld [vmem:[#allocation2 + $0x74] sm:$0x1]
          %v517 = vsel %vm488, 0, %v516
          %518 = vst [vmem:[#allocation2 + $0x74] sm:$0x1] %v517
          %v519 = vld [vmem:[#allocation2 + $0x80] sm:$0x1]
          %v520 = vsel %vm488, 0, %v519
          %521 = vst [vmem:[#allocation2 + $0x80] sm:$0x1] %v520
          %v522 = vld [vmem:[#allocation2 + $0x8c] sm:$0x1]
          %v523 = vsel %vm488, 0, %v522
          %524 = vst [vmem:[#allocation2 + $0x8c] sm:$0x1] %v523
          %v525 = vld [vmem:[#allocation2 + $0x98] sm:$0x1]
          %v526 = vsel %vm488, 0, %v525
          %527 = vst [vmem:[#allocation2 + $0x98] sm:$0x1] %v526
          %v528 = vld [vmem:[#allocation2 + $0xa4] sm:$0x1]
          %v529 = vsel %vm488, 0, %v528
          %530 = vst [vmem:[#allocation2 + $0xa4] sm:$0x1] %v529
          %v531 = vld [vmem:[#allocation2 + $0xb0] sm:$0x1]
          %v532 = vsel %vm488, 0, %v531
          %533 = vst [vmem:[#allocation2 + $0xb0] sm:$0x1] %v532
          %v534 = vld [vmem:[#allocation2 + $0xbc] sm:$0x1]
          %v535 = vsel %vm488, 0, %v534
          %536 = vst [vmem:[#allocation2 + $0xbc] sm:$0x1] %v535
          %v537 = vld [vmem:[#allocation2 + $0xc8] sm:$0x1]
          %v538 = vsel %vm488, 0, %v537
          %539 = vst [vmem:[#allocation2 + $0xc8] sm:$0x1] %v538
          %v540 = vld [vmem:[#allocation2 + $0xd4] sm:$0x1]
          %v541 = vsel %vm488, 0, %v540
          %542 = vst [vmem:[#allocation2 + $0xd4] sm:$0x1] %v541
          %543 = vst [vmem:[#allocation3] sm:$0xf] 0
          %544 = vst [vmem:[#allocation3 + $0x4] sm:$0xf] 0
          %545 = vst [vmem:[#allocation3 + $0x8] sm:$0x1] 0
          %s546 = scalar_lea.vmem [#allocation3], 204
          %547 = vst [vmem:[%s546] sm:$0xf] 0
          %548 = vst [vmem:[%s546 + $0x4] sm:$0xf] 0
          %549 = vst [vmem:[%s546 + $0x8] sm:$0x1] 0
          %v550 = vld [vmem:[#allocation3] sm:$0x1]
          %v551 = vsel %vm432, 0, %v550
          %552 = vst [vmem:[#allocation3] sm:$0x1] %v551
          %v553 = vld [vmem:[#allocation3 + $0xc] sm:$0x1]
          %v554 = vsel %vm432, 0, %v553
          %555 = vst [vmem:[#allocation3 + $0xc] sm:$0x1] %v554
          %v556 = vld [vmem:[#allocation3 + $0x18] sm:$0x1]
          %v557 = vsel %vm432, 0, %v556
          %558 = vst [vmem:[#allocation3 + $0x18] sm:$0x1] %v557
          %v559 = vld [vmem:[#allocation3 + $0x24] sm:$0x1]
          %v560 = vsel %vm432, 0, %v559
          %561 = vst [vmem:[#allocation3 + $0x24] sm:$0x1] %v560
          %v562 = vld [vmem:[#allocation3 + $0x30] sm:$0x1]
          %v563 = vsel %vm432, 0, %v562
          %564 = vst [vmem:[#allocation3 + $0x30] sm:$0x1] %v563
          %v565 = vld [vmem:[#allocation3 + $0x3c] sm:$0x1]
          %v566 = vsel %vm432, 0, %v565
          %567 = vst [vmem:[#allocation3 + $0x3c] sm:$0x1] %v566
          %v568 = vld [vmem:[#allocation3 + $0x48] sm:$0x1]
          %v569 = vsel %vm432, 0, %v568
          %570 = vst [vmem:[#allocation3 + $0x48] sm:$0x1] %v569
          %v571 = vld [vmem:[#allocation3 + $0x54] sm:$0x1]
          %v572 = vsel %vm432, 0, %v571
          %573 = vst [vmem:[#allocation3 + $0x54] sm:$0x1] %v572
          %v574 = vld [vmem:[#allocation3 + $0x60] sm:$0x1]
          %v575 = vsel %vm432, 0, %v574
          %576 = vst [vmem:[#allocation3 + $0x60] sm:$0x1] %v575
          %v577 = vld [vmem:[#allocation3 + $0x6c] sm:$0x1]
          %v578 = vsel %vm432, 0, %v577
          %579 = vst [vmem:[#allocation3 + $0x6c] sm:$0x1] %v578
          %v580 = vld [vmem:[#allocation3 + $0x78] sm:$0x1]
          %v581 = vsel %vm432, 0, %v580
          %582 = vst [vmem:[#allocation3 + $0x78] sm:$0x1] %v581
          %v583 = vld [vmem:[#allocation3 + $0x84] sm:$0x1]
          %v584 = vsel %vm432, 0, %v583
          %585 = vst [vmem:[#allocation3 + $0x84] sm:$0x1] %v584
          %v586 = vld [vmem:[#allocation3 + $0x90] sm:$0x1]
          %v587 = vsel %vm432, 0, %v586
          %588 = vst [vmem:[#allocation3 + $0x90] sm:$0x1] %v587
          %v589 = vld [vmem:[#allocation3 + $0x9c] sm:$0x1]
          %v590 = vsel %vm432, 0, %v589
          %591 = vst [vmem:[#allocation3 + $0x9c] sm:$0x1] %v590
          %v592 = vld [vmem:[#allocation3 + $0xa8] sm:$0x1]
          %v593 = vsel %vm432, 0, %v592
          %594 = vst [vmem:[#allocation3 + $0xa8] sm:$0x1] %v593
          %v595 = vld [vmem:[#allocation3 + $0xb4] sm:$0x1]
          %v596 = vsel %vm432, 0, %v595
          %597 = vst [vmem:[#allocation3 + $0xb4] sm:$0x1] %v596
          %v598 = vld [vmem:[#allocation3 + $0xc0] sm:$0x1]
          %v599 = vsel %vm432, 0, %v598
          %600 = vst [vmem:[#allocation3 + $0xc0] sm:$0x1] %v599
          %v601 = vld [vmem:[#allocation3 + $0xcc] sm:$0x1]
          %v602 = vsel %vm432, 0, %v601
          %603 = vst [vmem:[#allocation3 + $0xcc] sm:$0x1] %v602
          %v604 = vld [vmem:[#allocation3 + $0x8] sm:$0x1]
          %v605 = vsel %vm488, 0, %v604
          %606 = vst [vmem:[#allocation3 + $0x8] sm:$0x1] %v605
          %v607 = vld [vmem:[#allocation3 + $0x14] sm:$0x1]
          %v608 = vsel %vm488, 0, %v607
          %609 = vst [vmem:[#allocation3 + $0x14] sm:$0x1] %v608
          %v610 = vld [vmem:[#allocation3 + $0x20] sm:$0x1]
          %v611 = vsel %vm488, 0, %v610
          %612 = vst [vmem:[#allocation3 + $0x20] sm:$0x1] %v611
          %v613 = vld [vmem:[#allocation3 + $0x2c] sm:$0x1]
          %v614 = vsel %vm488, 0, %v613
          %615 = vst [vmem:[#allocation3 + $0x2c] sm:$0x1] %v614
          %v616 = vld [vmem:[#allocation3 + $0x38] sm:$0x1]
          %v617 = vsel %vm488, 0, %v616
          %618 = vst [vmem:[#allocation3 + $0x38] sm:$0x1] %v617
          %v619 = vld [vmem:[#allocation3 + $0x44] sm:$0x1]
          %v620 = vsel %vm488, 0, %v619
          %621 = vst [vmem:[#allocation3 + $0x44] sm:$0x1] %v620
          %v622 = vld [vmem:[#allocation3 + $0x50] sm:$0x1]
          %v623 = vsel %vm488, 0, %v622
          %624 = vst [vmem:[#allocation3 + $0x50] sm:$0x1] %v623
          %v625 = vld [vmem:[#allocation3 + $0x5c] sm:$0x1]
          %v626 = vsel %vm488, 0, %v625
          %627 = vst [vmem:[#allocation3 + $0x5c] sm:$0x1] %v626
          %v628 = vld [vmem:[#allocation3 + $0x68] sm:$0x1]
          %v629 = vsel %vm488, 0, %v628
          %630 = vst [vmem:[#allocation3 + $0x68] sm:$0x1] %v629
          %v631 = vld [vmem:[#allocation3 + $0x74] sm:$0x1]
          %v632 = vsel %vm488, 0, %v631
          %633 = vst [vmem:[#allocation3 + $0x74] sm:$0x1] %v632
          %v634 = vld [vmem:[#allocation3 + $0x80] sm:$0x1]
          %v635 = vsel %vm488, 0, %v634
          %636 = vst [vmem:[#allocation3 + $0x80] sm:$0x1] %v635
          %v637 = vld [vmem:[#allocation3 + $0x8c] sm:$0x1]
          %v638 = vsel %vm488, 0, %v637
          %639 = vst [vmem:[#allocation3 + $0x8c] sm:$0x1] %v638
          %v640 = vld [vmem:[#allocation3 + $0x98] sm:$0x1]
          %v641 = vsel %vm488, 0, %v640
          %642 = vst [vmem:[#allocation3 + $0x98] sm:$0x1] %v641
          %v643 = vld [vmem:[#allocation3 + $0xa4] sm:$0x1]
          %v644 = vsel %vm488, 0, %v643
          %645 = vst [vmem:[#allocation3 + $0xa4] sm:$0x1] %v644
          %v646 = vld [vmem:[#allocation3 + $0xb0] sm:$0x1]
          %v647 = vsel %vm488, 0, %v646
          %648 = vst [vmem:[#allocation3 + $0xb0] sm:$0x1] %v647
          %v649 = vld [vmem:[#allocation3 + $0xbc] sm:$0x1]
          %v650 = vsel %vm488, 0, %v649
          %651 = vst [vmem:[#allocation3 + $0xbc] sm:$0x1] %v650
          %v652 = vld [vmem:[#allocation3 + $0xc8] sm:$0x1]
          %v653 = vsel %vm488, 0, %v652
          %654 = vst [vmem:[#allocation3 + $0xc8] sm:$0x1] %v653
          %v655 = vld [vmem:[#allocation3 + $0xd4] sm:$0x1]
          %v656 = vsel %vm488, 0, %v655
          %657 = vst [vmem:[#allocation3 + $0xd4] sm:$0x1] %v656
        $region88: #{tpu_custom_call.1} parent=51 // pred_fallthru
          _
        %v658 = vld [vmem:[%s357] sm:$0xf]
        %v659 = vld [vmem:[%s357 + $0x4] sm:$0xf]
        %v660 = vld [vmem:[%s357 + $0x8] sm:$0xf]
        %v661 = vld [vmem:[%s357 + $0xc] sm:$0xf]
        %v662 = vld [vmem:[%s357 + $0x10] sm:$0xf]
        %v663 = vld [vmem:[%s357 + $0x14] sm:$0xf]
        %v664 = vld [vmem:[%s357 + $0x18] sm:$0xf]
        %v665 = vld [vmem:[%s357 + $0x1c] sm:$0xf]
        %v666 = vld [vmem:[%s357 + $0x20] sm:$0xf]
        %v667 = vld [vmem:[%s357 + $0x24] sm:$0xf]
        %v668 = vld [vmem:[%s357 + $0x28] sm:$0xf]
        %v669 = vld [vmem:[%s357 + $0x2c] sm:$0xf]
        %v670 = vld [vmem:[%s357 + $0x30] sm:$0xf]
        %v671 = vld [vmem:[%s357 + $0x34] sm:$0xf]
        %v672 = vld [vmem:[%s357 + $0x38] sm:$0xf]
        %v673 = vld [vmem:[%s357 + $0x3c] sm:$0xf]
        %v674 = vld [vmem:[%s357 + $0x40] sm:$0xf]
        %v675 = vld [vmem:[%s357 + $0x44] sm:$0xf]
        %v676 = vld [vmem:[%s357 + $0x48] sm:$0xf]
        %v677 = vld [vmem:[%s357 + $0x4c] sm:$0xf]
        %v678 = vld [vmem:[%s357 + $0x50] sm:$0xf]
        %v679 = vld [vmem:[%s357 + $0x54] sm:$0xf]
        %v680 = vld [vmem:[%s357 + $0x58] sm:$0xf]
        %v681 = vld [vmem:[%s357 + $0x5c] sm:$0xf]
        %v682 = vld [vmem:[%s357 + $0x60] sm:$0xf]
        %v683 = vld [vmem:[%s357 + $0x64] sm:$0xf]
        %v684 = vld [vmem:[%s357 + $0x68] sm:$0xf]
        %v685 = vld [vmem:[%s357 + $0x6c] sm:$0xf]
        %v686 = vld [vmem:[%s357 + $0x70] sm:$0xf]
        %v687 = vld [vmem:[%s357 + $0x74] sm:$0xf]
        %v688 = vld [vmem:[%s357 + $0x78] sm:$0xf]
        %v689 = vld [vmem:[%s357 + $0x7c] sm:$0xf]
        %v690 = vunpack.c.l.bf16 %v658
        %v691 = vunpack.c.l.bf16 %v659
        %v692 = vunpack.c.l.bf16 %v660
        %v693 = vunpack.c.l.bf16 %v661
        %v694 = vunpack.c.l.bf16 %v662
        %v695 = vunpack.c.l.bf16 %v663
        %v696 = vunpack.c.l.bf16 %v664
        %v697 = vunpack.c.l.bf16 %v665
        %v698 = vunpack.c.l.bf16 %v666
        %v699 = vunpack.c.l.bf16 %v667
        %v700 = vunpack.c.l.bf16 %v668
        %v701 = vunpack.c.l.bf16 %v669
        %v702 = vunpack.c.l.bf16 %v670
        %v703 = vunpack.c.l.bf16 %v671
        %v704 = vunpack.c.l.bf16 %v672
        %v705 = vunpack.c.l.bf16 %v673
        %v706 = vunpack.c.l.bf16 %v674
        %v707 = vunpack.c.l.bf16 %v675
        %v708 = vunpack.c.l.bf16 %v676
        %v709 = vunpack.c.l.bf16 %v677
        %v710 = vunpack.c.l.bf16 %v678
        %v711 = vunpack.c.l.bf16 %v679
        %v712 = vunpack.c.l.bf16 %v680
        %v713 = vunpack.c.l.bf16 %v681
        %v714 = vunpack.c.l.bf16 %v682
        %v715 = vunpack.c.l.bf16 %v683
        %v716 = vunpack.c.l.bf16 %v684
        %v717 = vunpack.c.l.bf16 %v685
        %v718 = vunpack.c.l.bf16 %v686
        %v719 = vunpack.c.l.bf16 %v687
        %v720 = vunpack.c.l.bf16 %v688
        %v721 = vunpack.c.l.bf16 %v689
        %v722 = vld [vmem:[#allocation7] sm:$0x1]
        %v724 = vlaneseq
        %v725 = vshrl.u32 %v724, 7
        %v726 = vsub.s32 0, %v725
        %v727 = vrot.slane %v722, %v726
        %v729 = vmul.f32 %v690, %v727
        %v730 = vmul.f32 %v691, %v727
        %v731 = vmul.f32 %v692, %v727
        %v732 = vmul.f32 %v693, %v727
        %v733 = vmul.f32 %v694, %v727
        %v734 = vmul.f32 %v695, %v727
        %v735 = vmul.f32 %v696, %v727
        %v736 = vmul.f32 %v697, %v727
        %v737 = vmul.f32 %v698, %v727
        %v738 = vmul.f32 %v699, %v727
        %v739 = vmul.f32 %v700, %v727
        %v740 = vmul.f32 %v701, %v727
        %v741 = vmul.f32 %v702, %v727
        %v742 = vmul.f32 %v703, %v727
        %v743 = vmul.f32 %v704, %v727
        %v744 = vmul.f32 %v705, %v727
        %v745 = vmul.f32 %v706, %v727
        %v746 = vmul.f32 %v707, %v727
        %v747 = vmul.f32 %v708, %v727
        %v748 = vmul.f32 %v709, %v727
        %v749 = vmul.f32 %v710, %v727
        %v750 = vmul.f32 %v711, %v727
        %v751 = vmul.f32 %v712, %v727
        %v752 = vmul.f32 %v713, %v727
        %v753 = vmul.f32 %v714, %v727
        %v754 = vmul.f32 %v715, %v727
        %v755 = vmul.f32 %v716, %v727
        %v756 = vmul.f32 %v717, %v727
        %v757 = vmul.f32 %v718, %v727
        %v758 = vmul.f32 %v719, %v727
        %v759 = vmul.f32 %v720, %v727
        %v760 = vmul.f32 %v721, %v727
        %v761 = vld [vmem:[#allocation9] sm:$0x1]
        %v763 = vlaneseq
        %v764 = vshrl.u32 %v763, 7
        %v765 = vsub.s32 0, %v764
        %v766 = vrot.slane %v761, %v765
        %v768 = vadd.f32 %v729, %v766
        %v769 = vadd.f32 %v730, %v766
        %v770 = vadd.f32 %v731, %v766
        %v771 = vadd.f32 %v732, %v766
        %v772 = vadd.f32 %v733, %v766
        %v773 = vadd.f32 %v734, %v766
        %v774 = vadd.f32 %v735, %v766
        %v775 = vadd.f32 %v736, %v766
        %v776 = vadd.f32 %v737, %v766
        %v777 = vadd.f32 %v738, %v766
        %v778 = vadd.f32 %v739, %v766
        %v779 = vadd.f32 %v740, %v766
        %v780 = vadd.f32 %v741, %v766
        %v781 = vadd.f32 %v742, %v766
        %v782 = vadd.f32 %v743, %v766
        %v783 = vadd.f32 %v744, %v766
        %v784 = vadd.f32 %v745, %v766
        %v785 = vadd.f32 %v746, %v766
        %v786 = vadd.f32 %v747, %v766
        %v787 = vadd.f32 %v748, %v766
        %v788 = vadd.f32 %v749, %v766
        %v789 = vadd.f32 %v750, %v766
        %v790 = vadd.f32 %v751, %v766
        %v791 = vadd.f32 %v752, %v766
        %v792 = vadd.f32 %v753, %v766
        %v793 = vadd.f32 %v754, %v766
        %v794 = vadd.f32 %v755, %v766
        %v795 = vadd.f32 %v756, %v766
        %v796 = vadd.f32 %v757, %v766
        %v797 = vadd.f32 %v758, %v766
        %v798 = vadd.f32 %v759, %v766
        %v799 = vadd.f32 %v760, %v766
        %v800 = vmax.f32 %v768, 0.0
        %v801 = vmax.f32 %v769, 0.0
        %v802 = vmax.f32 %v770, 0.0
        %v803 = vmax.f32 %v771, 0.0
        %v804 = vmax.f32 %v772, 0.0
        %v805 = vmax.f32 %v773, 0.0
        %v806 = vmax.f32 %v774, 0.0
        %v807 = vmax.f32 %v775, 0.0
        %v808 = vmax.f32 %v776, 0.0
        %v809 = vmax.f32 %v777, 0.0
        %v810 = vmax.f32 %v778, 0.0
        %v811 = vmax.f32 %v779, 0.0
        %v812 = vmax.f32 %v780, 0.0
        %v813 = vmax.f32 %v781, 0.0
        %v814 = vmax.f32 %v782, 0.0
        %v815 = vmax.f32 %v783, 0.0
        %v816 = vmax.f32 %v784, 0.0
        %v817 = vmax.f32 %v785, 0.0
        %v818 = vmax.f32 %v786, 0.0
        %v819 = vmax.f32 %v787, 0.0
        %v820 = vmax.f32 %v788, 0.0
        %v821 = vmax.f32 %v789, 0.0
        %v822 = vmax.f32 %v790, 0.0
        %v823 = vmax.f32 %v791, 0.0
        %v824 = vmax.f32 %v792, 0.0
        %v825 = vmax.f32 %v793, 0.0
        %v826 = vmax.f32 %v794, 0.0
        %v827 = vmax.f32 %v795, 0.0
        %v828 = vmax.f32 %v796, 0.0
        %v829 = vmax.f32 %v797, 0.0
        %v830 = vmax.f32 %v798, 0.0
        %v831 = vmax.f32 %v799, 0.0
        %v832 = vpack.c.bf16 %v801, %v800
        %v833 = vpack.c.bf16 %v803, %v802
        %v834 = vpack.c.bf16 %v805, %v804
        %v835 = vpack.c.bf16 %v807, %v806
        %v836 = vpack.c.bf16 %v809, %v808
        %v837 = vpack.c.bf16 %v811, %v810
        %v838 = vpack.c.bf16 %v813, %v812
        %v839 = vpack.c.bf16 %v815, %v814
        %v840 = vpack.c.bf16 %v817, %v816
        %v841 = vpack.c.bf16 %v819, %v818
        %v842 = vpack.c.bf16 %v821, %v820
        %v843 = vpack.c.bf16 %v823, %v822
        %v844 = vpack.c.bf16 %v825, %v824
        %v845 = vpack.c.bf16 %v827, %v826
        %v846 = vpack.c.bf16 %v829, %v828
        %v847 = vpack.c.bf16 %v831, %v830
        %v864 = vunpack.c.l.b16 %v832
        %v865 = vunpack.c.h.b16 %v832
        %v866 = vunpack.c.l.b16 %v833
        %v867 = vunpack.c.h.b16 %v833
        %v868 = vunpack.c.l.b16 %v834
        %v869 = vunpack.c.h.b16 %v834
        %v870 = vunpack.c.l.b16 %v835
        %v871 = vunpack.c.h.b16 %v835
        %v872 = vunpack.c.l.b16 %v836
        %v873 = vunpack.c.h.b16 %v836
        %v874 = vunpack.c.l.b16 %v837
        %v875 = vunpack.c.h.b16 %v837
        %v876 = vunpack.c.l.b16 %v838
        %v877 = vunpack.c.h.b16 %v838
        %v878 = vunpack.c.l.b16 %v839
        %v879 = vunpack.c.h.b16 %v839
        %v880 = vunpack.c.l.b16 %v840
        %v881 = vunpack.c.h.b16 %v840
        %v882 = vunpack.c.l.b16 %v841
        %v883 = vunpack.c.h.b16 %v841
        %v884 = vunpack.c.l.b16 %v842
        %v885 = vunpack.c.h.b16 %v842
        %v886 = vunpack.c.l.b16 %v843
        %v887 = vunpack.c.h.b16 %v843
        %v888 = vunpack.c.l.b16 %v844
        %v889 = vunpack.c.h.b16 %v844
        %v890 = vunpack.c.l.b16 %v845
        %v891 = vunpack.c.h.b16 %v845
        %v892 = vunpack.c.l.b16 %v846
        %v893 = vunpack.c.h.b16 %v846
        %v894 = vunpack.c.l.b16 %v847
        %v895 = vunpack.c.h.b16 %v847
        %v896 = vpack.c.b16 %v864, %v864
        %v897 = vpack.c.b16 %v865, %v865
        %v898 = vpack.c.b16 %v866, %v866
        %v899 = vpack.c.b16 %v867, %v867
        %v900 = vpack.c.b16 %v868, %v868
        %v901 = vpack.c.b16 %v869, %v869
        %v902 = vpack.c.b16 %v870, %v870
        %v903 = vpack.c.b16 %v871, %v871
        %v904 = vpack.c.b16 %v872, %v872
        %v905 = vpack.c.b16 %v873, %v873
        %v906 = vpack.c.b16 %v874, %v874
        %v907 = vpack.c.b16 %v875, %v875
        %v908 = vpack.c.b16 %v876, %v876
        %v909 = vpack.c.b16 %v877, %v877
        %v910 = vpack.c.b16 %v878, %v878
        %v911 = vpack.c.b16 %v879, %v879
        %v912 = vpack.c.b16 %v880, %v880
        %v913 = vpack.c.b16 %v881, %v881
        %v914 = vpack.c.b16 %v882, %v882
        %v915 = vpack.c.b16 %v883, %v883
        %v916 = vpack.c.b16 %v884, %v884
        %v917 = vpack.c.b16 %v885, %v885
        %v918 = vpack.c.b16 %v886, %v886
        %v919 = vpack.c.b16 %v887, %v887
        %v920 = vpack.c.b16 %v888, %v888
        %v921 = vpack.c.b16 %v889, %v889
        %v922 = vpack.c.b16 %v890, %v890
        %v923 = vpack.c.b16 %v891, %v891
        %v924 = vpack.c.b16 %v892, %v892
        %v925 = vpack.c.b16 %v893, %v893
        %v926 = vpack.c.b16 %v894, %v894
        %v927 = vpack.c.b16 %v895, %v895
        %vm928 = vsmask.f32 256
        %vm929 = vsmask.f32 4368
        %vm930 = vmor %vm928, %vm929
        %v932 = vshrl.u32 %v896, 16
        %v934 = vrot.slane %v932, 7
        %v935 = vshll.u32 %v896, 16
        %v937 = vor.u32 %v934, %v935
        %v938 = vrot.slane %v934, 4
        %v940 = vshrl.u32 %v897, 16
        %v942 = vrot.slane %v940, 7
        %v943 = vshll.u32 %v897, 16
        %v945 = vor.u32 %v942, %v943
        %v946 = vsel %vm930, %v938, %v945
        %v947 = vrot.slane %v942, 4
        %v949 = vshrl.u32 %v898, 16
        %v951 = vrot.slane %v949, 7
        %v952 = vshll.u32 %v898, 16
        %v954 = vor.u32 %v951, %v952
        %v955 = vrot.slane %v951, 4
        %v957 = vshrl.u32 %v899, 16
        %v959 = vrot.slane %v957, 7
        %v960 = vshll.u32 %v899, 16
        %v962 = vor.u32 %v959, %v960
        %v963 = vsel %vm930, %v955, %v962
        %v964 = vrot.slane %v959, 4
        %v966 = vshrl.u32 %v900, 16
        %v968 = vrot.slane %v966, 7
        %v969 = vshll.u32 %v900, 16
        %v971 = vor.u32 %v968, %v969
        %v972 = vrot.slane %v968, 4
        %v974 = vshrl.u32 %v901, 16
        %v976 = vrot.slane %v974, 7
        %v977 = vshll.u32 %v901, 16
        %v979 = vor.u32 %v976, %v977
        %v980 = vsel %vm930, %v972, %v979
        %v981 = vrot.slane %v976, 4
        %v983 = vshrl.u32 %v902, 16
        %v985 = vrot.slane %v983, 7
        %v986 = vshll.u32 %v902, 16
        %v988 = vor.u32 %v985, %v986
        %v989 = vrot.slane %v985, 4
        %v991 = vshrl.u32 %v903, 16
        %v993 = vrot.slane %v991, 7
        %v994 = vshll.u32 %v903, 16
        %v996 = vor.u32 %v993, %v994
        %v997 = vsel %vm930, %v989, %v996
        %v998 = vrot.slane %v993, 4
        %v1000 = vshrl.u32 %v904, 16
        %v1002 = vrot.slane %v1000, 7
        %v1003 = vshll.u32 %v904, 16
        %v1005 = vor.u32 %v1002, %v1003
        %v1006 = vrot.slane %v1002, 4
        %v1008 = vshrl.u32 %v905, 16
        %v1010 = vrot.slane %v1008, 7
        %v1011 = vshll.u32 %v905, 16
        %v1013 = vor.u32 %v1010, %v1011
        %v1014 = vsel %vm930, %v1006, %v1013
        %v1015 = vrot.slane %v1010, 4
        %v1017 = vshrl.u32 %v906, 16
        %v1019 = vrot.slane %v1017, 7
        %v1020 = vshll.u32 %v906, 16
        %v1022 = vor.u32 %v1019, %v1020
        %v1023 = vrot.slane %v1019, 4
        %v1025 = vshrl.u32 %v907, 16
        %v1027 = vrot.slane %v1025, 7
        %v1028 = vshll.u32 %v907, 16
        %v1030 = vor.u32 %v1027, %v1028
        %v1031 = vsel %vm930, %v1023, %v1030
        %v1032 = vrot.slane %v1027, 4
        %v1034 = vshrl.u32 %v908, 16
        %v1036 = vrot.slane %v1034, 7
        %v1037 = vshll.u32 %v908, 16
        %v1039 = vor.u32 %v1036, %v1037
        %v1040 = vrot.slane %v1036, 4
        %v1042 = vshrl.u32 %v909, 16
        %v1044 = vrot.slane %v1042, 7
        %v1045 = vshll.u32 %v909, 16
        %v1047 = vor.u32 %v1044, %v1045
        %v1048 = vsel %vm930, %v1040, %v1047
        %v1049 = vrot.slane %v1044, 4
        %v1051 = vshrl.u32 %v910, 16
        %v1053 = vrot.slane %v1051, 7
        %v1054 = vshll.u32 %v910, 16
        %v1056 = vor.u32 %v1053, %v1054
        %v1057 = vrot.slane %v1053, 4
        %v1059 = vshrl.u32 %v911, 16
        %v1061 = vrot.slane %v1059, 7
        %v1062 = vshll.u32 %v911, 16
        %v1064 = vor.u32 %v1061, %v1062
        %v1065 = vsel %vm930, %v1057, %v1064
        %v1066 = vrot.slane %v1061, 4
        %v1068 = vshrl.u32 %v912, 16
        %v1070 = vrot.slane %v1068, 7
        %v1071 = vshll.u32 %v912, 16
        %v1073 = vor.u32 %v1070, %v1071
        %v1074 = vrot.slane %v1070, 4
        %v1076 = vshrl.u32 %v913, 16
        %v1078 = vrot.slane %v1076, 7
        %v1079 = vshll.u32 %v913, 16
        %v1081 = vor.u32 %v1078, %v1079
        %v1082 = vsel %vm930, %v1074, %v1081
        %v1083 = vrot.slane %v1078, 4
        %v1085 = vshrl.u32 %v914, 16
        %v1087 = vrot.slane %v1085, 7
        %v1088 = vshll.u32 %v914, 16
        %v1090 = vor.u32 %v1087, %v1088
        %v1091 = vrot.slane %v1087, 4
        %v1093 = vshrl.u32 %v915, 16
        %v1095 = vrot.slane %v1093, 7
        %v1096 = vshll.u32 %v915, 16
        %v1098 = vor.u32 %v1095, %v1096
        %v1099 = vsel %vm930, %v1091, %v1098
        %v1100 = vrot.slane %v1095, 4
        %v1102 = vshrl.u32 %v916, 16
        %v1104 = vrot.slane %v1102, 7
        %v1105 = vshll.u32 %v916, 16
        %v1107 = vor.u32 %v1104, %v1105
        %v1108 = vrot.slane %v1104, 4
        %v1110 = vshrl.u32 %v917, 16
        %v1112 = vrot.slane %v1110, 7
        %v1113 = vshll.u32 %v917, 16
        %v1115 = vor.u32 %v1112, %v1113
        %v1116 = vsel %vm930, %v1108, %v1115
        %v1117 = vrot.slane %v1112, 4
        %v1119 = vshrl.u32 %v918, 16
        %v1121 = vrot.slane %v1119, 7
        %v1122 = vshll.u32 %v918, 16
        %v1124 = vor.u32 %v1121, %v1122
        %v1125 = vrot.slane %v1121, 4
        %v1127 = vshrl.u32 %v919, 16
        %v1129 = vrot.slane %v1127, 7
        %v1130 = vshll.u32 %v919, 16
        %v1132 = vor.u32 %v1129, %v1130
        %v1133 = vsel %vm930, %v1125, %v1132
        %v1134 = vrot.slane %v1129, 4
        %v1136 = vshrl.u32 %v920, 16
        %v1138 = vrot.slane %v1136, 7
        %v1139 = vshll.u32 %v920, 16
        %v1141 = vor.u32 %v1138, %v1139
        %v1142 = vrot.slane %v1138, 4
        %v1144 = vshrl.u32 %v921, 16
        %v1146 = vrot.slane %v1144, 7
        %v1147 = vshll.u32 %v921, 16
        %v1149 = vor.u32 %v1146, %v1147
        %v1150 = vsel %vm930, %v1142, %v1149
        %v1151 = vrot.slane %v1146, 4
        %v1153 = vshrl.u32 %v922, 16
        %v1155 = vrot.slane %v1153, 7
        %v1156 = vshll.u32 %v922, 16
        %v1158 = vor.u32 %v1155, %v1156
        %v1159 = vrot.slane %v1155, 4
        %v1161 = vshrl.u32 %v923, 16
        %v1163 = vrot.slane %v1161, 7
        %v1164 = vshll.u32 %v923, 16
        %v1166 = vor.u32 %v1163, %v1164
        %v1167 = vsel %vm930, %v1159, %v1166
        %v1168 = vrot.slane %v1163, 4
        %v1170 = vshrl.u32 %v924, 16
        %v1172 = vrot.slane %v1170, 7
        %v1173 = vshll.u32 %v924, 16
        %v1175 = vor.u32 %v1172, %v1173
        %v1176 = vrot.slane %v1172, 4
        %v1178 = vshrl.u32 %v925, 16
        %v1180 = vrot.slane %v1178, 7
        %v1181 = vshll.u32 %v925, 16
        %v1183 = vor.u32 %v1180, %v1181
        %v1184 = vsel %vm930, %v1176, %v1183
        %v1185 = vrot.slane %v1180, 4
        %v1187 = vshrl.u32 %v926, 16
        %v1189 = vrot.slane %v1187, 7
        %v1190 = vshll.u32 %v926, 16
        %v1192 = vor.u32 %v1189, %v1190
        %v1193 = vrot.slane %v1189, 4
        %v1195 = vshrl.u32 %v927, 16
        %v1197 = vrot.slane %v1195, 7
        %v1198 = vshll.u32 %v927, 16
        %v1200 = vor.u32 %v1197, %v1198
        %v1201 = vsel %vm930, %v1193, %v1200
        %v1202 = vrot.slane %v1197, 4
        %s1251 = scalar_lea.vmem [#allocation2], 12
        %vm1252 = vcmask 1043456
        %vm1253 = vsmask.f32 7938
        %vm1254 = vmand %vm1252, %vm1253
        %v1255 = vld [vmem:[%s1251] sm:$0xf]
        %v1256 = vsel %vm1254, %v937, %v1255
        %1257 = vst [vmem:[%s1251] sm:$0xf] %v1256
        %1258 = vst [vmem:[%s1251 + $0x4] sm:$0xf] %v946
        %vm1259 = vcmask 1040384
        %vm1260 = vmand %vm1259, %vm928
        %v1261 = vld [vmem:[%s1251 + $0x8] sm:$0x1]
        %v1262 = vsel %vm1260, %v947, %v1261
        %1263 = vst [vmem:[%s1251 + $0x8] sm:$0x1] %v1262
        %v1264 = vld [vmem:[%s1251 + $0xc] sm:$0xf]
        %v1265 = vsel %vm1254, %v954, %v1264
        %1266 = vst [vmem:[%s1251 + $0xc] sm:$0xf] %v1265
        %1267 = vst [vmem:[%s1251 + $0x10] sm:$0xf] %v963
        %v1268 = vld [vmem:[%s1251 + $0x14] sm:$0x1]
        %v1269 = vsel %vm1260, %v964, %v1268
        %1270 = vst [vmem:[%s1251 + $0x14] sm:$0x1] %v1269
        %v1271 = vld [vmem:[%s1251 + $0x18] sm:$0xf]
        %v1272 = vsel %vm1254, %v971, %v1271
        %1273 = vst [vmem:[%s1251 + $0x18] sm:$0xf] %v1272
        %1274 = vst [vmem:[%s1251 + $0x1c] sm:$0xf] %v980
        %v1275 = vld [vmem:[%s1251 + $0x20] sm:$0x1]
        %v1276 = vsel %vm1260, %v981, %v1275
        %1277 = vst [vmem:[%s1251 + $0x20] sm:$0x1] %v1276
        %v1278 = vld [vmem:[%s1251 + $0x24] sm:$0xf]
        %v1279 = vsel %vm1254, %v988, %v1278
        %1280 = vst [vmem:[%s1251 + $0x24] sm:$0xf] %v1279
        %1281 = vst [vmem:[%s1251 + $0x28] sm:$0xf] %v997
        %v1282 = vld [vmem:[%s1251 + $0x2c] sm:$0x1]
        %v1283 = vsel %vm1260, %v998, %v1282
        %1284 = vst [vmem:[%s1251 + $0x2c] sm:$0x1] %v1283
        %v1285 = vld [vmem:[%s1251 + $0x30] sm:$0xf]
        %v1286 = vsel %vm1254, %v1005, %v1285
        %1287 = vst [vmem:[%s1251 + $0x30] sm:$0xf] %v1286
        %1288 = vst [vmem:[%s1251 + $0x34] sm:$0xf] %v1014
        %v1289 = vld [vmem:[%s1251 + $0x38] sm:$0x1]
        %v1290 = vsel %vm1260, %v1015, %v1289
        %1291 = vst [vmem:[%s1251 + $0x38] sm:$0x1] %v1290
        %v1292 = vld [vmem:[%s1251 + $0x3c] sm:$0xf]
        %v1293 = vsel %vm1254, %v1022, %v1292
        %1294 = vst [vmem:[%s1251 + $0x3c] sm:$0xf] %v1293
        %1295 = vst [vmem:[%s1251 + $0x40] sm:$0xf] %v1031
        %v1296 = vld [vmem:[%s1251 + $0x44] sm:$0x1]
        %v1297 = vsel %vm1260, %v1032, %v1296
        %1298 = vst [vmem:[%s1251 + $0x44] sm:$0x1] %v1297
        %v1299 = vld [vmem:[%s1251 + $0x48] sm:$0xf]
        %v1300 = vsel %vm1254, %v1039, %v1299
        %1301 = vst [vmem:[%s1251 + $0x48] sm:$0xf] %v1300
        %1302 = vst [vmem:[%s1251 + $0x4c] sm:$0xf] %v1048
        %v1303 = vld [vmem:[%s1251 + $0x50] sm:$0x1]
        %v1304 = vsel %vm1260, %v1049, %v1303
        %1305 = vst [vmem:[%s1251 + $0x50] sm:$0x1] %v1304
        %v1306 = vld [vmem:[%s1251 + $0x54] sm:$0xf]
        %v1307 = vsel %vm1254, %v1056, %v1306
        %1308 = vst [vmem:[%s1251 + $0x54] sm:$0xf] %v1307
        %1309 = vst [vmem:[%s1251 + $0x58] sm:$0xf] %v1065
        %v1310 = vld [vmem:[%s1251 + $0x5c] sm:$0x1]
        %v1311 = vsel %vm1260, %v1066, %v1310
        %1312 = vst [vmem:[%s1251 + $0x5c] sm:$0x1] %v1311
        %v1313 = vld [vmem:[%s1251 + $0x60] sm:$0xf]
        %v1314 = vsel %vm1254, %v1073, %v1313
        %1315 = vst [vmem:[%s1251 + $0x60] sm:$0xf] %v1314
        %1316 = vst [vmem:[%s1251 + $0x64] sm:$0xf] %v1082
        %v1317 = vld [vmem:[%s1251 + $0x68] sm:$0x1]
        %v1318 = vsel %vm1260, %v1083, %v1317
        %1319 = vst [vmem:[%s1251 + $0x68] sm:$0x1] %v1318
        %v1320 = vld [vmem:[%s1251 + $0x6c] sm:$0xf]
        %v1321 = vsel %vm1254, %v1090, %v1320
        %1322 = vst [vmem:[%s1251 + $0x6c] sm:$0xf] %v1321
        %1323 = vst [vmem:[%s1251 + $0x70] sm:$0xf] %v1099
        %v1324 = vld [vmem:[%s1251 + $0x74] sm:$0x1]
        %v1325 = vsel %vm1260, %v1100, %v1324
        %1326 = vst [vmem:[%s1251 + $0x74] sm:$0x1] %v1325
        %v1327 = vld [vmem:[%s1251 + $0x78] sm:$0xf]
        %v1328 = vsel %vm1254, %v1107, %v1327
        %1329 = vst [vmem:[%s1251 + $0x78] sm:$0xf] %v1328
        %1330 = vst [vmem:[%s1251 + $0x7c] sm:$0xf] %v1116
        %v1331 = vld [vmem:[%s1251 + $0x80] sm:$0x1]
        %v1332 = vsel %vm1260, %v1117, %v1331
        %1333 = vst [vmem:[%s1251 + $0x80] sm:$0x1] %v1332
        %v1334 = vld [vmem:[%s1251 + $0x84] sm:$0xf]
        %v1335 = vsel %vm1254, %v1124, %v1334
        %1336 = vst [vmem:[%s1251 + $0x84] sm:$0xf] %v1335
        %1337 = vst [vmem:[%s1251 + $0x88] sm:$0xf] %v1133
        %v1338 = vld [vmem:[%s1251 + $0x8c] sm:$0x1]
        %v1339 = vsel %vm1260, %v1134, %v1338
        %1340 = vst [vmem:[%s1251 + $0x8c] sm:$0x1] %v1339
        %v1341 = vld [vmem:[%s1251 + $0x90] sm:$0xf]
        %v1342 = vsel %vm1254, %v1141, %v1341
        %1343 = vst [vmem:[%s1251 + $0x90] sm:$0xf] %v1342
        %1344 = vst [vmem:[%s1251 + $0x94] sm:$0xf] %v1150
        %v1345 = vld [vmem:[%s1251 + $0x98] sm:$0x1]
        %v1346 = vsel %vm1260, %v1151, %v1345
        %1347 = vst [vmem:[%s1251 + $0x98] sm:$0x1] %v1346
        %v1348 = vld [vmem:[%s1251 + $0x9c] sm:$0xf]
        %v1349 = vsel %vm1254, %v1158, %v1348
        %1350 = vst [vmem:[%s1251 + $0x9c] sm:$0xf] %v1349
        %1351 = vst [vmem:[%s1251 + $0xa0] sm:$0xf] %v1167
        %v1352 = vld [vmem:[%s1251 + $0xa4] sm:$0x1]
        %v1353 = vsel %vm1260, %v1168, %v1352
        %1354 = vst [vmem:[%s1251 + $0xa4] sm:$0x1] %v1353
        %v1355 = vld [vmem:[%s1251 + $0xa8] sm:$0xf]
        %v1356 = vsel %vm1254, %v1175, %v1355
        %1357 = vst [vmem:[%s1251 + $0xa8] sm:$0xf] %v1356
        %1358 = vst [vmem:[%s1251 + $0xac] sm:$0xf] %v1184
        %v1359 = vld [vmem:[%s1251 + $0xb0] sm:$0x1]
        %v1360 = vsel %vm1260, %v1185, %v1359
        %1361 = vst [vmem:[%s1251 + $0xb0] sm:$0x1] %v1360
        %v1362 = vld [vmem:[%s1251 + $0xb4] sm:$0xf]
        %v1363 = vsel %vm1254, %v1192, %v1362
        %1364 = vst [vmem:[%s1251 + $0xb4] sm:$0xf] %v1363
        %1365 = vst [vmem:[%s1251 + $0xb8] sm:$0xf] %v1201
        %v1366 = vld [vmem:[%s1251 + $0xbc] sm:$0x1]
        %v1367 = vsel %vm1260, %v1202, %v1366
        %1368 = vst [vmem:[%s1251 + $0xbc] sm:$0x1] %v1367
        %v1369 = vld [vmem:[#allocation16] sm:$0xf]
        %v1370 = vld [vmem:[#allocation16 + $0x4] sm:$0xf]
        %v1371 = vld [vmem:[#allocation16 + $0x8] sm:$0xf]
        %v1372 = vld [vmem:[#allocation16 + $0xc] sm:$0xf]
        %v1373 = vld [vmem:[#allocation16 + $0x10] sm:$0xf]
        %v1374 = vld [vmem:[#allocation16 + $0x14] sm:$0xf]
        %v1375 = vld [vmem:[#allocation16 + $0x18] sm:$0xf]
        %v1376 = vld [vmem:[#allocation16 + $0x1c] sm:$0xf]
        %v1377 = vld [vmem:[#allocation16 + $0x20] sm:$0xf]
        %v1378 = vld [vmem:[#allocation16 + $0x24] sm:$0xf]
        %v1379 = vld [vmem:[#allocation16 + $0x28] sm:$0xf]
        %v1380 = vld [vmem:[#allocation16 + $0x2c] sm:$0xf]
        %v1381 = vld [vmem:[#allocation16 + $0x30] sm:$0xf]
        %v1382 = vld [vmem:[#allocation16 + $0x34] sm:$0xf]
        %v1383 = vld [vmem:[#allocation16 + $0x38] sm:$0xf]
        %v1384 = vld [vmem:[#allocation16 + $0x3c] sm:$0xf]
        %v1401 = vunpack.c.l.b16 %v1369
        %v1402 = vunpack.c.l.b16 %v1370
        %v1403 = vunpack.c.l.b16 %v1371
        %v1404 = vunpack.c.l.b16 %v1372
        %v1405 = vunpack.c.l.b16 %v1373
        %v1406 = vunpack.c.l.b16 %v1374
        %v1407 = vunpack.c.l.b16 %v1375
        %v1408 = vunpack.c.l.b16 %v1376
        %v1409 = vunpack.c.l.b16 %v1377
        %v1410 = vunpack.c.l.b16 %v1378
        %v1411 = vunpack.c.l.b16 %v1379
        %v1412 = vunpack.c.l.b16 %v1380
        %v1413 = vunpack.c.l.b16 %v1381
        %v1414 = vunpack.c.l.b16 %v1382
        %v1415 = vunpack.c.l.b16 %v1383
        %v1416 = vunpack.c.l.b16 %v1384
        %v1417 = vpack.c.b16 %v1402, %v1401
        %v1418 = vpack.c.b16 %v1404, %v1403
        %v1419 = vpack.c.b16 %v1406, %v1405
        %v1420 = vpack.c.b16 %v1408, %v1407
        %v1421 = vpack.c.b16 %v1410, %v1409
        %v1422 = vpack.c.b16 %v1412, %v1411
        %v1423 = vpack.c.b16 %v1414, %v1413
        %v1424 = vpack.c.b16 %v1416, %v1415
        %1433 = vmatprep.subr.bf16.mxu0 0
        %1434 = vmatpush1.bf16.msra.mxu0 %v1417
        %1435 = vmatprep.subr.bf16.mxu0 0
        %1436 = vmatpush1.bf16.msra.mxu0 %v1418
        %1437 = vmatprep.subr.bf16.mxu0 0
        %1438 = vmatpush1.bf16.msra.mxu0 %v1419
        %1439 = vmatprep.subr.bf16.mxu0 0
        %1440 = vmatpush1.bf16.msra.mxu0 %v1420
        %1441 = vmatprep.subr.bf16.mxu0 0
        %1442 = vmatpush1.bf16.msra.mxu0 %v1421
        %1443 = vmatprep.subr.bf16.mxu0 0
        %1444 = vmatpush1.bf16.msra.mxu0 %v1422
        %1445 = vmatprep.subr.bf16.mxu0 0
        %1446 = vmatpush1.bf16.msra.mxu0 %v1423
        %1447 = vmatprep.subr.bf16.mxu0 0
        %1448 = vmatpush1.bf16.msra.mxu0 %v1424
        %1449 = vmatprep.subr.bf16.mxu0 0
        %1450 = vmatpush1.bf16.msra.mxu0 0
        %1451 = vmatprep.subr.bf16.mxu0 0
        %1452 = vmatpush1.bf16.msra.mxu0 0
        %1453 = vmatprep.subr.bf16.mxu0 0
        %1454 = vmatpush1.bf16.msra.mxu0 0
        %1455 = vmatprep.subr.bf16.mxu0 0
        %1456 = vmatpush1.bf16.msra.mxu0 0
        %1457 = vmatprep.subr.bf16.mxu0 0
        %1458 = vmatpush1.bf16.msra.mxu0 0
        %1459 = vmatprep.subr.bf16.mxu0 0
        %1460 = vmatpush1.bf16.msra.mxu0 0
        %1461 = vmatprep.subr.bf16.mxu0 0
        %1462 = vmatpush1.bf16.msra.mxu0 0
        %1463 = vmatprep.subr.bf16.mxu0 0
        %1464 = vmatpush1.bf16.msra.mxu0 0
        %1465 = vmatprep.mubr.bf16.mxu0 0
        %1466 = vmatmul.mubr.bf16.gmra.mrb[0].mxu0 %v832
        %v1467 = vpop.f32.mrb[0].mxu0
        %v1468 = vadd.f32 0.0, %v1467
        %v1469 = vpop.f32.mrb[0].mxu0
        %v1470 = vpop.f32.mrb[0].mxu0
        %v1471 = vadd.f32 0.0, %v1470
        %v1472 = vpop.f32.mrb[0].mxu0
        %1473 = vmatprep.mubr.bf16.mxu0 0
        %1474 = vmatmul.mubr.bf16.gmra.mrb[0].mxu0 %v833
        %v1475 = vpop.f32.mrb[0].mxu0
        %v1476 = vadd.f32 0.0, %v1475
        %v1477 = vpop.f32.mrb[0].mxu0
        %v1478 = vpop.f32.mrb[0].mxu0
        %v1479 = vadd.f32 0.0, %v1478
        %v1480 = vpop.f32.mrb[0].mxu0
        %1481 = vmatprep.mubr.bf16.mxu0 0
        %1482 = vmatmul.mubr.bf16.gmra.mrb[0].mxu0 %v834
        %v1483 = vpop.f32.mrb[0].mxu0
        %v1484 = vadd.f32 0.0, %v1483
        %v1485 = vpop.f32.mrb[0].mxu0
        %v1486 = vpop.f32.mrb[0].mxu0
        %v1487 = vadd.f32 0.0, %v1486
        %v1488 = vpop.f32.mrb[0].mxu0
        %1489 = vmatprep.mubr.bf16.mxu0 0
        %1490 = vmatmul.mubr.bf16.gmra.mrb[0].mxu0 %v835
        %v1491 = vpop.f32.mrb[0].mxu0
        %v1492 = vadd.f32 0.0, %v1491
        %v1493 = vpop.f32.mrb[0].mxu0
        %v1494 = vpop.f32.mrb[0].mxu0
        %v1495 = vadd.f32 0.0, %v1494
        %v1496 = vpop.f32.mrb[0].mxu0
        %1497 = vmatprep.mubr.bf16.mxu0 0
        %1498 = vmatmul.mubr.bf16.gmra.mrb[0].mxu0 %v836
        %v1499 = vpop.f32.mrb[0].mxu0
        %v1500 = vadd.f32 0.0, %v1499
        %v1501 = vpop.f32.mrb[0].mxu0
        %v1502 = vpop.f32.mrb[0].mxu0
        %v1503 = vadd.f32 0.0, %v1502
        %v1504 = vpop.f32.mrb[0].mxu0
        %1505 = vmatprep.mubr.bf16.mxu0 0
        %1506 = vmatmul.mubr.bf16.gmra.mrb[0].mxu0 %v837
        %v1507 = vpop.f32.mrb[0].mxu0
        %v1508 = vadd.f32 0.0, %v1507
        %v1509 = vpop.f32.mrb[0].mxu0
        %v1510 = vpop.f32.mrb[0].mxu0
        %v1511 = vadd.f32 0.0, %v1510
        %v1512 = vpop.f32.mrb[0].mxu0
        %1513 = vmatprep.mubr.bf16.mxu0 0
        %1514 = vmatmul.mubr.bf16.gmra.mrb[0].mxu0 %v838
        %v1515 = vpop.f32.mrb[0].mxu0
        %v1516 = vadd.f32 0.0, %v1515
        %v1517 = vpop.f32.mrb[0].mxu0
        %v1518 = vpop.f32.mrb[0].mxu0
        %v1519 = vadd.f32 0.0, %v1518
        %v1520 = vpop.f32.mrb[0].mxu0
        %1521 = vmatprep.mubr.bf16.mxu0 0
        %1522 = vmatmul.mubr.bf16.gmra.mrb[0].mxu0 %v839
        %v1523 = vpop.f32.mrb[0].mxu0
        %v1524 = vadd.f32 0.0, %v1523
        %v1525 = vpop.f32.mrb[0].mxu0
        %v1526 = vpop.f32.mrb[0].mxu0
        %v1527 = vadd.f32 0.0, %v1526
        %v1528 = vpop.f32.mrb[0].mxu0
        %1529 = vmatprep.mubr.bf16.mxu0 0
        %1530 = vmatmul.mubr.bf16.gmra.mrb[0].mxu0 %v840
        %v1531 = vpop.f32.mrb[0].mxu0
        %v1532 = vadd.f32 0.0, %v1531
        %v1533 = vpop.f32.mrb[0].mxu0
        %v1534 = vpop.f32.mrb[0].mxu0
        %v1535 = vadd.f32 0.0, %v1534
        %v1536 = vpop.f32.mrb[0].mxu0
        %1537 = vmatprep.mubr.bf16.mxu0 0
        %1538 = vmatmul.mubr.bf16.gmra.mrb[0].mxu0 %v841
        %v1539 = vpop.f32.mrb[0].mxu0
        %v1540 = vadd.f32 0.0, %v1539
        %v1541 = vpop.f32.mrb[0].mxu0
        %v1542 = vpop.f32.mrb[0].mxu0
        %v1543 = vadd.f32 0.0, %v1542
        %v1544 = vpop.f32.mrb[0].mxu0
        %1545 = vmatprep.mubr.bf16.mxu0 0
        %1546 = vmatmul.mubr.bf16.gmra.mrb[0].mxu0 %v842
        %v1547 = vpop.f32.mrb[0].mxu0
        %v1548 = vadd.f32 0.0, %v1547
        %v1549 = vpop.f32.mrb[0].mxu0
        %v1550 = vpop.f32.mrb[0].mxu0
        %v1551 = vadd.f32 0.0, %v1550
        %v1552 = vpop.f32.mrb[0].mxu0
        %1553 = vmatprep.mubr.bf16.mxu0 0
        %1554 = vmatmul.mubr.bf16.gmra.mrb[0].mxu0 %v843
        %v1555 = vpop.f32.mrb[0].mxu0
        %v1556 = vadd.f32 0.0, %v1555
        %v1557 = vpop.f32.mrb[0].mxu0
        %v1558 = vpop.f32.mrb[0].mxu0
        %v1559 = vadd.f32 0.0, %v1558
        %v1560 = vpop.f32.mrb[0].mxu0
        %1561 = vmatprep.mubr.bf16.mxu0 0
        %1562 = vmatmul.mubr.bf16.gmra.mrb[0].mxu0 %v844
        %v1563 = vpop.f32.mrb[0].mxu0
        %v1564 = vadd.f32 0.0, %v1563
        %v1565 = vpop.f32.mrb[0].mxu0
        %v1566 = vpop.f32.mrb[0].mxu0
        %v1567 = vadd.f32 0.0, %v1566
        %v1568 = vpop.f32.mrb[0].mxu0
        %1569 = vmatprep.mubr.bf16.mxu0 0
        %1570 = vmatmul.mubr.bf16.gmra.mrb[0].mxu0 %v845
        %v1571 = vpop.f32.mrb[0].mxu0
        %v1572 = vadd.f32 0.0, %v1571
        %v1573 = vpop.f32.mrb[0].mxu0
        %v1574 = vpop.f32.mrb[0].mxu0
        %v1575 = vadd.f32 0.0, %v1574
        %v1576 = vpop.f32.mrb[0].mxu0
        %1577 = vmatprep.mubr.bf16.mxu0 0
        %1578 = vmatmul.mubr.bf16.gmra.mrb[0].mxu0 %v846
        %v1579 = vpop.f32.mrb[0].mxu0
        %v1580 = vadd.f32 0.0, %v1579
        %v1581 = vpop.f32.mrb[0].mxu0
        %v1582 = vpop.f32.mrb[0].mxu0
        %v1583 = vadd.f32 0.0, %v1582
        %v1584 = vpop.f32.mrb[0].mxu0
        %1585 = vmatprep.mubr.bf16.mxu0 0
        %1586 = vmatmul.mubr.bf16.gmra.mrb[0].mxu0 %v847
        %v1587 = vpop.f32.mrb[0].mxu0
        %v1588 = vadd.f32 0.0, %v1587
        %v1589 = vpop.f32.mrb[0].mxu0
        %v1590 = vpop.f32.mrb[0].mxu0
        %v1591 = vadd.f32 0.0, %v1590
        %v1592 = vpop.f32.mrb[0].mxu0
        %1593 = vdwg.mxu0
        %v1594 = vld [vmem:[#allocation2] sm:$0xf]
        %v1595 = vld [vmem:[#allocation2 + $0x4] sm:$0xf]
        %v1596 = vld [vmem:[#allocation2 + $0xc] sm:$0xf]
        %v1597 = vld [vmem:[#allocation2 + $0x10] sm:$0xf]
        %v1598 = vld [vmem:[#allocation2 + $0x18] sm:$0xf]
        %v1599 = vld [vmem:[#allocation2 + $0x1c] sm:$0xf]
        %v1600 = vld [vmem:[#allocation2 + $0x24] sm:$0xf]
        %v1601 = vld [vmem:[#allocation2 + $0x28] sm:$0xf]
        %v1602 = vld [vmem:[#allocation2 + $0x30] sm:$0xf]
        %v1603 = vld [vmem:[#allocation2 + $0x34] sm:$0xf]
        %v1604 = vld [vmem:[#allocation2 + $0x3c] sm:$0xf]
        %v1605 = vld [vmem:[#allocation2 + $0x40] sm:$0xf]
        %v1606 = vld [vmem:[#allocation2 + $0x48] sm:$0xf]
        %v1607 = vld [vmem:[#allocation2 + $0x4c] sm:$0xf]
        %v1608 = vld [vmem:[#allocation2 + $0x54] sm:$0xf]
        %v1609 = vld [vmem:[#allocation2 + $0x58] sm:$0xf]
        %v1610 = vld [vmem:[#allocation2 + $0x60] sm:$0xf]
        %v1611 = vld [vmem:[#allocation2 + $0x64] sm:$0xf]
        %v1612 = vld [vmem:[#allocation2 + $0x6c] sm:$0xf]
        %v1613 = vld [vmem:[#allocation2 + $0x70] sm:$0xf]
        %v1614 = vld [vmem:[#allocation2 + $0x78] sm:$0xf]
        %v1615 = vld [vmem:[#allocation2 + $0x7c] sm:$0xf]
        %v1616 = vld [vmem:[#allocation2 + $0x84] sm:$0xf]
        %v1617 = vld [vmem:[#allocation2 + $0x88] sm:$0xf]
        %v1618 = vld [vmem:[#allocation2 + $0x90] sm:$0xf]
        %v1619 = vld [vmem:[#allocation2 + $0x94] sm:$0xf]
        %v1620 = vld [vmem:[#allocation2 + $0x9c] sm:$0xf]
        %v1621 = vld [vmem:[#allocation2 + $0xa0] sm:$0xf]
        %v1622 = vld [vmem:[#allocation2 + $0xa8] sm:$0xf]
        %v1623 = vld [vmem:[#allocation2 + $0xac] sm:$0xf]
        %v1624 = vld [vmem:[#allocation2 + $0xb4] sm:$0xf]
        %v1625 = vld [vmem:[#allocation2 + $0xb8] sm:$0xf]
        %v1626 = vld [vmem:[#allocation10] sm:$0xf]
        %v1627 = vld [vmem:[#allocation10 + $0x4] sm:$0xf]
        %v1628 = vld [vmem:[#allocation10 + $0x8] sm:$0xf]
        %v1629 = vld [vmem:[#allocation10 + $0xc] sm:$0xf]
        %v1630 = vld [vmem:[#allocation10 + $0x10] sm:$0xf]
        %v1631 = vld [vmem:[#allocation10 + $0x14] sm:$0xf]
        %v1632 = vld [vmem:[#allocation10 + $0x18] sm:$0xf]
        %v1633 = vld [vmem:[#allocation10 + $0x1c] sm:$0xf]
        %v1634 = vld [vmem:[#allocation10 + $0x20] sm:$0xf]
        %v1635 = vld [vmem:[#allocation10 + $0x24] sm:$0xf]
        %v1636 = vld [vmem:[#allocation10 + $0x28] sm:$0xf]
        %v1637 = vld [vmem:[#allocation10 + $0x2c] sm:$0xf]
        %v1638 = vld [vmem:[#allocation10 + $0x30] sm:$0xf]
        %v1639 = vld [vmem:[#allocation10 + $0x34] sm:$0xf]
        %v1640 = vld [vmem:[#allocation10 + $0x38] sm:$0xf]
        %v1641 = vld [vmem:[#allocation10 + $0x3c] sm:$0xf]
        %v1642 = vld [vmem:[#allocation2 + $0x8] sm:$0x1]
        %v1643 = vld [vmem:[#allocation2 + $0x14] sm:$0x1]
        %v1644 = vld [vmem:[#allocation2 + $0x20] sm:$0x1]
        %v1645 = vld [vmem:[#allocation2 + $0x2c] sm:$0x1]
        %v1646 = vld [vmem:[#allocation2 + $0x38] sm:$0x1]
        %v1647 = vld [vmem:[#allocation2 + $0x44] sm:$0x1]
        %v1648 = vld [vmem:[#allocation2 + $0x50] sm:$0x1]
        %v1649 = vld [vmem:[#allocation2 + $0x5c] sm:$0x1]
        %v1650 = vld [vmem:[#allocation2 + $0x68] sm:$0x1]
        %v1651 = vld [vmem:[#allocation2 + $0x74] sm:$0x1]
        %v1652 = vld [vmem:[#allocation2 + $0x80] sm:$0x1]
        %v1653 = vld [vmem:[#allocation2 + $0x8c] sm:$0x1]
        %v1654 = vld [vmem:[#allocation2 + $0x98] sm:$0x1]
        %v1655 = vld [vmem:[#allocation2 + $0xa4] sm:$0x1]
        %v1656 = vld [vmem:[#allocation2 + $0xb0] sm:$0x1]
        %v1657 = vld [vmem:[#allocation2 + $0xbc] sm:$0x1]
        %vm1658 = vsmask.f32 3328
        %vm1659 = vsmask.f32 7440
        %vm1660 = vmor %vm1658, %vm1659
        %v1662 = vshrl.u32 %v1594, 16
        %v1664 = vrot.slane %v1662, 4
        %v1665 = vshll.u32 %v1594, 16
        %v1667 = vrot.slane %v1665, 5
        %v1668 = vor.u32 %v1664, %v1667
        %v1669 = vrot.slane %v1668, 4
        %v1671 = vshll.u32 %v1595, 16
        %v1673 = vrot.slane %v1671, 5
        %v1674 = vsel %vm1660, %v1669, %v1673
        %v1675 = vshrl.u32 %v1595, 16
        %v1677 = vrot.slane %v1675, 4
        %v1678 = vor.u32 %v1677, %v1673
        %v1679 = vrot.slane %v1678, 4
        %v1681 = vshll.u32 %v1642, 16
        %v1683 = vrot.slane %v1681, 5
        %v1684 = vsel %vm1660, %v1679, %v1683
        %v1686 = vshrl.u32 %v1596, 16
        %v1688 = vrot.slane %v1686, 4
        %v1689 = vshll.u32 %v1596, 16
        %v1691 = vrot.slane %v1689, 5
        %v1692 = vor.u32 %v1688, %v1691
        %v1693 = vrot.slane %v1692, 4
        %v1695 = vshll.u32 %v1597, 16
        %v1697 = vrot.slane %v1695, 5
        %v1698 = vsel %vm1660, %v1693, %v1697
        %v1699 = vshrl.u32 %v1597, 16
        %v1701 = vrot.slane %v1699, 4
        %v1702 = vor.u32 %v1701, %v1697
        %v1703 = vrot.slane %v1702, 4
        %v1705 = vshll.u32 %v1643, 16
        %v1707 = vrot.slane %v1705, 5
        %v1708 = vsel %vm1660, %v1703, %v1707
        %v1710 = vshrl.u32 %v1598, 16
        %v1712 = vrot.slane %v1710, 4
        %v1713 = vshll.u32 %v1598, 16
        %v1715 = vrot.slane %v1713, 5
        %v1716 = vor.u32 %v1712, %v1715
        %v1717 = vrot.slane %v1716, 4
        %v1719 = vshll.u32 %v1599, 16
        %v1721 = vrot.slane %v1719, 5
        %v1722 = vsel %vm1660, %v1717, %v1721
        %v1723 = vshrl.u32 %v1599, 16
        %v1725 = vrot.slane %v1723, 4
        %v1726 = vor.u32 %v1725, %v1721
        %v1727 = vrot.slane %v1726, 4
        %v1729 = vshll.u32 %v1644, 16
        %v1731 = vrot.slane %v1729, 5
        %v1732 = vsel %vm1660, %v1727, %v1731
        %v1734 = vshrl.u32 %v1600, 16
        %v1736 = vrot.slane %v1734, 4
        %v1737 = vshll.u32 %v1600, 16
        %v1739 = vrot.slane %v1737, 5
        %v1740 = vor.u32 %v1736, %v1739
        %v1741 = vrot.slane %v1740, 4
        %v1743 = vshll.u32 %v1601, 16
        %v1745 = vrot.slane %v1743, 5
        %v1746 = vsel %vm1660, %v1741, %v1745
        %v1747 = vshrl.u32 %v1601, 16
        %v1749 = vrot.slane %v1747, 4
        %v1750 = vor.u32 %v1749, %v1745
        %v1751 = vrot.slane %v1750, 4
        %v1753 = vshll.u32 %v1645, 16
        %v1755 = vrot.slane %v1753, 5
        %v1756 = vsel %vm1660, %v1751, %v1755
        %v1758 = vshrl.u32 %v1602, 16
        %v1760 = vrot.slane %v1758, 4
        %v1761 = vshll.u32 %v1602, 16
        %v1763 = vrot.slane %v1761, 5
        %v1764 = vor.u32 %v1760, %v1763
        %v1765 = vrot.slane %v1764, 4
        %v1767 = vshll.u32 %v1603, 16
        %v1769 = vrot.slane %v1767, 5
        %v1770 = vsel %vm1660, %v1765, %v1769
        %v1771 = vshrl.u32 %v1603, 16
        %v1773 = vrot.slane %v1771, 4
        %v1774 = vor.u32 %v1773, %v1769
        %v1775 = vrot.slane %v1774, 4
        %v1777 = vshll.u32 %v1646, 16
        %v1779 = vrot.slane %v1777, 5
        %v1780 = vsel %vm1660, %v1775, %v1779
        %v1782 = vshrl.u32 %v1604, 16
        %v1784 = vrot.slane %v1782, 4
        %v1785 = vshll.u32 %v1604, 16
        %v1787 = vrot.slane %v1785, 5
        %v1788 = vor.u32 %v1784, %v1787
        %v1789 = vrot.slane %v1788, 4
        %v1791 = vshll.u32 %v1605, 16
        %v1793 = vrot.slane %v1791, 5
        %v1794 = vsel %vm1660, %v1789, %v1793
        %v1795 = vshrl.u32 %v1605, 16
        %v1797 = vrot.slane %v1795, 4
        %v1798 = vor.u32 %v1797, %v1793
        %v1799 = vrot.slane %v1798, 4
        %v1801 = vshll.u32 %v1647, 16
        %v1803 = vrot.slane %v1801, 5
        %v1804 = vsel %vm1660, %v1799, %v1803
        %v1806 = vshrl.u32 %v1606, 16
        %v1808 = vrot.slane %v1806, 4
        %v1809 = vshll.u32 %v1606, 16
        %v1811 = vrot.slane %v1809, 5
        %v1812 = vor.u32 %v1808, %v1811
        %v1813 = vrot.slane %v1812, 4
        %v1815 = vshll.u32 %v1607, 16
        %v1817 = vrot.slane %v1815, 5
        %v1818 = vsel %vm1660, %v1813, %v1817
        %v1819 = vshrl.u32 %v1607, 16
        %v1821 = vrot.slane %v1819, 4
        %v1822 = vor.u32 %v1821, %v1817
        %v1823 = vrot.slane %v1822, 4
        %v1825 = vshll.u32 %v1648, 16
        %v1827 = vrot.slane %v1825, 5
        %v1828 = vsel %vm1660, %v1823, %v1827
        %v1830 = vshrl.u32 %v1608, 16
        %v1832 = vrot.slane %v1830, 4
        %v1833 = vshll.u32 %v1608, 16
        %v1835 = vrot.slane %v1833, 5
        %v1836 = vor.u32 %v1832, %v1835
        %v1837 = vrot.slane %v1836, 4
        %v1839 = vshll.u32 %v1609, 16
        %v1841 = vrot.slane %v1839, 5
        %v1842 = vsel %vm1660, %v1837, %v1841
        %v1843 = vshrl.u32 %v1609, 16
        %v1845 = vrot.slane %v1843, 4
        %v1846 = vor.u32 %v1845, %v1841
        %v1847 = vrot.slane %v1846, 4
        %v1849 = vshll.u32 %v1649, 16
        %v1851 = vrot.slane %v1849, 5
        %v1852 = vsel %vm1660, %v1847, %v1851
        %v1854 = vshrl.u32 %v1610, 16
        %v1856 = vrot.slane %v1854, 4
        %v1857 = vshll.u32 %v1610, 16
        %v1859 = vrot.slane %v1857, 5
        %v1860 = vor.u32 %v1856, %v1859
        %v1861 = vrot.slane %v1860, 4
        %v1863 = vshll.u32 %v1611, 16
        %v1865 = vrot.slane %v1863, 5
        %v1866 = vsel %vm1660, %v1861, %v1865
        %v1867 = vshrl.u32 %v1611, 16
        %v1869 = vrot.slane %v1867, 4
        %v1870 = vor.u32 %v1869, %v1865
        %v1871 = vrot.slane %v1870, 4
        %v1873 = vshll.u32 %v1650, 16
        %v1875 = vrot.slane %v1873, 5
        %v1876 = vsel %vm1660, %v1871, %v1875
        %v1878 = vshrl.u32 %v1612, 16
        %v1880 = vrot.slane %v1878, 4
        %v1881 = vshll.u32 %v1612, 16
        %v1883 = vrot.slane %v1881, 5
        %v1884 = vor.u32 %v1880, %v1883
        %v1885 = vrot.slane %v1884, 4
        %v1887 = vshll.u32 %v1613, 16
        %v1889 = vrot.slane %v1887, 5
        %v1890 = vsel %vm1660, %v1885, %v1889
        %v1891 = vshrl.u32 %v1613, 16
        %v1893 = vrot.slane %v1891, 4
        %v1894 = vor.u32 %v1893, %v1889
        %v1895 = vrot.slane %v1894, 4
        %v1897 = vshll.u32 %v1651, 16
        %v1899 = vrot.slane %v1897, 5
        %v1900 = vsel %vm1660, %v1895, %v1899
        %v1902 = vshrl.u32 %v1614, 16
        %v1904 = vrot.slane %v1902, 4
        %v1905 = vshll.u32 %v1614, 16
        %v1907 = vrot.slane %v1905, 5
        %v1908 = vor.u32 %v1904, %v1907
        %v1909 = vrot.slane %v1908, 4
        %v1911 = vshll.u32 %v1615, 16
        %v1913 = vrot.slane %v1911, 5
        %v1914 = vsel %vm1660, %v1909, %v1913
        %v1915 = vshrl.u32 %v1615, 16
        %v1917 = vrot.slane %v1915, 4
        %v1918 = vor.u32 %v1917, %v1913
        %v1919 = vrot.slane %v1918, 4
        %v1921 = vshll.u32 %v1652, 16
        %v1923 = vrot.slane %v1921, 5
        %v1924 = vsel %vm1660, %v1919, %v1923
        %v1926 = vshrl.u32 %v1616, 16
        %v1928 = vrot.slane %v1926, 4
        %v1929 = vshll.u32 %v1616, 16
        %v1931 = vrot.slane %v1929, 5
        %v1932 = vor.u32 %v1928, %v1931
        %v1933 = vrot.slane %v1932, 4
        %v1935 = vshll.u32 %v1617, 16
        %v1937 = vrot.slane %v1935, 5
        %v1938 = vsel %vm1660, %v1933, %v1937
        %v1939 = vshrl.u32 %v1617, 16
        %v1941 = vrot.slane %v1939, 4
        %v1942 = vor.u32 %v1941, %v1937
        %v1943 = vrot.slane %v1942, 4
        %v1945 = vshll.u32 %v1653, 16
        %v1947 = vrot.slane %v1945, 5
        %v1948 = vsel %vm1660, %v1943, %v1947
        %v1950 = vshrl.u32 %v1618, 16
        %v1952 = vrot.slane %v1950, 4
        %v1953 = vshll.u32 %v1618, 16
        %v1955 = vrot.slane %v1953, 5
        %v1956 = vor.u32 %v1952, %v1955
        %v1957 = vrot.slane %v1956, 4
        %v1959 = vshll.u32 %v1619, 16
        %v1961 = vrot.slane %v1959, 5
        %v1962 = vsel %vm1660, %v1957, %v1961
        %v1963 = vshrl.u32 %v1619, 16
        %v1965 = vrot.slane %v1963, 4
        %v1966 = vor.u32 %v1965, %v1961
        %v1967 = vrot.slane %v1966, 4
        %v1969 = vshll.u32 %v1654, 16
        %v1971 = vrot.slane %v1969, 5
        %v1972 = vsel %vm1660, %v1967, %v1971
        %v1974 = vshrl.u32 %v1620, 16
        %v1976 = vrot.slane %v1974, 4
        %v1977 = vshll.u32 %v1620, 16
        %v1979 = vrot.slane %v1977, 5
        %v1980 = vor.u32 %v1976, %v1979
        %v1981 = vrot.slane %v1980, 4
        %v1983 = vshll.u32 %v1621, 16
        %v1985 = vrot.slane %v1983, 5
        %v1986 = vsel %vm1660, %v1981, %v1985
        %v1987 = vshrl.u32 %v1621, 16
        %v1989 = vrot.slane %v1987, 4
        %v1990 = vor.u32 %v1989, %v1985
        %v1991 = vrot.slane %v1990, 4
        %v1993 = vshll.u32 %v1655, 16
        %v1995 = vrot.slane %v1993, 5
        %v1996 = vsel %vm1660, %v1991, %v1995
        %v1998 = vshrl.u32 %v1622, 16
        %v2000 = vrot.slane %v1998, 4
        %v2001 = vshll.u32 %v1622, 16
        %v2003 = vrot.slane %v2001, 5
        %v2004 = vor.u32 %v2000, %v2003
        %v2005 = vrot.slane %v2004, 4
        %v2007 = vshll.u32 %v1623, 16
        %v2009 = vrot.slane %v2007, 5
        %v2010 = vsel %vm1660, %v2005, %v2009
        %v2011 = vshrl.u32 %v1623, 16
        %v2013 = vrot.slane %v2011, 4
        %v2014 = vor.u32 %v2013, %v2009
        %v2015 = vrot.slane %v2014, 4
        %v2017 = vshll.u32 %v1656, 16
        %v2019 = vrot.slane %v2017, 5
        %v2020 = vsel %vm1660, %v2015, %v2019
        %v2022 = vshrl.u32 %v1624, 16
        %v2024 = vrot.slane %v2022, 4
        %v2025 = vshll.u32 %v1624, 16
        %v2027 = vrot.slane %v2025, 5
        %v2028 = vor.u32 %v2024, %v2027
        %v2029 = vrot.slane %v2028, 4
        %v2031 = vshll.u32 %v1625, 16
        %v2033 = vrot.slane %v2031, 5
        %v2034 = vsel %vm1660, %v2029, %v2033
        %v2035 = vshrl.u32 %v1625, 16
        %v2037 = vrot.slane %v2035, 4
        %v2038 = vor.u32 %v2037, %v2033
        %v2039 = vrot.slane %v2038, 4
        %v2041 = vshll.u32 %v1657, 16
        %v2043 = vrot.slane %v2041, 5
        %v2044 = vsel %vm1660, %v2039, %v2043
        %s2045 = scalar_lea.vmem [#allocation10], 64
        %v2046 = vld [vmem:[%s2045] sm:$0xf]
        %v2047 = vld [vmem:[%s2045 + $0x4] sm:$0xf]
        %v2048 = vld [vmem:[%s2045 + $0x8] sm:$0xf]
        %v2049 = vld [vmem:[%s2045 + $0xc] sm:$0xf]
        %v2050 = vld [vmem:[%s2045 + $0x10] sm:$0xf]
        %v2051 = vld [vmem:[%s2045 + $0x14] sm:$0xf]
        %v2052 = vld [vmem:[%s2045 + $0x18] sm:$0xf]
        %v2053 = vld [vmem:[%s2045 + $0x1c] sm:$0xf]
        %v2054 = vld [vmem:[%s2045 + $0x20] sm:$0xf]
        %v2055 = vld [vmem:[%s2045 + $0x24] sm:$0xf]
        %v2056 = vld [vmem:[%s2045 + $0x28] sm:$0xf]
        %v2057 = vld [vmem:[%s2045 + $0x2c] sm:$0xf]
        %v2058 = vld [vmem:[%s2045 + $0x30] sm:$0xf]
        %v2059 = vld [vmem:[%s2045 + $0x34] sm:$0xf]
        %v2060 = vld [vmem:[%s2045 + $0x38] sm:$0xf]
        %v2061 = vld [vmem:[%s2045 + $0x3c] sm:$0xf]
        %v2062 = vunpack.c.l.b16 %v1674
        %v2063 = vunpack.c.l.b16 %v1684
        %v2064 = vunpack.c.l.b16 %v1698
        %v2065 = vunpack.c.l.b16 %v1708
        %v2066 = vunpack.c.l.b16 %v1722
        %v2067 = vunpack.c.l.b16 %v1732
        %v2068 = vunpack.c.l.b16 %v1746
        %v2069 = vunpack.c.l.b16 %v1756
        %v2070 = vunpack.c.l.b16 %v1770
        %v2071 = vunpack.c.l.b16 %v1780
        %v2072 = vunpack.c.l.b16 %v1794
        %v2073 = vunpack.c.l.b16 %v1804
        %v2074 = vunpack.c.l.b16 %v1818
        %v2075 = vunpack.c.l.b16 %v1828
        %v2076 = vunpack.c.l.b16 %v1842
        %v2077 = vunpack.c.l.b16 %v1852
        %v2078 = vunpack.c.l.b16 %v1866
        %v2079 = vunpack.c.l.b16 %v1876
        %v2080 = vunpack.c.l.b16 %v1890
        %v2081 = vunpack.c.l.b16 %v1900
        %v2082 = vunpack.c.l.b16 %v1914
        %v2083 = vunpack.c.l.b16 %v1924
        %v2084 = vunpack.c.l.b16 %v1938
        %v2085 = vunpack.c.l.b16 %v1948
        %v2086 = vunpack.c.l.b16 %v1962
        %v2087 = vunpack.c.l.b16 %v1972
        %v2088 = vunpack.c.l.b16 %v1986
        %v2089 = vunpack.c.l.b16 %v1996
        %v2090 = vunpack.c.l.b16 %v2010
        %v2091 = vunpack.c.l.b16 %v2020
        %v2092 = vunpack.c.l.b16 %v2034
        %v2093 = vunpack.c.l.b16 %v2044
        %v2094 = vpack.c.b16 %v2063, %v2062
        %v2095 = vpack.c.b16 %v2065, %v2064
        %v2096 = vpack.c.b16 %v2067, %v2066
        %v2097 = vpack.c.b16 %v2069, %v2068
        %v2098 = vpack.c.b16 %v2071, %v2070
        %v2099 = vpack.c.b16 %v2073, %v2072
        %v2100 = vpack.c.b16 %v2075, %v2074
        %v2101 = vpack.c.b16 %v2077, %v2076
        %v2102 = vpack.c.b16 %v2079, %v2078
        %v2103 = vpack.c.b16 %v2081, %v2080
        %v2104 = vpack.c.b16 %v2083, %v2082
        %v2105 = vpack.c.b16 %v2085, %v2084
        %v2106 = vpack.c.b16 %v2087, %v2086
        %v2107 = vpack.c.b16 %v2089, %v2088
        %v2108 = vpack.c.b16 %v2091, %v2090
        %v2109 = vpack.c.b16 %v2093, %v2092
        %v2142 = vunpack.c.l.b16 %v2046
        %v2143 = vunpack.c.l.b16 %v2047
        %v2144 = vunpack.c.l.b16 %v2048
        %v2145 = vunpack.c.l.b16 %v2049
        %v2146 = vunpack.c.l.b16 %v2050
        %v2147 = vunpack.c.l.b16 %v2051
        %v2148 = vunpack.c.l.b16 %v2052
        %v2149 = vunpack.c.l.b16 %v2053
        %v2150 = vunpack.c.l.b16 %v2054
        %v2151 = vunpack.c.l.b16 %v2055
        %v2152 = vunpack.c.l.b16 %v2056
        %v2153 = vunpack.c.l.b16 %v2057
        %v2154 = vunpack.c.l.b16 %v2058
        %v2155 = vunpack.c.l.b16 %v2059
        %v2156 = vunpack.c.l.b16 %v2060
        %v2157 = vunpack.c.l.b16 %v2061
        %v2158 = vpack.c.b16 %v2143, %v2142
        %v2159 = vpack.c.b16 %v2145, %v2144
        %v2160 = vpack.c.b16 %v2147, %v2146
        %v2161 = vpack.c.b16 %v2149, %v2148
        %v2162 = vpack.c.b16 %v2151, %v2150
        %v2163 = vpack.c.b16 %v2153, %v2152
        %v2164 = vpack.c.b16 %v2155, %v2154
        %v2165 = vpack.c.b16 %v2157, %v2156
        %2174 = vmatprep.subr.bf16.mxu0 0
        %2175 = vmatpush1.bf16.msra.mxu0 %v2158
        %2176 = vmatprep.subr.bf16.mxu0 0
        %2177 = vmatpush1.bf16.msra.mxu0 %v2159
        %2178 = vmatprep.subr.bf16.mxu0 0
        %2179 = vmatpush1.bf16.msra.mxu0 %v2160
        %2180 = vmatprep.subr.bf16.mxu0 0
        %2181 = vmatpush1.bf16.msra.mxu0 %v2161
        %2182 = vmatprep.subr.bf16.mxu0 0
        %2183 = vmatpush1.bf16.msra.mxu0 %v2162
        %2184 = vmatprep.subr.bf16.mxu0 0
        %2185 = vmatpush1.bf16.msra.mxu0 %v2163
        %2186 = vmatprep.subr.bf16.mxu0 0
        %2187 = vmatpush1.bf16.msra.mxu0 %v2164
        %2188 = vmatprep.subr.bf16.mxu0 0
        %2189 = vmatpush1.bf16.msra.mxu0 %v2165
        %2190 = vmatprep.subr.bf16.mxu0 0
        %2191 = vmatpush1.bf16.msra.mxu0 0
        %2192 = vmatprep.subr.bf16.mxu0 0
        %2193 = vmatpush1.bf16.msra.mxu0 0
        %2194 = vmatprep.subr.bf16.mxu0 0
        %2195 = vmatpush1.bf16.msra.mxu0 0
        %2196 = vmatprep.subr.bf16.mxu0 0
        %2197 = vmatpush1.bf16.msra.mxu0 0
        %2198 = vmatprep.subr.bf16.mxu0 0
        %2199 = vmatpush1.bf16.msra.mxu0 0
        %2200 = vmatprep.subr.bf16.mxu0 0
        %2201 = vmatpush1.bf16.msra.mxu0 0
        %2202 = vmatprep.subr.bf16.mxu0 0
        %2203 = vmatpush1.bf16.msra.mxu0 0
        %2204 = vmatprep.subr.bf16.mxu0 0
        %2205 = vmatpush1.bf16.msra.mxu0 0
        %2206 = vmatprep.mubr.bf16.mxu0 0
        %2207 = vmatmul.mubr.bf16.gmra.mrb[0].mxu0 %v2094
        %v2208 = vpop.f32.mrb[0].mxu0
        %v2209 = vadd.f32 0.0, %v2208
        %v2210 = vpop.f32.mrb[0].mxu0
        %v2211 = vpop.f32.mrb[0].mxu0
        %v2212 = vadd.f32 0.0, %v2211
        %v2213 = vpop.f32.mrb[0].mxu0
        %2214 = vmatprep.mubr.bf16.mxu0 0
        %2215 = vmatmul.mubr.bf16.gmra.mrb[0].mxu0 %v2095
        %v2216 = vpop.f32.mrb[0].mxu0
        %v2217 = vadd.f32 0.0, %v2216
        %v2218 = vpop.f32.mrb[0].mxu0
        %v2219 = vpop.f32.mrb[0].mxu0
        %v2220 = vadd.f32 0.0, %v2219
        %v2221 = vpop.f32.mrb[0].mxu0
        %2222 = vmatprep.mubr.bf16.mxu0 0
        %2223 = vmatmul.mubr.bf16.gmra.mrb[0].mxu0 %v2096
        %v2224 = vpop.f32.mrb[0].mxu0
        %v2225 = vadd.f32 0.0, %v2224
        %v2226 = vpop.f32.mrb[0].mxu0
        %v2227 = vpop.f32.mrb[0].mxu0
        %v2228 = vadd.f32 0.0, %v2227
        %v2229 = vpop.f32.mrb[0].mxu0
        %2230 = vmatprep.mubr.bf16.mxu0 0
        %2231 = vmatmul.mubr.bf16.gmra.mrb[0].mxu0 %v2097
        %v2232 = vpop.f32.mrb[0].mxu0
        %v2233 = vadd.f32 0.0, %v2232
        %v2234 = vpop.f32.mrb[0].mxu0
        %v2235 = vpop.f32.mrb[0].mxu0
        %v2236 = vadd.f32 0.0, %v2235
        %v2237 = vpop.f32.mrb[0].mxu0
        %2238 = vmatprep.mubr.bf16.mxu0 0
        %2239 = vmatmul.mubr.bf16.gmra.mrb[0].mxu0 %v2098
        %v2240 = vpop.f32.mrb[0].mxu0
        %v2241 = vadd.f32 0.0, %v2240
        %v2242 = vpop.f32.mrb[0].mxu0
        %v2243 = vpop.f32.mrb[0].mxu0
        %v2244 = vadd.f32 0.0, %v2243
        %v2245 = vpop.f32.mrb[0].mxu0
        %2246 = vmatprep.mubr.bf16.mxu0 0
        %2247 = vmatmul.mubr.bf16.gmra.mrb[0].mxu0 %v2099
        %v2248 = vpop.f32.mrb[0].mxu0
        %v2249 = vadd.f32 0.0, %v2248
        %v2250 = vpop.f32.mrb[0].mxu0
        %v2251 = vpop.f32.mrb[0].mxu0
        %v2252 = vadd.f32 0.0, %v2251
        %v2253 = vpop.f32.mrb[0].mxu0
        %2254 = vmatprep.mubr.bf16.mxu0 0
        %2255 = vmatmul.mubr.bf16.gmra.mrb[0].mxu0 %v2100
        %v2256 = vpop.f32.mrb[0].mxu0
        %v2257 = vadd.f32 0.0, %v2256
        %v2258 = vpop.f32.mrb[0].mxu0
        %v2259 = vpop.f32.mrb[0].mxu0
        %v2260 = vadd.f32 0.0, %v2259
        %v2261 = vpop.f32.mrb[0].mxu0
        %2262 = vmatprep.mubr.bf16.mxu0 0
        %2263 = vmatmul.mubr.bf16.gmra.mrb[0].mxu0 %v2101
        %v2264 = vpop.f32.mrb[0].mxu0
        %v2265 = vadd.f32 0.0, %v2264
        %v2266 = vpop.f32.mrb[0].mxu0
        %v2267 = vpop.f32.mrb[0].mxu0
        %v2268 = vadd.f32 0.0, %v2267
        %v2269 = vpop.f32.mrb[0].mxu0
        %2270 = vmatprep.mubr.bf16.mxu0 0
        %2271 = vmatmul.mubr.bf16.gmra.mrb[0].mxu0 %v2102
        %v2272 = vpop.f32.mrb[0].mxu0
        %v2273 = vadd.f32 0.0, %v2272
        %v2274 = vpop.f32.mrb[0].mxu0
        %v2275 = vpop.f32.mrb[0].mxu0
        %v2276 = vadd.f32 0.0, %v2275
        %v2277 = vpop.f32.mrb[0].mxu0
        %2278 = vmatprep.mubr.bf16.mxu0 0
        %2279 = vmatmul.mubr.bf16.gmra.mrb[0].mxu0 %v2103
        %v2280 = vpop.f32.mrb[0].mxu0
        %v2281 = vadd.f32 0.0, %v2280
        %v2282 = vpop.f32.mrb[0].mxu0
        %v2283 = vpop.f32.mrb[0].mxu0
        %v2284 = vadd.f32 0.0, %v2283
        %v2285 = vpop.f32.mrb[0].mxu0
        %2286 = vmatprep.mubr.bf16.mxu0 0
        %2287 = vmatmul.mubr.bf16.gmra.mrb[0].mxu0 %v2104
        %v2288 = vpop.f32.mrb[0].mxu0
        %v2289 = vadd.f32 0.0, %v2288
        %v2290 = vpop.f32.mrb[0].mxu0
        %v2291 = vpop.f32.mrb[0].mxu0
        %v2292 = vadd.f32 0.0, %v2291
        %v2293 = vpop.f32.mrb[0].mxu0
        %2294 = vmatprep.mubr.bf16.mxu0 0
        %2295 = vmatmul.mubr.bf16.gmra.mrb[0].mxu0 %v2105
        %v2296 = vpop.f32.mrb[0].mxu0
        %v2297 = vadd.f32 0.0, %v2296
        %v2298 = vpop.f32.mrb[0].mxu0
        %v2299 = vpop.f32.mrb[0].mxu0
        %v2300 = vadd.f32 0.0, %v2299
        %v2301 = vpop.f32.mrb[0].mxu0
        %2302 = vmatprep.mubr.bf16.mxu0 0
        %2303 = vmatmul.mubr.bf16.gmra.mrb[0].mxu0 %v2106
        %v2304 = vpop.f32.mrb[0].mxu0
        %v2305 = vadd.f32 0.0, %v2304
        %v2306 = vpop.f32.mrb[0].mxu0
        %v2307 = vpop.f32.mrb[0].mxu0
        %v2308 = vadd.f32 0.0, %v2307
        %v2309 = vpop.f32.mrb[0].mxu0
        %2310 = vmatprep.mubr.bf16.mxu0 0
        %2311 = vmatmul.mubr.bf16.gmra.mrb[0].mxu0 %v2107
        %v2312 = vpop.f32.mrb[0].mxu0
        %v2313 = vadd.f32 0.0, %v2312
        %v2314 = vpop.f32.mrb[0].mxu0
        %v2315 = vpop.f32.mrb[0].mxu0
        %v2316 = vadd.f32 0.0, %v2315
        %v2317 = vpop.f32.mrb[0].mxu0
        %2318 = vmatprep.mubr.bf16.mxu0 0
        %2319 = vmatmul.mubr.bf16.gmra.mrb[0].mxu0 %v2108
        %v2320 = vpop.f32.mrb[0].mxu0
        %v2321 = vadd.f32 0.0, %v2320
        %v2322 = vpop.f32.mrb[0].mxu0
        %v2323 = vpop.f32.mrb[0].mxu0
        %v2324 = vadd.f32 0.0, %v2323
        %v2325 = vpop.f32.mrb[0].mxu0
        %2326 = vmatprep.mubr.bf16.mxu0 0
        %2327 = vmatmul.mubr.bf16.gmra.mrb[0].mxu0 %v2109
        %v2328 = vpop.f32.mrb[0].mxu0
        %v2329 = vadd.f32 0.0, %v2328
        %v2330 = vpop.f32.mrb[0].mxu0
        %v2331 = vpop.f32.mrb[0].mxu0
        %v2332 = vadd.f32 0.0, %v2331
        %v2333 = vpop.f32.mrb[0].mxu0
        %2334 = vdwg.mxu0
        %v2367 = vunpack.c.l.b16 %v1594
        %v2368 = vunpack.c.l.b16 %v1595
        %v2369 = vunpack.c.l.b16 %v1596
        %v2370 = vunpack.c.l.b16 %v1597
        %v2371 = vunpack.c.l.b16 %v1598
        %v2372 = vunpack.c.l.b16 %v1599
        %v2373 = vunpack.c.l.b16 %v1600
        %v2374 = vunpack.c.l.b16 %v1601
        %v2375 = vunpack.c.l.b16 %v1602
        %v2376 = vunpack.c.l.b16 %v1603
        %v2377 = vunpack.c.l.b16 %v1604
        %v2378 = vunpack.c.l.b16 %v1605
        %v2379 = vunpack.c.l.b16 %v1606
        %v2380 = vunpack.c.l.b16 %v1607
        %v2381 = vunpack.c.l.b16 %v1608
        %v2382 = vunpack.c.l.b16 %v1609
        %v2383 = vunpack.c.l.b16 %v1610
        %v2384 = vunpack.c.l.b16 %v1611
        %v2385 = vunpack.c.l.b16 %v1612
        %v2386 = vunpack.c.l.b16 %v1613
        %v2387 = vunpack.c.l.b16 %v1614
        %v2388 = vunpack.c.l.b16 %v1615
        %v2389 = vunpack.c.l.b16 %v1616
        %v2390 = vunpack.c.l.b16 %v1617
        %v2391 = vunpack.c.l.b16 %v1618
        %v2392 = vunpack.c.l.b16 %v1619
        %v2393 = vunpack.c.l.b16 %v1620
        %v2394 = vunpack.c.l.b16 %v1621
        %v2395 = vunpack.c.l.b16 %v1622
        %v2396 = vunpack.c.l.b16 %v1623
        %v2397 = vunpack.c.l.b16 %v1624
        %v2398 = vunpack.c.l.b16 %v1625
        %v2399 = vpack.c.b16 %v2368, %v2367
        %v2400 = vpack.c.b16 %v2370, %v2369
        %v2401 = vpack.c.b16 %v2372, %v2371
        %v2402 = vpack.c.b16 %v2374, %v2373
        %v2403 = vpack.c.b16 %v2376, %v2375
        %v2404 = vpack.c.b16 %v2378, %v2377
        %v2405 = vpack.c.b16 %v2380, %v2379
        %v2406 = vpack.c.b16 %v2382, %v2381
        %v2407 = vpack.c.b16 %v2384, %v2383
        %v2408 = vpack.c.b16 %v2386, %v2385
        %v2409 = vpack.c.b16 %v2388, %v2387
        %v2410 = vpack.c.b16 %v2390, %v2389
        %v2411 = vpack.c.b16 %v2392, %v2391
        %v2412 = vpack.c.b16 %v2394, %v2393
        %v2413 = vpack.c.b16 %v2396, %v2395
        %v2414 = vpack.c.b16 %v2398, %v2397
        %v2447 = vunpack.c.l.b16 %v1626
        %v2448 = vunpack.c.l.b16 %v1627
        %v2449 = vunpack.c.l.b16 %v1628
        %v2450 = vunpack.c.l.b16 %v1629
        %v2451 = vunpack.c.l.b16 %v1630
        %v2452 = vunpack.c.l.b16 %v1631
        %v2453 = vunpack.c.l.b16 %v1632
        %v2454 = vunpack.c.l.b16 %v1633
        %v2455 = vunpack.c.l.b16 %v1634
        %v2456 = vunpack.c.l.b16 %v1635
        %v2457 = vunpack.c.l.b16 %v1636
        %v2458 = vunpack.c.l.b16 %v1637
        %v2459 = vunpack.c.l.b16 %v1638
        %v2460 = vunpack.c.l.b16 %v1639
        %v2461 = vunpack.c.l.b16 %v1640
        %v2462 = vunpack.c.l.b16 %v1641
        %v2463 = vpack.c.b16 %v2448, %v2447
        %v2464 = vpack.c.b16 %v2450, %v2449
        %v2465 = vpack.c.b16 %v2452, %v2451
        %v2466 = vpack.c.b16 %v2454, %v2453
        %v2467 = vpack.c.b16 %v2456, %v2455
        %v2468 = vpack.c.b16 %v2458, %v2457
        %v2469 = vpack.c.b16 %v2460, %v2459
        %v2470 = vpack.c.b16 %v2462, %v2461
        %2479 = vmatprep.subr.bf16.mxu0 0
        %2480 = vmatpush1.bf16.msra.mxu0 %v2463
        %2481 = vmatprep.subr.bf16.mxu0 0
        %2482 = vmatpush1.bf16.msra.mxu0 %v2464
        %2483 = vmatprep.subr.bf16.mxu0 0
        %2484 = vmatpush1.bf16.msra.mxu0 %v2465
        %2485 = vmatprep.subr.bf16.mxu0 0
        %2486 = vmatpush1.bf16.msra.mxu0 %v2466
        %2487 = vmatprep.subr.bf16.mxu0 0
        %2488 = vmatpush1.bf16.msra.mxu0 %v2467
        %2489 = vmatprep.subr.bf16.mxu0 0
        %2490 = vmatpush1.bf16.msra.mxu0 %v2468
        %2491 = vmatprep.subr.bf16.mxu0 0
        %2492 = vmatpush1.bf16.msra.mxu0 %v2469
        %2493 = vmatprep.subr.bf16.mxu0 0
        %2494 = vmatpush1.bf16.msra.mxu0 %v2470
        %2495 = vmatprep.subr.bf16.mxu0 0
        %2496 = vmatpush1.bf16.msra.mxu0 0
        %2497 = vmatprep.subr.bf16.mxu0 0
        %2498 = vmatpush1.bf16.msra.mxu0 0
        %2499 = vmatprep.subr.bf16.mxu0 0
        %2500 = vmatpush1.bf16.msra.mxu0 0
        %2501 = vmatprep.subr.bf16.mxu0 0
        %2502 = vmatpush1.bf16.msra.mxu0 0
        %2503 = vmatprep.subr.bf16.mxu0 0
        %2504 = vmatpush1.bf16.msra.mxu0 0
        %2505 = vmatprep.subr.bf16.mxu0 0
        %2506 = vmatpush1.bf16.msra.mxu0 0
        %2507 = vmatprep.subr.bf16.mxu0 0
        %2508 = vmatpush1.bf16.msra.mxu0 0
        %2509 = vmatprep.subr.bf16.mxu0 0
        %2510 = vmatpush1.bf16.msra.mxu0 0
        %2511 = vmatprep.mubr.bf16.mxu0 0
        %2512 = vmatmul.mubr.bf16.gmra.mrb[0].mxu0 %v2399
        %v2513 = vpop.f32.mrb[0].mxu0
        %v2514 = vadd.f32 %v2209, %v2513
        %v2515 = vpop.f32.mrb[0].mxu0
        %v2516 = vpop.f32.mrb[0].mxu0
        %v2517 = vadd.f32 %v2212, %v2516
        %v2518 = vpop.f32.mrb[0].mxu0
        %2519 = vmatprep.mubr.bf16.mxu0 0
        %2520 = vmatmul.mubr.bf16.gmra.mrb[0].mxu0 %v2400
        %v2521 = vpop.f32.mrb[0].mxu0
        %v2522 = vadd.f32 %v2217, %v2521
        %v2523 = vpop.f32.mrb[0].mxu0
        %v2524 = vpop.f32.mrb[0].mxu0
        %v2525 = vadd.f32 %v2220, %v2524
        %v2526 = vpop.f32.mrb[0].mxu0
        %2527 = vmatprep.mubr.bf16.mxu0 0
        %2528 = vmatmul.mubr.bf16.gmra.mrb[0].mxu0 %v2401
        %v2529 = vpop.f32.mrb[0].mxu0
        %v2530 = vadd.f32 %v2225, %v2529
        %v2531 = vpop.f32.mrb[0].mxu0
        %v2532 = vpop.f32.mrb[0].mxu0
        %v2533 = vadd.f32 %v2228, %v2532
        %v2534 = vpop.f32.mrb[0].mxu0
        %2535 = vmatprep.mubr.bf16.mxu0 0
        %2536 = vmatmul.mubr.bf16.gmra.mrb[0].mxu0 %v2402
        %v2537 = vpop.f32.mrb[0].mxu0
        %v2538 = vadd.f32 %v2233, %v2537
        %v2539 = vpop.f32.mrb[0].mxu0
        %v2540 = vpop.f32.mrb[0].mxu0
        %v2541 = vadd.f32 %v2236, %v2540
        %v2542 = vpop.f32.mrb[0].mxu0
        %2543 = vmatprep.mubr.bf16.mxu0 0
        %2544 = vmatmul.mubr.bf16.gmra.mrb[0].mxu0 %v2403
        %v2545 = vpop.f32.mrb[0].mxu0
        %v2546 = vadd.f32 %v2241, %v2545
        %v2547 = vpop.f32.mrb[0].mxu0
        %v2548 = vpop.f32.mrb[0].mxu0
        %v2549 = vadd.f32 %v2244, %v2548
        %v2550 = vpop.f32.mrb[0].mxu0
        %2551 = vmatprep.mubr.bf16.mxu0 0
        %2552 = vmatmul.mubr.bf16.gmra.mrb[0].mxu0 %v2404
        %v2553 = vpop.f32.mrb[0].mxu0
        %v2554 = vadd.f32 %v2249, %v2553
        %v2555 = vpop.f32.mrb[0].mxu0
        %v2556 = vpop.f32.mrb[0].mxu0
        %v2557 = vadd.f32 %v2252, %v2556
        %v2558 = vpop.f32.mrb[0].mxu0
        %2559 = vmatprep.mubr.bf16.mxu0 0
        %2560 = vmatmul.mubr.bf16.gmra.mrb[0].mxu0 %v2405
        %v2561 = vpop.f32.mrb[0].mxu0
        %v2562 = vadd.f32 %v2257, %v2561
        %v2563 = vpop.f32.mrb[0].mxu0
        %v2564 = vpop.f32.mrb[0].mxu0
        %v2565 = vadd.f32 %v2260, %v2564
        %v2566 = vpop.f32.mrb[0].mxu0
        %2567 = vmatprep.mubr.bf16.mxu0 0
        %2568 = vmatmul.mubr.bf16.gmra.mrb[0].mxu0 %v2406
        %v2569 = vpop.f32.mrb[0].mxu0
        %v2570 = vadd.f32 %v2265, %v2569
        %v2571 = vpop.f32.mrb[0].mxu0
        %v2572 = vpop.f32.mrb[0].mxu0
        %v2573 = vadd.f32 %v2268, %v2572
        %v2574 = vpop.f32.mrb[0].mxu0
        %2575 = vmatprep.mubr.bf16.mxu0 0
        %2576 = vmatmul.mubr.bf16.gmra.mrb[0].mxu0 %v2407
        %v2577 = vpop.f32.mrb[0].mxu0
        %v2578 = vadd.f32 %v2273, %v2577
        %v2579 = vpop.f32.mrb[0].mxu0
        %v2580 = vpop.f32.mrb[0].mxu0
        %v2581 = vadd.f32 %v2276, %v2580
        %v2582 = vpop.f32.mrb[0].mxu0
        %2583 = vmatprep.mubr.bf16.mxu0 0
        %2584 = vmatmul.mubr.bf16.gmra.mrb[0].mxu0 %v2408
        %v2585 = vpop.f32.mrb[0].mxu0
        %v2586 = vadd.f32 %v2281, %v2585
        %v2587 = vpop.f32.mrb[0].mxu0
        %v2588 = vpop.f32.mrb[0].mxu0
        %v2589 = vadd.f32 %v2284, %v2588
        %v2590 = vpop.f32.mrb[0].mxu0
        %2591 = vmatprep.mubr.bf16.mxu0 0
        %2592 = vmatmul.mubr.bf16.gmra.mrb[0].mxu0 %v2409
        %v2593 = vpop.f32.mrb[0].mxu0
        %v2594 = vadd.f32 %v2289, %v2593
        %v2595 = vpop.f32.mrb[0].mxu0
        %v2596 = vpop.f32.mrb[0].mxu0
        %v2597 = vadd.f32 %v2292, %v2596
        %v2598 = vpop.f32.mrb[0].mxu0
        %2599 = vmatprep.mubr.bf16.mxu0 0
        %2600 = vmatmul.mubr.bf16.gmra.mrb[0].mxu0 %v2410
        %v2601 = vpop.f32.mrb[0].mxu0
        %v2602 = vadd.f32 %v2297, %v2601
        %v2603 = vpop.f32.mrb[0].mxu0
        %v2604 = vpop.f32.mrb[0].mxu0
        %v2605 = vadd.f32 %v2300, %v2604
        %v2606 = vpop.f32.mrb[0].mxu0
        %2607 = vmatprep.mubr.bf16.mxu0 0
        %2608 = vmatmul.mubr.bf16.gmra.mrb[0].mxu0 %v2411
        %v2609 = vpop.f32.mrb[0].mxu0
        %v2610 = vadd.f32 %v2305, %v2609
        %v2611 = vpop.f32.mrb[0].mxu0
        %v2612 = vpop.f32.mrb[0].mxu0
        %v2613 = vadd.f32 %v2308, %v2612
        %v2614 = vpop.f32.mrb[0].mxu0
        %2615 = vmatprep.mubr.bf16.mxu0 0
        %2616 = vmatmul.mubr.bf16.gmra.mrb[0].mxu0 %v2412
        %v2617 = vpop.f32.mrb[0].mxu0
        %v2618 = vadd.f32 %v2313, %v2617
        %v2619 = vpop.f32.mrb[0].mxu0
        %v2620 = vpop.f32.mrb[0].mxu0
        %v2621 = vadd.f32 %v2316, %v2620
        %v2622 = vpop.f32.mrb[0].mxu0
        %2623 = vmatprep.mubr.bf16.mxu0 0
        %2624 = vmatmul.mubr.bf16.gmra.mrb[0].mxu0 %v2413
        %v2625 = vpop.f32.mrb[0].mxu0
        %v2626 = vadd.f32 %v2321, %v2625
        %v2627 = vpop.f32.mrb[0].mxu0
        %v2628 = vpop.f32.mrb[0].mxu0
        %v2629 = vadd.f32 %v2324, %v2628
        %v2630 = vpop.f32.mrb[0].mxu0
        %2631 = vmatprep.mubr.bf16.mxu0 0
        %2632 = vmatmul.mubr.bf16.gmra.mrb[0].mxu0 %v2414
        %v2633 = vpop.f32.mrb[0].mxu0
        %v2634 = vadd.f32 %v2329, %v2633
        %v2635 = vpop.f32.mrb[0].mxu0
        %v2636 = vpop.f32.mrb[0].mxu0
        %v2637 = vadd.f32 %v2332, %v2636
        %v2638 = vpop.f32.mrb[0].mxu0
        %2639 = vdwg.mxu0
        %v2640 = vld [vmem:[#allocation2] sm:$0xe]
        %v2641 = vld [vmem:[#allocation2 + $0xc] sm:$0xe]
        %v2642 = vld [vmem:[#allocation2 + $0x18] sm:$0xe]
        %v2643 = vld [vmem:[#allocation2 + $0x24] sm:$0xe]
        %v2644 = vld [vmem:[#allocation2 + $0x30] sm:$0xe]
        %v2645 = vld [vmem:[#allocation2 + $0x3c] sm:$0xe]
        %v2646 = vld [vmem:[#allocation2 + $0x48] sm:$0xe]
        %v2647 = vld [vmem:[#allocation2 + $0x54] sm:$0xe]
        %v2648 = vld [vmem:[#allocation2 + $0x60] sm:$0xe]
        %v2649 = vld [vmem:[#allocation2 + $0x6c] sm:$0xe]
        %v2650 = vld [vmem:[#allocation2 + $0x78] sm:$0xe]
        %v2651 = vld [vmem:[#allocation2 + $0x84] sm:$0xe]
        %v2652 = vld [vmem:[#allocation2 + $0x90] sm:$0xe]
        %v2653 = vld [vmem:[#allocation2 + $0x9c] sm:$0xe]
        %v2654 = vld [vmem:[#allocation2 + $0xa8] sm:$0xe]
        %v2655 = vld [vmem:[#allocation2 + $0xb4] sm:$0xe]
        %vm2688 = vcmask 1042432
        %vm2689 = vcmask 1046532
        %vm2690 = vmor %vm2688, %vm2689
        %v2691 = vrot.slane %v2640, 5
        %v2692 = vrot.slane %v2691, 4
        %v2693 = vrot.slane %v1595, 5
        %v2694 = vsel %vm2690, %v2692, %v2693
        %v2695 = vrot.slane %v2693, 4
        %v2696 = vrot.slane %v1642, 5
        %v2697 = vsel %vm2690, %v2695, %v2696
        %v2698 = vrot.slane %v2641, 5
        %v2699 = vrot.slane %v2698, 4
        %v2700 = vrot.slane %v1597, 5
        %v2701 = vsel %vm2690, %v2699, %v2700
        %v2702 = vrot.slane %v2700, 4
        %v2703 = vrot.slane %v1643, 5
        %v2704 = vsel %vm2690, %v2702, %v2703
        %v2705 = vrot.slane %v2642, 5
        %v2706 = vrot.slane %v2705, 4
        %v2707 = vrot.slane %v1599, 5
        %v2708 = vsel %vm2690, %v2706, %v2707
        %v2709 = vrot.slane %v2707, 4
        %v2710 = vrot.slane %v1644, 5
        %v2711 = vsel %vm2690, %v2709, %v2710
        %v2712 = vrot.slane %v2643, 5
        %v2713 = vrot.slane %v2712, 4
        %v2714 = vrot.slane %v1601, 5
        %v2715 = vsel %vm2690, %v2713, %v2714
        %v2716 = vrot.slane %v2714, 4
        %v2717 = vrot.slane %v1645, 5
        %v2718 = vsel %vm2690, %v2716, %v2717
        %v2719 = vrot.slane %v2644, 5
        %v2720 = vrot.slane %v2719, 4
        %v2721 = vrot.slane %v1603, 5
        %v2722 = vsel %vm2690, %v2720, %v2721
        %v2723 = vrot.slane %v2721, 4
        %v2724 = vrot.slane %v1646, 5
        %v2725 = vsel %vm2690, %v2723, %v2724
        %v2726 = vrot.slane %v2645, 5
        %v2727 = vrot.slane %v2726, 4
        %v2728 = vrot.slane %v1605, 5
        %v2729 = vsel %vm2690, %v2727, %v2728
        %v2730 = vrot.slane %v2728, 4
        %v2731 = vrot.slane %v1647, 5
        %v2732 = vsel %vm2690, %v2730, %v2731
        %v2733 = vrot.slane %v2646, 5
        %v2734 = vrot.slane %v2733, 4
        %v2735 = vrot.slane %v1607, 5
        %v2736 = vsel %vm2690, %v2734, %v2735
        %v2737 = vrot.slane %v2735, 4
        %v2738 = vrot.slane %v1648, 5
        %v2739 = vsel %vm2690, %v2737, %v2738
        %v2740 = vrot.slane %v2647, 5
        %v2741 = vrot.slane %v2740, 4
        %v2742 = vrot.slane %v1609, 5
        %v2743 = vsel %vm2690, %v2741, %v2742
        %v2744 = vrot.slane %v2742, 4
        %v2745 = vrot.slane %v1649, 5
        %v2746 = vsel %vm2690, %v2744, %v2745
        %v2747 = vrot.slane %v2648, 5
        %v2748 = vrot.slane %v2747, 4
        %v2749 = vrot.slane %v1611, 5
        %v2750 = vsel %vm2690, %v2748, %v2749
        %v2751 = vrot.slane %v2749, 4
        %v2752 = vrot.slane %v1650, 5
        %v2753 = vsel %vm2690, %v2751, %v2752
        %v2754 = vrot.slane %v2649, 5
        %v2755 = vrot.slane %v2754, 4
        %v2756 = vrot.slane %v1613, 5
        %v2757 = vsel %vm2690, %v2755, %v2756
        %v2758 = vrot.slane %v2756, 4
        %v2759 = vrot.slane %v1651, 5
        %v2760 = vsel %vm2690, %v2758, %v2759
        %v2761 = vrot.slane %v2650, 5
        %v2762 = vrot.slane %v2761, 4
        %v2763 = vrot.slane %v1615, 5
        %v2764 = vsel %vm2690, %v2762, %v2763
        %v2765 = vrot.slane %v2763, 4
        %v2766 = vrot.slane %v1652, 5
        %v2767 = vsel %vm2690, %v2765, %v2766
        %v2768 = vrot.slane %v2651, 5
        %v2769 = vrot.slane %v2768, 4
        %v2770 = vrot.slane %v1617, 5
        %v2771 = vsel %vm2690, %v2769, %v2770
        %v2772 = vrot.slane %v2770, 4
        %v2773 = vrot.slane %v1653, 5
        %v2774 = vsel %vm2690, %v2772, %v2773
        %v2775 = vrot.slane %v2652, 5
        %v2776 = vrot.slane %v2775, 4
        %v2777 = vrot.slane %v1619, 5
        %v2778 = vsel %vm2690, %v2776, %v2777
        %v2779 = vrot.slane %v2777, 4
        %v2780 = vrot.slane %v1654, 5
        %v2781 = vsel %vm2690, %v2779, %v2780
        %v2782 = vrot.slane %v2653, 5
        %v2783 = vrot.slane %v2782, 4
        %v2784 = vrot.slane %v1621, 5
        %v2785 = vsel %vm2690, %v2783, %v2784
        %v2786 = vrot.slane %v2784, 4
        %v2787 = vrot.slane %v1655, 5
        %v2788 = vsel %vm2690, %v2786, %v2787
        %v2789 = vrot.slane %v2654, 5
        %v2790 = vrot.slane %v2789, 4
        %v2791 = vrot.slane %v1623, 5
        %v2792 = vsel %vm2690, %v2790, %v2791
        %v2793 = vrot.slane %v2791, 4
        %v2794 = vrot.slane %v1656, 5
        %v2795 = vsel %vm2690, %v2793, %v2794
        %v2796 = vrot.slane %v2655, 5
        %v2797 = vrot.slane %v2796, 4
        %v2798 = vrot.slane %v1625, 5
        %v2799 = vsel %vm2690, %v2797, %v2798
        %v2800 = vrot.slane %v2798, 4
        %v2801 = vrot.slane %v1657, 5
        %v2802 = vsel %vm2690, %v2800, %v2801
        %s2803 = scalar_lea.vmem [#allocation10], 128
        %v2804 = vld [vmem:[%s2803] sm:$0xf]
        %v2805 = vld [vmem:[%s2803 + $0x4] sm:$0xf]
        %v2806 = vld [vmem:[%s2803 + $0x8] sm:$0xf]
        %v2807 = vld [vmem:[%s2803 + $0xc] sm:$0xf]
        %v2808 = vld [vmem:[%s2803 + $0x10] sm:$0xf]
        %v2809 = vld [vmem:[%s2803 + $0x14] sm:$0xf]
        %v2810 = vld [vmem:[%s2803 + $0x18] sm:$0xf]
        %v2811 = vld [vmem:[%s2803 + $0x1c] sm:$0xf]
        %v2812 = vld [vmem:[%s2803 + $0x20] sm:$0xf]
        %v2813 = vld [vmem:[%s2803 + $0x24] sm:$0xf]
        %v2814 = vld [vmem:[%s2803 + $0x28] sm:$0xf]
        %v2815 = vld [vmem:[%s2803 + $0x2c] sm:$0xf]
        %v2816 = vld [vmem:[%s2803 + $0x30] sm:$0xf]
        %v2817 = vld [vmem:[%s2803 + $0x34] sm:$0xf]
        %v2818 = vld [vmem:[%s2803 + $0x38] sm:$0xf]
        %v2819 = vld [vmem:[%s2803 + $0x3c] sm:$0xf]
        %v2820 = vunpack.c.l.b16 %v2694
        %v2821 = vunpack.c.l.b16 %v2697
        %v2822 = vunpack.c.l.b16 %v2701
        %v2823 = vunpack.c.l.b16 %v2704
        %v2824 = vunpack.c.l.b16 %v2708
        %v2825 = vunpack.c.l.b16 %v2711
        %v2826 = vunpack.c.l.b16 %v2715
        %v2827 = vunpack.c.l.b16 %v2718
        %v2828 = vunpack.c.l.b16 %v2722
        %v2829 = vunpack.c.l.b16 %v2725
        %v2830 = vunpack.c.l.b16 %v2729
        %v2831 = vunpack.c.l.b16 %v2732
        %v2832 = vunpack.c.l.b16 %v2736
        %v2833 = vunpack.c.l.b16 %v2739
        %v2834 = vunpack.c.l.b16 %v2743
        %v2835 = vunpack.c.l.b16 %v2746
        %v2836 = vunpack.c.l.b16 %v2750
        %v2837 = vunpack.c.l.b16 %v2753
        %v2838 = vunpack.c.l.b16 %v2757
        %v2839 = vunpack.c.l.b16 %v2760
        %v2840 = vunpack.c.l.b16 %v2764
        %v2841 = vunpack.c.l.b16 %v2767
        %v2842 = vunpack.c.l.b16 %v2771
        %v2843 = vunpack.c.l.b16 %v2774
        %v2844 = vunpack.c.l.b16 %v2778
        %v2845 = vunpack.c.l.b16 %v2781
        %v2846 = vunpack.c.l.b16 %v2785
        %v2847 = vunpack.c.l.b16 %v2788
        %v2848 = vunpack.c.l.b16 %v2792
        %v2849 = vunpack.c.l.b16 %v2795
        %v2850 = vunpack.c.l.b16 %v2799
        %v2851 = vunpack.c.l.b16 %v2802
        %v2852 = vpack.c.b16 %v2821, %v2820
        %v2853 = vpack.c.b16 %v2823, %v2822
        %v2854 = vpack.c.b16 %v2825, %v2824
        %v2855 = vpack.c.b16 %v2827, %v2826
        %v2856 = vpack.c.b16 %v2829, %v2828
        %v2857 = vpack.c.b16 %v2831, %v2830
        %v2858 = vpack.c.b16 %v2833, %v2832
        %v2859 = vpack.c.b16 %v2835, %v2834
        %v2860 = vpack.c.b16 %v2837, %v2836
        %v2861 = vpack.c.b16 %v2839, %v2838
        %v2862 = vpack.c.b16 %v2841, %v2840
        %v2863 = vpack.c.b16 %v2843, %v2842
        %v2864 = vpack.c.b16 %v2845, %v2844
        %v2865 = vpack.c.b16 %v2847, %v2846
        %v2866 = vpack.c.b16 %v2849, %v2848
        %v2867 = vpack.c.b16 %v2851, %v2850
        %v2900 = vunpack.c.l.b16 %v2804
        %v2901 = vunpack.c.l.b16 %v2805
        %v2902 = vunpack.c.l.b16 %v2806
        %v2903 = vunpack.c.l.b16 %v2807
        %v2904 = vunpack.c.l.b16 %v2808
        %v2905 = vunpack.c.l.b16 %v2809
        %v2906 = vunpack.c.l.b16 %v2810
        %v2907 = vunpack.c.l.b16 %v2811
        %v2908 = vunpack.c.l.b16 %v2812
        %v2909 = vunpack.c.l.b16 %v2813
        %v2910 = vunpack.c.l.b16 %v2814
        %v2911 = vunpack.c.l.b16 %v2815
        %v2912 = vunpack.c.l.b16 %v2816
        %v2913 = vunpack.c.l.b16 %v2817
        %v2914 = vunpack.c.l.b16 %v2818
        %v2915 = vunpack.c.l.b16 %v2819
        %v2916 = vpack.c.b16 %v2901, %v2900
        %v2917 = vpack.c.b16 %v2903, %v2902
        %v2918 = vpack.c.b16 %v2905, %v2904
        %v2919 = vpack.c.b16 %v2907, %v2906
        %v2920 = vpack.c.b16 %v2909, %v2908
        %v2921 = vpack.c.b16 %v2911, %v2910
        %v2922 = vpack.c.b16 %v2913, %v2912
        %v2923 = vpack.c.b16 %v2915, %v2914
        %2932 = vmatprep.subr.bf16.mxu0 0
        %2933 = vmatpush1.bf16.msra.mxu0 %v2916
        %2934 = vmatprep.subr.bf16.mxu0 0
        %2935 = vmatpush1.bf16.msra.mxu0 %v2917
        %2936 = vmatprep.subr.bf16.mxu0 0
        %2937 = vmatpush1.bf16.msra.mxu0 %v2918
        %2938 = vmatprep.subr.bf16.mxu0 0
        %2939 = vmatpush1.bf16.msra.mxu0 %v2919
        %2940 = vmatprep.subr.bf16.mxu0 0
        %2941 = vmatpush1.bf16.msra.mxu0 %v2920
        %2942 = vmatprep.subr.bf16.mxu0 0
        %2943 = vmatpush1.bf16.msra.mxu0 %v2921
        %2944 = vmatprep.subr.bf16.mxu0 0
        %2945 = vmatpush1.bf16.msra.mxu0 %v2922
        %2946 = vmatprep.subr.bf16.mxu0 0
        %2947 = vmatpush1.bf16.msra.mxu0 %v2923
        %2948 = vmatprep.subr.bf16.mxu0 0
        %2949 = vmatpush1.bf16.msra.mxu0 0
        %2950 = vmatprep.subr.bf16.mxu0 0
        %2951 = vmatpush1.bf16.msra.mxu0 0
        %2952 = vmatprep.subr.bf16.mxu0 0
        %2953 = vmatpush1.bf16.msra.mxu0 0
        %2954 = vmatprep.subr.bf16.mxu0 0
        %2955 = vmatpush1.bf16.msra.mxu0 0
        %2956 = vmatprep.subr.bf16.mxu0 0
        %2957 = vmatpush1.bf16.msra.mxu0 0
        %2958 = vmatprep.subr.bf16.mxu0 0
        %2959 = vmatpush1.bf16.msra.mxu0 0
        %2960 = vmatprep.subr.bf16.mxu0 0
        %2961 = vmatpush1.bf16.msra.mxu0 0
        %2962 = vmatprep.subr.bf16.mxu0 0
        %2963 = vmatpush1.bf16.msra.mxu0 0
        %2964 = vmatprep.mubr.bf16.mxu0 0
        %2965 = vmatmul.mubr.bf16.gmra.mrb[0].mxu0 %v2852
        %v2966 = vpop.f32.mrb[0].mxu0
        %v2967 = vadd.f32 0.0, %v2966
        %v2968 = vpop.f32.mrb[0].mxu0
        %v2969 = vpop.f32.mrb[0].mxu0
        %v2970 = vadd.f32 0.0, %v2969
        %v2971 = vpop.f32.mrb[0].mxu0
        %2972 = vmatprep.mubr.bf16.mxu0 0
        %2973 = vmatmul.mubr.bf16.gmra.mrb[0].mxu0 %v2853
        %v2974 = vpop.f32.mrb[0].mxu0
        %v2975 = vadd.f32 0.0, %v2974
        %v2976 = vpop.f32.mrb[0].mxu0
        %v2977 = vpop.f32.mrb[0].mxu0
        %v2978 = vadd.f32 0.0, %v2977
        %v2979 = vpop.f32.mrb[0].mxu0
        %2980 = vmatprep.mubr.bf16.mxu0 0
        %2981 = vmatmul.mubr.bf16.gmra.mrb[0].mxu0 %v2854
        %v2982 = vpop.f32.mrb[0].mxu0
        %v2983 = vadd.f32 0.0, %v2982
        %v2984 = vpop.f32.mrb[0].mxu0
        %v2985 = vpop.f32.mrb[0].mxu0
        %v2986 = vadd.f32 0.0, %v2985
        %v2987 = vpop.f32.mrb[0].mxu0
        %2988 = vmatprep.mubr.bf16.mxu0 0
        %2989 = vmatmul.mubr.bf16.gmra.mrb[0].mxu0 %v2855
        %v2990 = vpop.f32.mrb[0].mxu0
        %v2991 = vadd.f32 0.0, %v2990
        %v2992 = vpop.f32.mrb[0].mxu0
        %v2993 = vpop.f32.mrb[0].mxu0
        %v2994 = vadd.f32 0.0, %v2993
        %v2995 = vpop.f32.mrb[0].mxu0
        %2996 = vmatprep.mubr.bf16.mxu0 0
        %2997 = vmatmul.mubr.bf16.gmra.mrb[0].mxu0 %v2856
        %v2998 = vpop.f32.mrb[0].mxu0
        %v2999 = vadd.f32 0.0, %v2998
        %v3000 = vpop.f32.mrb[0].mxu0
        %v3001 = vpop.f32.mrb[0].mxu0
        %v3002 = vadd.f32 0.0, %v3001
        %v3003 = vpop.f32.mrb[0].mxu0
        %3004 = vmatprep.mubr.bf16.mxu0 0
        %3005 = vmatmul.mubr.bf16.gmra.mrb[0].mxu0 %v2857
        %v3006 = vpop.f32.mrb[0].mxu0
        %v3007 = vadd.f32 0.0, %v3006
        %v3008 = vpop.f32.mrb[0].mxu0
        %v3009 = vpop.f32.mrb[0].mxu0
        %v3010 = vadd.f32 0.0, %v3009
        %v3011 = vpop.f32.mrb[0].mxu0
        %3012 = vmatprep.mubr.bf16.mxu0 0
        %3013 = vmatmul.mubr.bf16.gmra.mrb[0].mxu0 %v2858
        %v3014 = vpop.f32.mrb[0].mxu0
        %v3015 = vadd.f32 0.0, %v3014
        %v3016 = vpop.f32.mrb[0].mxu0
        %v3017 = vpop.f32.mrb[0].mxu0
        %v3018 = vadd.f32 0.0, %v3017
        %v3019 = vpop.f32.mrb[0].mxu0
        %3020 = vmatprep.mubr.bf16.mxu0 0
        %3021 = vmatmul.mubr.bf16.gmra.mrb[0].mxu0 %v2859
        %v3022 = vpop.f32.mrb[0].mxu0
        %v3023 = vadd.f32 0.0, %v3022
        %v3024 = vpop.f32.mrb[0].mxu0
        %v3025 = vpop.f32.mrb[0].mxu0
        %v3026 = vadd.f32 0.0, %v3025
        %v3027 = vpop.f32.mrb[0].mxu0
        %3028 = vmatprep.mubr.bf16.mxu0 0
        %3029 = vmatmul.mubr.bf16.gmra.mrb[0].mxu0 %v2860
        %v3030 = vpop.f32.mrb[0].mxu0
        %v3031 = vadd.f32 0.0, %v3030
        %v3032 = vpop.f32.mrb[0].mxu0
        %v3033 = vpop.f32.mrb[0].mxu0
        %v3034 = vadd.f32 0.0, %v3033
        %v3035 = vpop.f32.mrb[0].mxu0
        %3036 = vmatprep.mubr.bf16.mxu0 0
        %3037 = vmatmul.mubr.bf16.gmra.mrb[0].mxu0 %v2861
        %v3038 = vpop.f32.mrb[0].mxu0
        %v3039 = vadd.f32 0.0, %v3038
        %v3040 = vpop.f32.mrb[0].mxu0
        %v3041 = vpop.f32.mrb[0].mxu0
        %v3042 = vadd.f32 0.0, %v3041
        %v3043 = vpop.f32.mrb[0].mxu0
        %3044 = vmatprep.mubr.bf16.mxu0 0
        %3045 = vmatmul.mubr.bf16.gmra.mrb[0].mxu0 %v2862
        %v3046 = vpop.f32.mrb[0].mxu0
        %v3047 = vadd.f32 0.0, %v3046
        %v3048 = vpop.f32.mrb[0].mxu0
        %v3049 = vpop.f32.mrb[0].mxu0
        %v3050 = vadd.f32 0.0, %v3049
        %v3051 = vpop.f32.mrb[0].mxu0
        %3052 = vmatprep.mubr.bf16.mxu0 0
        %3053 = vmatmul.mubr.bf16.gmra.mrb[0].mxu0 %v2863
        %v3054 = vpop.f32.mrb[0].mxu0
        %v3055 = vadd.f32 0.0, %v3054
        %v3056 = vpop.f32.mrb[0].mxu0
        %v3057 = vpop.f32.mrb[0].mxu0
        %v3058 = vadd.f32 0.0, %v3057
        %v3059 = vpop.f32.mrb[0].mxu0
        %3060 = vmatprep.mubr.bf16.mxu0 0
        %3061 = vmatmul.mubr.bf16.gmra.mrb[0].mxu0 %v2864
        %v3062 = vpop.f32.mrb[0].mxu0
        %v3063 = vadd.f32 0.0, %v3062
        %v3064 = vpop.f32.mrb[0].mxu0
        %v3065 = vpop.f32.mrb[0].mxu0
        %v3066 = vadd.f32 0.0, %v3065
        %v3067 = vpop.f32.mrb[0].mxu0
        %3068 = vmatprep.mubr.bf16.mxu0 0
        %3069 = vmatmul.mubr.bf16.gmra.mrb[0].mxu0 %v2865
        %v3070 = vpop.f32.mrb[0].mxu0
        %v3071 = vadd.f32 0.0, %v3070
        %v3072 = vpop.f32.mrb[0].mxu0
        %v3073 = vpop.f32.mrb[0].mxu0
        %v3074 = vadd.f32 0.0, %v3073
        %v3075 = vpop.f32.mrb[0].mxu0
        %3076 = vmatprep.mubr.bf16.mxu0 0
        %3077 = vmatmul.mubr.bf16.gmra.mrb[0].mxu0 %v2866
        %v3078 = vpop.f32.mrb[0].mxu0
        %v3079 = vadd.f32 0.0, %v3078
        %v3080 = vpop.f32.mrb[0].mxu0
        %v3081 = vpop.f32.mrb[0].mxu0
        %v3082 = vadd.f32 0.0, %v3081
        %v3083 = vpop.f32.mrb[0].mxu0
        %3084 = vmatprep.mubr.bf16.mxu0 0
        %3085 = vmatmul.mubr.bf16.gmra.mrb[0].mxu0 %v2867
        %v3086 = vpop.f32.mrb[0].mxu0
        %v3087 = vadd.f32 0.0, %v3086
        %v3088 = vpop.f32.mrb[0].mxu0
        %v3089 = vpop.f32.mrb[0].mxu0
        %v3090 = vadd.f32 0.0, %v3089
        %v3091 = vpop.f32.mrb[0].mxu0
        %3092 = vdwg.mxu0
        %v3093 = vadd.f32 %v2514, %v2967
        %v3094 = vadd.f32 %v2517, %v2970
        %v3095 = vadd.f32 %v2522, %v2975
        %v3096 = vadd.f32 %v2525, %v2978
        %v3097 = vadd.f32 %v2530, %v2983
        %v3098 = vadd.f32 %v2533, %v2986
        %v3099 = vadd.f32 %v2538, %v2991
        %v3100 = vadd.f32 %v2541, %v2994
        %v3101 = vadd.f32 %v2546, %v2999
        %v3102 = vadd.f32 %v2549, %v3002
        %v3103 = vadd.f32 %v2554, %v3007
        %v3104 = vadd.f32 %v2557, %v3010
        %v3105 = vadd.f32 %v2562, %v3015
        %v3106 = vadd.f32 %v2565, %v3018
        %v3107 = vadd.f32 %v2570, %v3023
        %v3108 = vadd.f32 %v2573, %v3026
        %v3109 = vadd.f32 %v2578, %v3031
        %v3110 = vadd.f32 %v2581, %v3034
        %v3111 = vadd.f32 %v2586, %v3039
        %v3112 = vadd.f32 %v2589, %v3042
        %v3113 = vadd.f32 %v2594, %v3047
        %v3114 = vadd.f32 %v2597, %v3050
        %v3115 = vadd.f32 %v2602, %v3055
        %v3116 = vadd.f32 %v2605, %v3058
        %v3117 = vadd.f32 %v2610, %v3063
        %v3118 = vadd.f32 %v2613, %v3066
        %v3119 = vadd.f32 %v2618, %v3071
        %v3120 = vadd.f32 %v2621, %v3074
        %v3121 = vadd.f32 %v2626, %v3079
        %v3122 = vadd.f32 %v2629, %v3082
        %v3123 = vadd.f32 %v2634, %v3087
        %v3124 = vadd.f32 %v2637, %v3090
        %v3125 = vld [vmem:[%s1251] sm:$0xf]
        %v3126 = vld [vmem:[%s1251 + $0x4] sm:$0xf]
        %v3127 = vld [vmem:[%s1251 + $0xc] sm:$0xf]
        %v3128 = vld [vmem:[%s1251 + $0x10] sm:$0xf]
        %v3129 = vld [vmem:[%s1251 + $0x18] sm:$0xf]
        %v3130 = vld [vmem:[%s1251 + $0x1c] sm:$0xf]
        %v3131 = vld [vmem:[%s1251 + $0x24] sm:$0xf]
        %v3132 = vld [vmem:[%s1251 + $0x28] sm:$0xf]
        %v3133 = vld [vmem:[%s1251 + $0x30] sm:$0xf]
        %v3134 = vld [vmem:[%s1251 + $0x34] sm:$0xf]
        %v3135 = vld [vmem:[%s1251 + $0x3c] sm:$0xf]
        %v3136 = vld [vmem:[%s1251 + $0x40] sm:$0xf]
        %v3137 = vld [vmem:[%s1251 + $0x48] sm:$0xf]
        %v3138 = vld [vmem:[%s1251 + $0x4c] sm:$0xf]
        %v3139 = vld [vmem:[%s1251 + $0x54] sm:$0xf]
        %v3140 = vld [vmem:[%s1251 + $0x58] sm:$0xf]
        %v3141 = vld [vmem:[%s1251 + $0x60] sm:$0xf]
        %v3142 = vld [vmem:[%s1251 + $0x64] sm:$0xf]
        %v3143 = vld [vmem:[%s1251 + $0x6c] sm:$0xf]
        %v3144 = vld [vmem:[%s1251 + $0x70] sm:$0xf]
        %v3145 = vld [vmem:[%s1251 + $0x78] sm:$0xf]
        %v3146 = vld [vmem:[%s1251 + $0x7c] sm:$0xf]
        %v3147 = vld [vmem:[%s1251 + $0x84] sm:$0xf]
        %v3148 = vld [vmem:[%s1251 + $0x88] sm:$0xf]
        %v3149 = vld [vmem:[%s1251 + $0x90] sm:$0xf]
        %v3150 = vld [vmem:[%s1251 + $0x94] sm:$0xf]
        %v3151 = vld [vmem:[%s1251 + $0x9c] sm:$0xf]
        %v3152 = vld [vmem:[%s1251 + $0xa0] sm:$0xf]
        %v3153 = vld [vmem:[%s1251 + $0xa8] sm:$0xf]
        %v3154 = vld [vmem:[%s1251 + $0xac] sm:$0xf]
        %v3155 = vld [vmem:[%s1251 + $0xb4] sm:$0xf]
        %v3156 = vld [vmem:[%s1251 + $0xb8] sm:$0xf]
        %s3157 = scalar_lea.vmem [#allocation10], 192
        %v3158 = vld [vmem:[%s3157] sm:$0xf]
        %v3159 = vld [vmem:[%s3157 + $0x4] sm:$0xf]
        %v3160 = vld [vmem:[%s3157 + $0x8] sm:$0xf]
        %v3161 = vld [vmem:[%s3157 + $0xc] sm:$0xf]
        %v3162 = vld [vmem:[%s3157 + $0x10] sm:$0xf]
        %v3163 = vld [vmem:[%s3157 + $0x14] sm:$0xf]
        %v3164 = vld [vmem:[%s3157 + $0x18] sm:$0xf]
        %v3165 = vld [vmem:[%s3157 + $0x1c] sm:$0xf]
        %v3166 = vld [vmem:[%s3157 + $0x20] sm:$0xf]
        %v3167 = vld [vmem:[%s3157 + $0x24] sm:$0xf]
        %v3168 = vld [vmem:[%s3157 + $0x28] sm:$0xf]
        %v3169 = vld [vmem:[%s3157 + $0x2c] sm:$0xf]
        %v3170 = vld [vmem:[%s3157 + $0x30] sm:$0xf]
        %v3171 = vld [vmem:[%s3157 + $0x34] sm:$0xf]
        %v3172 = vld [vmem:[%s3157 + $0x38] sm:$0xf]
        %v3173 = vld [vmem:[%s3157 + $0x3c] sm:$0xf]
        %v3206 = vunpack.c.l.b16 %v3125
        %v3207 = vunpack.c.l.b16 %v3126
        %v3208 = vunpack.c.l.b16 %v3127
        %v3209 = vunpack.c.l.b16 %v3128
        %v3210 = vunpack.c.l.b16 %v3129
        %v3211 = vunpack.c.l.b16 %v3130
        %v3212 = vunpack.c.l.b16 %v3131
        %v3213 = vunpack.c.l.b16 %v3132
        %v3214 = vunpack.c.l.b16 %v3133
        %v3215 = vunpack.c.l.b16 %v3134
        %v3216 = vunpack.c.l.b16 %v3135
        %v3217 = vunpack.c.l.b16 %v3136
        %v3218 = vunpack.c.l.b16 %v3137
        %v3219 = vunpack.c.l.b16 %v3138
        %v3220 = vunpack.c.l.b16 %v3139
        %v3221 = vunpack.c.l.b16 %v3140
        %v3222 = vunpack.c.l.b16 %v3141
        %v3223 = vunpack.c.l.b16 %v3142
        %v3224 = vunpack.c.l.b16 %v3143
        %v3225 = vunpack.c.l.b16 %v3144
        %v3226 = vunpack.c.l.b16 %v3145
        %v3227 = vunpack.c.l.b16 %v3146
        %v3228 = vunpack.c.l.b16 %v3147
        %v3229 = vunpack.c.l.b16 %v3148
        %v3230 = vunpack.c.l.b16 %v3149
        %v3231 = vunpack.c.l.b16 %v3150
        %v3232 = vunpack.c.l.b16 %v3151
        %v3233 = vunpack.c.l.b16 %v3152
        %v3234 = vunpack.c.l.b16 %v3153
        %v3235 = vunpack.c.l.b16 %v3154
        %v3236 = vunpack.c.l.b16 %v3155
        %v3237 = vunpack.c.l.b16 %v3156
        %v3238 = vpack.c.b16 %v3207, %v3206
        %v3239 = vpack.c.b16 %v3209, %v3208
        %v3240 = vpack.c.b16 %v3211, %v3210
        %v3241 = vpack.c.b16 %v3213, %v3212
        %v3242 = vpack.c.b16 %v3215, %v3214
        %v3243 = vpack.c.b16 %v3217, %v3216
        %v3244 = vpack.c.b16 %v3219, %v3218
        %v3245 = vpack.c.b16 %v3221, %v3220
        %v3246 = vpack.c.b16 %v3223, %v3222
        %v3247 = vpack.c.b16 %v3225, %v3224
        %v3248 = vpack.c.b16 %v3227, %v3226
        %v3249 = vpack.c.b16 %v3229, %v3228
        %v3250 = vpack.c.b16 %v3231, %v3230
        %v3251 = vpack.c.b16 %v3233, %v3232
        %v3252 = vpack.c.b16 %v3235, %v3234
        %v3253 = vpack.c.b16 %v3237, %v3236
        %v3286 = vunpack.c.l.b16 %v3158
        %v3287 = vunpack.c.l.b16 %v3159
        %v3288 = vunpack.c.l.b16 %v3160
        %v3289 = vunpack.c.l.b16 %v3161
        %v3290 = vunpack.c.l.b16 %v3162
        %v3291 = vunpack.c.l.b16 %v3163
        %v3292 = vunpack.c.l.b16 %v3164
        %v3293 = vunpack.c.l.b16 %v3165
        %v3294 = vunpack.c.l.b16 %v3166
        %v3295 = vunpack.c.l.b16 %v3167
        %v3296 = vunpack.c.l.b16 %v3168
        %v3297 = vunpack.c.l.b16 %v3169
        %v3298 = vunpack.c.l.b16 %v3170
        %v3299 = vunpack.c.l.b16 %v3171
        %v3300 = vunpack.c.l.b16 %v3172
        %v3301 = vunpack.c.l.b16 %v3173
        %v3302 = vpack.c.b16 %v3287, %v3286
        %v3303 = vpack.c.b16 %v3289, %v3288
        %v3304 = vpack.c.b16 %v3291, %v3290
        %v3305 = vpack.c.b16 %v3293, %v3292
        %v3306 = vpack.c.b16 %v3295, %v3294
        %v3307 = vpack.c.b16 %v3297, %v3296
        %v3308 = vpack.c.b16 %v3299, %v3298
        %v3309 = vpack.c.b16 %v3301, %v3300
        %3318 = vmatprep.subr.bf16.mxu0 0
        %3319 = vmatpush1.bf16.msra.mxu0 %v3302
        %3320 = vmatprep.subr.bf16.mxu0 0
        %3321 = vmatpush1.bf16.msra.mxu0 %v3303
        %3322 = vmatprep.subr.bf16.mxu0 0
        %3323 = vmatpush1.bf16.msra.mxu0 %v3304
        %3324 = vmatprep.subr.bf16.mxu0 0
        %3325 = vmatpush1.bf16.msra.mxu0 %v3305
        %3326 = vmatprep.subr.bf16.mxu0 0
        %3327 = vmatpush1.bf16.msra.mxu0 %v3306
        %3328 = vmatprep.subr.bf16.mxu0 0
        %3329 = vmatpush1.bf16.msra.mxu0 %v3307
        %3330 = vmatprep.subr.bf16.mxu0 0
        %3331 = vmatpush1.bf16.msra.mxu0 %v3308
        %3332 = vmatprep.subr.bf16.mxu0 0
        %3333 = vmatpush1.bf16.msra.mxu0 %v3309
        %3334 = vmatprep.subr.bf16.mxu0 0
        %3335 = vmatpush1.bf16.msra.mxu0 0
        %3336 = vmatprep.subr.bf16.mxu0 0
        %3337 = vmatpush1.bf16.msra.mxu0 0
        %3338 = vmatprep.subr.bf16.mxu0 0
        %3339 = vmatpush1.bf16.msra.mxu0 0
        %3340 = vmatprep.subr.bf16.mxu0 0
        %3341 = vmatpush1.bf16.msra.mxu0 0
        %3342 = vmatprep.subr.bf16.mxu0 0
        %3343 = vmatpush1.bf16.msra.mxu0 0
        %3344 = vmatprep.subr.bf16.mxu0 0
        %3345 = vmatpush1.bf16.msra.mxu0 0
        %3346 = vmatprep.subr.bf16.mxu0 0
        %3347 = vmatpush1.bf16.msra.mxu0 0
        %3348 = vmatprep.subr.bf16.mxu0 0
        %3349 = vmatpush1.bf16.msra.mxu0 0
        %3350 = vmatprep.mubr.bf16.mxu0 0
        %3351 = vmatmul.mubr.bf16.gmra.mrb[0].mxu0 %v3238
        %v3352 = vpop.f32.mrb[0].mxu0
        %v3353 = vadd.f32 0.0, %v3352
        %v3354 = vpop.f32.mrb[0].mxu0
        %v3355 = vpop.f32.mrb[0].mxu0
        %v3356 = vadd.f32 0.0, %v3355
        %v3357 = vpop.f32.mrb[0].mxu0
        %3358 = vmatprep.mubr.bf16.mxu0 0
        %3359 = vmatmul.mubr.bf16.gmra.mrb[0].mxu0 %v3239
        %v3360 = vpop.f32.mrb[0].mxu0
        %v3361 = vadd.f32 0.0, %v3360
        %v3362 = vpop.f32.mrb[0].mxu0
        %v3363 = vpop.f32.mrb[0].mxu0
        %v3364 = vadd.f32 0.0, %v3363
        %v3365 = vpop.f32.mrb[0].mxu0
        %3366 = vmatprep.mubr.bf16.mxu0 0
        %3367 = vmatmul.mubr.bf16.gmra.mrb[0].mxu0 %v3240
        %v3368 = vpop.f32.mrb[0].mxu0
        %v3369 = vadd.f32 0.0, %v3368
        %v3370 = vpop.f32.mrb[0].mxu0
        %v3371 = vpop.f32.mrb[0].mxu0
        %v3372 = vadd.f32 0.0, %v3371
        %v3373 = vpop.f32.mrb[0].mxu0
        %3374 = vmatprep.mubr.bf16.mxu0 0
        %3375 = vmatmul.mubr.bf16.gmra.mrb[0].mxu0 %v3241
        %v3376 = vpop.f32.mrb[0].mxu0
        %v3377 = vadd.f32 0.0, %v3376
        %v3378 = vpop.f32.mrb[0].mxu0
        %v3379 = vpop.f32.mrb[0].mxu0
        %v3380 = vadd.f32 0.0, %v3379
        %v3381 = vpop.f32.mrb[0].mxu0
        %3382 = vmatprep.mubr.bf16.mxu0 0
        %3383 = vmatmul.mubr.bf16.gmra.mrb[0].mxu0 %v3242
        %v3384 = vpop.f32.mrb[0].mxu0
        %v3385 = vadd.f32 0.0, %v3384
        %v3386 = vpop.f32.mrb[0].mxu0
        %v3387 = vpop.f32.mrb[0].mxu0
        %v3388 = vadd.f32 0.0, %v3387
        %v3389 = vpop.f32.mrb[0].mxu0
        %3390 = vmatprep.mubr.bf16.mxu0 0
        %3391 = vmatmul.mubr.bf16.gmra.mrb[0].mxu0 %v3243
        %v3392 = vpop.f32.mrb[0].mxu0
        %v3393 = vadd.f32 0.0, %v3392
        %v3394 = vpop.f32.mrb[0].mxu0
        %v3395 = vpop.f32.mrb[0].mxu0
        %v3396 = vadd.f32 0.0, %v3395
        %v3397 = vpop.f32.mrb[0].mxu0
        %3398 = vmatprep.mubr.bf16.mxu0 0
        %3399 = vmatmul.mubr.bf16.gmra.mrb[0].mxu0 %v3244
        %v3400 = vpop.f32.mrb[0].mxu0
        %v3401 = vadd.f32 0.0, %v3400
        %v3402 = vpop.f32.mrb[0].mxu0
        %v3403 = vpop.f32.mrb[0].mxu0
        %v3404 = vadd.f32 0.0, %v3403
        %v3405 = vpop.f32.mrb[0].mxu0
        %3406 = vmatprep.mubr.bf16.mxu0 0
        %3407 = vmatmul.mubr.bf16.gmra.mrb[0].mxu0 %v3245
        %v3408 = vpop.f32.mrb[0].mxu0
        %v3409 = vadd.f32 0.0, %v3408
        %v3410 = vpop.f32.mrb[0].mxu0
        %v3411 = vpop.f32.mrb[0].mxu0
        %v3412 = vadd.f32 0.0, %v3411
        %v3413 = vpop.f32.mrb[0].mxu0
        %3414 = vmatprep.mubr.bf16.mxu0 0
        %3415 = vmatmul.mubr.bf16.gmra.mrb[0].mxu0 %v3246
        %v3416 = vpop.f32.mrb[0].mxu0
        %v3417 = vadd.f32 0.0, %v3416
        %v3418 = vpop.f32.mrb[0].mxu0
        %v3419 = vpop.f32.mrb[0].mxu0
        %v3420 = vadd.f32 0.0, %v3419
        %v3421 = vpop.f32.mrb[0].mxu0
        %3422 = vmatprep.mubr.bf16.mxu0 0
        %3423 = vmatmul.mubr.bf16.gmra.mrb[0].mxu0 %v3247
        %v3424 = vpop.f32.mrb[0].mxu0
        %v3425 = vadd.f32 0.0, %v3424
        %v3426 = vpop.f32.mrb[0].mxu0
        %v3427 = vpop.f32.mrb[0].mxu0
        %v3428 = vadd.f32 0.0, %v3427
        %v3429 = vpop.f32.mrb[0].mxu0
        %3430 = vmatprep.mubr.bf16.mxu0 0
        %3431 = vmatmul.mubr.bf16.gmra.mrb[0].mxu0 %v3248
        %v3432 = vpop.f32.mrb[0].mxu0
        %v3433 = vadd.f32 0.0, %v3432
        %v3434 = vpop.f32.mrb[0].mxu0
        %v3435 = vpop.f32.mrb[0].mxu0
        %v3436 = vadd.f32 0.0, %v3435
        %v3437 = vpop.f32.mrb[0].mxu0
        %3438 = vmatprep.mubr.bf16.mxu0 0
        %3439 = vmatmul.mubr.bf16.gmra.mrb[0].mxu0 %v3249
        %v3440 = vpop.f32.mrb[0].mxu0
        %v3441 = vadd.f32 0.0, %v3440
        %v3442 = vpop.f32.mrb[0].mxu0
        %v3443 = vpop.f32.mrb[0].mxu0
        %v3444 = vadd.f32 0.0, %v3443
        %v3445 = vpop.f32.mrb[0].mxu0
        %3446 = vmatprep.mubr.bf16.mxu0 0
        %3447 = vmatmul.mubr.bf16.gmra.mrb[0].mxu0 %v3250
        %v3448 = vpop.f32.mrb[0].mxu0
        %v3449 = vadd.f32 0.0, %v3448
        %v3450 = vpop.f32.mrb[0].mxu0
        %v3451 = vpop.f32.mrb[0].mxu0
        %v3452 = vadd.f32 0.0, %v3451
        %v3453 = vpop.f32.mrb[0].mxu0
        %3454 = vmatprep.mubr.bf16.mxu0 0
        %3455 = vmatmul.mubr.bf16.gmra.mrb[0].mxu0 %v3251
        %v3456 = vpop.f32.mrb[0].mxu0
        %v3457 = vadd.f32 0.0, %v3456
        %v3458 = vpop.f32.mrb[0].mxu0
        %v3459 = vpop.f32.mrb[0].mxu0
        %v3460 = vadd.f32 0.0, %v3459
        %v3461 = vpop.f32.mrb[0].mxu0
        %3462 = vmatprep.mubr.bf16.mxu0 0
        %3463 = vmatmul.mubr.bf16.gmra.mrb[0].mxu0 %v3252
        %v3464 = vpop.f32.mrb[0].mxu0
        %v3465 = vadd.f32 0.0, %v3464
        %v3466 = vpop.f32.mrb[0].mxu0
        %v3467 = vpop.f32.mrb[0].mxu0
        %v3468 = vadd.f32 0.0, %v3467
        %v3469 = vpop.f32.mrb[0].mxu0
        %3470 = vmatprep.mubr.bf16.mxu0 0
        %3471 = vmatmul.mubr.bf16.gmra.mrb[0].mxu0 %v3253
        %v3472 = vpop.f32.mrb[0].mxu0
        %v3473 = vadd.f32 0.0, %v3472
        %v3474 = vpop.f32.mrb[0].mxu0
        %v3475 = vpop.f32.mrb[0].mxu0
        %v3476 = vadd.f32 0.0, %v3475
        %v3477 = vpop.f32.mrb[0].mxu0
        %3478 = vdwg.mxu0
        %v3479 = vadd.f32 %v3093, %v3353
        %v3480 = vadd.f32 %v3094, %v3356
        %v3481 = vadd.f32 %v3095, %v3361
        %v3482 = vadd.f32 %v3096, %v3364
        %v3483 = vadd.f32 %v3097, %v3369
        %v3484 = vadd.f32 %v3098, %v3372
        %v3485 = vadd.f32 %v3099, %v3377
        %v3486 = vadd.f32 %v3100, %v3380
        %v3487 = vadd.f32 %v3101, %v3385
        %v3488 = vadd.f32 %v3102, %v3388
        %v3489 = vadd.f32 %v3103, %v3393
        %v3490 = vadd.f32 %v3104, %v3396
        %v3491 = vadd.f32 %v3105, %v3401
        %v3492 = vadd.f32 %v3106, %v3404
        %v3493 = vadd.f32 %v3107, %v3409
        %v3494 = vadd.f32 %v3108, %v3412
        %v3495 = vadd.f32 %v3109, %v3417
        %v3496 = vadd.f32 %v3110, %v3420
        %v3497 = vadd.f32 %v3111, %v3425
        %v3498 = vadd.f32 %v3112, %v3428
        %v3499 = vadd.f32 %v3113, %v3433
        %v3500 = vadd.f32 %v3114, %v3436
        %v3501 = vadd.f32 %v3115, %v3441
        %v3502 = vadd.f32 %v3116, %v3444
        %v3503 = vadd.f32 %v3117, %v3449
        %v3504 = vadd.f32 %v3118, %v3452
        %v3505 = vadd.f32 %v3119, %v3457
        %v3506 = vadd.f32 %v3120, %v3460
        %v3507 = vadd.f32 %v3121, %v3465
        %v3508 = vadd.f32 %v3122, %v3468
        %v3509 = vadd.f32 %v3123, %v3473
        %v3510 = vadd.f32 %v3124, %v3476
        %v3511 = vld [vmem:[%s1251] sm:$0xf]
        %v3512 = vld [vmem:[%s1251 + $0x4] sm:$0xf]
        %v3513 = vld [vmem:[%s1251 + $0x8] sm:$0x1]
        %v3514 = vld [vmem:[%s1251 + $0xc] sm:$0xf]
        %v3515 = vld [vmem:[%s1251 + $0x10] sm:$0xf]
        %v3516 = vld [vmem:[%s1251 + $0x14] sm:$0x1]
        %v3517 = vld [vmem:[%s1251 + $0x18] sm:$0xf]
        %v3518 = vld [vmem:[%s1251 + $0x1c] sm:$0xf]
        %v3519 = vld [vmem:[%s1251 + $0x20] sm:$0x1]
        %v3520 = vld [vmem:[%s1251 + $0x24] sm:$0xf]
        %v3521 = vld [vmem:[%s1251 + $0x28] sm:$0xf]
        %v3522 = vld [vmem:[%s1251 + $0x2c] sm:$0x1]
        %v3523 = vld [vmem:[%s1251 + $0x30] sm:$0xf]
        %v3524 = vld [vmem:[%s1251 + $0x34] sm:$0xf]
        %v3525 = vld [vmem:[%s1251 + $0x38] sm:$0x1]
        %v3526 = vld [vmem:[%s1251 + $0x3c] sm:$0xf]
        %v3527 = vld [vmem:[%s1251 + $0x40] sm:$0xf]
        %v3528 = vld [vmem:[%s1251 + $0x44] sm:$0x1]
        %v3529 = vld [vmem:[%s1251 + $0x48] sm:$0xf]
        %v3530 = vld [vmem:[%s1251 + $0x4c] sm:$0xf]
        %v3531 = vld [vmem:[%s1251 + $0x50] sm:$0x1]
        %v3532 = vld [vmem:[%s1251 + $0x54] sm:$0xf]
        %v3533 = vld [vmem:[%s1251 + $0x58] sm:$0xf]
        %v3534 = vld [vmem:[%s1251 + $0x5c] sm:$0x1]
        %v3535 = vld [vmem:[%s1251 + $0x60] sm:$0xf]
        %v3536 = vld [vmem:[%s1251 + $0x64] sm:$0xf]
        %v3537 = vld [vmem:[%s1251 + $0x68] sm:$0x1]
        %v3538 = vld [vmem:[%s1251 + $0x6c] sm:$0xf]
        %v3539 = vld [vmem:[%s1251 + $0x70] sm:$0xf]
        %v3540 = vld [vmem:[%s1251 + $0x74] sm:$0x1]
        %v3541 = vld [vmem:[%s1251 + $0x78] sm:$0xf]
        %v3542 = vld [vmem:[%s1251 + $0x7c] sm:$0xf]
        %v3543 = vld [vmem:[%s1251 + $0x80] sm:$0x1]
        %v3544 = vld [vmem:[%s1251 + $0x84] sm:$0xf]
        %v3545 = vld [vmem:[%s1251 + $0x88] sm:$0xf]
        %v3546 = vld [vmem:[%s1251 + $0x8c] sm:$0x1]
        %v3547 = vld [vmem:[%s1251 + $0x90] sm:$0xf]
        %v3548 = vld [vmem:[%s1251 + $0x94] sm:$0xf]
        %v3549 = vld [vmem:[%s1251 + $0x98] sm:$0x1]
        %v3550 = vld [vmem:[%s1251 + $0x9c] sm:$0xf]
        %v3551 = vld [vmem:[%s1251 + $0xa0] sm:$0xf]
        %v3552 = vld [vmem:[%s1251 + $0xa4] sm:$0x1]
        %v3553 = vld [vmem:[%s1251 + $0xa8] sm:$0xf]
        %v3554 = vld [vmem:[%s1251 + $0xac] sm:$0xf]
        %v3555 = vld [vmem:[%s1251 + $0xb0] sm:$0x1]
        %v3556 = vld [vmem:[%s1251 + $0xb4] sm:$0xf]
        %v3557 = vld [vmem:[%s1251 + $0xb8] sm:$0xf]
        %v3558 = vld [vmem:[%s1251 + $0xbc] sm:$0x1]
        %v3560 = vshrl.u32 %v3511, 16
        %v3562 = vrot.slane %v3560, 4
        %v3563 = vshll.u32 %v3511, 16
        %v3565 = vrot.slane %v3563, 5
        %v3566 = vor.u32 %v3562, %v3565
        %v3567 = vrot.slane %v3566, 4
        %v3569 = vshll.u32 %v3512, 16
        %v3571 = vrot.slane %v3569, 5
        %v3572 = vsel %vm1660, %v3567, %v3571
        %v3573 = vshrl.u32 %v3512, 16
        %v3575 = vrot.slane %v3573, 4
        %v3576 = vor.u32 %v3575, %v3571
        %v3577 = vrot.slane %v3576, 4
        %v3579 = vshll.u32 %v3513, 16
        %v3581 = vrot.slane %v3579, 5
        %v3582 = vsel %vm1660, %v3577, %v3581
        %v3584 = vshrl.u32 %v3514, 16
        %v3586 = vrot.slane %v3584, 4
        %v3587 = vshll.u32 %v3514, 16
        %v3589 = vrot.slane %v3587, 5
        %v3590 = vor.u32 %v3586, %v3589
        %v3591 = vrot.slane %v3590, 4
        %v3593 = vshll.u32 %v3515, 16
        %v3595 = vrot.slane %v3593, 5
        %v3596 = vsel %vm1660, %v3591, %v3595
        %v3597 = vshrl.u32 %v3515, 16
        %v3599 = vrot.slane %v3597, 4
        %v3600 = vor.u32 %v3599, %v3595
        %v3601 = vrot.slane %v3600, 4
        %v3603 = vshll.u32 %v3516, 16
        %v3605 = vrot.slane %v3603, 5
        %v3606 = vsel %vm1660, %v3601, %v3605
        %v3608 = vshrl.u32 %v3517, 16
        %v3610 = vrot.slane %v3608, 4
        %v3611 = vshll.u32 %v3517, 16
        %v3613 = vrot.slane %v3611, 5
        %v3614 = vor.u32 %v3610, %v3613
        %v3615 = vrot.slane %v3614, 4
        %v3617 = vshll.u32 %v3518, 16
        %v3619 = vrot.slane %v3617, 5
        %v3620 = vsel %vm1660, %v3615, %v3619
        %v3621 = vshrl.u32 %v3518, 16
        %v3623 = vrot.slane %v3621, 4
        %v3624 = vor.u32 %v3623, %v3619
        %v3625 = vrot.slane %v3624, 4
        %v3627 = vshll.u32 %v3519, 16
        %v3629 = vrot.slane %v3627, 5
        %v3630 = vsel %vm1660, %v3625, %v3629
        %v3632 = vshrl.u32 %v3520, 16
        %v3634 = vrot.slane %v3632, 4
        %v3635 = vshll.u32 %v3520, 16
        %v3637 = vrot.slane %v3635, 5
        %v3638 = vor.u32 %v3634, %v3637
        %v3639 = vrot.slane %v3638, 4
        %v3641 = vshll.u32 %v3521, 16
        %v3643 = vrot.slane %v3641, 5
        %v3644 = vsel %vm1660, %v3639, %v3643
        %v3645 = vshrl.u32 %v3521, 16
        %v3647 = vrot.slane %v3645, 4
        %v3648 = vor.u32 %v3647, %v3643
        %v3649 = vrot.slane %v3648, 4
        %v3651 = vshll.u32 %v3522, 16
        %v3653 = vrot.slane %v3651, 5
        %v3654 = vsel %vm1660, %v3649, %v3653
        %v3656 = vshrl.u32 %v3523, 16
        %v3658 = vrot.slane %v3656, 4
        %v3659 = vshll.u32 %v3523, 16
        %v3661 = vrot.slane %v3659, 5
        %v3662 = vor.u32 %v3658, %v3661
        %v3663 = vrot.slane %v3662, 4
        %v3665 = vshll.u32 %v3524, 16
        %v3667 = vrot.slane %v3665, 5
        %v3668 = vsel %vm1660, %v3663, %v3667
        %v3669 = vshrl.u32 %v3524, 16
        %v3671 = vrot.slane %v3669, 4
        %v3672 = vor.u32 %v3671, %v3667
        %v3673 = vrot.slane %v3672, 4
        %v3675 = vshll.u32 %v3525, 16
        %v3677 = vrot.slane %v3675, 5
        %v3678 = vsel %vm1660, %v3673, %v3677
        %v3680 = vshrl.u32 %v3526, 16
        %v3682 = vrot.slane %v3680, 4
        %v3683 = vshll.u32 %v3526, 16
        %v3685 = vrot.slane %v3683, 5
        %v3686 = vor.u32 %v3682, %v3685
        %v3687 = vrot.slane %v3686, 4
        %v3689 = vshll.u32 %v3527, 16
        %v3691 = vrot.slane %v3689, 5
        %v3692 = vsel %vm1660, %v3687, %v3691
        %v3693 = vshrl.u32 %v3527, 16
        %v3695 = vrot.slane %v3693, 4
        %v3696 = vor.u32 %v3695, %v3691
        %v3697 = vrot.slane %v3696, 4
        %v3699 = vshll.u32 %v3528, 16
        %v3701 = vrot.slane %v3699, 5
        %v3702 = vsel %vm1660, %v3697, %v3701
        %v3704 = vshrl.u32 %v3529, 16
        %v3706 = vrot.slane %v3704, 4
        %v3707 = vshll.u32 %v3529, 16
        %v3709 = vrot.slane %v3707, 5
        %v3710 = vor.u32 %v3706, %v3709
        %v3711 = vrot.slane %v3710, 4
        %v3713 = vshll.u32 %v3530, 16
        %v3715 = vrot.slane %v3713, 5
        %v3716 = vsel %vm1660, %v3711, %v3715
        %v3717 = vshrl.u32 %v3530, 16
        %v3719 = vrot.slane %v3717, 4
        %v3720 = vor.u32 %v3719, %v3715
        %v3721 = vrot.slane %v3720, 4
        %v3723 = vshll.u32 %v3531, 16
        %v3725 = vrot.slane %v3723, 5
        %v3726 = vsel %vm1660, %v3721, %v3725
        %v3728 = vshrl.u32 %v3532, 16
        %v3730 = vrot.slane %v3728, 4
        %v3731 = vshll.u32 %v3532, 16
        %v3733 = vrot.slane %v3731, 5
        %v3734 = vor.u32 %v3730, %v3733
        %v3735 = vrot.slane %v3734, 4
        %v3737 = vshll.u32 %v3533, 16
        %v3739 = vrot.slane %v3737, 5
        %v3740 = vsel %vm1660, %v3735, %v3739
        %v3741 = vshrl.u32 %v3533, 16
        %v3743 = vrot.slane %v3741, 4
        %v3744 = vor.u32 %v3743, %v3739
        %v3745 = vrot.slane %v3744, 4
        %v3747 = vshll.u32 %v3534, 16
        %v3749 = vrot.slane %v3747, 5
        %v3750 = vsel %vm1660, %v3745, %v3749
        %v3752 = vshrl.u32 %v3535, 16
        %v3754 = vrot.slane %v3752, 4
        %v3755 = vshll.u32 %v3535, 16
        %v3757 = vrot.slane %v3755, 5
        %v3758 = vor.u32 %v3754, %v3757
        %v3759 = vrot.slane %v3758, 4
        %v3761 = vshll.u32 %v3536, 16
        %v3763 = vrot.slane %v3761, 5
        %v3764 = vsel %vm1660, %v3759, %v3763
        %v3765 = vshrl.u32 %v3536, 16
        %v3767 = vrot.slane %v3765, 4
        %v3768 = vor.u32 %v3767, %v3763
        %v3769 = vrot.slane %v3768, 4
        %v3771 = vshll.u32 %v3537, 16
        %v3773 = vrot.slane %v3771, 5
        %v3774 = vsel %vm1660, %v3769, %v3773
        %v3776 = vshrl.u32 %v3538, 16
        %v3778 = vrot.slane %v3776, 4
        %v3779 = vshll.u32 %v3538, 16
        %v3781 = vrot.slane %v3779, 5
        %v3782 = vor.u32 %v3778, %v3781
        %v3783 = vrot.slane %v3782, 4
        %v3785 = vshll.u32 %v3539, 16
        %v3787 = vrot.slane %v3785, 5
        %v3788 = vsel %vm1660, %v3783, %v3787
        %v3789 = vshrl.u32 %v3539, 16
        %v3791 = vrot.slane %v3789, 4
        %v3792 = vor.u32 %v3791, %v3787
        %v3793 = vrot.slane %v3792, 4
        %v3795 = vshll.u32 %v3540, 16
        %v3797 = vrot.slane %v3795, 5
        %v3798 = vsel %vm1660, %v3793, %v3797
        %v3800 = vshrl.u32 %v3541, 16
        %v3802 = vrot.slane %v3800, 4
        %v3803 = vshll.u32 %v3541, 16
        %v3805 = vrot.slane %v3803, 5
        %v3806 = vor.u32 %v3802, %v3805
        %v3807 = vrot.slane %v3806, 4
        %v3809 = vshll.u32 %v3542, 16
        %v3811 = vrot.slane %v3809, 5
        %v3812 = vsel %vm1660, %v3807, %v3811
        %v3813 = vshrl.u32 %v3542, 16
        %v3815 = vrot.slane %v3813, 4
        %v3816 = vor.u32 %v3815, %v3811
        %v3817 = vrot.slane %v3816, 4
        %v3819 = vshll.u32 %v3543, 16
        %v3821 = vrot.slane %v3819, 5
        %v3822 = vsel %vm1660, %v3817, %v3821
        %v3824 = vshrl.u32 %v3544, 16
        %v3826 = vrot.slane %v3824, 4
        %v3827 = vshll.u32 %v3544, 16
        %v3829 = vrot.slane %v3827, 5
        %v3830 = vor.u32 %v3826, %v3829
        %v3831 = vrot.slane %v3830, 4
        %v3833 = vshll.u32 %v3545, 16
        %v3835 = vrot.slane %v3833, 5
        %v3836 = vsel %vm1660, %v3831, %v3835
        %v3837 = vshrl.u32 %v3545, 16
        %v3839 = vrot.slane %v3837, 4
        %v3840 = vor.u32 %v3839, %v3835
        %v3841 = vrot.slane %v3840, 4
        %v3843 = vshll.u32 %v3546, 16
        %v3845 = vrot.slane %v3843, 5
        %v3846 = vsel %vm1660, %v3841, %v3845
        %v3848 = vshrl.u32 %v3547, 16
        %v3850 = vrot.slane %v3848, 4
        %v3851 = vshll.u32 %v3547, 16
        %v3853 = vrot.slane %v3851, 5
        %v3854 = vor.u32 %v3850, %v3853
        %v3855 = vrot.slane %v3854, 4
        %v3857 = vshll.u32 %v3548, 16
        %v3859 = vrot.slane %v3857, 5
        %v3860 = vsel %vm1660, %v3855, %v3859
        %v3861 = vshrl.u32 %v3548, 16
        %v3863 = vrot.slane %v3861, 4
        %v3864 = vor.u32 %v3863, %v3859
        %v3865 = vrot.slane %v3864, 4
        %v3867 = vshll.u32 %v3549, 16
        %v3869 = vrot.slane %v3867, 5
        %v3870 = vsel %vm1660, %v3865, %v3869
        %v3872 = vshrl.u32 %v3550, 16
        %v3874 = vrot.slane %v3872, 4
        %v3875 = vshll.u32 %v3550, 16
        %v3877 = vrot.slane %v3875, 5
        %v3878 = vor.u32 %v3874, %v3877
        %v3879 = vrot.slane %v3878, 4
        %v3881 = vshll.u32 %v3551, 16
        %v3883 = vrot.slane %v3881, 5
        %v3884 = vsel %vm1660, %v3879, %v3883
        %v3885 = vshrl.u32 %v3551, 16
        %v3887 = vrot.slane %v3885, 4
        %v3888 = vor.u32 %v3887, %v3883
        %v3889 = vrot.slane %v3888, 4
        %v3891 = vshll.u32 %v3552, 16
        %v3893 = vrot.slane %v3891, 5
        %v3894 = vsel %vm1660, %v3889, %v3893
        %v3896 = vshrl.u32 %v3553, 16
        %v3898 = vrot.slane %v3896, 4
        %v3899 = vshll.u32 %v3553, 16
        %v3901 = vrot.slane %v3899, 5
        %v3902 = vor.u32 %v3898, %v3901
        %v3903 = vrot.slane %v3902, 4
        %v3905 = vshll.u32 %v3554, 16
        %v3907 = vrot.slane %v3905, 5
        %v3908 = vsel %vm1660, %v3903, %v3907
        %v3909 = vshrl.u32 %v3554, 16
        %v3911 = vrot.slane %v3909, 4
        %v3912 = vor.u32 %v3911, %v3907
        %v3913 = vrot.slane %v3912, 4
        %v3915 = vshll.u32 %v3555, 16
        %v3917 = vrot.slane %v3915, 5
        %v3918 = vsel %vm1660, %v3913, %v3917
        %v3920 = vshrl.u32 %v3556, 16
        %v3922 = vrot.slane %v3920, 4
        %v3923 = vshll.u32 %v3556, 16
        %v3925 = vrot.slane %v3923, 5
        %v3926 = vor.u32 %v3922, %v3925
        %v3927 = vrot.slane %v3926, 4
        %v3929 = vshll.u32 %v3557, 16
        %v3931 = vrot.slane %v3929, 5
        %v3932 = vsel %vm1660, %v3927, %v3931
        %v3933 = vshrl.u32 %v3557, 16
        %v3935 = vrot.slane %v3933, 4
        %v3936 = vor.u32 %v3935, %v3931
        %v3937 = vrot.slane %v3936, 4
        %v3939 = vshll.u32 %v3558, 16
        %v3941 = vrot.slane %v3939, 5
        %v3942 = vsel %vm1660, %v3937, %v3941
        %s3943 = scalar_lea.vmem [#allocation10], 256
        %v3944 = vld [vmem:[%s3943] sm:$0xf]
        %v3945 = vld [vmem:[%s3943 + $0x4] sm:$0xf]
        %v3946 = vld [vmem:[%s3943 + $0x8] sm:$0xf]
        %v3947 = vld [vmem:[%s3943 + $0xc] sm:$0xf]
        %v3948 = vld [vmem:[%s3943 + $0x10] sm:$0xf]
        %v3949 = vld [vmem:[%s3943 + $0x14] sm:$0xf]
        %v3950 = vld [vmem:[%s3943 + $0x18] sm:$0xf]
        %v3951 = vld [vmem:[%s3943 + $0x1c] sm:$0xf]
        %v3952 = vld [vmem:[%s3943 + $0x20] sm:$0xf]
        %v3953 = vld [vmem:[%s3943 + $0x24] sm:$0xf]
        %v3954 = vld [vmem:[%s3943 + $0x28] sm:$0xf]
        %v3955 = vld [vmem:[%s3943 + $0x2c] sm:$0xf]
        %v3956 = vld [vmem:[%s3943 + $0x30] sm:$0xf]
        %v3957 = vld [vmem:[%s3943 + $0x34] sm:$0xf]
        %v3958 = vld [vmem:[%s3943 + $0x38] sm:$0xf]
        %v3959 = vld [vmem:[%s3943 + $0x3c] sm:$0xf]
        %v3960 = vunpack.c.l.b16 %v3572
        %v3961 = vunpack.c.l.b16 %v3582
        %v3962 = vunpack.c.l.b16 %v3596
        %v3963 = vunpack.c.l.b16 %v3606
        %v3964 = vunpack.c.l.b16 %v3620
        %v3965 = vunpack.c.l.b16 %v3630
        %v3966 = vunpack.c.l.b16 %v3644
        %v3967 = vunpack.c.l.b16 %v3654
        %v3968 = vunpack.c.l.b16 %v3668
        %v3969 = vunpack.c.l.b16 %v3678
        %v3970 = vunpack.c.l.b16 %v3692
        %v3971 = vunpack.c.l.b16 %v3702
        %v3972 = vunpack.c.l.b16 %v3716
        %v3973 = vunpack.c.l.b16 %v3726
        %v3974 = vunpack.c.l.b16 %v3740
        %v3975 = vunpack.c.l.b16 %v3750
        %v3976 = vunpack.c.l.b16 %v3764
        %v3977 = vunpack.c.l.b16 %v3774
        %v3978 = vunpack.c.l.b16 %v3788
        %v3979 = vunpack.c.l.b16 %v3798
        %v3980 = vunpack.c.l.b16 %v3812
        %v3981 = vunpack.c.l.b16 %v3822
        %v3982 = vunpack.c.l.b16 %v3836
        %v3983 = vunpack.c.l.b16 %v3846
        %v3984 = vunpack.c.l.b16 %v3860
        %v3985 = vunpack.c.l.b16 %v3870
        %v3986 = vunpack.c.l.b16 %v3884
        %v3987 = vunpack.c.l.b16 %v3894
        %v3988 = vunpack.c.l.b16 %v3908
        %v3989 = vunpack.c.l.b16 %v3918
        %v3990 = vunpack.c.l.b16 %v3932
        %v3991 = vunpack.c.l.b16 %v3942
        %v3992 = vpack.c.b16 %v3961, %v3960
        %v3993 = vpack.c.b16 %v3963, %v3962
        %v3994 = vpack.c.b16 %v3965, %v3964
        %v3995 = vpack.c.b16 %v3967, %v3966
        %v3996 = vpack.c.b16 %v3969, %v3968
        %v3997 = vpack.c.b16 %v3971, %v3970
        %v3998 = vpack.c.b16 %v3973, %v3972
        %v3999 = vpack.c.b16 %v3975, %v3974
        %v4000 = vpack.c.b16 %v3977, %v3976
        %v4001 = vpack.c.b16 %v3979, %v3978
        %v4002 = vpack.c.b16 %v3981, %v3980
        %v4003 = vpack.c.b16 %v3983, %v3982
        %v4004 = vpack.c.b16 %v3985, %v3984
        %v4005 = vpack.c.b16 %v3987, %v3986
        %v4006 = vpack.c.b16 %v3989, %v3988
        %v4007 = vpack.c.b16 %v3991, %v3990
        %v4040 = vunpack.c.l.b16 %v3944
        %v4041 = vunpack.c.l.b16 %v3945
        %v4042 = vunpack.c.l.b16 %v3946
        %v4043 = vunpack.c.l.b16 %v3947
        %v4044 = vunpack.c.l.b16 %v3948
        %v4045 = vunpack.c.l.b16 %v3949
        %v4046 = vunpack.c.l.b16 %v3950
        %v4047 = vunpack.c.l.b16 %v3951
        %v4048 = vunpack.c.l.b16 %v3952
        %v4049 = vunpack.c.l.b16 %v3953
        %v4050 = vunpack.c.l.b16 %v3954
        %v4051 = vunpack.c.l.b16 %v3955
        %v4052 = vunpack.c.l.b16 %v3956
        %v4053 = vunpack.c.l.b16 %v3957
        %v4054 = vunpack.c.l.b16 %v3958
        %v4055 = vunpack.c.l.b16 %v3959
        %v4056 = vpack.c.b16 %v4041, %v4040
        %v4057 = vpack.c.b16 %v4043, %v4042
        %v4058 = vpack.c.b16 %v4045, %v4044
        %v4059 = vpack.c.b16 %v4047, %v4046
        %v4060 = vpack.c.b16 %v4049, %v4048
        %v4061 = vpack.c.b16 %v4051, %v4050
        %v4062 = vpack.c.b16 %v4053, %v4052
        %v4063 = vpack.c.b16 %v4055, %v4054
        %4072 = vmatprep.subr.bf16.mxu0 0
        %4073 = vmatpush1.bf16.msra.mxu0 %v4056
        %4074 = vmatprep.subr.bf16.mxu0 0
        %4075 = vmatpush1.bf16.msra.mxu0 %v4057
        %4076 = vmatprep.subr.bf16.mxu0 0
        %4077 = vmatpush1.bf16.msra.mxu0 %v4058
        %4078 = vmatprep.subr.bf16.mxu0 0
        %4079 = vmatpush1.bf16.msra.mxu0 %v4059
        %4080 = vmatprep.subr.bf16.mxu0 0
        %4081 = vmatpush1.bf16.msra.mxu0 %v4060
        %4082 = vmatprep.subr.bf16.mxu0 0
        %4083 = vmatpush1.bf16.msra.mxu0 %v4061
        %4084 = vmatprep.subr.bf16.mxu0 0
        %4085 = vmatpush1.bf16.msra.mxu0 %v4062
        %4086 = vmatprep.subr.bf16.mxu0 0
        %4087 = vmatpush1.bf16.msra.mxu0 %v4063
        %4088 = vmatprep.subr.bf16.mxu0 0
        %4089 = vmatpush1.bf16.msra.mxu0 0
        %4090 = vmatprep.subr.bf16.mxu0 0
        %4091 = vmatpush1.bf16.msra.mxu0 0
        %4092 = vmatprep.subr.bf16.mxu0 0
        %4093 = vmatpush1.bf16.msra.mxu0 0
        %4094 = vmatprep.subr.bf16.mxu0 0
        %4095 = vmatpush1.bf16.msra.mxu0 0
        %4096 = vmatprep.subr.bf16.mxu0 0
        %4097 = vmatpush1.bf16.msra.mxu0 0
        %4098 = vmatprep.subr.bf16.mxu0 0
        %4099 = vmatpush1.bf16.msra.mxu0 0
        %4100 = vmatprep.subr.bf16.mxu0 0
        %4101 = vmatpush1.bf16.msra.mxu0 0
        %4102 = vmatprep.subr.bf16.mxu0 0
        %4103 = vmatpush1.bf16.msra.mxu0 0
        %4104 = vmatprep.mubr.bf16.mxu0 0
        %4105 = vmatmul.mubr.bf16.gmra.mrb[0].mxu0 %v3992
        %v4106 = vpop.f32.mrb[0].mxu0
        %v4107 = vadd.f32 0.0, %v4106
        %v4108 = vpop.f32.mrb[0].mxu0
        %v4109 = vpop.f32.mrb[0].mxu0
        %v4110 = vadd.f32 0.0, %v4109
        %v4111 = vpop.f32.mrb[0].mxu0
        %4112 = vmatprep.mubr.bf16.mxu0 0
        %4113 = vmatmul.mubr.bf16.gmra.mrb[0].mxu0 %v3993
        %v4114 = vpop.f32.mrb[0].mxu0
        %v4115 = vadd.f32 0.0, %v4114
        %v4116 = vpop.f32.mrb[0].mxu0
        %v4117 = vpop.f32.mrb[0].mxu0
        %v4118 = vadd.f32 0.0, %v4117
        %v4119 = vpop.f32.mrb[0].mxu0
        %4120 = vmatprep.mubr.bf16.mxu0 0
        %4121 = vmatmul.mubr.bf16.gmra.mrb[0].mxu0 %v3994
        %v4122 = vpop.f32.mrb[0].mxu0
        %v4123 = vadd.f32 0.0, %v4122
        %v4124 = vpop.f32.mrb[0].mxu0
        %v4125 = vpop.f32.mrb[0].mxu0
        %v4126 = vadd.f32 0.0, %v4125
        %v4127 = vpop.f32.mrb[0].mxu0
        %4128 = vmatprep.mubr.bf16.mxu0 0
        %4129 = vmatmul.mubr.bf16.gmra.mrb[0].mxu0 %v3995
        %v4130 = vpop.f32.mrb[0].mxu0
        %v4131 = vadd.f32 0.0, %v4130
        %v4132 = vpop.f32.mrb[0].mxu0
        %v4133 = vpop.f32.mrb[0].mxu0
        %v4134 = vadd.f32 0.0, %v4133
        %v4135 = vpop.f32.mrb[0].mxu0
        %4136 = vmatprep.mubr.bf16.mxu0 0
        %4137 = vmatmul.mubr.bf16.gmra.mrb[0].mxu0 %v3996
        %v4138 = vpop.f32.mrb[0].mxu0
        %v4139 = vadd.f32 0.0, %v4138
        %v4140 = vpop.f32.mrb[0].mxu0
        %v4141 = vpop.f32.mrb[0].mxu0
        %v4142 = vadd.f32 0.0, %v4141
        %v4143 = vpop.f32.mrb[0].mxu0
        %4144 = vmatprep.mubr.bf16.mxu0 0
        %4145 = vmatmul.mubr.bf16.gmra.mrb[0].mxu0 %v3997
        %v4146 = vpop.f32.mrb[0].mxu0
        %v4147 = vadd.f32 0.0, %v4146
        %v4148 = vpop.f32.mrb[0].mxu0
        %v4149 = vpop.f32.mrb[0].mxu0
        %v4150 = vadd.f32 0.0, %v4149
        %v4151 = vpop.f32.mrb[0].mxu0
        %4152 = vmatprep.mubr.bf16.mxu0 0
        %4153 = vmatmul.mubr.bf16.gmra.mrb[0].mxu0 %v3998
        %v4154 = vpop.f32.mrb[0].mxu0
        %v4155 = vadd.f32 0.0, %v4154
        %v4156 = vpop.f32.mrb[0].mxu0
        %v4157 = vpop.f32.mrb[0].mxu0
        %v4158 = vadd.f32 0.0, %v4157
        %v4159 = vpop.f32.mrb[0].mxu0
        %4160 = vmatprep.mubr.bf16.mxu0 0
        %4161 = vmatmul.mubr.bf16.gmra.mrb[0].mxu0 %v3999
        %v4162 = vpop.f32.mrb[0].mxu0
        %v4163 = vadd.f32 0.0, %v4162
        %v4164 = vpop.f32.mrb[0].mxu0
        %v4165 = vpop.f32.mrb[0].mxu0
        %v4166 = vadd.f32 0.0, %v4165
        %v4167 = vpop.f32.mrb[0].mxu0
        %4168 = vmatprep.mubr.bf16.mxu0 0
        %4169 = vmatmul.mubr.bf16.gmra.mrb[0].mxu0 %v4000
        %v4170 = vpop.f32.mrb[0].mxu0
        %v4171 = vadd.f32 0.0, %v4170
        %v4172 = vpop.f32.mrb[0].mxu0
        %v4173 = vpop.f32.mrb[0].mxu0
        %v4174 = vadd.f32 0.0, %v4173
        %v4175 = vpop.f32.mrb[0].mxu0
        %4176 = vmatprep.mubr.bf16.mxu0 0
        %4177 = vmatmul.mubr.bf16.gmra.mrb[0].mxu0 %v4001
        %v4178 = vpop.f32.mrb[0].mxu0
        %v4179 = vadd.f32 0.0, %v4178
        %v4180 = vpop.f32.mrb[0].mxu0
        %v4181 = vpop.f32.mrb[0].mxu0
        %v4182 = vadd.f32 0.0, %v4181
        %v4183 = vpop.f32.mrb[0].mxu0
        %4184 = vmatprep.mubr.bf16.mxu0 0
        %4185 = vmatmul.mubr.bf16.gmra.mrb[0].mxu0 %v4002
        %v4186 = vpop.f32.mrb[0].mxu0
        %v4187 = vadd.f32 0.0, %v4186
        %v4188 = vpop.f32.mrb[0].mxu0
        %v4189 = vpop.f32.mrb[0].mxu0
        %v4190 = vadd.f32 0.0, %v4189
        %v4191 = vpop.f32.mrb[0].mxu0
        %4192 = vmatprep.mubr.bf16.mxu0 0
        %4193 = vmatmul.mubr.bf16.gmra.mrb[0].mxu0 %v4003
        %v4194 = vpop.f32.mrb[0].mxu0
        %v4195 = vadd.f32 0.0, %v4194
        %v4196 = vpop.f32.mrb[0].mxu0
        %v4197 = vpop.f32.mrb[0].mxu0
        %v4198 = vadd.f32 0.0, %v4197
        %v4199 = vpop.f32.mrb[0].mxu0
        %4200 = vmatprep.mubr.bf16.mxu0 0
        %4201 = vmatmul.mubr.bf16.gmra.mrb[0].mxu0 %v4004
        %v4202 = vpop.f32.mrb[0].mxu0
        %v4203 = vadd.f32 0.0, %v4202
        %v4204 = vpop.f32.mrb[0].mxu0
        %v4205 = vpop.f32.mrb[0].mxu0
        %v4206 = vadd.f32 0.0, %v4205
        %v4207 = vpop.f32.mrb[0].mxu0
        %4208 = vmatprep.mubr.bf16.mxu0 0
        %4209 = vmatmul.mubr.bf16.gmra.mrb[0].mxu0 %v4005
        %v4210 = vpop.f32.mrb[0].mxu0
        %v4211 = vadd.f32 0.0, %v4210
        %v4212 = vpop.f32.mrb[0].mxu0
        %v4213 = vpop.f32.mrb[0].mxu0
        %v4214 = vadd.f32 0.0, %v4213
        %v4215 = vpop.f32.mrb[0].mxu0
        %4216 = vmatprep.mubr.bf16.mxu0 0
        %4217 = vmatmul.mubr.bf16.gmra.mrb[0].mxu0 %v4006
        %v4218 = vpop.f32.mrb[0].mxu0
        %v4219 = vadd.f32 0.0, %v4218
        %v4220 = vpop.f32.mrb[0].mxu0
        %v4221 = vpop.f32.mrb[0].mxu0
        %v4222 = vadd.f32 0.0, %v4221
        %v4223 = vpop.f32.mrb[0].mxu0
        %4224 = vmatprep.mubr.bf16.mxu0 0
        %4225 = vmatmul.mubr.bf16.gmra.mrb[0].mxu0 %v4007
        %v4226 = vpop.f32.mrb[0].mxu0
        %v4227 = vadd.f32 0.0, %v4226
        %v4228 = vpop.f32.mrb[0].mxu0
        %v4229 = vpop.f32.mrb[0].mxu0
        %v4230 = vadd.f32 0.0, %v4229
        %v4231 = vpop.f32.mrb[0].mxu0
        %4232 = vdwg.mxu0
        %v4233 = vadd.f32 %v3479, %v4107
        %v4234 = vadd.f32 %v3480, %v4110
        %v4235 = vadd.f32 %v3481, %v4115
        %v4236 = vadd.f32 %v3482, %v4118
        %v4237 = vadd.f32 %v3483, %v4123
        %v4238 = vadd.f32 %v3484, %v4126
        %v4239 = vadd.f32 %v3485, %v4131
        %v4240 = vadd.f32 %v3486, %v4134
        %v4241 = vadd.f32 %v3487, %v4139
        %v4242 = vadd.f32 %v3488, %v4142
        %v4243 = vadd.f32 %v3489, %v4147
        %v4244 = vadd.f32 %v3490, %v4150
        %v4245 = vadd.f32 %v3491, %v4155
        %v4246 = vadd.f32 %v3492, %v4158
        %v4247 = vadd.f32 %v3493, %v4163
        %v4248 = vadd.f32 %v3494, %v4166
        %v4249 = vadd.f32 %v3495, %v4171
        %v4250 = vadd.f32 %v3496, %v4174
        %v4251 = vadd.f32 %v3497, %v4179
        %v4252 = vadd.f32 %v3498, %v4182
        %v4253 = vadd.f32 %v3499, %v4187
        %v4254 = vadd.f32 %v3500, %v4190
        %v4255 = vadd.f32 %v3501, %v4195
        %v4256 = vadd.f32 %v3502, %v4198
        %v4257 = vadd.f32 %v3503, %v4203
        %v4258 = vadd.f32 %v3504, %v4206
        %v4259 = vadd.f32 %v3505, %v4211
        %v4260 = vadd.f32 %v3506, %v4214
        %v4261 = vadd.f32 %v3507, %v4219
        %v4262 = vadd.f32 %v3508, %v4222
        %v4263 = vadd.f32 %v3509, %v4227
        %v4264 = vadd.f32 %v3510, %v4230
        %v4265 = vld [vmem:[%s1251] sm:$0xe]
        %v4266 = vld [vmem:[%s1251 + $0xc] sm:$0xe]
        %v4267 = vld [vmem:[%s1251 + $0x18] sm:$0xe]
        %v4268 = vld [vmem:[%s1251 + $0x24] sm:$0xe]
        %v4269 = vld [vmem:[%s1251 + $0x30] sm:$0xe]
        %v4270 = vld [vmem:[%s1251 + $0x3c] sm:$0xe]
        %v4271 = vld [vmem:[%s1251 + $0x48] sm:$0xe]
        %v4272 = vld [vmem:[%s1251 + $0x54] sm:$0xe]
        %v4273 = vld [vmem:[%s1251 + $0x60] sm:$0xe]
        %v4274 = vld [vmem:[%s1251 + $0x6c] sm:$0xe]
        %v4275 = vld [vmem:[%s1251 + $0x78] sm:$0xe]
        %v4276 = vld [vmem:[%s1251 + $0x84] sm:$0xe]
        %v4277 = vld [vmem:[%s1251 + $0x90] sm:$0xe]
        %v4278 = vld [vmem:[%s1251 + $0x9c] sm:$0xe]
        %v4279 = vld [vmem:[%s1251 + $0xa8] sm:$0xe]
        %v4280 = vld [vmem:[%s1251 + $0xb4] sm:$0xe]
        %v4329 = vrot.slane %v4265, 5
        %v4330 = vrot.slane %v4329, 4
        %v4331 = vrot.slane %v3512, 5
        %v4332 = vsel %vm2690, %v4330, %v4331
        %v4333 = vrot.slane %v4331, 4
        %v4334 = vrot.slane %v3513, 5
        %v4335 = vsel %vm2690, %v4333, %v4334
        %v4336 = vrot.slane %v4266, 5
        %v4337 = vrot.slane %v4336, 4
        %v4338 = vrot.slane %v3515, 5
        %v4339 = vsel %vm2690, %v4337, %v4338
        %v4340 = vrot.slane %v4338, 4
        %v4341 = vrot.slane %v3516, 5
        %v4342 = vsel %vm2690, %v4340, %v4341
        %v4343 = vrot.slane %v4267, 5
        %v4344 = vrot.slane %v4343, 4
        %v4345 = vrot.slane %v3518, 5
        %v4346 = vsel %vm2690, %v4344, %v4345
        %v4347 = vrot.slane %v4345, 4
        %v4348 = vrot.slane %v3519, 5
        %v4349 = vsel %vm2690, %v4347, %v4348
        %v4350 = vrot.slane %v4268, 5
        %v4351 = vrot.slane %v4350, 4
        %v4352 = vrot.slane %v3521, 5
        %v4353 = vsel %vm2690, %v4351, %v4352
        %v4354 = vrot.slane %v4352, 4
        %v4355 = vrot.slane %v3522, 5
        %v4356 = vsel %vm2690, %v4354, %v4355
        %v4357 = vrot.slane %v4269, 5
        %v4358 = vrot.slane %v4357, 4
        %v4359 = vrot.slane %v3524, 5
        %v4360 = vsel %vm2690, %v4358, %v4359
        %v4361 = vrot.slane %v4359, 4
        %v4362 = vrot.slane %v3525, 5
        %v4363 = vsel %vm2690, %v4361, %v4362
        %v4364 = vrot.slane %v4270, 5
        %v4365 = vrot.slane %v4364, 4
        %v4366 = vrot.slane %v3527, 5
        %v4367 = vsel %vm2690, %v4365, %v4366
        %v4368 = vrot.slane %v4366, 4
        %v4369 = vrot.slane %v3528, 5
        %v4370 = vsel %vm2690, %v4368, %v4369
        %v4371 = vrot.slane %v4271, 5
        %v4372 = vrot.slane %v4371, 4
        %v4373 = vrot.slane %v3530, 5
        %v4374 = vsel %vm2690, %v4372, %v4373
        %v4375 = vrot.slane %v4373, 4
        %v4376 = vrot.slane %v3531, 5
        %v4377 = vsel %vm2690, %v4375, %v4376
        %v4378 = vrot.slane %v4272, 5
        %v4379 = vrot.slane %v4378, 4
        %v4380 = vrot.slane %v3533, 5
        %v4381 = vsel %vm2690, %v4379, %v4380
        %v4382 = vrot.slane %v4380, 4
        %v4383 = vrot.slane %v3534, 5
        %v4384 = vsel %vm2690, %v4382, %v4383
        %v4385 = vrot.slane %v4273, 5
        %v4386 = vrot.slane %v4385, 4
        %v4387 = vrot.slane %v3536, 5
        %v4388 = vsel %vm2690, %v4386, %v4387
        %v4389 = vrot.slane %v4387, 4
        %v4390 = vrot.slane %v3537, 5
        %v4391 = vsel %vm2690, %v4389, %v4390
        %v4392 = vrot.slane %v4274, 5
        %v4393 = vrot.slane %v4392, 4
        %v4394 = vrot.slane %v3539, 5
        %v4395 = vsel %vm2690, %v4393, %v4394
        %v4396 = vrot.slane %v4394, 4
        %v4397 = vrot.slane %v3540, 5
        %v4398 = vsel %vm2690, %v4396, %v4397
        %v4399 = vrot.slane %v4275, 5
        %v4400 = vrot.slane %v4399, 4
        %v4401 = vrot.slane %v3542, 5
        %v4402 = vsel %vm2690, %v4400, %v4401
        %v4403 = vrot.slane %v4401, 4
        %v4404 = vrot.slane %v3543, 5
        %v4405 = vsel %vm2690, %v4403, %v4404
        %v4406 = vrot.slane %v4276, 5
        %v4407 = vrot.slane %v4406, 4
        %v4408 = vrot.slane %v3545, 5
        %v4409 = vsel %vm2690, %v4407, %v4408
        %v4410 = vrot.slane %v4408, 4
        %v4411 = vrot.slane %v3546, 5
        %v4412 = vsel %vm2690, %v4410, %v4411
        %v4413 = vrot.slane %v4277, 5
        %v4414 = vrot.slane %v4413, 4
        %v4415 = vrot.slane %v3548, 5
        %v4416 = vsel %vm2690, %v4414, %v4415
        %v4417 = vrot.slane %v4415, 4
        %v4418 = vrot.slane %v3549, 5
        %v4419 = vsel %vm2690, %v4417, %v4418
        %v4420 = vrot.slane %v4278, 5
        %v4421 = vrot.slane %v4420, 4
        %v4422 = vrot.slane %v3551, 5
        %v4423 = vsel %vm2690, %v4421, %v4422
        %v4424 = vrot.slane %v4422, 4
        %v4425 = vrot.slane %v3552, 5
        %v4426 = vsel %vm2690, %v4424, %v4425
        %v4427 = vrot.slane %v4279, 5
        %v4428 = vrot.slane %v4427, 4
        %v4429 = vrot.slane %v3554, 5
        %v4430 = vsel %vm2690, %v4428, %v4429
        %v4431 = vrot.slane %v4429, 4
        %v4432 = vrot.slane %v3555, 5
        %v4433 = vsel %vm2690, %v4431, %v4432
        %v4434 = vrot.slane %v4280, 5
        %v4435 = vrot.slane %v4434, 4
        %v4436 = vrot.slane %v3557, 5
        %v4437 = vsel %vm2690, %v4435, %v4436
        %v4438 = vrot.slane %v4436, 4
        %v4439 = vrot.slane %v3558, 5
        %v4440 = vsel %vm2690, %v4438, %v4439
        %s4441 = scalar_lea.vmem [#allocation10], 320
        %v4442 = vld [vmem:[%s4441] sm:$0xf]
        %v4443 = vld [vmem:[%s4441 + $0x4] sm:$0xf]
        %v4444 = vld [vmem:[%s4441 + $0x8] sm:$0xf]
        %v4445 = vld [vmem:[%s4441 + $0xc] sm:$0xf]
        %v4446 = vld [vmem:[%s4441 + $0x10] sm:$0xf]
        %v4447 = vld [vmem:[%s4441 + $0x14] sm:$0xf]
        %v4448 = vld [vmem:[%s4441 + $0x18] sm:$0xf]
        %v4449 = vld [vmem:[%s4441 + $0x1c] sm:$0xf]
        %v4450 = vld [vmem:[%s4441 + $0x20] sm:$0xf]
        %v4451 = vld [vmem:[%s4441 + $0x24] sm:$0xf]
        %v4452 = vld [vmem:[%s4441 + $0x28] sm:$0xf]
        %v4453 = vld [vmem:[%s4441 + $0x2c] sm:$0xf]
        %v4454 = vld [vmem:[%s4441 + $0x30] sm:$0xf]
        %v4455 = vld [vmem:[%s4441 + $0x34] sm:$0xf]
        %v4456 = vld [vmem:[%s4441 + $0x38] sm:$0xf]
        %v4457 = vld [vmem:[%s4441 + $0x3c] sm:$0xf]
        %v4458 = vunpack.c.l.b16 %v4332
        %v4459 = vunpack.c.l.b16 %v4335
        %v4460 = vunpack.c.l.b16 %v4339
        %v4461 = vunpack.c.l.b16 %v4342
        %v4462 = vunpack.c.l.b16 %v4346
        %v4463 = vunpack.c.l.b16 %v4349
        %v4464 = vunpack.c.l.b16 %v4353
        %v4465 = vunpack.c.l.b16 %v4356
        %v4466 = vunpack.c.l.b16 %v4360
        %v4467 = vunpack.c.l.b16 %v4363
        %v4468 = vunpack.c.l.b16 %v4367
        %v4469 = vunpack.c.l.b16 %v4370
        %v4470 = vunpack.c.l.b16 %v4374
        %v4471 = vunpack.c.l.b16 %v4377
        %v4472 = vunpack.c.l.b16 %v4381
        %v4473 = vunpack.c.l.b16 %v4384
        %v4474 = vunpack.c.l.b16 %v4388
        %v4475 = vunpack.c.l.b16 %v4391
        %v4476 = vunpack.c.l.b16 %v4395
        %v4477 = vunpack.c.l.b16 %v4398
        %v4478 = vunpack.c.l.b16 %v4402
        %v4479 = vunpack.c.l.b16 %v4405
        %v4480 = vunpack.c.l.b16 %v4409
        %v4481 = vunpack.c.l.b16 %v4412
        %v4482 = vunpack.c.l.b16 %v4416
        %v4483 = vunpack.c.l.b16 %v4419
        %v4484 = vunpack.c.l.b16 %v4423
        %v4485 = vunpack.c.l.b16 %v4426
        %v4486 = vunpack.c.l.b16 %v4430
        %v4487 = vunpack.c.l.b16 %v4433
        %v4488 = vunpack.c.l.b16 %v4437
        %v4489 = vunpack.c.l.b16 %v4440
        %v4490 = vpack.c.b16 %v4459, %v4458
        %v4491 = vpack.c.b16 %v4461, %v4460
        %v4492 = vpack.c.b16 %v4463, %v4462
        %v4493 = vpack.c.b16 %v4465, %v4464
        %v4494 = vpack.c.b16 %v4467, %v4466
        %v4495 = vpack.c.b16 %v4469, %v4468
        %v4496 = vpack.c.b16 %v4471, %v4470
        %v4497 = vpack.c.b16 %v4473, %v4472
        %v4498 = vpack.c.b16 %v4475, %v4474
        %v4499 = vpack.c.b16 %v4477, %v4476
        %v4500 = vpack.c.b16 %v4479, %v4478
        %v4501 = vpack.c.b16 %v4481, %v4480
        %v4502 = vpack.c.b16 %v4483, %v4482
        %v4503 = vpack.c.b16 %v4485, %v4484
        %v4504 = vpack.c.b16 %v4487, %v4486
        %v4505 = vpack.c.b16 %v4489, %v4488
        %v4538 = vunpack.c.l.b16 %v4442
        %v4539 = vunpack.c.l.b16 %v4443
        %v4540 = vunpack.c.l.b16 %v4444
        %v4541 = vunpack.c.l.b16 %v4445
        %v4542 = vunpack.c.l.b16 %v4446
        %v4543 = vunpack.c.l.b16 %v4447
        %v4544 = vunpack.c.l.b16 %v4448
        %v4545 = vunpack.c.l.b16 %v4449
        %v4546 = vunpack.c.l.b16 %v4450
        %v4547 = vunpack.c.l.b16 %v4451
        %v4548 = vunpack.c.l.b16 %v4452
        %v4549 = vunpack.c.l.b16 %v4453
        %v4550 = vunpack.c.l.b16 %v4454
        %v4551 = vunpack.c.l.b16 %v4455
        %v4552 = vunpack.c.l.b16 %v4456
        %v4553 = vunpack.c.l.b16 %v4457
        %v4554 = vpack.c.b16 %v4539, %v4538
        %v4555 = vpack.c.b16 %v4541, %v4540
        %v4556 = vpack.c.b16 %v4543, %v4542
        %v4557 = vpack.c.b16 %v4545, %v4544
        %v4558 = vpack.c.b16 %v4547, %v4546
        %v4559 = vpack.c.b16 %v4549, %v4548
        %v4560 = vpack.c.b16 %v4551, %v4550
        %v4561 = vpack.c.b16 %v4553, %v4552
        %4570 = vmatprep.subr.bf16.mxu0 0
        %4571 = vmatpush1.bf16.msra.mxu0 %v4554
        %4572 = vmatprep.subr.bf16.mxu0 0
        %4573 = vmatpush1.bf16.msra.mxu0 %v4555
        %4574 = vmatprep.subr.bf16.mxu0 0
        %4575 = vmatpush1.bf16.msra.mxu0 %v4556
        %4576 = vmatprep.subr.bf16.mxu0 0
        %4577 = vmatpush1.bf16.msra.mxu0 %v4557
        %4578 = vmatprep.subr.bf16.mxu0 0
        %4579 = vmatpush1.bf16.msra.mxu0 %v4558
        %4580 = vmatprep.subr.bf16.mxu0 0
        %4581 = vmatpush1.bf16.msra.mxu0 %v4559
        %4582 = vmatprep.subr.bf16.mxu0 0
        %4583 = vmatpush1.bf16.msra.mxu0 %v4560
        %4584 = vmatprep.subr.bf16.mxu0 0
        %4585 = vmatpush1.bf16.msra.mxu0 %v4561
        %4586 = vmatprep.subr.bf16.mxu0 0
        %4587 = vmatpush1.bf16.msra.mxu0 0
        %4588 = vmatprep.subr.bf16.mxu0 0
        %4589 = vmatpush1.bf16.msra.mxu0 0
        %4590 = vmatprep.subr.bf16.mxu0 0
        %4591 = vmatpush1.bf16.msra.mxu0 0
        %4592 = vmatprep.subr.bf16.mxu0 0
        %4593 = vmatpush1.bf16.msra.mxu0 0
        %4594 = vmatprep.subr.bf16.mxu0 0
        %4595 = vmatpush1.bf16.msra.mxu0 0
        %4596 = vmatprep.subr.bf16.mxu0 0
        %4597 = vmatpush1.bf16.msra.mxu0 0
        %4598 = vmatprep.subr.bf16.mxu0 0
        %4599 = vmatpush1.bf16.msra.mxu0 0
        %4600 = vmatprep.subr.bf16.mxu0 0
        %4601 = vmatpush1.bf16.msra.mxu0 0
        %4602 = vmatprep.mubr.bf16.mxu0 0
        %4603 = vmatmul.mubr.bf16.gmra.mrb[0].mxu0 %v4490
        %v4604 = vpop.f32.mrb[0].mxu0
        %v4605 = vadd.f32 0.0, %v4604
        %v4606 = vpop.f32.mrb[0].mxu0
        %v4607 = vpop.f32.mrb[0].mxu0
        %v4608 = vadd.f32 0.0, %v4607
        %v4609 = vpop.f32.mrb[0].mxu0
        %4610 = vmatprep.mubr.bf16.mxu0 0
        %4611 = vmatmul.mubr.bf16.gmra.mrb[0].mxu0 %v4491
        %v4612 = vpop.f32.mrb[0].mxu0
        %v4613 = vadd.f32 0.0, %v4612
        %v4614 = vpop.f32.mrb[0].mxu0
        %v4615 = vpop.f32.mrb[0].mxu0
        %v4616 = vadd.f32 0.0, %v4615
        %v4617 = vpop.f32.mrb[0].mxu0
        %4618 = vmatprep.mubr.bf16.mxu0 0
        %4619 = vmatmul.mubr.bf16.gmra.mrb[0].mxu0 %v4492
        %v4620 = vpop.f32.mrb[0].mxu0
        %v4621 = vadd.f32 0.0, %v4620
        %v4622 = vpop.f32.mrb[0].mxu0
        %v4623 = vpop.f32.mrb[0].mxu0
        %v4624 = vadd.f32 0.0, %v4623
        %v4625 = vpop.f32.mrb[0].mxu0
        %4626 = vmatprep.mubr.bf16.mxu0 0
        %4627 = vmatmul.mubr.bf16.gmra.mrb[0].mxu0 %v4493
        %v4628 = vpop.f32.mrb[0].mxu0
        %v4629 = vadd.f32 0.0, %v4628
        %v4630 = vpop.f32.mrb[0].mxu0
        %v4631 = vpop.f32.mrb[0].mxu0
        %v4632 = vadd.f32 0.0, %v4631
        %v4633 = vpop.f32.mrb[0].mxu0
        %4634 = vmatprep.mubr.bf16.mxu0 0
        %4635 = vmatmul.mubr.bf16.gmra.mrb[0].mxu0 %v4494
        %v4636 = vpop.f32.mrb[0].mxu0
        %v4637 = vadd.f32 0.0, %v4636
        %v4638 = vpop.f32.mrb[0].mxu0
        %v4639 = vpop.f32.mrb[0].mxu0
        %v4640 = vadd.f32 0.0, %v4639
        %v4641 = vpop.f32.mrb[0].mxu0
        %4642 = vmatprep.mubr.bf16.mxu0 0
        %4643 = vmatmul.mubr.bf16.gmra.mrb[0].mxu0 %v4495
        %v4644 = vpop.f32.mrb[0].mxu0
        %v4645 = vadd.f32 0.0, %v4644
        %v4646 = vpop.f32.mrb[0].mxu0
        %v4647 = vpop.f32.mrb[0].mxu0
        %v4648 = vadd.f32 0.0, %v4647
        %v4649 = vpop.f32.mrb[0].mxu0
        %4650 = vmatprep.mubr.bf16.mxu0 0
        %4651 = vmatmul.mubr.bf16.gmra.mrb[0].mxu0 %v4496
        %v4652 = vpop.f32.mrb[0].mxu0
        %v4653 = vadd.f32 0.0, %v4652
        %v4654 = vpop.f32.mrb[0].mxu0
        %v4655 = vpop.f32.mrb[0].mxu0
        %v4656 = vadd.f32 0.0, %v4655
        %v4657 = vpop.f32.mrb[0].mxu0
        %4658 = vmatprep.mubr.bf16.mxu0 0
        %4659 = vmatmul.mubr.bf16.gmra.mrb[0].mxu0 %v4497
        %v4660 = vpop.f32.mrb[0].mxu0
        %v4661 = vadd.f32 0.0, %v4660
        %v4662 = vpop.f32.mrb[0].mxu0
        %v4663 = vpop.f32.mrb[0].mxu0
        %v4664 = vadd.f32 0.0, %v4663
        %v4665 = vpop.f32.mrb[0].mxu0
        %4666 = vmatprep.mubr.bf16.mxu0 0
        %4667 = vmatmul.mubr.bf16.gmra.mrb[0].mxu0 %v4498
        %v4668 = vpop.f32.mrb[0].mxu0
        %v4669 = vadd.f32 0.0, %v4668
        %v4670 = vpop.f32.mrb[0].mxu0
        %v4671 = vpop.f32.mrb[0].mxu0
        %v4672 = vadd.f32 0.0, %v4671
        %v4673 = vpop.f32.mrb[0].mxu0
        %4674 = vmatprep.mubr.bf16.mxu0 0
        %4675 = vmatmul.mubr.bf16.gmra.mrb[0].mxu0 %v4499
        %v4676 = vpop.f32.mrb[0].mxu0
        %v4677 = vadd.f32 0.0, %v4676
        %v4678 = vpop.f32.mrb[0].mxu0
        %v4679 = vpop.f32.mrb[0].mxu0
        %v4680 = vadd.f32 0.0, %v4679
        %v4681 = vpop.f32.mrb[0].mxu0
        %4682 = vmatprep.mubr.bf16.mxu0 0
        %4683 = vmatmul.mubr.bf16.gmra.mrb[0].mxu0 %v4500
        %v4684 = vpop.f32.mrb[0].mxu0
        %v4685 = vadd.f32 0.0, %v4684
        %v4686 = vpop.f32.mrb[0].mxu0
        %v4687 = vpop.f32.mrb[0].mxu0
        %v4688 = vadd.f32 0.0, %v4687
        %v4689 = vpop.f32.mrb[0].mxu0
        %4690 = vmatprep.mubr.bf16.mxu0 0
        %4691 = vmatmul.mubr.bf16.gmra.mrb[0].mxu0 %v4501
        %v4692 = vpop.f32.mrb[0].mxu0
        %v4693 = vadd.f32 0.0, %v4692
        %v4694 = vpop.f32.mrb[0].mxu0
        %v4695 = vpop.f32.mrb[0].mxu0
        %v4696 = vadd.f32 0.0, %v4695
        %v4697 = vpop.f32.mrb[0].mxu0
        %4698 = vmatprep.mubr.bf16.mxu0 0
        %4699 = vmatmul.mubr.bf16.gmra.mrb[0].mxu0 %v4502
        %v4700 = vpop.f32.mrb[0].mxu0
        %v4701 = vadd.f32 0.0, %v4700
        %v4702 = vpop.f32.mrb[0].mxu0
        %v4703 = vpop.f32.mrb[0].mxu0
        %v4704 = vadd.f32 0.0, %v4703
        %v4705 = vpop.f32.mrb[0].mxu0
        %4706 = vmatprep.mubr.bf16.mxu0 0
        %4707 = vmatmul.mubr.bf16.gmra.mrb[0].mxu0 %v4503
        %v4708 = vpop.f32.mrb[0].mxu0
        %v4709 = vadd.f32 0.0, %v4708
        %v4710 = vpop.f32.mrb[0].mxu0
        %v4711 = vpop.f32.mrb[0].mxu0
        %v4712 = vadd.f32 0.0, %v4711
        %v4713 = vpop.f32.mrb[0].mxu0
        %4714 = vmatprep.mubr.bf16.mxu0 0
        %4715 = vmatmul.mubr.bf16.gmra.mrb[0].mxu0 %v4504
        %v4716 = vpop.f32.mrb[0].mxu0
        %v4717 = vadd.f32 0.0, %v4716
        %v4718 = vpop.f32.mrb[0].mxu0
        %v4719 = vpop.f32.mrb[0].mxu0
        %v4720 = vadd.f32 0.0, %v4719
        %v4721 = vpop.f32.mrb[0].mxu0
        %4722 = vmatprep.mubr.bf16.mxu0 0
        %4723 = vmatmul.mubr.bf16.gmra.mrb[0].mxu0 %v4505
        %v4724 = vpop.f32.mrb[0].mxu0
        %v4725 = vadd.f32 0.0, %v4724
        %v4726 = vpop.f32.mrb[0].mxu0
        %v4727 = vpop.f32.mrb[0].mxu0
        %v4728 = vadd.f32 0.0, %v4727
        %v4729 = vpop.f32.mrb[0].mxu0
        %4730 = vdwg.mxu0
        %v4731 = vadd.f32 %v4233, %v4605
        %v4732 = vadd.f32 %v4234, %v4608
        %v4733 = vadd.f32 %v4235, %v4613
        %v4734 = vadd.f32 %v4236, %v4616
        %v4735 = vadd.f32 %v4237, %v4621
        %v4736 = vadd.f32 %v4238, %v4624
        %v4737 = vadd.f32 %v4239, %v4629
        %v4738 = vadd.f32 %v4240, %v4632
        %v4739 = vadd.f32 %v4241, %v4637
        %v4740 = vadd.f32 %v4242, %v4640
        %v4741 = vadd.f32 %v4243, %v4645
        %v4742 = vadd.f32 %v4244, %v4648
        %v4743 = vadd.f32 %v4245, %v4653
        %v4744 = vadd.f32 %v4246, %v4656
        %v4745 = vadd.f32 %v4247, %v4661
        %v4746 = vadd.f32 %v4248, %v4664
        %v4747 = vadd.f32 %v4249, %v4669
        %v4748 = vadd.f32 %v4250, %v4672
        %v4749 = vadd.f32 %v4251, %v4677
        %v4750 = vadd.f32 %v4252, %v4680
        %v4751 = vadd.f32 %v4253, %v4685
        %v4752 = vadd.f32 %v4254, %v4688
        %v4753 = vadd.f32 %v4255, %v4693
        %v4754 = vadd.f32 %v4256, %v4696
        %v4755 = vadd.f32 %v4257, %v4701
        %v4756 = vadd.f32 %v4258, %v4704
        %v4757 = vadd.f32 %v4259, %v4709
        %v4758 = vadd.f32 %v4260, %v4712
        %v4759 = vadd.f32 %v4261, %v4717
        %v4760 = vadd.f32 %v4262, %v4720
        %v4761 = vadd.f32 %v4263, %v4725
        %v4762 = vadd.f32 %v4264, %v4728
        %s4763 = scalar_lea.vmem [#allocation2], 24
        %v4764 = vld [vmem:[%s4763] sm:$0xf]
        %v4765 = vld [vmem:[%s4763 + $0x4] sm:$0xf]
        %v4766 = vld [vmem:[%s4763 + $0xc] sm:$0xf]
        %v4767 = vld [vmem:[%s4763 + $0x10] sm:$0xf]
        %v4768 = vld [vmem:[%s4763 + $0x18] sm:$0xf]
        %v4769 = vld [vmem:[%s4763 + $0x1c] sm:$0xf]
        %v4770 = vld [vmem:[%s4763 + $0x24] sm:$0xf]
        %v4771 = vld [vmem:[%s4763 + $0x28] sm:$0xf]
        %v4772 = vld [vmem:[%s4763 + $0x30] sm:$0xf]
        %v4773 = vld [vmem:[%s4763 + $0x34] sm:$0xf]
        %v4774 = vld [vmem:[%s4763 + $0x3c] sm:$0xf]
        %v4775 = vld [vmem:[%s4763 + $0x40] sm:$0xf]
        %v4776 = vld [vmem:[%s4763 + $0x48] sm:$0xf]
        %v4777 = vld [vmem:[%s4763 + $0x4c] sm:$0xf]
        %v4778 = vld [vmem:[%s4763 + $0x54] sm:$0xf]
        %v4779 = vld [vmem:[%s4763 + $0x58] sm:$0xf]
        %v4780 = vld [vmem:[%s4763 + $0x60] sm:$0xf]
        %v4781 = vld [vmem:[%s4763 + $0x64] sm:$0xf]
        %v4782 = vld [vmem:[%s4763 + $0x6c] sm:$0xf]
        %v4783 = vld [vmem:[%s4763 + $0x70] sm:$0xf]
        %v4784 = vld [vmem:[%s4763 + $0x78] sm:$0xf]
        %v4785 = vld [vmem:[%s4763 + $0x7c] sm:$0xf]
        %v4786 = vld [vmem:[%s4763 + $0x84] sm:$0xf]
        %v4787 = vld [vmem:[%s4763 + $0x88] sm:$0xf]
        %v4788 = vld [vmem:[%s4763 + $0x90] sm:$0xf]
        %v4789 = vld [vmem:[%s4763 + $0x94] sm:$0xf]
        %v4790 = vld [vmem:[%s4763 + $0x9c] sm:$0xf]
        %v4791 = vld [vmem:[%s4763 + $0xa0] sm:$0xf]
        %v4792 = vld [vmem:[%s4763 + $0xa8] sm:$0xf]
        %v4793 = vld [vmem:[%s4763 + $0xac] sm:$0xf]
        %v4794 = vld [vmem:[%s4763 + $0xb4] sm:$0xf]
        %v4795 = vld [vmem:[%s4763 + $0xb8] sm:$0xf]
        %s4796 = scalar_lea.vmem [#allocation10], 384
        %v4797 = vld [vmem:[%s4796] sm:$0xf]
        %v4798 = vld [vmem:[%s4796 + $0x4] sm:$0xf]
        %v4799 = vld [vmem:[%s4796 + $0x8] sm:$0xf]
        %v4800 = vld [vmem:[%s4796 + $0xc] sm:$0xf]
        %v4801 = vld [vmem:[%s4796 + $0x10] sm:$0xf]
        %v4802 = vld [vmem:[%s4796 + $0x14] sm:$0xf]
        %v4803 = vld [vmem:[%s4796 + $0x18] sm:$0xf]
        %v4804 = vld [vmem:[%s4796 + $0x1c] sm:$0xf]
        %v4805 = vld [vmem:[%s4796 + $0x20] sm:$0xf]
        %v4806 = vld [vmem:[%s4796 + $0x24] sm:$0xf]
        %v4807 = vld [vmem:[%s4796 + $0x28] sm:$0xf]
        %v4808 = vld [vmem:[%s4796 + $0x2c] sm:$0xf]
        %v4809 = vld [vmem:[%s4796 + $0x30] sm:$0xf]
        %v4810 = vld [vmem:[%s4796 + $0x34] sm:$0xf]
        %v4811 = vld [vmem:[%s4796 + $0x38] sm:$0xf]
        %v4812 = vld [vmem:[%s4796 + $0x3c] sm:$0xf]
        %v4845 = vunpack.c.l.b16 %v4764
        %v4846 = vunpack.c.l.b16 %v4765
        %v4847 = vunpack.c.l.b16 %v4766
        %v4848 = vunpack.c.l.b16 %v4767
        %v4849 = vunpack.c.l.b16 %v4768
        %v4850 = vunpack.c.l.b16 %v4769
        %v4851 = vunpack.c.l.b16 %v4770
        %v4852 = vunpack.c.l.b16 %v4771
        %v4853 = vunpack.c.l.b16 %v4772
        %v4854 = vunpack.c.l.b16 %v4773
        %v4855 = vunpack.c.l.b16 %v4774
        %v4856 = vunpack.c.l.b16 %v4775
        %v4857 = vunpack.c.l.b16 %v4776
        %v4858 = vunpack.c.l.b16 %v4777
        %v4859 = vunpack.c.l.b16 %v4778
        %v4860 = vunpack.c.l.b16 %v4779
        %v4861 = vunpack.c.l.b16 %v4780
        %v4862 = vunpack.c.l.b16 %v4781
        %v4863 = vunpack.c.l.b16 %v4782
        %v4864 = vunpack.c.l.b16 %v4783
        %v4865 = vunpack.c.l.b16 %v4784
        %v4866 = vunpack.c.l.b16 %v4785
        %v4867 = vunpack.c.l.b16 %v4786
        %v4868 = vunpack.c.l.b16 %v4787
        %v4869 = vunpack.c.l.b16 %v4788
        %v4870 = vunpack.c.l.b16 %v4789
        %v4871 = vunpack.c.l.b16 %v4790
        %v4872 = vunpack.c.l.b16 %v4791
        %v4873 = vunpack.c.l.b16 %v4792
        %v4874 = vunpack.c.l.b16 %v4793
        %v4875 = vunpack.c.l.b16 %v4794
        %v4876 = vunpack.c.l.b16 %v4795
        %v4877 = vpack.c.b16 %v4846, %v4845
        %v4878 = vpack.c.b16 %v4848, %v4847
        %v4879 = vpack.c.b16 %v4850, %v4849
        %v4880 = vpack.c.b16 %v4852, %v4851
        %v4881 = vpack.c.b16 %v4854, %v4853
        %v4882 = vpack.c.b16 %v4856, %v4855
        %v4883 = vpack.c.b16 %v4858, %v4857
        %v4884 = vpack.c.b16 %v4860, %v4859
        %v4885 = vpack.c.b16 %v4862, %v4861
        %v4886 = vpack.c.b16 %v4864, %v4863
        %v4887 = vpack.c.b16 %v4866, %v4865
        %v4888 = vpack.c.b16 %v4868, %v4867
        %v4889 = vpack.c.b16 %v4870, %v4869
        %v4890 = vpack.c.b16 %v4872, %v4871
        %v4891 = vpack.c.b16 %v4874, %v4873
        %v4892 = vpack.c.b16 %v4876, %v4875
        %v4925 = vunpack.c.l.b16 %v4797
        %v4926 = vunpack.c.l.b16 %v4798
        %v4927 = vunpack.c.l.b16 %v4799
        %v4928 = vunpack.c.l.b16 %v4800
        %v4929 = vunpack.c.l.b16 %v4801
        %v4930 = vunpack.c.l.b16 %v4802
        %v4931 = vunpack.c.l.b16 %v4803
        %v4932 = vunpack.c.l.b16 %v4804
        %v4933 = vunpack.c.l.b16 %v4805
        %v4934 = vunpack.c.l.b16 %v4806
        %v4935 = vunpack.c.l.b16 %v4807
        %v4936 = vunpack.c.l.b16 %v4808
        %v4937 = vunpack.c.l.b16 %v4809
        %v4938 = vunpack.c.l.b16 %v4810
        %v4939 = vunpack.c.l.b16 %v4811
        %v4940 = vunpack.c.l.b16 %v4812
        %v4941 = vpack.c.b16 %v4926, %v4925
        %v4942 = vpack.c.b16 %v4928, %v4927
        %v4943 = vpack.c.b16 %v4930, %v4929
        %v4944 = vpack.c.b16 %v4932, %v4931
        %v4945 = vpack.c.b16 %v4934, %v4933
        %v4946 = vpack.c.b16 %v4936, %v4935
        %v4947 = vpack.c.b16 %v4938, %v4937
        %v4948 = vpack.c.b16 %v4940, %v4939
        %4957 = vmatprep.subr.bf16.mxu0 0
        %4958 = vmatpush1.bf16.msra.mxu0 %v4941
        %4959 = vmatprep.subr.bf16.mxu0 0
        %4960 = vmatpush1.bf16.msra.mxu0 %v4942
        %4961 = vmatprep.subr.bf16.mxu0 0
        %4962 = vmatpush1.bf16.msra.mxu0 %v4943
        %4963 = vmatprep.subr.bf16.mxu0 0
        %4964 = vmatpush1.bf16.msra.mxu0 %v4944
        %4965 = vmatprep.subr.bf16.mxu0 0
        %4966 = vmatpush1.bf16.msra.mxu0 %v4945
        %4967 = vmatprep.subr.bf16.mxu0 0
        %4968 = vmatpush1.bf16.msra.mxu0 %v4946
        %4969 = vmatprep.subr.bf16.mxu0 0
        %4970 = vmatpush1.bf16.msra.mxu0 %v4947
        %4971 = vmatprep.subr.bf16.mxu0 0
        %4972 = vmatpush1.bf16.msra.mxu0 %v4948
        %4973 = vmatprep.subr.bf16.mxu0 0
        %4974 = vmatpush1.bf16.msra.mxu0 0
        %4975 = vmatprep.subr.bf16.mxu0 0
        %4976 = vmatpush1.bf16.msra.mxu0 0
        %4977 = vmatprep.subr.bf16.mxu0 0
        %4978 = vmatpush1.bf16.msra.mxu0 0
        %4979 = vmatprep.subr.bf16.mxu0 0
        %4980 = vmatpush1.bf16.msra.mxu0 0
        %4981 = vmatprep.subr.bf16.mxu0 0
        %4982 = vmatpush1.bf16.msra.mxu0 0
        %4983 = vmatprep.subr.bf16.mxu0 0
        %4984 = vmatpush1.bf16.msra.mxu0 0
        %4985 = vmatprep.subr.bf16.mxu0 0
        %4986 = vmatpush1.bf16.msra.mxu0 0
        %4987 = vmatprep.subr.bf16.mxu0 0
        %4988 = vmatpush1.bf16.msra.mxu0 0
        %4989 = vmatprep.mubr.bf16.mxu0 0
        %4990 = vmatmul.mubr.bf16.gmra.mrb[0].mxu0 %v4877
        %v4991 = vpop.f32.mrb[0].mxu0
        %v4992 = vadd.f32 0.0, %v4991
        %v4993 = vpop.f32.mrb[0].mxu0
        %v4994 = vpop.f32.mrb[0].mxu0
        %v4995 = vadd.f32 0.0, %v4994
        %v4996 = vpop.f32.mrb[0].mxu0
        %4997 = vmatprep.mubr.bf16.mxu0 0
        %4998 = vmatmul.mubr.bf16.gmra.mrb[0].mxu0 %v4878
        %v4999 = vpop.f32.mrb[0].mxu0
        %v5000 = vadd.f32 0.0, %v4999
        %v5001 = vpop.f32.mrb[0].mxu0
        %v5002 = vpop.f32.mrb[0].mxu0
        %v5003 = vadd.f32 0.0, %v5002
        %v5004 = vpop.f32.mrb[0].mxu0
        %5005 = vmatprep.mubr.bf16.mxu0 0
        %5006 = vmatmul.mubr.bf16.gmra.mrb[0].mxu0 %v4879
        %v5007 = vpop.f32.mrb[0].mxu0
        %v5008 = vadd.f32 0.0, %v5007
        %v5009 = vpop.f32.mrb[0].mxu0
        %v5010 = vpop.f32.mrb[0].mxu0
        %v5011 = vadd.f32 0.0, %v5010
        %v5012 = vpop.f32.mrb[0].mxu0
        %5013 = vmatprep.mubr.bf16.mxu0 0
        %5014 = vmatmul.mubr.bf16.gmra.mrb[0].mxu0 %v4880
        %v5015 = vpop.f32.mrb[0].mxu0
        %v5016 = vadd.f32 0.0, %v5015
        %v5017 = vpop.f32.mrb[0].mxu0
        %v5018 = vpop.f32.mrb[0].mxu0
        %v5019 = vadd.f32 0.0, %v5018
        %v5020 = vpop.f32.mrb[0].mxu0
        %5021 = vmatprep.mubr.bf16.mxu0 0
        %5022 = vmatmul.mubr.bf16.gmra.mrb[0].mxu0 %v4881
        %v5023 = vpop.f32.mrb[0].mxu0
        %v5024 = vadd.f32 0.0, %v5023
        %v5025 = vpop.f32.mrb[0].mxu0
        %v5026 = vpop.f32.mrb[0].mxu0
        %v5027 = vadd.f32 0.0, %v5026
        %v5028 = vpop.f32.mrb[0].mxu0
        %5029 = vmatprep.mubr.bf16.mxu0 0
        %5030 = vmatmul.mubr.bf16.gmra.mrb[0].mxu0 %v4882
        %v5031 = vpop.f32.mrb[0].mxu0
        %v5032 = vadd.f32 0.0, %v5031
        %v5033 = vpop.f32.mrb[0].mxu0
        %v5034 = vpop.f32.mrb[0].mxu0
        %v5035 = vadd.f32 0.0, %v5034
        %v5036 = vpop.f32.mrb[0].mxu0
        %5037 = vmatprep.mubr.bf16.mxu0 0
        %5038 = vmatmul.mubr.bf16.gmra.mrb[0].mxu0 %v4883
        %v5039 = vpop.f32.mrb[0].mxu0
        %v5040 = vadd.f32 0.0, %v5039
        %v5041 = vpop.f32.mrb[0].mxu0
        %v5042 = vpop.f32.mrb[0].mxu0
        %v5043 = vadd.f32 0.0, %v5042
        %v5044 = vpop.f32.mrb[0].mxu0
        %5045 = vmatprep.mubr.bf16.mxu0 0
        %5046 = vmatmul.mubr.bf16.gmra.mrb[0].mxu0 %v4884
        %v5047 = vpop.f32.mrb[0].mxu0
        %v5048 = vadd.f32 0.0, %v5047
        %v5049 = vpop.f32.mrb[0].mxu0
        %v5050 = vpop.f32.mrb[0].mxu0
        %v5051 = vadd.f32 0.0, %v5050
        %v5052 = vpop.f32.mrb[0].mxu0
        %5053 = vmatprep.mubr.bf16.mxu0 0
        %5054 = vmatmul.mubr.bf16.gmra.mrb[0].mxu0 %v4885
        %v5055 = vpop.f32.mrb[0].mxu0
        %v5056 = vadd.f32 0.0, %v5055
        %v5057 = vpop.f32.mrb[0].mxu0
        %v5058 = vpop.f32.mrb[0].mxu0
        %v5059 = vadd.f32 0.0, %v5058
        %v5060 = vpop.f32.mrb[0].mxu0
        %5061 = vmatprep.mubr.bf16.mxu0 0
        %5062 = vmatmul.mubr.bf16.gmra.mrb[0].mxu0 %v4886
        %v5063 = vpop.f32.mrb[0].mxu0
        %v5064 = vadd.f32 0.0, %v5063
        %v5065 = vpop.f32.mrb[0].mxu0
        %v5066 = vpop.f32.mrb[0].mxu0
        %v5067 = vadd.f32 0.0, %v5066
        %v5068 = vpop.f32.mrb[0].mxu0
        %5069 = vmatprep.mubr.bf16.mxu0 0
        %5070 = vmatmul.mubr.bf16.gmra.mrb[0].mxu0 %v4887
        %v5071 = vpop.f32.mrb[0].mxu0
        %v5072 = vadd.f32 0.0, %v5071
        %v5073 = vpop.f32.mrb[0].mxu0
        %v5074 = vpop.f32.mrb[0].mxu0
        %v5075 = vadd.f32 0.0, %v5074
        %v5076 = vpop.f32.mrb[0].mxu0
        %5077 = vmatprep.mubr.bf16.mxu0 0
        %5078 = vmatmul.mubr.bf16.gmra.mrb[0].mxu0 %v4888
        %v5079 = vpop.f32.mrb[0].mxu0
        %v5080 = vadd.f32 0.0, %v5079
        %v5081 = vpop.f32.mrb[0].mxu0
        %v5082 = vpop.f32.mrb[0].mxu0
        %v5083 = vadd.f32 0.0, %v5082
        %v5084 = vpop.f32.mrb[0].mxu0
        %5085 = vmatprep.mubr.bf16.mxu0 0
        %5086 = vmatmul.mubr.bf16.gmra.mrb[0].mxu0 %v4889
        %v5087 = vpop.f32.mrb[0].mxu0
        %v5088 = vadd.f32 0.0, %v5087
        %v5089 = vpop.f32.mrb[0].mxu0
        %v5090 = vpop.f32.mrb[0].mxu0
        %v5091 = vadd.f32 0.0, %v5090
        %v5092 = vpop.f32.mrb[0].mxu0
        %5093 = vmatprep.mubr.bf16.mxu0 0
        %5094 = vmatmul.mubr.bf16.gmra.mrb[0].mxu0 %v4890
        %v5095 = vpop.f32.mrb[0].mxu0
        %v5096 = vadd.f32 0.0, %v5095
        %v5097 = vpop.f32.mrb[0].mxu0
        %v5098 = vpop.f32.mrb[0].mxu0
        %v5099 = vadd.f32 0.0, %v5098
        %v5100 = vpop.f32.mrb[0].mxu0
        %5101 = vmatprep.mubr.bf16.mxu0 0
        %5102 = vmatmul.mubr.bf16.gmra.mrb[0].mxu0 %v4891
        %v5103 = vpop.f32.mrb[0].mxu0
        %v5104 = vadd.f32 0.0, %v5103
        %v5105 = vpop.f32.mrb[0].mxu0
        %v5106 = vpop.f32.mrb[0].mxu0
        %v5107 = vadd.f32 0.0, %v5106
        %v5108 = vpop.f32.mrb[0].mxu0
        %5109 = vmatprep.mubr.bf16.mxu0 0
        %5110 = vmatmul.mubr.bf16.gmra.mrb[0].mxu0 %v4892
        %v5111 = vpop.f32.mrb[0].mxu0
        %v5112 = vadd.f32 0.0, %v5111
        %v5113 = vpop.f32.mrb[0].mxu0
        %v5114 = vpop.f32.mrb[0].mxu0
        %v5115 = vadd.f32 0.0, %v5114
        %v5116 = vpop.f32.mrb[0].mxu0
        %5117 = vdwg.mxu0
        %v5118 = vadd.f32 %v4731, %v4992
        %v5119 = vadd.f32 %v4732, %v4995
        %v5120 = vadd.f32 %v4733, %v5000
        %v5121 = vadd.f32 %v4734, %v5003
        %v5122 = vadd.f32 %v4735, %v5008
        %v5123 = vadd.f32 %v4736, %v5011
        %v5124 = vadd.f32 %v4737, %v5016
        %v5125 = vadd.f32 %v4738, %v5019
        %v5126 = vadd.f32 %v4739, %v5024
        %v5127 = vadd.f32 %v4740, %v5027
        %v5128 = vadd.f32 %v4741, %v5032
        %v5129 = vadd.f32 %v4742, %v5035
        %v5130 = vadd.f32 %v4743, %v5040
        %v5131 = vadd.f32 %v4744, %v5043
        %v5132 = vadd.f32 %v4745, %v5048
        %v5133 = vadd.f32 %v4746, %v5051
        %v5134 = vadd.f32 %v4747, %v5056
        %v5135 = vadd.f32 %v4748, %v5059
        %v5136 = vadd.f32 %v4749, %v5064
        %v5137 = vadd.f32 %v4750, %v5067
        %v5138 = vadd.f32 %v4751, %v5072
        %v5139 = vadd.f32 %v4752, %v5075
        %v5140 = vadd.f32 %v4753, %v5080
        %v5141 = vadd.f32 %v4754, %v5083
        %v5142 = vadd.f32 %v4755, %v5088
        %v5143 = vadd.f32 %v4756, %v5091
        %v5144 = vadd.f32 %v4757, %v5096
        %v5145 = vadd.f32 %v4758, %v5099
        %v5146 = vadd.f32 %v4759, %v5104
        %v5147 = vadd.f32 %v4760, %v5107
        %v5148 = vadd.f32 %v4761, %v5112
        %v5149 = vadd.f32 %v4762, %v5115
        %v5150 = vld [vmem:[%s4763] sm:$0xf]
        %v5151 = vld [vmem:[%s4763 + $0x4] sm:$0xf]
        %v5152 = vld [vmem:[%s4763 + $0x8] sm:$0x1]
        %v5153 = vld [vmem:[%s4763 + $0xc] sm:$0xf]
        %v5154 = vld [vmem:[%s4763 + $0x10] sm:$0xf]
        %v5155 = vld [vmem:[%s4763 + $0x14] sm:$0x1]
        %v5156 = vld [vmem:[%s4763 + $0x18] sm:$0xf]
        %v5157 = vld [vmem:[%s4763 + $0x1c] sm:$0xf]
        %v5158 = vld [vmem:[%s4763 + $0x20] sm:$0x1]
        %v5159 = vld [vmem:[%s4763 + $0x24] sm:$0xf]
        %v5160 = vld [vmem:[%s4763 + $0x28] sm:$0xf]
        %v5161 = vld [vmem:[%s4763 + $0x2c] sm:$0x1]
        %v5162 = vld [vmem:[%s4763 + $0x30] sm:$0xf]
        %v5163 = vld [vmem:[%s4763 + $0x34] sm:$0xf]
        %v5164 = vld [vmem:[%s4763 + $0x38] sm:$0x1]
        %v5165 = vld [vmem:[%s4763 + $0x3c] sm:$0xf]
        %v5166 = vld [vmem:[%s4763 + $0x40] sm:$0xf]
        %v5167 = vld [vmem:[%s4763 + $0x44] sm:$0x1]
        %v5168 = vld [vmem:[%s4763 + $0x48] sm:$0xf]
        %v5169 = vld [vmem:[%s4763 + $0x4c] sm:$0xf]
        %v5170 = vld [vmem:[%s4763 + $0x50] sm:$0x1]
        %v5171 = vld [vmem:[%s4763 + $0x54] sm:$0xf]
        %v5172 = vld [vmem:[%s4763 + $0x58] sm:$0xf]
        %v5173 = vld [vmem:[%s4763 + $0x5c] sm:$0x1]
        %v5174 = vld [vmem:[%s4763 + $0x60] sm:$0xf]
        %v5175 = vld [vmem:[%s4763 + $0x64] sm:$0xf]
        %v5176 = vld [vmem:[%s4763 + $0x68] sm:$0x1]
        %v5177 = vld [vmem:[%s4763 + $0x6c] sm:$0xf]
        %v5178 = vld [vmem:[%s4763 + $0x70] sm:$0xf]
        %v5179 = vld [vmem:[%s4763 + $0x74] sm:$0x1]
        %v5180 = vld [vmem:[%s4763 + $0x78] sm:$0xf]
        %v5181 = vld [vmem:[%s4763 + $0x7c] sm:$0xf]
        %v5182 = vld [vmem:[%s4763 + $0x80] sm:$0x1]
        %v5183 = vld [vmem:[%s4763 + $0x84] sm:$0xf]
        %v5184 = vld [vmem:[%s4763 + $0x88] sm:$0xf]
        %v5185 = vld [vmem:[%s4763 + $0x8c] sm:$0x1]
        %v5186 = vld [vmem:[%s4763 + $0x90] sm:$0xf]
        %v5187 = vld [vmem:[%s4763 + $0x94] sm:$0xf]
        %v5188 = vld [vmem:[%s4763 + $0x98] sm:$0x1]
        %v5189 = vld [vmem:[%s4763 + $0x9c] sm:$0xf]
        %v5190 = vld [vmem:[%s4763 + $0xa0] sm:$0xf]
        %v5191 = vld [vmem:[%s4763 + $0xa4] sm:$0x1]
        %v5192 = vld [vmem:[%s4763 + $0xa8] sm:$0xf]
        %v5193 = vld [vmem:[%s4763 + $0xac] sm:$0xf]
        %v5194 = vld [vmem:[%s4763 + $0xb0] sm:$0x1]
        %v5195 = vld [vmem:[%s4763 + $0xb4] sm:$0xf]
        %v5196 = vld [vmem:[%s4763 + $0xb8] sm:$0xf]
        %v5197 = vld [vmem:[%s4763 + $0xbc] sm:$0x1]
        %v5199 = vshrl.u32 %v5150, 16
        %v5201 = vrot.slane %v5199, 4
        %v5202 = vshll.u32 %v5150, 16
        %v5204 = vrot.slane %v5202, 5
        %v5205 = vor.u32 %v5201, %v5204
        %v5206 = vrot.slane %v5205, 4
        %v5208 = vshll.u32 %v5151, 16
        %v5210 = vrot.slane %v5208, 5
        %v5211 = vsel %vm1660, %v5206, %v5210
        %v5212 = vshrl.u32 %v5151, 16
        %v5214 = vrot.slane %v5212, 4
        %v5215 = vor.u32 %v5214, %v5210
        %v5216 = vrot.slane %v5215, 4
        %v5218 = vshll.u32 %v5152, 16
        %v5220 = vrot.slane %v5218, 5
        %v5221 = vsel %vm1660, %v5216, %v5220
        %v5223 = vshrl.u32 %v5153, 16
        %v5225 = vrot.slane %v5223, 4
        %v5226 = vshll.u32 %v5153, 16
        %v5228 = vrot.slane %v5226, 5
        %v5229 = vor.u32 %v5225, %v5228
        %v5230 = vrot.slane %v5229, 4
        %v5232 = vshll.u32 %v5154, 16
        %v5234 = vrot.slane %v5232, 5
        %v5235 = vsel %vm1660, %v5230, %v5234
        %v5236 = vshrl.u32 %v5154, 16
        %v5238 = vrot.slane %v5236, 4
        %v5239 = vor.u32 %v5238, %v5234
        %v5240 = vrot.slane %v5239, 4
        %v5242 = vshll.u32 %v5155, 16
        %v5244 = vrot.slane %v5242, 5
        %v5245 = vsel %vm1660, %v5240, %v5244
        %v5247 = vshrl.u32 %v5156, 16
        %v5249 = vrot.slane %v5247, 4
        %v5250 = vshll.u32 %v5156, 16
        %v5252 = vrot.slane %v5250, 5
        %v5253 = vor.u32 %v5249, %v5252
        %v5254 = vrot.slane %v5253, 4
        %v5256 = vshll.u32 %v5157, 16
        %v5258 = vrot.slane %v5256, 5
        %v5259 = vsel %vm1660, %v5254, %v5258
        %v5260 = vshrl.u32 %v5157, 16
        %v5262 = vrot.slane %v5260, 4
        %v5263 = vor.u32 %v5262, %v5258
        %v5264 = vrot.slane %v5263, 4
        %v5266 = vshll.u32 %v5158, 16
        %v5268 = vrot.slane %v5266, 5
        %v5269 = vsel %vm1660, %v5264, %v5268
        %v5271 = vshrl.u32 %v5159, 16
        %v5273 = vrot.slane %v5271, 4
        %v5274 = vshll.u32 %v5159, 16
        %v5276 = vrot.slane %v5274, 5
        %v5277 = vor.u32 %v5273, %v5276
        %v5278 = vrot.slane %v5277, 4
        %v5280 = vshll.u32 %v5160, 16
        %v5282 = vrot.slane %v5280, 5
        %v5283 = vsel %vm1660, %v5278, %v5282
        %v5284 = vshrl.u32 %v5160, 16
        %v5286 = vrot.slane %v5284, 4
        %v5287 = vor.u32 %v5286, %v5282
        %v5288 = vrot.slane %v5287, 4
        %v5290 = vshll.u32 %v5161, 16
        %v5292 = vrot.slane %v5290, 5
        %v5293 = vsel %vm1660, %v5288, %v5292
        %v5295 = vshrl.u32 %v5162, 16
        %v5297 = vrot.slane %v5295, 4
        %v5298 = vshll.u32 %v5162, 16
        %v5300 = vrot.slane %v5298, 5
        %v5301 = vor.u32 %v5297, %v5300
        %v5302 = vrot.slane %v5301, 4
        %v5304 = vshll.u32 %v5163, 16
        %v5306 = vrot.slane %v5304, 5
        %v5307 = vsel %vm1660, %v5302, %v5306
        %v5308 = vshrl.u32 %v5163, 16
        %v5310 = vrot.slane %v5308, 4
        %v5311 = vor.u32 %v5310, %v5306
        %v5312 = vrot.slane %v5311, 4
        %v5314 = vshll.u32 %v5164, 16
        %v5316 = vrot.slane %v5314, 5
        %v5317 = vsel %vm1660, %v5312, %v5316
        %v5319 = vshrl.u32 %v5165, 16
        %v5321 = vrot.slane %v5319, 4
        %v5322 = vshll.u32 %v5165, 16
        %v5324 = vrot.slane %v5322, 5
        %v5325 = vor.u32 %v5321, %v5324
        %v5326 = vrot.slane %v5325, 4
        %v5328 = vshll.u32 %v5166, 16
        %v5330 = vrot.slane %v5328, 5
        %v5331 = vsel %vm1660, %v5326, %v5330
        %v5332 = vshrl.u32 %v5166, 16
        %v5334 = vrot.slane %v5332, 4
        %v5335 = vor.u32 %v5334, %v5330
        %v5336 = vrot.slane %v5335, 4
        %v5338 = vshll.u32 %v5167, 16
        %v5340 = vrot.slane %v5338, 5
        %v5341 = vsel %vm1660, %v5336, %v5340
        %v5343 = vshrl.u32 %v5168, 16
        %v5345 = vrot.slane %v5343, 4
        %v5346 = vshll.u32 %v5168, 16
        %v5348 = vrot.slane %v5346, 5
        %v5349 = vor.u32 %v5345, %v5348
        %v5350 = vrot.slane %v5349, 4
        %v5352 = vshll.u32 %v5169, 16
        %v5354 = vrot.slane %v5352, 5
        %v5355 = vsel %vm1660, %v5350, %v5354
        %v5356 = vshrl.u32 %v5169, 16
        %v5358 = vrot.slane %v5356, 4
        %v5359 = vor.u32 %v5358, %v5354
        %v5360 = vrot.slane %v5359, 4
        %v5362 = vshll.u32 %v5170, 16
        %v5364 = vrot.slane %v5362, 5
        %v5365 = vsel %vm1660, %v5360, %v5364
        %v5367 = vshrl.u32 %v5171, 16
        %v5369 = vrot.slane %v5367, 4
        %v5370 = vshll.u32 %v5171, 16
        %v5372 = vrot.slane %v5370, 5
        %v5373 = vor.u32 %v5369, %v5372
        %v5374 = vrot.slane %v5373, 4
        %v5376 = vshll.u32 %v5172, 16
        %v5378 = vrot.slane %v5376, 5
        %v5379 = vsel %vm1660, %v5374, %v5378
        %v5380 = vshrl.u32 %v5172, 16
        %v5382 = vrot.slane %v5380, 4
        %v5383 = vor.u32 %v5382, %v5378
        %v5384 = vrot.slane %v5383, 4
        %v5386 = vshll.u32 %v5173, 16
        %v5388 = vrot.slane %v5386, 5
        %v5389 = vsel %vm1660, %v5384, %v5388
        %v5391 = vshrl.u32 %v5174, 16
        %v5393 = vrot.slane %v5391, 4
        %v5394 = vshll.u32 %v5174, 16
        %v5396 = vrot.slane %v5394, 5
        %v5397 = vor.u32 %v5393, %v5396
        %v5398 = vrot.slane %v5397, 4
        %v5400 = vshll.u32 %v5175, 16
        %v5402 = vrot.slane %v5400, 5
        %v5403 = vsel %vm1660, %v5398, %v5402
        %v5404 = vshrl.u32 %v5175, 16
        %v5406 = vrot.slane %v5404, 4
        %v5407 = vor.u32 %v5406, %v5402
        %v5408 = vrot.slane %v5407, 4
        %v5410 = vshll.u32 %v5176, 16
        %v5412 = vrot.slane %v5410, 5
        %v5413 = vsel %vm1660, %v5408, %v5412
        %v5415 = vshrl.u32 %v5177, 16
        %v5417 = vrot.slane %v5415, 4
        %v5418 = vshll.u32 %v5177, 16
        %v5420 = vrot.slane %v5418, 5
        %v5421 = vor.u32 %v5417, %v5420
        %v5422 = vrot.slane %v5421, 4
        %v5424 = vshll.u32 %v5178, 16
        %v5426 = vrot.slane %v5424, 5
        %v5427 = vsel %vm1660, %v5422, %v5426
        %v5428 = vshrl.u32 %v5178, 16
        %v5430 = vrot.slane %v5428, 4
        %v5431 = vor.u32 %v5430, %v5426
        %v5432 = vrot.slane %v5431, 4
        %v5434 = vshll.u32 %v5179, 16
        %v5436 = vrot.slane %v5434, 5
        %v5437 = vsel %vm1660, %v5432, %v5436
        %v5439 = vshrl.u32 %v5180, 16
        %v5441 = vrot.slane %v5439, 4
        %v5442 = vshll.u32 %v5180, 16
        %v5444 = vrot.slane %v5442, 5
        %v5445 = vor.u32 %v5441, %v5444
        %v5446 = vrot.slane %v5445, 4
        %v5448 = vshll.u32 %v5181, 16
        %v5450 = vrot.slane %v5448, 5
        %v5451 = vsel %vm1660, %v5446, %v5450
        %v5452 = vshrl.u32 %v5181, 16
        %v5454 = vrot.slane %v5452, 4
        %v5455 = vor.u32 %v5454, %v5450
        %v5456 = vrot.slane %v5455, 4
        %v5458 = vshll.u32 %v5182, 16
        %v5460 = vrot.slane %v5458, 5
        %v5461 = vsel %vm1660, %v5456, %v5460
        %v5463 = vshrl.u32 %v5183, 16
        %v5465 = vrot.slane %v5463, 4
        %v5466 = vshll.u32 %v5183, 16
        %v5468 = vrot.slane %v5466, 5
        %v5469 = vor.u32 %v5465, %v5468
        %v5470 = vrot.slane %v5469, 4
        %v5472 = vshll.u32 %v5184, 16
        %v5474 = vrot.slane %v5472, 5
        %v5475 = vsel %vm1660, %v5470, %v5474
        %v5476 = vshrl.u32 %v5184, 16
        %v5478 = vrot.slane %v5476, 4
        %v5479 = vor.u32 %v5478, %v5474
        %v5480 = vrot.slane %v5479, 4
        %v5482 = vshll.u32 %v5185, 16
        %v5484 = vrot.slane %v5482, 5
        %v5485 = vsel %vm1660, %v5480, %v5484
        %v5487 = vshrl.u32 %v5186, 16
        %v5489 = vrot.slane %v5487, 4
        %v5490 = vshll.u32 %v5186, 16
        %v5492 = vrot.slane %v5490, 5
        %v5493 = vor.u32 %v5489, %v5492
        %v5494 = vrot.slane %v5493, 4
        %v5496 = vshll.u32 %v5187, 16
        %v5498 = vrot.slane %v5496, 5
        %v5499 = vsel %vm1660, %v5494, %v5498
        %v5500 = vshrl.u32 %v5187, 16
        %v5502 = vrot.slane %v5500, 4
        %v5503 = vor.u32 %v5502, %v5498
        %v5504 = vrot.slane %v5503, 4
        %v5506 = vshll.u32 %v5188, 16
        %v5508 = vrot.slane %v5506, 5
        %v5509 = vsel %vm1660, %v5504, %v5508
        %v5511 = vshrl.u32 %v5189, 16
        %v5513 = vrot.slane %v5511, 4
        %v5514 = vshll.u32 %v5189, 16
        %v5516 = vrot.slane %v5514, 5
        %v5517 = vor.u32 %v5513, %v5516
        %v5518 = vrot.slane %v5517, 4
        %v5520 = vshll.u32 %v5190, 16
        %v5522 = vrot.slane %v5520, 5
        %v5523 = vsel %vm1660, %v5518, %v5522
        %v5524 = vshrl.u32 %v5190, 16
        %v5526 = vrot.slane %v5524, 4
        %v5527 = vor.u32 %v5526, %v5522
        %v5528 = vrot.slane %v5527, 4
        %v5530 = vshll.u32 %v5191, 16
        %v5532 = vrot.slane %v5530, 5
        %v5533 = vsel %vm1660, %v5528, %v5532
        %v5535 = vshrl.u32 %v5192, 16
        %v5537 = vrot.slane %v5535, 4
        %v5538 = vshll.u32 %v5192, 16
        %v5540 = vrot.slane %v5538, 5
        %v5541 = vor.u32 %v5537, %v5540
        %v5542 = vrot.slane %v5541, 4
        %v5544 = vshll.u32 %v5193, 16
        %v5546 = vrot.slane %v5544, 5
        %v5547 = vsel %vm1660, %v5542, %v5546
        %v5548 = vshrl.u32 %v5193, 16
        %v5550 = vrot.slane %v5548, 4
        %v5551 = vor.u32 %v5550, %v5546
        %v5552 = vrot.slane %v5551, 4
        %v5554 = vshll.u32 %v5194, 16
        %v5556 = vrot.slane %v5554, 5
        %v5557 = vsel %vm1660, %v5552, %v5556
        %v5559 = vshrl.u32 %v5195, 16
        %v5561 = vrot.slane %v5559, 4
        %v5562 = vshll.u32 %v5195, 16
        %v5564 = vrot.slane %v5562, 5
        %v5565 = vor.u32 %v5561, %v5564
        %v5566 = vrot.slane %v5565, 4
        %v5568 = vshll.u32 %v5196, 16
        %v5570 = vrot.slane %v5568, 5
        %v5571 = vsel %vm1660, %v5566, %v5570
        %v5572 = vshrl.u32 %v5196, 16
        %v5574 = vrot.slane %v5572, 4
        %v5575 = vor.u32 %v5574, %v5570
        %v5576 = vrot.slane %v5575, 4
        %v5578 = vshll.u32 %v5197, 16
        %v5580 = vrot.slane %v5578, 5
        %v5581 = vsel %vm1660, %v5576, %v5580
        %s5582 = scalar_lea.vmem [#allocation10], 448
        %v5583 = vld [vmem:[%s5582] sm:$0xf]
        %v5584 = vld [vmem:[%s5582 + $0x4] sm:$0xf]
        %v5585 = vld [vmem:[%s5582 + $0x8] sm:$0xf]
        %v5586 = vld [vmem:[%s5582 + $0xc] sm:$0xf]
        %v5587 = vld [vmem:[%s5582 + $0x10] sm:$0xf]
        %v5588 = vld [vmem:[%s5582 + $0x14] sm:$0xf]
        %v5589 = vld [vmem:[%s5582 + $0x18] sm:$0xf]
        %v5590 = vld [vmem:[%s5582 + $0x1c] sm:$0xf]
        %v5591 = vld [vmem:[%s5582 + $0x20] sm:$0xf]
        %v5592 = vld [vmem:[%s5582 + $0x24] sm:$0xf]
        %v5593 = vld [vmem:[%s5582 + $0x28] sm:$0xf]
        %v5594 = vld [vmem:[%s5582 + $0x2c] sm:$0xf]
        %v5595 = vld [vmem:[%s5582 + $0x30] sm:$0xf]
        %v5596 = vld [vmem:[%s5582 + $0x34] sm:$0xf]
        %v5597 = vld [vmem:[%s5582 + $0x38] sm:$0xf]
        %v5598 = vld [vmem:[%s5582 + $0x3c] sm:$0xf]
        %v5599 = vunpack.c.l.b16 %v5211
        %v5600 = vunpack.c.l.b16 %v5221
        %v5601 = vunpack.c.l.b16 %v5235
        %v5602 = vunpack.c.l.b16 %v5245
        %v5603 = vunpack.c.l.b16 %v5259
        %v5604 = vunpack.c.l.b16 %v5269
        %v5605 = vunpack.c.l.b16 %v5283
        %v5606 = vunpack.c.l.b16 %v5293
        %v5607 = vunpack.c.l.b16 %v5307
        %v5608 = vunpack.c.l.b16 %v5317
        %v5609 = vunpack.c.l.b16 %v5331
        %v5610 = vunpack.c.l.b16 %v5341
        %v5611 = vunpack.c.l.b16 %v5355
        %v5612 = vunpack.c.l.b16 %v5365
        %v5613 = vunpack.c.l.b16 %v5379
        %v5614 = vunpack.c.l.b16 %v5389
        %v5615 = vunpack.c.l.b16 %v5403
        %v5616 = vunpack.c.l.b16 %v5413
        %v5617 = vunpack.c.l.b16 %v5427
        %v5618 = vunpack.c.l.b16 %v5437
        %v5619 = vunpack.c.l.b16 %v5451
        %v5620 = vunpack.c.l.b16 %v5461
        %v5621 = vunpack.c.l.b16 %v5475
        %v5622 = vunpack.c.l.b16 %v5485
        %v5623 = vunpack.c.l.b16 %v5499
        %v5624 = vunpack.c.l.b16 %v5509
        %v5625 = vunpack.c.l.b16 %v5523
        %v5626 = vunpack.c.l.b16 %v5533
        %v5627 = vunpack.c.l.b16 %v5547
        %v5628 = vunpack.c.l.b16 %v5557
        %v5629 = vunpack.c.l.b16 %v5571
        %v5630 = vunpack.c.l.b16 %v5581
        %v5631 = vpack.c.b16 %v5600, %v5599
        %v5632 = vpack.c.b16 %v5602, %v5601
        %v5633 = vpack.c.b16 %v5604, %v5603
        %v5634 = vpack.c.b16 %v5606, %v5605
        %v5635 = vpack.c.b16 %v5608, %v5607
        %v5636 = vpack.c.b16 %v5610, %v5609
        %v5637 = vpack.c.b16 %v5612, %v5611
        %v5638 = vpack.c.b16 %v5614, %v5613
        %v5639 = vpack.c.b16 %v5616, %v5615
        %v5640 = vpack.c.b16 %v5618, %v5617
        %v5641 = vpack.c.b16 %v5620, %v5619
        %v5642 = vpack.c.b16 %v5622, %v5621
        %v5643 = vpack.c.b16 %v5624, %v5623
        %v5644 = vpack.c.b16 %v5626, %v5625
        %v5645 = vpack.c.b16 %v5628, %v5627
        %v5646 = vpack.c.b16 %v5630, %v5629
        %v5679 = vunpack.c.l.b16 %v5583
        %v5680 = vunpack.c.l.b16 %v5584
        %v5681 = vunpack.c.l.b16 %v5585
        %v5682 = vunpack.c.l.b16 %v5586
        %v5683 = vunpack.c.l.b16 %v5587
        %v5684 = vunpack.c.l.b16 %v5588
        %v5685 = vunpack.c.l.b16 %v5589
        %v5686 = vunpack.c.l.b16 %v5590
        %v5687 = vunpack.c.l.b16 %v5591
        %v5688 = vunpack.c.l.b16 %v5592
        %v5689 = vunpack.c.l.b16 %v5593
        %v5690 = vunpack.c.l.b16 %v5594
        %v5691 = vunpack.c.l.b16 %v5595
        %v5692 = vunpack.c.l.b16 %v5596
        %v5693 = vunpack.c.l.b16 %v5597
        %v5694 = vunpack.c.l.b16 %v5598
        %v5695 = vpack.c.b16 %v5680, %v5679
        %v5696 = vpack.c.b16 %v5682, %v5681
        %v5697 = vpack.c.b16 %v5684, %v5683
        %v5698 = vpack.c.b16 %v5686, %v5685
        %v5699 = vpack.c.b16 %v5688, %v5687
        %v5700 = vpack.c.b16 %v5690, %v5689
        %v5701 = vpack.c.b16 %v5692, %v5691
        %v5702 = vpack.c.b16 %v5694, %v5693
        %5711 = vmatprep.subr.bf16.mxu0 0
        %5712 = vmatpush1.bf16.msra.mxu0 %v5695
        %5713 = vmatprep.subr.bf16.mxu0 0
        %5714 = vmatpush1.bf16.msra.mxu0 %v5696
        %5715 = vmatprep.subr.bf16.mxu0 0
        %5716 = vmatpush1.bf16.msra.mxu0 %v5697
        %5717 = vmatprep.subr.bf16.mxu0 0
        %5718 = vmatpush1.bf16.msra.mxu0 %v5698
        %5719 = vmatprep.subr.bf16.mxu0 0
        %5720 = vmatpush1.bf16.msra.mxu0 %v5699
        %5721 = vmatprep.subr.bf16.mxu0 0
        %5722 = vmatpush1.bf16.msra.mxu0 %v5700
        %5723 = vmatprep.subr.bf16.mxu0 0
        %5724 = vmatpush1.bf16.msra.mxu0 %v5701
        %5725 = vmatprep.subr.bf16.mxu0 0
        %5726 = vmatpush1.bf16.msra.mxu0 %v5702
        %5727 = vmatprep.subr.bf16.mxu0 0
        %5728 = vmatpush1.bf16.msra.mxu0 0
        %5729 = vmatprep.subr.bf16.mxu0 0
        %5730 = vmatpush1.bf16.msra.mxu0 0
        %5731 = vmatprep.subr.bf16.mxu0 0
        %5732 = vmatpush1.bf16.msra.mxu0 0
        %5733 = vmatprep.subr.bf16.mxu0 0
        %5734 = vmatpush1.bf16.msra.mxu0 0
        %5735 = vmatprep.subr.bf16.mxu0 0
        %5736 = vmatpush1.bf16.msra.mxu0 0
        %5737 = vmatprep.subr.bf16.mxu0 0
        %5738 = vmatpush1.bf16.msra.mxu0 0
        %5739 = vmatprep.subr.bf16.mxu0 0
        %5740 = vmatpush1.bf16.msra.mxu0 0
        %5741 = vmatprep.subr.bf16.mxu0 0
        %5742 = vmatpush1.bf16.msra.mxu0 0
        %5743 = vmatprep.mubr.bf16.mxu0 0
        %5744 = vmatmul.mubr.bf16.gmra.mrb[0].mxu0 %v5631
        %v5745 = vpop.f32.mrb[0].mxu0
        %v5746 = vadd.f32 0.0, %v5745
        %v5747 = vpop.f32.mrb[0].mxu0
        %v5748 = vpop.f32.mrb[0].mxu0
        %v5749 = vadd.f32 0.0, %v5748
        %v5750 = vpop.f32.mrb[0].mxu0
        %5751 = vmatprep.mubr.bf16.mxu0 0
        %5752 = vmatmul.mubr.bf16.gmra.mrb[0].mxu0 %v5632
        %v5753 = vpop.f32.mrb[0].mxu0
        %v5754 = vadd.f32 0.0, %v5753
        %v5755 = vpop.f32.mrb[0].mxu0
        %v5756 = vpop.f32.mrb[0].mxu0
        %v5757 = vadd.f32 0.0, %v5756
        %v5758 = vpop.f32.mrb[0].mxu0
        %5759 = vmatprep.mubr.bf16.mxu0 0
        %5760 = vmatmul.mubr.bf16.gmra.mrb[0].mxu0 %v5633
        %v5761 = vpop.f32.mrb[0].mxu0
        %v5762 = vadd.f32 0.0, %v5761
        %v5763 = vpop.f32.mrb[0].mxu0
        %v5764 = vpop.f32.mrb[0].mxu0
        %v5765 = vadd.f32 0.0, %v5764
        %v5766 = vpop.f32.mrb[0].mxu0
        %5767 = vmatprep.mubr.bf16.mxu0 0
        %5768 = vmatmul.mubr.bf16.gmra.mrb[0].mxu0 %v5634
        %v5769 = vpop.f32.mrb[0].mxu0
        %v5770 = vadd.f32 0.0, %v5769
        %v5771 = vpop.f32.mrb[0].mxu0
        %v5772 = vpop.f32.mrb[0].mxu0
        %v5773 = vadd.f32 0.0, %v5772
        %v5774 = vpop.f32.mrb[0].mxu0
        %5775 = vmatprep.mubr.bf16.mxu0 0
        %5776 = vmatmul.mubr.bf16.gmra.mrb[0].mxu0 %v5635
        %v5777 = vpop.f32.mrb[0].mxu0
        %v5778 = vadd.f32 0.0, %v5777
        %v5779 = vpop.f32.mrb[0].mxu0
        %v5780 = vpop.f32.mrb[0].mxu0
        %v5781 = vadd.f32 0.0, %v5780
        %v5782 = vpop.f32.mrb[0].mxu0
        %5783 = vmatprep.mubr.bf16.mxu0 0
        %5784 = vmatmul.mubr.bf16.gmra.mrb[0].mxu0 %v5636
        %v5785 = vpop.f32.mrb[0].mxu0
        %v5786 = vadd.f32 0.0, %v5785
        %v5787 = vpop.f32.mrb[0].mxu0
        %v5788 = vpop.f32.mrb[0].mxu0
        %v5789 = vadd.f32 0.0, %v5788
        %v5790 = vpop.f32.mrb[0].mxu0
        %5791 = vmatprep.mubr.bf16.mxu0 0
        %5792 = vmatmul.mubr.bf16.gmra.mrb[0].mxu0 %v5637
        %v5793 = vpop.f32.mrb[0].mxu0
        %v5794 = vadd.f32 0.0, %v5793
        %v5795 = vpop.f32.mrb[0].mxu0
        %v5796 = vpop.f32.mrb[0].mxu0
        %v5797 = vadd.f32 0.0, %v5796
        %v5798 = vpop.f32.mrb[0].mxu0
        %5799 = vmatprep.mubr.bf16.mxu0 0
        %5800 = vmatmul.mubr.bf16.gmra.mrb[0].mxu0 %v5638
        %v5801 = vpop.f32.mrb[0].mxu0
        %v5802 = vadd.f32 0.0, %v5801
        %v5803 = vpop.f32.mrb[0].mxu0
        %v5804 = vpop.f32.mrb[0].mxu0
        %v5805 = vadd.f32 0.0, %v5804
        %v5806 = vpop.f32.mrb[0].mxu0
        %5807 = vmatprep.mubr.bf16.mxu0 0
        %5808 = vmatmul.mubr.bf16.gmra.mrb[0].mxu0 %v5639
        %v5809 = vpop.f32.mrb[0].mxu0
        %v5810 = vadd.f32 0.0, %v5809
        %v5811 = vpop.f32.mrb[0].mxu0
        %v5812 = vpop.f32.mrb[0].mxu0
        %v5813 = vadd.f32 0.0, %v5812
        %v5814 = vpop.f32.mrb[0].mxu0
        %5815 = vmatprep.mubr.bf16.mxu0 0
        %5816 = vmatmul.mubr.bf16.gmra.mrb[0].mxu0 %v5640
        %v5817 = vpop.f32.mrb[0].mxu0
        %v5818 = vadd.f32 0.0, %v5817
        %v5819 = vpop.f32.mrb[0].mxu0
        %v5820 = vpop.f32.mrb[0].mxu0
        %v5821 = vadd.f32 0.0, %v5820
        %v5822 = vpop.f32.mrb[0].mxu0
        %5823 = vmatprep.mubr.bf16.mxu0 0
        %5824 = vmatmul.mubr.bf16.gmra.mrb[0].mxu0 %v5641
        %v5825 = vpop.f32.mrb[0].mxu0
        %v5826 = vadd.f32 0.0, %v5825
        %v5827 = vpop.f32.mrb[0].mxu0
        %v5828 = vpop.f32.mrb[0].mxu0
        %v5829 = vadd.f32 0.0, %v5828
        %v5830 = vpop.f32.mrb[0].mxu0
        %5831 = vmatprep.mubr.bf16.mxu0 0
        %5832 = vmatmul.mubr.bf16.gmra.mrb[0].mxu0 %v5642
        %v5833 = vpop.f32.mrb[0].mxu0
        %v5834 = vadd.f32 0.0, %v5833
        %v5835 = vpop.f32.mrb[0].mxu0
        %v5836 = vpop.f32.mrb[0].mxu0
        %v5837 = vadd.f32 0.0, %v5836
        %v5838 = vpop.f32.mrb[0].mxu0
        %5839 = vmatprep.mubr.bf16.mxu0 0
        %5840 = vmatmul.mubr.bf16.gmra.mrb[0].mxu0 %v5643
        %v5841 = vpop.f32.mrb[0].mxu0
        %v5842 = vadd.f32 0.0, %v5841
        %v5843 = vpop.f32.mrb[0].mxu0
        %v5844 = vpop.f32.mrb[0].mxu0
        %v5845 = vadd.f32 0.0, %v5844
        %v5846 = vpop.f32.mrb[0].mxu0
        %5847 = vmatprep.mubr.bf16.mxu0 0
        %5848 = vmatmul.mubr.bf16.gmra.mrb[0].mxu0 %v5644
        %v5849 = vpop.f32.mrb[0].mxu0
        %v5850 = vadd.f32 0.0, %v5849
        %v5851 = vpop.f32.mrb[0].mxu0
        %v5852 = vpop.f32.mrb[0].mxu0
        %v5853 = vadd.f32 0.0, %v5852
        %v5854 = vpop.f32.mrb[0].mxu0
        %5855 = vmatprep.mubr.bf16.mxu0 0
        %5856 = vmatmul.mubr.bf16.gmra.mrb[0].mxu0 %v5645
        %v5857 = vpop.f32.mrb[0].mxu0
        %v5858 = vadd.f32 0.0, %v5857
        %v5859 = vpop.f32.mrb[0].mxu0
        %v5860 = vpop.f32.mrb[0].mxu0
        %v5861 = vadd.f32 0.0, %v5860
        %v5862 = vpop.f32.mrb[0].mxu0
        %5863 = vmatprep.mubr.bf16.mxu0 0
        %5864 = vmatmul.mubr.bf16.gmra.mrb[0].mxu0 %v5646
        %v5865 = vpop.f32.mrb[0].mxu0
        %v5866 = vadd.f32 0.0, %v5865
        %v5867 = vpop.f32.mrb[0].mxu0
        %v5868 = vpop.f32.mrb[0].mxu0
        %v5869 = vadd.f32 0.0, %v5868
        %v5870 = vpop.f32.mrb[0].mxu0
        %5871 = vdwg.mxu0
        %v5872 = vadd.f32 %v5118, %v5746
        %v5873 = vadd.f32 %v5119, %v5749
        %v5874 = vadd.f32 %v5120, %v5754
        %v5875 = vadd.f32 %v5121, %v5757
        %v5876 = vadd.f32 %v5122, %v5762
        %v5877 = vadd.f32 %v5123, %v5765
        %v5878 = vadd.f32 %v5124, %v5770
        %v5879 = vadd.f32 %v5125, %v5773
        %v5880 = vadd.f32 %v5126, %v5778
        %v5881 = vadd.f32 %v5127, %v5781
        %v5882 = vadd.f32 %v5128, %v5786
        %v5883 = vadd.f32 %v5129, %v5789
        %v5884 = vadd.f32 %v5130, %v5794
        %v5885 = vadd.f32 %v5131, %v5797
        %v5886 = vadd.f32 %v5132, %v5802
        %v5887 = vadd.f32 %v5133, %v5805
        %v5888 = vadd.f32 %v5134, %v5810
        %v5889 = vadd.f32 %v5135, %v5813
        %v5890 = vadd.f32 %v5136, %v5818
        %v5891 = vadd.f32 %v5137, %v5821
        %v5892 = vadd.f32 %v5138, %v5826
        %v5893 = vadd.f32 %v5139, %v5829
        %v5894 = vadd.f32 %v5140, %v5834
        %v5895 = vadd.f32 %v5141, %v5837
        %v5896 = vadd.f32 %v5142, %v5842
        %v5897 = vadd.f32 %v5143, %v5845
        %v5898 = vadd.f32 %v5144, %v5850
        %v5899 = vadd.f32 %v5145, %v5853
        %v5900 = vadd.f32 %v5146, %v5858
        %v5901 = vadd.f32 %v5147, %v5861
        %v5902 = vadd.f32 %v5148, %v5866
        %v5903 = vadd.f32 %v5149, %v5869
        %v5904 = vld [vmem:[%s4763] sm:$0xe]
        %v5905 = vld [vmem:[%s4763 + $0xc] sm:$0xe]
        %v5906 = vld [vmem:[%s4763 + $0x18] sm:$0xe]
        %v5907 = vld [vmem:[%s4763 + $0x24] sm:$0xe]
        %v5908 = vld [vmem:[%s4763 + $0x30] sm:$0xe]
        %v5909 = vld [vmem:[%s4763 + $0x3c] sm:$0xe]
        %v5910 = vld [vmem:[%s4763 + $0x48] sm:$0xe]
        %v5911 = vld [vmem:[%s4763 + $0x54] sm:$0xe]
        %v5912 = vld [vmem:[%s4763 + $0x60] sm:$0xe]
        %v5913 = vld [vmem:[%s4763 + $0x6c] sm:$0xe]
        %v5914 = vld [vmem:[%s4763 + $0x78] sm:$0xe]
        %v5915 = vld [vmem:[%s4763 + $0x84] sm:$0xe]
        %v5916 = vld [vmem:[%s4763 + $0x90] sm:$0xe]
        %v5917 = vld [vmem:[%s4763 + $0x9c] sm:$0xe]
        %v5918 = vld [vmem:[%s4763 + $0xa8] sm:$0xe]
        %v5919 = vld [vmem:[%s4763 + $0xb4] sm:$0xe]
        %v5968 = vrot.slane %v5904, 5
        %v5969 = vrot.slane %v5968, 4
        %v5970 = vrot.slane %v5151, 5
        %v5971 = vsel %vm2690, %v5969, %v5970
        %v5972 = vrot.slane %v5970, 4
        %v5973 = vrot.slane %v5152, 5
        %v5974 = vsel %vm2690, %v5972, %v5973
        %v5975 = vrot.slane %v5905, 5
        %v5976 = vrot.slane %v5975, 4
        %v5977 = vrot.slane %v5154, 5
        %v5978 = vsel %vm2690, %v5976, %v5977
        %v5979 = vrot.slane %v5977, 4
        %v5980 = vrot.slane %v5155, 5
        %v5981 = vsel %vm2690, %v5979, %v5980
        %v5982 = vrot.slane %v5906, 5
        %v5983 = vrot.slane %v5982, 4
        %v5984 = vrot.slane %v5157, 5
        %v5985 = vsel %vm2690, %v5983, %v5984
        %v5986 = vrot.slane %v5984, 4
        %v5987 = vrot.slane %v5158, 5
        %v5988 = vsel %vm2690, %v5986, %v5987
        %v5989 = vrot.slane %v5907, 5
        %v5990 = vrot.slane %v5989, 4
        %v5991 = vrot.slane %v5160, 5
        %v5992 = vsel %vm2690, %v5990, %v5991
        %v5993 = vrot.slane %v5991, 4
        %v5994 = vrot.slane %v5161, 5
        %v5995 = vsel %vm2690, %v5993, %v5994
        %v5996 = vrot.slane %v5908, 5
        %v5997 = vrot.slane %v5996, 4
        %v5998 = vrot.slane %v5163, 5
        %v5999 = vsel %vm2690, %v5997, %v5998
        %v6000 = vrot.slane %v5998, 4
        %v6001 = vrot.slane %v5164, 5
        %v6002 = vsel %vm2690, %v6000, %v6001
        %v6003 = vrot.slane %v5909, 5
        %v6004 = vrot.slane %v6003, 4
        %v6005 = vrot.slane %v5166, 5
        %v6006 = vsel %vm2690, %v6004, %v6005
        %v6007 = vrot.slane %v6005, 4
        %v6008 = vrot.slane %v5167, 5
        %v6009 = vsel %vm2690, %v6007, %v6008
        %v6010 = vrot.slane %v5910, 5
        %v6011 = vrot.slane %v6010, 4
        %v6012 = vrot.slane %v5169, 5
        %v6013 = vsel %vm2690, %v6011, %v6012
        %v6014 = vrot.slane %v6012, 4
        %v6015 = vrot.slane %v5170, 5
        %v6016 = vsel %vm2690, %v6014, %v6015
        %v6017 = vrot.slane %v5911, 5
        %v6018 = vrot.slane %v6017, 4
        %v6019 = vrot.slane %v5172, 5
        %v6020 = vsel %vm2690, %v6018, %v6019
        %v6021 = vrot.slane %v6019, 4
        %v6022 = vrot.slane %v5173, 5
        %v6023 = vsel %vm2690, %v6021, %v6022
        %v6024 = vrot.slane %v5912, 5
        %v6025 = vrot.slane %v6024, 4
        %v6026 = vrot.slane %v5175, 5
        %v6027 = vsel %vm2690, %v6025, %v6026
        %v6028 = vrot.slane %v6026, 4
        %v6029 = vrot.slane %v5176, 5
        %v6030 = vsel %vm2690, %v6028, %v6029
        %v6031 = vrot.slane %v5913, 5
        %v6032 = vrot.slane %v6031, 4
        %v6033 = vrot.slane %v5178, 5
        %v6034 = vsel %vm2690, %v6032, %v6033
        %v6035 = vrot.slane %v6033, 4
        %v6036 = vrot.slane %v5179, 5
        %v6037 = vsel %vm2690, %v6035, %v6036
        %v6038 = vrot.slane %v5914, 5
        %v6039 = vrot.slane %v6038, 4
        %v6040 = vrot.slane %v5181, 5
        %v6041 = vsel %vm2690, %v6039, %v6040
        %v6042 = vrot.slane %v6040, 4
        %v6043 = vrot.slane %v5182, 5
        %v6044 = vsel %vm2690, %v6042, %v6043
        %v6045 = vrot.slane %v5915, 5
        %v6046 = vrot.slane %v6045, 4
        %v6047 = vrot.slane %v5184, 5
        %v6048 = vsel %vm2690, %v6046, %v6047
        %v6049 = vrot.slane %v6047, 4
        %v6050 = vrot.slane %v5185, 5
        %v6051 = vsel %vm2690, %v6049, %v6050
        %v6052 = vrot.slane %v5916, 5
        %v6053 = vrot.slane %v6052, 4
        %v6054 = vrot.slane %v5187, 5
        %v6055 = vsel %vm2690, %v6053, %v6054
        %v6056 = vrot.slane %v6054, 4
        %v6057 = vrot.slane %v5188, 5
        %v6058 = vsel %vm2690, %v6056, %v6057
        %v6059 = vrot.slane %v5917, 5
        %v6060 = vrot.slane %v6059, 4
        %v6061 = vrot.slane %v5190, 5
        %v6062 = vsel %vm2690, %v6060, %v6061
        %v6063 = vrot.slane %v6061, 4
        %v6064 = vrot.slane %v5191, 5
        %v6065 = vsel %vm2690, %v6063, %v6064
        %v6066 = vrot.slane %v5918, 5
        %v6067 = vrot.slane %v6066, 4
        %v6068 = vrot.slane %v5193, 5
        %v6069 = vsel %vm2690, %v6067, %v6068
        %v6070 = vrot.slane %v6068, 4
        %v6071 = vrot.slane %v5194, 5
        %v6072 = vsel %vm2690, %v6070, %v6071
        %v6073 = vrot.slane %v5919, 5
        %v6074 = vrot.slane %v6073, 4
        %v6075 = vrot.slane %v5196, 5
        %v6076 = vsel %vm2690, %v6074, %v6075
        %v6077 = vrot.slane %v6075, 4
        %v6078 = vrot.slane %v5197, 5
        %v6079 = vsel %vm2690, %v6077, %v6078
        %s6080 = scalar_lea.vmem [#allocation10], 512
        %v6081 = vld [vmem:[%s6080] sm:$0xf]
        %v6082 = vld [vmem:[%s6080 + $0x4] sm:$0xf]
        %v6083 = vld [vmem:[%s6080 + $0x8] sm:$0xf]
        %v6084 = vld [vmem:[%s6080 + $0xc] sm:$0xf]
        %v6085 = vld [vmem:[%s6080 + $0x10] sm:$0xf]
        %v6086 = vld [vmem:[%s6080 + $0x14] sm:$0xf]
        %v6087 = vld [vmem:[%s6080 + $0x18] sm:$0xf]
        %v6088 = vld [vmem:[%s6080 + $0x1c] sm:$0xf]
        %v6089 = vld [vmem:[%s6080 + $0x20] sm:$0xf]
        %v6090 = vld [vmem:[%s6080 + $0x24] sm:$0xf]
        %v6091 = vld [vmem:[%s6080 + $0x28] sm:$0xf]
        %v6092 = vld [vmem:[%s6080 + $0x2c] sm:$0xf]
        %v6093 = vld [vmem:[%s6080 + $0x30] sm:$0xf]
        %v6094 = vld [vmem:[%s6080 + $0x34] sm:$0xf]
        %v6095 = vld [vmem:[%s6080 + $0x38] sm:$0xf]
        %v6096 = vld [vmem:[%s6080 + $0x3c] sm:$0xf]
        %v6097 = vunpack.c.l.b16 %v5971
        %v6098 = vunpack.c.l.b16 %v5974
        %v6099 = vunpack.c.l.b16 %v5978
        %v6100 = vunpack.c.l.b16 %v5981
        %v6101 = vunpack.c.l.b16 %v5985
        %v6102 = vunpack.c.l.b16 %v5988
        %v6103 = vunpack.c.l.b16 %v5992
        %v6104 = vunpack.c.l.b16 %v5995
        %v6105 = vunpack.c.l.b16 %v5999
        %v6106 = vunpack.c.l.b16 %v6002
        %v6107 = vunpack.c.l.b16 %v6006
        %v6108 = vunpack.c.l.b16 %v6009
        %v6109 = vunpack.c.l.b16 %v6013
        %v6110 = vunpack.c.l.b16 %v6016
        %v6111 = vunpack.c.l.b16 %v6020
        %v6112 = vunpack.c.l.b16 %v6023
        %v6113 = vunpack.c.l.b16 %v6027
        %v6114 = vunpack.c.l.b16 %v6030
        %v6115 = vunpack.c.l.b16 %v6034
        %v6116 = vunpack.c.l.b16 %v6037
        %v6117 = vunpack.c.l.b16 %v6041
        %v6118 = vunpack.c.l.b16 %v6044
        %v6119 = vunpack.c.l.b16 %v6048
        %v6120 = vunpack.c.l.b16 %v6051
        %v6121 = vunpack.c.l.b16 %v6055
        %v6122 = vunpack.c.l.b16 %v6058
        %v6123 = vunpack.c.l.b16 %v6062
        %v6124 = vunpack.c.l.b16 %v6065
        %v6125 = vunpack.c.l.b16 %v6069
        %v6126 = vunpack.c.l.b16 %v6072
        %v6127 = vunpack.c.l.b16 %v6076
        %v6128 = vunpack.c.l.b16 %v6079
        %v6129 = vpack.c.b16 %v6098, %v6097
        %v6130 = vpack.c.b16 %v6100, %v6099
        %v6131 = vpack.c.b16 %v6102, %v6101
        %v6132 = vpack.c.b16 %v6104, %v6103
        %v6133 = vpack.c.b16 %v6106, %v6105
        %v6134 = vpack.c.b16 %v6108, %v6107
        %v6135 = vpack.c.b16 %v6110, %v6109
        %v6136 = vpack.c.b16 %v6112, %v6111
        %v6137 = vpack.c.b16 %v6114, %v6113
        %v6138 = vpack.c.b16 %v6116, %v6115
        %v6139 = vpack.c.b16 %v6118, %v6117
        %v6140 = vpack.c.b16 %v6120, %v6119
        %v6141 = vpack.c.b16 %v6122, %v6121
        %v6142 = vpack.c.b16 %v6124, %v6123
        %v6143 = vpack.c.b16 %v6126, %v6125
        %v6144 = vpack.c.b16 %v6128, %v6127
        %v6177 = vunpack.c.l.b16 %v6081
        %v6178 = vunpack.c.l.b16 %v6082
        %v6179 = vunpack.c.l.b16 %v6083
        %v6180 = vunpack.c.l.b16 %v6084
        %v6181 = vunpack.c.l.b16 %v6085
        %v6182 = vunpack.c.l.b16 %v6086
        %v6183 = vunpack.c.l.b16 %v6087
        %v6184 = vunpack.c.l.b16 %v6088
        %v6185 = vunpack.c.l.b16 %v6089
        %v6186 = vunpack.c.l.b16 %v6090
        %v6187 = vunpack.c.l.b16 %v6091
        %v6188 = vunpack.c.l.b16 %v6092
        %v6189 = vunpack.c.l.b16 %v6093
        %v6190 = vunpack.c.l.b16 %v6094
        %v6191 = vunpack.c.l.b16 %v6095
        %v6192 = vunpack.c.l.b16 %v6096
        %v6193 = vpack.c.b16 %v6178, %v6177
        %v6194 = vpack.c.b16 %v6180, %v6179
        %v6195 = vpack.c.b16 %v6182, %v6181
        %v6196 = vpack.c.b16 %v6184, %v6183
        %v6197 = vpack.c.b16 %v6186, %v6185
        %v6198 = vpack.c.b16 %v6188, %v6187
        %v6199 = vpack.c.b16 %v6190, %v6189
        %v6200 = vpack.c.b16 %v6192, %v6191
        %6209 = vmatprep.subr.bf16.mxu0 0
        %6210 = vmatpush1.bf16.msra.mxu0 %v6193
        %6211 = vmatprep.subr.bf16.mxu0 0
        %6212 = vmatpush1.bf16.msra.mxu0 %v6194
        %6213 = vmatprep.subr.bf16.mxu0 0
        %6214 = vmatpush1.bf16.msra.mxu0 %v6195
        %6215 = vmatprep.subr.bf16.mxu0 0
        %6216 = vmatpush1.bf16.msra.mxu0 %v6196
        %6217 = vmatprep.subr.bf16.mxu0 0
        %6218 = vmatpush1.bf16.msra.mxu0 %v6197
        %6219 = vmatprep.subr.bf16.mxu0 0
        %6220 = vmatpush1.bf16.msra.mxu0 %v6198
        %6221 = vmatprep.subr.bf16.mxu0 0
        %6222 = vmatpush1.bf16.msra.mxu0 %v6199
        %6223 = vmatprep.subr.bf16.mxu0 0
        %6224 = vmatpush1.bf16.msra.mxu0 %v6200
        %6225 = vmatprep.subr.bf16.mxu0 0
        %6226 = vmatpush1.bf16.msra.mxu0 0
        %6227 = vmatprep.subr.bf16.mxu0 0
        %6228 = vmatpush1.bf16.msra.mxu0 0
        %6229 = vmatprep.subr.bf16.mxu0 0
        %6230 = vmatpush1.bf16.msra.mxu0 0
        %6231 = vmatprep.subr.bf16.mxu0 0
        %6232 = vmatpush1.bf16.msra.mxu0 0
        %6233 = vmatprep.subr.bf16.mxu0 0
        %6234 = vmatpush1.bf16.msra.mxu0 0
        %6235 = vmatprep.subr.bf16.mxu0 0
        %6236 = vmatpush1.bf16.msra.mxu0 0
        %6237 = vmatprep.subr.bf16.mxu0 0
        %6238 = vmatpush1.bf16.msra.mxu0 0
        %6239 = vmatprep.subr.bf16.mxu0 0
        %6240 = vmatpush1.bf16.msra.mxu0 0
        %6241 = vmatprep.mubr.bf16.mxu0 0
        %6242 = vmatmul.mubr.bf16.gmra.mrb[0].mxu0 %v6129
        %v6243 = vpop.f32.mrb[0].mxu0
        %v6244 = vadd.f32 0.0, %v6243
        %v6245 = vpop.f32.mrb[0].mxu0
        %v6246 = vpop.f32.mrb[0].mxu0
        %v6247 = vadd.f32 0.0, %v6246
        %v6248 = vpop.f32.mrb[0].mxu0
        %6249 = vmatprep.mubr.bf16.mxu0 0
        %6250 = vmatmul.mubr.bf16.gmra.mrb[0].mxu0 %v6130
        %v6251 = vpop.f32.mrb[0].mxu0
        %v6252 = vadd.f32 0.0, %v6251
        %v6253 = vpop.f32.mrb[0].mxu0
        %v6254 = vpop.f32.mrb[0].mxu0
        %v6255 = vadd.f32 0.0, %v6254
        %v6256 = vpop.f32.mrb[0].mxu0
        %6257 = vmatprep.mubr.bf16.mxu0 0
        %6258 = vmatmul.mubr.bf16.gmra.mrb[0].mxu0 %v6131
        %v6259 = vpop.f32.mrb[0].mxu0
        %v6260 = vadd.f32 0.0, %v6259
        %v6261 = vpop.f32.mrb[0].mxu0
        %v6262 = vpop.f32.mrb[0].mxu0
        %v6263 = vadd.f32 0.0, %v6262
        %v6264 = vpop.f32.mrb[0].mxu0
        %6265 = vmatprep.mubr.bf16.mxu0 0
        %6266 = vmatmul.mubr.bf16.gmra.mrb[0].mxu0 %v6132
        %v6267 = vpop.f32.mrb[0].mxu0
        %v6268 = vadd.f32 0.0, %v6267
        %v6269 = vpop.f32.mrb[0].mxu0
        %v6270 = vpop.f32.mrb[0].mxu0
        %v6271 = vadd.f32 0.0, %v6270
        %v6272 = vpop.f32.mrb[0].mxu0
        %6273 = vmatprep.mubr.bf16.mxu0 0
        %6274 = vmatmul.mubr.bf16.gmra.mrb[0].mxu0 %v6133
        %v6275 = vpop.f32.mrb[0].mxu0
        %v6276 = vadd.f32 0.0, %v6275
        %v6277 = vpop.f32.mrb[0].mxu0
        %v6278 = vpop.f32.mrb[0].mxu0
        %v6279 = vadd.f32 0.0, %v6278
        %v6280 = vpop.f32.mrb[0].mxu0
        %6281 = vmatprep.mubr.bf16.mxu0 0
        %6282 = vmatmul.mubr.bf16.gmra.mrb[0].mxu0 %v6134
        %v6283 = vpop.f32.mrb[0].mxu0
        %v6284 = vadd.f32 0.0, %v6283
        %v6285 = vpop.f32.mrb[0].mxu0
        %v6286 = vpop.f32.mrb[0].mxu0
        %v6287 = vadd.f32 0.0, %v6286
        %v6288 = vpop.f32.mrb[0].mxu0
        %6289 = vmatprep.mubr.bf16.mxu0 0
        %6290 = vmatmul.mubr.bf16.gmra.mrb[0].mxu0 %v6135
        %v6291 = vpop.f32.mrb[0].mxu0
        %v6292 = vadd.f32 0.0, %v6291
        %v6293 = vpop.f32.mrb[0].mxu0
        %v6294 = vpop.f32.mrb[0].mxu0
        %v6295 = vadd.f32 0.0, %v6294
        %v6296 = vpop.f32.mrb[0].mxu0
        %6297 = vmatprep.mubr.bf16.mxu0 0
        %6298 = vmatmul.mubr.bf16.gmra.mrb[0].mxu0 %v6136
        %v6299 = vpop.f32.mrb[0].mxu0
        %v6300 = vadd.f32 0.0, %v6299
        %v6301 = vpop.f32.mrb[0].mxu0
        %v6302 = vpop.f32.mrb[0].mxu0
        %v6303 = vadd.f32 0.0, %v6302
        %v6304 = vpop.f32.mrb[0].mxu0
        %6305 = vmatprep.mubr.bf16.mxu0 0
        %6306 = vmatmul.mubr.bf16.gmra.mrb[0].mxu0 %v6137
        %v6307 = vpop.f32.mrb[0].mxu0
        %v6308 = vadd.f32 0.0, %v6307
        %v6309 = vpop.f32.mrb[0].mxu0
        %v6310 = vpop.f32.mrb[0].mxu0
        %v6311 = vadd.f32 0.0, %v6310
        %v6312 = vpop.f32.mrb[0].mxu0
        %6313 = vmatprep.mubr.bf16.mxu0 0
        %6314 = vmatmul.mubr.bf16.gmra.mrb[0].mxu0 %v6138
        %v6315 = vpop.f32.mrb[0].mxu0
        %v6316 = vadd.f32 0.0, %v6315
        %v6317 = vpop.f32.mrb[0].mxu0
        %v6318 = vpop.f32.mrb[0].mxu0
        %v6319 = vadd.f32 0.0, %v6318
        %v6320 = vpop.f32.mrb[0].mxu0
        %6321 = vmatprep.mubr.bf16.mxu0 0
        %6322 = vmatmul.mubr.bf16.gmra.mrb[0].mxu0 %v6139
        %v6323 = vpop.f32.mrb[0].mxu0
        %v6324 = vadd.f32 0.0, %v6323
        %v6325 = vpop.f32.mrb[0].mxu0
        %v6326 = vpop.f32.mrb[0].mxu0
        %v6327 = vadd.f32 0.0, %v6326
        %v6328 = vpop.f32.mrb[0].mxu0
        %6329 = vmatprep.mubr.bf16.mxu0 0
        %6330 = vmatmul.mubr.bf16.gmra.mrb[0].mxu0 %v6140
        %v6331 = vpop.f32.mrb[0].mxu0
        %v6332 = vadd.f32 0.0, %v6331
        %v6333 = vpop.f32.mrb[0].mxu0
        %v6334 = vpop.f32.mrb[0].mxu0
        %v6335 = vadd.f32 0.0, %v6334
        %v6336 = vpop.f32.mrb[0].mxu0
        %6337 = vmatprep.mubr.bf16.mxu0 0
        %6338 = vmatmul.mubr.bf16.gmra.mrb[0].mxu0 %v6141
        %v6339 = vpop.f32.mrb[0].mxu0
        %v6340 = vadd.f32 0.0, %v6339
        %v6341 = vpop.f32.mrb[0].mxu0
        %v6342 = vpop.f32.mrb[0].mxu0
        %v6343 = vadd.f32 0.0, %v6342
        %v6344 = vpop.f32.mrb[0].mxu0
        %6345 = vmatprep.mubr.bf16.mxu0 0
        %6346 = vmatmul.mubr.bf16.gmra.mrb[0].mxu0 %v6142
        %v6347 = vpop.f32.mrb[0].mxu0
        %v6348 = vadd.f32 0.0, %v6347
        %v6349 = vpop.f32.mrb[0].mxu0
        %v6350 = vpop.f32.mrb[0].mxu0
        %v6351 = vadd.f32 0.0, %v6350
        %v6352 = vpop.f32.mrb[0].mxu0
        %6353 = vmatprep.mubr.bf16.mxu0 0
        %6354 = vmatmul.mubr.bf16.gmra.mrb[0].mxu0 %v6143
        %v6355 = vpop.f32.mrb[0].mxu0
        %v6356 = vadd.f32 0.0, %v6355
        %v6357 = vpop.f32.mrb[0].mxu0
        %v6358 = vpop.f32.mrb[0].mxu0
        %v6359 = vadd.f32 0.0, %v6358
        %v6360 = vpop.f32.mrb[0].mxu0
        %6361 = vmatprep.mubr.bf16.mxu0 0
        %6362 = vmatmul.mubr.bf16.gmra.mrb[0].mxu0 %v6144
        %v6363 = vpop.f32.mrb[0].mxu0
        %v6364 = vadd.f32 0.0, %v6363
        %v6365 = vpop.f32.mrb[0].mxu0
        %v6366 = vpop.f32.mrb[0].mxu0
        %v6367 = vadd.f32 0.0, %v6366
        %v6368 = vpop.f32.mrb[0].mxu0
        %6369 = vdwg.mxu0
        %v6370 = vadd.f32 %v5872, %v6244
        %v6371 = vadd.f32 %v5873, %v6247
        %v6372 = vadd.f32 %v5874, %v6252
        %v6373 = vadd.f32 %v5875, %v6255
        %v6374 = vadd.f32 %v5876, %v6260
        %v6375 = vadd.f32 %v5877, %v6263
        %v6376 = vadd.f32 %v5878, %v6268
        %v6377 = vadd.f32 %v5879, %v6271
        %v6378 = vadd.f32 %v5880, %v6276
        %v6379 = vadd.f32 %v5881, %v6279
        %v6380 = vadd.f32 %v5882, %v6284
        %v6381 = vadd.f32 %v5883, %v6287
        %v6382 = vadd.f32 %v5884, %v6292
        %v6383 = vadd.f32 %v5885, %v6295
        %v6384 = vadd.f32 %v5886, %v6300
        %v6385 = vadd.f32 %v5887, %v6303
        %v6386 = vadd.f32 %v5888, %v6308
        %v6387 = vadd.f32 %v5889, %v6311
        %v6388 = vadd.f32 %v5890, %v6316
        %v6389 = vadd.f32 %v5891, %v6319
        %v6390 = vadd.f32 %v5892, %v6324
        %v6391 = vadd.f32 %v5893, %v6327
        %v6392 = vadd.f32 %v5894, %v6332
        %v6393 = vadd.f32 %v5895, %v6335
        %v6394 = vadd.f32 %v5896, %v6340
        %v6395 = vadd.f32 %v5897, %v6343
        %v6396 = vadd.f32 %v5898, %v6348
        %v6397 = vadd.f32 %v5899, %v6351
        %v6398 = vadd.f32 %v5900, %v6356
        %v6399 = vadd.f32 %v5901, %v6359
        %v6400 = vadd.f32 %v5902, %v6364
        %v6401 = vadd.f32 %v5903, %v6367
        %v6402 = vld [vmem:[#allocation12] sm:$0x1]
        %v6404 = vlaneseq
        %v6405 = vshrl.u32 %v6404, 7
        %v6406 = vsub.s32 0, %v6405
        %v6407 = vrot.slane %v6402, %v6406
        %v6409 = vmul.f32 %v6370, %v6407
        %v6410 = vmul.f32 %v6371, %v6407
        %v6411 = vmul.f32 %v6372, %v6407
        %v6412 = vmul.f32 %v6373, %v6407
        %v6413 = vmul.f32 %v6374, %v6407
        %v6414 = vmul.f32 %v6375, %v6407
        %v6415 = vmul.f32 %v6376, %v6407
        %v6416 = vmul.f32 %v6377, %v6407
        %v6417 = vmul.f32 %v6378, %v6407
        %v6418 = vmul.f32 %v6379, %v6407
        %v6419 = vmul.f32 %v6380, %v6407
        %v6420 = vmul.f32 %v6381, %v6407
        %v6421 = vmul.f32 %v6382, %v6407
        %v6422 = vmul.f32 %v6383, %v6407
        %v6423 = vmul.f32 %v6384, %v6407
        %v6424 = vmul.f32 %v6385, %v6407
        %v6425 = vmul.f32 %v6386, %v6407
        %v6426 = vmul.f32 %v6387, %v6407
        %v6427 = vmul.f32 %v6388, %v6407
        %v6428 = vmul.f32 %v6389, %v6407
        %v6429 = vmul.f32 %v6390, %v6407
        %v6430 = vmul.f32 %v6391, %v6407
        %v6431 = vmul.f32 %v6392, %v6407
        %v6432 = vmul.f32 %v6393, %v6407
        %v6433 = vmul.f32 %v6394, %v6407
        %v6434 = vmul.f32 %v6395, %v6407
        %v6435 = vmul.f32 %v6396, %v6407
        %v6436 = vmul.f32 %v6397, %v6407
        %v6437 = vmul.f32 %v6398, %v6407
        %v6438 = vmul.f32 %v6399, %v6407
        %v6439 = vmul.f32 %v6400, %v6407
        %v6440 = vmul.f32 %v6401, %v6407
        %v6441 = vld [vmem:[#allocation13] sm:$0x1]
        %v6443 = vlaneseq
        %v6444 = vshrl.u32 %v6443, 7
        %v6445 = vsub.s32 0, %v6444
        %v6446 = vrot.slane %v6441, %v6445
        %v6448 = vadd.f32 %v6409, %v6446
        %v6449 = vadd.f32 %v6410, %v6446
        %v6450 = vadd.f32 %v6411, %v6446
        %v6451 = vadd.f32 %v6412, %v6446
        %v6452 = vadd.f32 %v6413, %v6446
        %v6453 = vadd.f32 %v6414, %v6446
        %v6454 = vadd.f32 %v6415, %v6446
        %v6455 = vadd.f32 %v6416, %v6446
        %v6456 = vadd.f32 %v6417, %v6446
        %v6457 = vadd.f32 %v6418, %v6446
        %v6458 = vadd.f32 %v6419, %v6446
        %v6459 = vadd.f32 %v6420, %v6446
        %v6460 = vadd.f32 %v6421, %v6446
        %v6461 = vadd.f32 %v6422, %v6446
        %v6462 = vadd.f32 %v6423, %v6446
        %v6463 = vadd.f32 %v6424, %v6446
        %v6464 = vadd.f32 %v6425, %v6446
        %v6465 = vadd.f32 %v6426, %v6446
        %v6466 = vadd.f32 %v6427, %v6446
        %v6467 = vadd.f32 %v6428, %v6446
        %v6468 = vadd.f32 %v6429, %v6446
        %v6469 = vadd.f32 %v6430, %v6446
        %v6470 = vadd.f32 %v6431, %v6446
        %v6471 = vadd.f32 %v6432, %v6446
        %v6472 = vadd.f32 %v6433, %v6446
        %v6473 = vadd.f32 %v6434, %v6446
        %v6474 = vadd.f32 %v6435, %v6446
        %v6475 = vadd.f32 %v6436, %v6446
        %v6476 = vadd.f32 %v6437, %v6446
        %v6477 = vadd.f32 %v6438, %v6446
        %v6478 = vadd.f32 %v6439, %v6446
        %v6479 = vadd.f32 %v6440, %v6446
        %v6480 = vmax.f32 %v6448, 0.0
        %v6481 = vmax.f32 %v6449, 0.0
        %v6482 = vmax.f32 %v6450, 0.0
        %v6483 = vmax.f32 %v6451, 0.0
        %v6484 = vmax.f32 %v6452, 0.0
        %v6485 = vmax.f32 %v6453, 0.0
        %v6486 = vmax.f32 %v6454, 0.0
        %v6487 = vmax.f32 %v6455, 0.0
        %v6488 = vmax.f32 %v6456, 0.0
        %v6489 = vmax.f32 %v6457, 0.0
        %v6490 = vmax.f32 %v6458, 0.0
        %v6491 = vmax.f32 %v6459, 0.0
        %v6492 = vmax.f32 %v6460, 0.0
        %v6493 = vmax.f32 %v6461, 0.0
        %v6494 = vmax.f32 %v6462, 0.0
        %v6495 = vmax.f32 %v6463, 0.0
        %v6496 = vmax.f32 %v6464, 0.0
        %v6497 = vmax.f32 %v6465, 0.0
        %v6498 = vmax.f32 %v6466, 0.0
        %v6499 = vmax.f32 %v6467, 0.0
        %v6500 = vmax.f32 %v6468, 0.0
        %v6501 = vmax.f32 %v6469, 0.0
        %v6502 = vmax.f32 %v6470, 0.0
        %v6503 = vmax.f32 %v6471, 0.0
        %v6504 = vmax.f32 %v6472, 0.0
        %v6505 = vmax.f32 %v6473, 0.0
        %v6506 = vmax.f32 %v6474, 0.0
        %v6507 = vmax.f32 %v6475, 0.0
        %v6508 = vmax.f32 %v6476, 0.0
        %v6509 = vmax.f32 %v6477, 0.0
        %v6510 = vmax.f32 %v6478, 0.0
        %v6511 = vmax.f32 %v6479, 0.0
        %v6512 = vpack.c.bf16 %v6481, %v6480
        %v6513 = vpack.c.bf16 %v6483, %v6482
        %v6514 = vpack.c.bf16 %v6485, %v6484
        %v6515 = vpack.c.bf16 %v6487, %v6486
        %v6516 = vpack.c.bf16 %v6489, %v6488
        %v6517 = vpack.c.bf16 %v6491, %v6490
        %v6518 = vpack.c.bf16 %v6493, %v6492
        %v6519 = vpack.c.bf16 %v6495, %v6494
        %v6520 = vpack.c.bf16 %v6497, %v6496
        %v6521 = vpack.c.bf16 %v6499, %v6498
        %v6522 = vpack.c.bf16 %v6501, %v6500
        %v6523 = vpack.c.bf16 %v6503, %v6502
        %v6524 = vpack.c.bf16 %v6505, %v6504
        %v6525 = vpack.c.bf16 %v6507, %v6506
        %v6526 = vpack.c.bf16 %v6509, %v6508
        %v6527 = vpack.c.bf16 %v6511, %v6510
        %v6544 = vunpack.c.l.b16 %v6512
        %v6545 = vunpack.c.h.b16 %v6512
        %v6546 = vunpack.c.l.b16 %v6513
        %v6547 = vunpack.c.h.b16 %v6513
        %v6548 = vunpack.c.l.b16 %v6514
        %v6549 = vunpack.c.h.b16 %v6514
        %v6550 = vunpack.c.l.b16 %v6515
        %v6551 = vunpack.c.h.b16 %v6515
        %v6552 = vunpack.c.l.b16 %v6516
        %v6553 = vunpack.c.h.b16 %v6516
        %v6554 = vunpack.c.l.b16 %v6517
        %v6555 = vunpack.c.h.b16 %v6517
        %v6556 = vunpack.c.l.b16 %v6518
        %v6557 = vunpack.c.h.b16 %v6518
        %v6558 = vunpack.c.l.b16 %v6519
        %v6559 = vunpack.c.h.b16 %v6519
        %v6560 = vunpack.c.l.b16 %v6520
        %v6561 = vunpack.c.h.b16 %v6520
        %v6562 = vunpack.c.l.b16 %v6521
        %v6563 = vunpack.c.h.b16 %v6521
        %v6564 = vunpack.c.l.b16 %v6522
        %v6565 = vunpack.c.h.b16 %v6522
        %v6566 = vunpack.c.l.b16 %v6523
        %v6567 = vunpack.c.h.b16 %v6523
        %v6568 = vunpack.c.l.b16 %v6524
        %v6569 = vunpack.c.h.b16 %v6524
        %v6570 = vunpack.c.l.b16 %v6525
        %v6571 = vunpack.c.h.b16 %v6525
        %v6572 = vunpack.c.l.b16 %v6526
        %v6573 = vunpack.c.h.b16 %v6526
        %v6574 = vunpack.c.l.b16 %v6527
        %v6575 = vunpack.c.h.b16 %v6527
        %v6576 = vpack.c.b16 %v6544, %v6544
        %v6577 = vpack.c.b16 %v6545, %v6545
        %v6578 = vpack.c.b16 %v6546, %v6546
        %v6579 = vpack.c.b16 %v6547, %v6547
        %v6580 = vpack.c.b16 %v6548, %v6548
        %v6581 = vpack.c.b16 %v6549, %v6549
        %v6582 = vpack.c.b16 %v6550, %v6550
        %v6583 = vpack.c.b16 %v6551, %v6551
        %v6584 = vpack.c.b16 %v6552, %v6552
        %v6585 = vpack.c.b16 %v6553, %v6553
        %v6586 = vpack.c.b16 %v6554, %v6554
        %v6587 = vpack.c.b16 %v6555, %v6555
        %v6588 = vpack.c.b16 %v6556, %v6556
        %v6589 = vpack.c.b16 %v6557, %v6557
        %v6590 = vpack.c.b16 %v6558, %v6558
        %v6591 = vpack.c.b16 %v6559, %v6559
        %v6592 = vpack.c.b16 %v6560, %v6560
        %v6593 = vpack.c.b16 %v6561, %v6561
        %v6594 = vpack.c.b16 %v6562, %v6562
        %v6595 = vpack.c.b16 %v6563, %v6563
        %v6596 = vpack.c.b16 %v6564, %v6564
        %v6597 = vpack.c.b16 %v6565, %v6565
        %v6598 = vpack.c.b16 %v6566, %v6566
        %v6599 = vpack.c.b16 %v6567, %v6567
        %v6600 = vpack.c.b16 %v6568, %v6568
        %v6601 = vpack.c.b16 %v6569, %v6569
        %v6602 = vpack.c.b16 %v6570, %v6570
        %v6603 = vpack.c.b16 %v6571, %v6571
        %v6604 = vpack.c.b16 %v6572, %v6572
        %v6605 = vpack.c.b16 %v6573, %v6573
        %v6606 = vpack.c.b16 %v6574, %v6574
        %v6607 = vpack.c.b16 %v6575, %v6575
        %v6609 = vshrl.u32 %v6576, 16
        %v6611 = vrot.slane %v6609, 7
        %v6612 = vshll.u32 %v6576, 16
        %v6614 = vor.u32 %v6611, %v6612
        %v6615 = vrot.slane %v6611, 4
        %v6617 = vshrl.u32 %v6577, 16
        %v6619 = vrot.slane %v6617, 7
        %v6620 = vshll.u32 %v6577, 16
        %v6622 = vor.u32 %v6619, %v6620
        %v6623 = vsel %vm930, %v6615, %v6622
        %v6624 = vrot.slane %v6619, 4
        %v6626 = vshrl.u32 %v6578, 16
        %v6628 = vrot.slane %v6626, 7
        %v6629 = vshll.u32 %v6578, 16
        %v6631 = vor.u32 %v6628, %v6629
        %v6632 = vrot.slane %v6628, 4
        %v6634 = vshrl.u32 %v6579, 16
        %v6636 = vrot.slane %v6634, 7
        %v6637 = vshll.u32 %v6579, 16
        %v6639 = vor.u32 %v6636, %v6637
        %v6640 = vsel %vm930, %v6632, %v6639
        %v6641 = vrot.slane %v6636, 4
        %v6643 = vshrl.u32 %v6580, 16
        %v6645 = vrot.slane %v6643, 7
        %v6646 = vshll.u32 %v6580, 16
        %v6648 = vor.u32 %v6645, %v6646
        %v6649 = vrot.slane %v6645, 4
        %v6651 = vshrl.u32 %v6581, 16
        %v6653 = vrot.slane %v6651, 7
        %v6654 = vshll.u32 %v6581, 16
        %v6656 = vor.u32 %v6653, %v6654
        %v6657 = vsel %vm930, %v6649, %v6656
        %v6658 = vrot.slane %v6653, 4
        %v6660 = vshrl.u32 %v6582, 16
        %v6662 = vrot.slane %v6660, 7
        %v6663 = vshll.u32 %v6582, 16
        %v6665 = vor.u32 %v6662, %v6663
        %v6666 = vrot.slane %v6662, 4
        %v6668 = vshrl.u32 %v6583, 16
        %v6670 = vrot.slane %v6668, 7
        %v6671 = vshll.u32 %v6583, 16
        %v6673 = vor.u32 %v6670, %v6671
        %v6674 = vsel %vm930, %v6666, %v6673
        %v6675 = vrot.slane %v6670, 4
        %v6677 = vshrl.u32 %v6584, 16
        %v6679 = vrot.slane %v6677, 7
        %v6680 = vshll.u32 %v6584, 16
        %v6682 = vor.u32 %v6679, %v6680
        %v6683 = vrot.slane %v6679, 4
        %v6685 = vshrl.u32 %v6585, 16
        %v6687 = vrot.slane %v6685, 7
        %v6688 = vshll.u32 %v6585, 16
        %v6690 = vor.u32 %v6687, %v6688
        %v6691 = vsel %vm930, %v6683, %v6690
        %v6692 = vrot.slane %v6687, 4
        %v6694 = vshrl.u32 %v6586, 16
        %v6696 = vrot.slane %v6694, 7
        %v6697 = vshll.u32 %v6586, 16
        %v6699 = vor.u32 %v6696, %v6697
        %v6700 = vrot.slane %v6696, 4
        %v6702 = vshrl.u32 %v6587, 16
        %v6704 = vrot.slane %v6702, 7
        %v6705 = vshll.u32 %v6587, 16
        %v6707 = vor.u32 %v6704, %v6705
        %v6708 = vsel %vm930, %v6700, %v6707
        %v6709 = vrot.slane %v6704, 4
        %v6711 = vshrl.u32 %v6588, 16
        %v6713 = vrot.slane %v6711, 7
        %v6714 = vshll.u32 %v6588, 16
        %v6716 = vor.u32 %v6713, %v6714
        %v6717 = vrot.slane %v6713, 4
        %v6719 = vshrl.u32 %v6589, 16
        %v6721 = vrot.slane %v6719, 7
        %v6722 = vshll.u32 %v6589, 16
        %v6724 = vor.u32 %v6721, %v6722
        %v6725 = vsel %vm930, %v6717, %v6724
        %v6726 = vrot.slane %v6721, 4
        %v6728 = vshrl.u32 %v6590, 16
        %v6730 = vrot.slane %v6728, 7
        %v6731 = vshll.u32 %v6590, 16
        %v6733 = vor.u32 %v6730, %v6731
        %v6734 = vrot.slane %v6730, 4
        %v6736 = vshrl.u32 %v6591, 16
        %v6738 = vrot.slane %v6736, 7
        %v6739 = vshll.u32 %v6591, 16
        %v6741 = vor.u32 %v6738, %v6739
        %v6742 = vsel %vm930, %v6734, %v6741
        %v6743 = vrot.slane %v6738, 4
        %v6745 = vshrl.u32 %v6592, 16
        %v6747 = vrot.slane %v6745, 7
        %v6748 = vshll.u32 %v6592, 16
        %v6750 = vor.u32 %v6747, %v6748
        %v6751 = vrot.slane %v6747, 4
        %v6753 = vshrl.u32 %v6593, 16
        %v6755 = vrot.slane %v6753, 7
        %v6756 = vshll.u32 %v6593, 16
        %v6758 = vor.u32 %v6755, %v6756
        %v6759 = vsel %vm930, %v6751, %v6758
        %v6760 = vrot.slane %v6755, 4
        %v6762 = vshrl.u32 %v6594, 16
        %v6764 = vrot.slane %v6762, 7
        %v6765 = vshll.u32 %v6594, 16
        %v6767 = vor.u32 %v6764, %v6765
        %v6768 = vrot.slane %v6764, 4
        %v6770 = vshrl.u32 %v6595, 16
        %v6772 = vrot.slane %v6770, 7
        %v6773 = vshll.u32 %v6595, 16
        %v6775 = vor.u32 %v6772, %v6773
        %v6776 = vsel %vm930, %v6768, %v6775
        %v6777 = vrot.slane %v6772, 4
        %v6779 = vshrl.u32 %v6596, 16
        %v6781 = vrot.slane %v6779, 7
        %v6782 = vshll.u32 %v6596, 16
        %v6784 = vor.u32 %v6781, %v6782
        %v6785 = vrot.slane %v6781, 4
        %v6787 = vshrl.u32 %v6597, 16
        %v6789 = vrot.slane %v6787, 7
        %v6790 = vshll.u32 %v6597, 16
        %v6792 = vor.u32 %v6789, %v6790
        %v6793 = vsel %vm930, %v6785, %v6792
        %v6794 = vrot.slane %v6789, 4
        %v6796 = vshrl.u32 %v6598, 16
        %v6798 = vrot.slane %v6796, 7
        %v6799 = vshll.u32 %v6598, 16
        %v6801 = vor.u32 %v6798, %v6799
        %v6802 = vrot.slane %v6798, 4
        %v6804 = vshrl.u32 %v6599, 16
        %v6806 = vrot.slane %v6804, 7
        %v6807 = vshll.u32 %v6599, 16
        %v6809 = vor.u32 %v6806, %v6807
        %v6810 = vsel %vm930, %v6802, %v6809
        %v6811 = vrot.slane %v6806, 4
        %v6813 = vshrl.u32 %v6600, 16
        %v6815 = vrot.slane %v6813, 7
        %v6816 = vshll.u32 %v6600, 16
        %v6818 = vor.u32 %v6815, %v6816
        %v6819 = vrot.slane %v6815, 4
        %v6821 = vshrl.u32 %v6601, 16
        %v6823 = vrot.slane %v6821, 7
        %v6824 = vshll.u32 %v6601, 16
        %v6826 = vor.u32 %v6823, %v6824
        %v6827 = vsel %vm930, %v6819, %v6826
        %v6828 = vrot.slane %v6823, 4
        %v6830 = vshrl.u32 %v6602, 16
        %v6832 = vrot.slane %v6830, 7
        %v6833 = vshll.u32 %v6602, 16
        %v6835 = vor.u32 %v6832, %v6833
        %v6836 = vrot.slane %v6832, 4
        %v6838 = vshrl.u32 %v6603, 16
        %v6840 = vrot.slane %v6838, 7
        %v6841 = vshll.u32 %v6603, 16
        %v6843 = vor.u32 %v6840, %v6841
        %v6844 = vsel %vm930, %v6836, %v6843
        %v6845 = vrot.slane %v6840, 4
        %v6847 = vshrl.u32 %v6604, 16
        %v6849 = vrot.slane %v6847, 7
        %v6850 = vshll.u32 %v6604, 16
        %v6852 = vor.u32 %v6849, %v6850
        %v6853 = vrot.slane %v6849, 4
        %v6855 = vshrl.u32 %v6605, 16
        %v6857 = vrot.slane %v6855, 7
        %v6858 = vshll.u32 %v6605, 16
        %v6860 = vor.u32 %v6857, %v6858
        %v6861 = vsel %vm930, %v6853, %v6860
        %v6862 = vrot.slane %v6857, 4
        %v6864 = vshrl.u32 %v6606, 16
        %v6866 = vrot.slane %v6864, 7
        %v6867 = vshll.u32 %v6606, 16
        %v6869 = vor.u32 %v6866, %v6867
        %v6870 = vrot.slane %v6866, 4
        %v6872 = vshrl.u32 %v6607, 16
        %v6874 = vrot.slane %v6872, 7
        %v6875 = vshll.u32 %v6607, 16
        %v6877 = vor.u32 %v6874, %v6875
        %v6878 = vsel %vm930, %v6870, %v6877
        %v6879 = vrot.slane %v6874, 4
        %s6928 = scalar_lea.vmem [#allocation3], 12
        %v6929 = vld [vmem:[%s6928] sm:$0xf]
        %v6930 = vsel %vm1254, %v6614, %v6929
        %6931 = vst [vmem:[%s6928] sm:$0xf] %v6930
        %6932 = vst [vmem:[%s6928 + $0x4] sm:$0xf] %v6623
        %v6933 = vld [vmem:[%s6928 + $0x8] sm:$0x1]
        %v6934 = vsel %vm1260, %v6624, %v6933
        %6935 = vst [vmem:[%s6928 + $0x8] sm:$0x1] %v6934
        %v6936 = vld [vmem:[%s6928 + $0xc] sm:$0xf]
        %v6937 = vsel %vm1254, %v6631, %v6936
        %6938 = vst [vmem:[%s6928 + $0xc] sm:$0xf] %v6937
        %6939 = vst [vmem:[%s6928 + $0x10] sm:$0xf] %v6640
        %v6940 = vld [vmem:[%s6928 + $0x14] sm:$0x1]
        %v6941 = vsel %vm1260, %v6641, %v6940
        %6942 = vst [vmem:[%s6928 + $0x14] sm:$0x1] %v6941
        %v6943 = vld [vmem:[%s6928 + $0x18] sm:$0xf]
        %v6944 = vsel %vm1254, %v6648, %v6943
        %6945 = vst [vmem:[%s6928 + $0x18] sm:$0xf] %v6944
        %6946 = vst [vmem:[%s6928 + $0x1c] sm:$0xf] %v6657
        %v6947 = vld [vmem:[%s6928 + $0x20] sm:$0x1]
        %v6948 = vsel %vm1260, %v6658, %v6947
        %6949 = vst [vmem:[%s6928 + $0x20] sm:$0x1] %v6948
        %v6950 = vld [vmem:[%s6928 + $0x24] sm:$0xf]
        %v6951 = vsel %vm1254, %v6665, %v6950
        %6952 = vst [vmem:[%s6928 + $0x24] sm:$0xf] %v6951
        %6953 = vst [vmem:[%s6928 + $0x28] sm:$0xf] %v6674
        %v6954 = vld [vmem:[%s6928 + $0x2c] sm:$0x1]
        %v6955 = vsel %vm1260, %v6675, %v6954
        %6956 = vst [vmem:[%s6928 + $0x2c] sm:$0x1] %v6955
        %v6957 = vld [vmem:[%s6928 + $0x30] sm:$0xf]
        %v6958 = vsel %vm1254, %v6682, %v6957
        %6959 = vst [vmem:[%s6928 + $0x30] sm:$0xf] %v6958
        %6960 = vst [vmem:[%s6928 + $0x34] sm:$0xf] %v6691
        %v6961 = vld [vmem:[%s6928 + $0x38] sm:$0x1]
        %v6962 = vsel %vm1260, %v6692, %v6961
        %6963 = vst [vmem:[%s6928 + $0x38] sm:$0x1] %v6962
        %v6964 = vld [vmem:[%s6928 + $0x3c] sm:$0xf]
        %v6965 = vsel %vm1254, %v6699, %v6964
        %6966 = vst [vmem:[%s6928 + $0x3c] sm:$0xf] %v6965
        %6967 = vst [vmem:[%s6928 + $0x40] sm:$0xf] %v6708
        %v6968 = vld [vmem:[%s6928 + $0x44] sm:$0x1]
        %v6969 = vsel %vm1260, %v6709, %v6968
        %6970 = vst [vmem:[%s6928 + $0x44] sm:$0x1] %v6969
        %v6971 = vld [vmem:[%s6928 + $0x48] sm:$0xf]
        %v6972 = vsel %vm1254, %v6716, %v6971
        %6973 = vst [vmem:[%s6928 + $0x48] sm:$0xf] %v6972
        %6974 = vst [vmem:[%s6928 + $0x4c] sm:$0xf] %v6725
        %v6975 = vld [vmem:[%s6928 + $0x50] sm:$0x1]
        %v6976 = vsel %vm1260, %v6726, %v6975
        %6977 = vst [vmem:[%s6928 + $0x50] sm:$0x1] %v6976
        %v6978 = vld [vmem:[%s6928 + $0x54] sm:$0xf]
        %v6979 = vsel %vm1254, %v6733, %v6978
        %6980 = vst [vmem:[%s6928 + $0x54] sm:$0xf] %v6979
        %6981 = vst [vmem:[%s6928 + $0x58] sm:$0xf] %v6742
        %v6982 = vld [vmem:[%s6928 + $0x5c] sm:$0x1]
        %v6983 = vsel %vm1260, %v6743, %v6982
        %6984 = vst [vmem:[%s6928 + $0x5c] sm:$0x1] %v6983
        %v6985 = vld [vmem:[%s6928 + $0x60] sm:$0xf]
        %v6986 = vsel %vm1254, %v6750, %v6985
        %6987 = vst [vmem:[%s6928 + $0x60] sm:$0xf] %v6986
        %6988 = vst [vmem:[%s6928 + $0x64] sm:$0xf] %v6759
        %v6989 = vld [vmem:[%s6928 + $0x68] sm:$0x1]
        %v6990 = vsel %vm1260, %v6760, %v6989
        %6991 = vst [vmem:[%s6928 + $0x68] sm:$0x1] %v6990
        %v6992 = vld [vmem:[%s6928 + $0x6c] sm:$0xf]
        %v6993 = vsel %vm1254, %v6767, %v6992
        %6994 = vst [vmem:[%s6928 + $0x6c] sm:$0xf] %v6993
        %6995 = vst [vmem:[%s6928 + $0x70] sm:$0xf] %v6776
        %v6996 = vld [vmem:[%s6928 + $0x74] sm:$0x1]
        %v6997 = vsel %vm1260, %v6777, %v6996
        %6998 = vst [vmem:[%s6928 + $0x74] sm:$0x1] %v6997
        %v6999 = vld [vmem:[%s6928 + $0x78] sm:$0xf]
        %v7000 = vsel %vm1254, %v6784, %v6999
        %7001 = vst [vmem:[%s6928 + $0x78] sm:$0xf] %v7000
        %7002 = vst [vmem:[%s6928 + $0x7c] sm:$0xf] %v6793
        %v7003 = vld [vmem:[%s6928 + $0x80] sm:$0x1]
        %v7004 = vsel %vm1260, %v6794, %v7003
        %7005 = vst [vmem:[%s6928 + $0x80] sm:$0x1] %v7004
        %v7006 = vld [vmem:[%s6928 + $0x84] sm:$0xf]
        %v7007 = vsel %vm1254, %v6801, %v7006
        %7008 = vst [vmem:[%s6928 + $0x84] sm:$0xf] %v7007
        %7009 = vst [vmem:[%s6928 + $0x88] sm:$0xf] %v6810
        %v7010 = vld [vmem:[%s6928 + $0x8c] sm:$0x1]
        %v7011 = vsel %vm1260, %v6811, %v7010
        %7012 = vst [vmem:[%s6928 + $0x8c] sm:$0x1] %v7011
        %v7013 = vld [vmem:[%s6928 + $0x90] sm:$0xf]
        %v7014 = vsel %vm1254, %v6818, %v7013
        %7015 = vst [vmem:[%s6928 + $0x90] sm:$0xf] %v7014
        %7016 = vst [vmem:[%s6928 + $0x94] sm:$0xf] %v6827
        %v7017 = vld [vmem:[%s6928 + $0x98] sm:$0x1]
        %v7018 = vsel %vm1260, %v6828, %v7017
        %7019 = vst [vmem:[%s6928 + $0x98] sm:$0x1] %v7018
        %v7020 = vld [vmem:[%s6928 + $0x9c] sm:$0xf]
        %v7021 = vsel %vm1254, %v6835, %v7020
        %7022 = vst [vmem:[%s6928 + $0x9c] sm:$0xf] %v7021
        %7023 = vst [vmem:[%s6928 + $0xa0] sm:$0xf] %v6844
        %v7024 = vld [vmem:[%s6928 + $0xa4] sm:$0x1]
        %v7025 = vsel %vm1260, %v6845, %v7024
        %7026 = vst [vmem:[%s6928 + $0xa4] sm:$0x1] %v7025
        %v7027 = vld [vmem:[%s6928 + $0xa8] sm:$0xf]
        %v7028 = vsel %vm1254, %v6852, %v7027
        %7029 = vst [vmem:[%s6928 + $0xa8] sm:$0xf] %v7028
        %7030 = vst [vmem:[%s6928 + $0xac] sm:$0xf] %v6861
        %v7031 = vld [vmem:[%s6928 + $0xb0] sm:$0x1]
        %v7032 = vsel %vm1260, %v6862, %v7031
        %7033 = vst [vmem:[%s6928 + $0xb0] sm:$0x1] %v7032
        %v7034 = vld [vmem:[%s6928 + $0xb4] sm:$0xf]
        %v7035 = vsel %vm1254, %v6869, %v7034
        %7036 = vst [vmem:[%s6928 + $0xb4] sm:$0xf] %v7035
        %7037 = vst [vmem:[%s6928 + $0xb8] sm:$0xf] %v6878
        %v7038 = vld [vmem:[%s6928 + $0xbc] sm:$0x1]
        %v7039 = vsel %vm1260, %v6879, %v7038
        %7040 = vst [vmem:[%s6928 + $0xbc] sm:$0x1] %v7039
        %v7041 = vld [vmem:[#allocation3] sm:$0xf]
        %v7042 = vld [vmem:[#allocation3 + $0x4] sm:$0xf]
        %v7043 = vld [vmem:[#allocation3 + $0xc] sm:$0xf]
        %v7044 = vld [vmem:[#allocation3 + $0x10] sm:$0xf]
        %v7045 = vld [vmem:[#allocation3 + $0x18] sm:$0xf]
        %v7046 = vld [vmem:[#allocation3 + $0x1c] sm:$0xf]
        %v7047 = vld [vmem:[#allocation3 + $0x24] sm:$0xf]
        %v7048 = vld [vmem:[#allocation3 + $0x28] sm:$0xf]
        %v7049 = vld [vmem:[#allocation3 + $0x30] sm:$0xf]
        %v7050 = vld [vmem:[#allocation3 + $0x34] sm:$0xf]
        %v7051 = vld [vmem:[#allocation3 + $0x3c] sm:$0xf]
        %v7052 = vld [vmem:[#allocation3 + $0x40] sm:$0xf]
        %v7053 = vld [vmem:[#allocation3 + $0x48] sm:$0xf]
        %v7054 = vld [vmem:[#allocation3 + $0x4c] sm:$0xf]
        %v7055 = vld [vmem:[#allocation3 + $0x54] sm:$0xf]
        %v7056 = vld [vmem:[#allocation3 + $0x58] sm:$0xf]
        %v7057 = vld [vmem:[#allocation3 + $0x60] sm:$0xf]
        %v7058 = vld [vmem:[#allocation3 + $0x64] sm:$0xf]
        %v7059 = vld [vmem:[#allocation3 + $0x6c] sm:$0xf]
        %v7060 = vld [vmem:[#allocation3 + $0x70] sm:$0xf]
        %v7061 = vld [vmem:[#allocation3 + $0x78] sm:$0xf]
        %v7062 = vld [vmem:[#allocation3 + $0x7c] sm:$0xf]
        %v7063 = vld [vmem:[#allocation3 + $0x84] sm:$0xf]
        %v7064 = vld [vmem:[#allocation3 + $0x88] sm:$0xf]
        %v7065 = vld [vmem:[#allocation3 + $0x90] sm:$0xf]
        %v7066 = vld [vmem:[#allocation3 + $0x94] sm:$0xf]
        %v7067 = vld [vmem:[#allocation3 + $0x9c] sm:$0xf]
        %v7068 = vld [vmem:[#allocation3 + $0xa0] sm:$0xf]
        %v7069 = vld [vmem:[#allocation3 + $0xa8] sm:$0xf]
        %v7070 = vld [vmem:[#allocation3 + $0xac] sm:$0xf]
        %v7071 = vld [vmem:[#allocation3 + $0xb4] sm:$0xf]
        %v7072 = vld [vmem:[#allocation3 + $0xb8] sm:$0xf]
        %v7073 = vld [vmem:[#allocation15] sm:$0xf]
        %v7074 = vld [vmem:[#allocation15 + $0x4] sm:$0xf]
        %v7075 = vld [vmem:[#allocation15 + $0x8] sm:$0xf]
        %v7076 = vld [vmem:[#allocation15 + $0xc] sm:$0xf]
        %v7077 = vld [vmem:[#allocation15 + $0x10] sm:$0xf]
        %v7078 = vld [vmem:[#allocation15 + $0x14] sm:$0xf]
        %v7079 = vld [vmem:[#allocation15 + $0x18] sm:$0xf]
        %v7080 = vld [vmem:[#allocation15 + $0x1c] sm:$0xf]
        %v7081 = vld [vmem:[#allocation15 + $0x20] sm:$0xf]
        %v7082 = vld [vmem:[#allocation15 + $0x24] sm:$0xf]
        %v7083 = vld [vmem:[#allocation15 + $0x28] sm:$0xf]
        %v7084 = vld [vmem:[#allocation15 + $0x2c] sm:$0xf]
        %v7085 = vld [vmem:[#allocation15 + $0x30] sm:$0xf]
        %v7086 = vld [vmem:[#allocation15 + $0x34] sm:$0xf]
        %v7087 = vld [vmem:[#allocation15 + $0x38] sm:$0xf]
        %v7088 = vld [vmem:[#allocation15 + $0x3c] sm:$0xf]
        %v7089 = vld [vmem:[#allocation3 + $0x8] sm:$0x1]
        %v7090 = vld [vmem:[#allocation3 + $0x14] sm:$0x1]
        %v7091 = vld [vmem:[#allocation3 + $0x20] sm:$0x1]
        %v7092 = vld [vmem:[#allocation3 + $0x2c] sm:$0x1]
        %v7093 = vld [vmem:[#allocation3 + $0x38] sm:$0x1]
        %v7094 = vld [vmem:[#allocation3 + $0x44] sm:$0x1]
        %v7095 = vld [vmem:[#allocation3 + $0x50] sm:$0x1]
        %v7096 = vld [vmem:[#allocation3 + $0x5c] sm:$0x1]
        %v7097 = vld [vmem:[#allocation3 + $0x68] sm:$0x1]
        %v7098 = vld [vmem:[#allocation3 + $0x74] sm:$0x1]
        %v7099 = vld [vmem:[#allocation3 + $0x80] sm:$0x1]
        %v7100 = vld [vmem:[#allocation3 + $0x8c] sm:$0x1]
        %v7101 = vld [vmem:[#allocation3 + $0x98] sm:$0x1]
        %v7102 = vld [vmem:[#allocation3 + $0xa4] sm:$0x1]
        %v7103 = vld [vmem:[#allocation3 + $0xb0] sm:$0x1]
        %v7104 = vld [vmem:[#allocation3 + $0xbc] sm:$0x1]
        %v7106 = vshrl.u32 %v7041, 16
        %v7108 = vrot.slane %v7106, 4
        %v7109 = vshll.u32 %v7041, 16
        %v7111 = vrot.slane %v7109, 5
        %v7112 = vor.u32 %v7108, %v7111
        %v7113 = vrot.slane %v7112, 4
        %v7115 = vshll.u32 %v7042, 16
        %v7117 = vrot.slane %v7115, 5
        %v7118 = vsel %vm1660, %v7113, %v7117
        %v7119 = vshrl.u32 %v7042, 16
        %v7121 = vrot.slane %v7119, 4
        %v7122 = vor.u32 %v7121, %v7117
        %v7123 = vrot.slane %v7122, 4
        %v7125 = vshll.u32 %v7089, 16
        %v7127 = vrot.slane %v7125, 5
        %v7128 = vsel %vm1660, %v7123, %v7127
        %v7130 = vshrl.u32 %v7043, 16
        %v7132 = vrot.slane %v7130, 4
        %v7133 = vshll.u32 %v7043, 16
        %v7135 = vrot.slane %v7133, 5
        %v7136 = vor.u32 %v7132, %v7135
        %v7137 = vrot.slane %v7136, 4
        %v7139 = vshll.u32 %v7044, 16
        %v7141 = vrot.slane %v7139, 5
        %v7142 = vsel %vm1660, %v7137, %v7141
        %v7143 = vshrl.u32 %v7044, 16
        %v7145 = vrot.slane %v7143, 4
        %v7146 = vor.u32 %v7145, %v7141
        %v7147 = vrot.slane %v7146, 4
        %v7149 = vshll.u32 %v7090, 16
        %v7151 = vrot.slane %v7149, 5
        %v7152 = vsel %vm1660, %v7147, %v7151
        %v7154 = vshrl.u32 %v7045, 16
        %v7156 = vrot.slane %v7154, 4
        %v7157 = vshll.u32 %v7045, 16
        %v7159 = vrot.slane %v7157, 5
        %v7160 = vor.u32 %v7156, %v7159
        %v7161 = vrot.slane %v7160, 4
        %v7163 = vshll.u32 %v7046, 16
        %v7165 = vrot.slane %v7163, 5
        %v7166 = vsel %vm1660, %v7161, %v7165
        %v7167 = vshrl.u32 %v7046, 16
        %v7169 = vrot.slane %v7167, 4
        %v7170 = vor.u32 %v7169, %v7165
        %v7171 = vrot.slane %v7170, 4
        %v7173 = vshll.u32 %v7091, 16
        %v7175 = vrot.slane %v7173, 5
        %v7176 = vsel %vm1660, %v7171, %v7175
        %v7178 = vshrl.u32 %v7047, 16
        %v7180 = vrot.slane %v7178, 4
        %v7181 = vshll.u32 %v7047, 16
        %v7183 = vrot.slane %v7181, 5
        %v7184 = vor.u32 %v7180, %v7183
        %v7185 = vrot.slane %v7184, 4
        %v7187 = vshll.u32 %v7048, 16
        %v7189 = vrot.slane %v7187, 5
        %v7190 = vsel %vm1660, %v7185, %v7189
        %v7191 = vshrl.u32 %v7048, 16
        %v7193 = vrot.slane %v7191, 4
        %v7194 = vor.u32 %v7193, %v7189
        %v7195 = vrot.slane %v7194, 4
        %v7197 = vshll.u32 %v7092, 16
        %v7199 = vrot.slane %v7197, 5
        %v7200 = vsel %vm1660, %v7195, %v7199
        %v7202 = vshrl.u32 %v7049, 16
        %v7204 = vrot.slane %v7202, 4
        %v7205 = vshll.u32 %v7049, 16
        %v7207 = vrot.slane %v7205, 5
        %v7208 = vor.u32 %v7204, %v7207
        %v7209 = vrot.slane %v7208, 4
        %v7211 = vshll.u32 %v7050, 16
        %v7213 = vrot.slane %v7211, 5
        %v7214 = vsel %vm1660, %v7209, %v7213
        %v7215 = vshrl.u32 %v7050, 16
        %v7217 = vrot.slane %v7215, 4
        %v7218 = vor.u32 %v7217, %v7213
        %v7219 = vrot.slane %v7218, 4
        %v7221 = vshll.u32 %v7093, 16
        %v7223 = vrot.slane %v7221, 5
        %v7224 = vsel %vm1660, %v7219, %v7223
        %v7226 = vshrl.u32 %v7051, 16
        %v7228 = vrot.slane %v7226, 4
        %v7229 = vshll.u32 %v7051, 16
        %v7231 = vrot.slane %v7229, 5
        %v7232 = vor.u32 %v7228, %v7231
        %v7233 = vrot.slane %v7232, 4
        %v7235 = vshll.u32 %v7052, 16
        %v7237 = vrot.slane %v7235, 5
        %v7238 = vsel %vm1660, %v7233, %v7237
        %v7239 = vshrl.u32 %v7052, 16
        %v7241 = vrot.slane %v7239, 4
        %v7242 = vor.u32 %v7241, %v7237
        %v7243 = vrot.slane %v7242, 4
        %v7245 = vshll.u32 %v7094, 16
        %v7247 = vrot.slane %v7245, 5
        %v7248 = vsel %vm1660, %v7243, %v7247
        %v7250 = vshrl.u32 %v7053, 16
        %v7252 = vrot.slane %v7250, 4
        %v7253 = vshll.u32 %v7053, 16
        %v7255 = vrot.slane %v7253, 5
        %v7256 = vor.u32 %v7252, %v7255
        %v7257 = vrot.slane %v7256, 4
        %v7259 = vshll.u32 %v7054, 16
        %v7261 = vrot.slane %v7259, 5
        %v7262 = vsel %vm1660, %v7257, %v7261
        %v7263 = vshrl.u32 %v7054, 16
        %v7265 = vrot.slane %v7263, 4
        %v7266 = vor.u32 %v7265, %v7261
        %v7267 = vrot.slane %v7266, 4
        %v7269 = vshll.u32 %v7095, 16
        %v7271 = vrot.slane %v7269, 5
        %v7272 = vsel %vm1660, %v7267, %v7271
        %v7274 = vshrl.u32 %v7055, 16
        %v7276 = vrot.slane %v7274, 4
        %v7277 = vshll.u32 %v7055, 16
        %v7279 = vrot.slane %v7277, 5
        %v7280 = vor.u32 %v7276, %v7279
        %v7281 = vrot.slane %v7280, 4
        %v7283 = vshll.u32 %v7056, 16
        %v7285 = vrot.slane %v7283, 5
        %v7286 = vsel %vm1660, %v7281, %v7285
        %v7287 = vshrl.u32 %v7056, 16
        %v7289 = vrot.slane %v7287, 4
        %v7290 = vor.u32 %v7289, %v7285
        %v7291 = vrot.slane %v7290, 4
        %v7293 = vshll.u32 %v7096, 16
        %v7295 = vrot.slane %v7293, 5
        %v7296 = vsel %vm1660, %v7291, %v7295
        %v7298 = vshrl.u32 %v7057, 16
        %v7300 = vrot.slane %v7298, 4
        %v7301 = vshll.u32 %v7057, 16
        %v7303 = vrot.slane %v7301, 5
        %v7304 = vor.u32 %v7300, %v7303
        %v7305 = vrot.slane %v7304, 4
        %v7307 = vshll.u32 %v7058, 16
        %v7309 = vrot.slane %v7307, 5
        %v7310 = vsel %vm1660, %v7305, %v7309
        %v7311 = vshrl.u32 %v7058, 16
        %v7313 = vrot.slane %v7311, 4
        %v7314 = vor.u32 %v7313, %v7309
        %v7315 = vrot.slane %v7314, 4
        %v7317 = vshll.u32 %v7097, 16
        %v7319 = vrot.slane %v7317, 5
        %v7320 = vsel %vm1660, %v7315, %v7319
        %v7322 = vshrl.u32 %v7059, 16
        %v7324 = vrot.slane %v7322, 4
        %v7325 = vshll.u32 %v7059, 16
        %v7327 = vrot.slane %v7325, 5
        %v7328 = vor.u32 %v7324, %v7327
        %v7329 = vrot.slane %v7328, 4
        %v7331 = vshll.u32 %v7060, 16
        %v7333 = vrot.slane %v7331, 5
        %v7334 = vsel %vm1660, %v7329, %v7333
        %v7335 = vshrl.u32 %v7060, 16
        %v7337 = vrot.slane %v7335, 4
        %v7338 = vor.u32 %v7337, %v7333
        %v7339 = vrot.slane %v7338, 4
        %v7341 = vshll.u32 %v7098, 16
        %v7343 = vrot.slane %v7341, 5
        %v7344 = vsel %vm1660, %v7339, %v7343
        %v7346 = vshrl.u32 %v7061, 16
        %v7348 = vrot.slane %v7346, 4
        %v7349 = vshll.u32 %v7061, 16
        %v7351 = vrot.slane %v7349, 5
        %v7352 = vor.u32 %v7348, %v7351
        %v7353 = vrot.slane %v7352, 4
        %v7355 = vshll.u32 %v7062, 16
        %v7357 = vrot.slane %v7355, 5
        %v7358 = vsel %vm1660, %v7353, %v7357
        %v7359 = vshrl.u32 %v7062, 16
        %v7361 = vrot.slane %v7359, 4
        %v7362 = vor.u32 %v7361, %v7357
        %v7363 = vrot.slane %v7362, 4
        %v7365 = vshll.u32 %v7099, 16
        %v7367 = vrot.slane %v7365, 5
        %v7368 = vsel %vm1660, %v7363, %v7367
        %v7370 = vshrl.u32 %v7063, 16
        %v7372 = vrot.slane %v7370, 4
        %v7373 = vshll.u32 %v7063, 16
        %v7375 = vrot.slane %v7373, 5
        %v7376 = vor.u32 %v7372, %v7375
        %v7377 = vrot.slane %v7376, 4
        %v7379 = vshll.u32 %v7064, 16
        %v7381 = vrot.slane %v7379, 5
        %v7382 = vsel %vm1660, %v7377, %v7381
        %v7383 = vshrl.u32 %v7064, 16
        %v7385 = vrot.slane %v7383, 4
        %v7386 = vor.u32 %v7385, %v7381
        %v7387 = vrot.slane %v7386, 4
        %v7389 = vshll.u32 %v7100, 16
        %v7391 = vrot.slane %v7389, 5
        %v7392 = vsel %vm1660, %v7387, %v7391
        %v7394 = vshrl.u32 %v7065, 16
        %v7396 = vrot.slane %v7394, 4
        %v7397 = vshll.u32 %v7065, 16
        %v7399 = vrot.slane %v7397, 5
        %v7400 = vor.u32 %v7396, %v7399
        %v7401 = vrot.slane %v7400, 4
        %v7403 = vshll.u32 %v7066, 16
        %v7405 = vrot.slane %v7403, 5
        %v7406 = vsel %vm1660, %v7401, %v7405
        %v7407 = vshrl.u32 %v7066, 16
        %v7409 = vrot.slane %v7407, 4
        %v7410 = vor.u32 %v7409, %v7405
        %v7411 = vrot.slane %v7410, 4
        %v7413 = vshll.u32 %v7101, 16
        %v7415 = vrot.slane %v7413, 5
        %v7416 = vsel %vm1660, %v7411, %v7415
        %v7418 = vshrl.u32 %v7067, 16
        %v7420 = vrot.slane %v7418, 4
        %v7421 = vshll.u32 %v7067, 16
        %v7423 = vrot.slane %v7421, 5
        %v7424 = vor.u32 %v7420, %v7423
        %v7425 = vrot.slane %v7424, 4
        %v7427 = vshll.u32 %v7068, 16
        %v7429 = vrot.slane %v7427, 5
        %v7430 = vsel %vm1660, %v7425, %v7429
        %v7431 = vshrl.u32 %v7068, 16
        %v7433 = vrot.slane %v7431, 4
        %v7434 = vor.u32 %v7433, %v7429
        %v7435 = vrot.slane %v7434, 4
        %v7437 = vshll.u32 %v7102, 16
        %v7439 = vrot.slane %v7437, 5
        %v7440 = vsel %vm1660, %v7435, %v7439
        %v7442 = vshrl.u32 %v7069, 16
        %v7444 = vrot.slane %v7442, 4
        %v7445 = vshll.u32 %v7069, 16
        %v7447 = vrot.slane %v7445, 5
        %v7448 = vor.u32 %v7444, %v7447
        %v7449 = vrot.slane %v7448, 4
        %v7451 = vshll.u32 %v7070, 16
        %v7453 = vrot.slane %v7451, 5
        %v7454 = vsel %vm1660, %v7449, %v7453
        %v7455 = vshrl.u32 %v7070, 16
        %v7457 = vrot.slane %v7455, 4
        %v7458 = vor.u32 %v7457, %v7453
        %v7459 = vrot.slane %v7458, 4
        %v7461 = vshll.u32 %v7103, 16
        %v7463 = vrot.slane %v7461, 5
        %v7464 = vsel %vm1660, %v7459, %v7463
        %v7466 = vshrl.u32 %v7071, 16
        %v7468 = vrot.slane %v7466, 4
        %v7469 = vshll.u32 %v7071, 16
        %v7471 = vrot.slane %v7469, 5
        %v7472 = vor.u32 %v7468, %v7471
        %v7473 = vrot.slane %v7472, 4
        %v7475 = vshll.u32 %v7072, 16
        %v7477 = vrot.slane %v7475, 5
        %v7478 = vsel %vm1660, %v7473, %v7477
        %v7479 = vshrl.u32 %v7072, 16
        %v7481 = vrot.slane %v7479, 4
        %v7482 = vor.u32 %v7481, %v7477
        %v7483 = vrot.slane %v7482, 4
        %v7485 = vshll.u32 %v7104, 16
        %v7487 = vrot.slane %v7485, 5
        %v7488 = vsel %vm1660, %v7483, %v7487
        %s7489 = scalar_lea.vmem [#allocation15], 64
        %v7490 = vld [vmem:[%s7489] sm:$0xf]
        %v7491 = vld [vmem:[%s7489 + $0x4] sm:$0xf]
        %v7492 = vld [vmem:[%s7489 + $0x8] sm:$0xf]
        %v7493 = vld [vmem:[%s7489 + $0xc] sm:$0xf]
        %v7494 = vld [vmem:[%s7489 + $0x10] sm:$0xf]
        %v7495 = vld [vmem:[%s7489 + $0x14] sm:$0xf]
        %v7496 = vld [vmem:[%s7489 + $0x18] sm:$0xf]
        %v7497 = vld [vmem:[%s7489 + $0x1c] sm:$0xf]
        %v7498 = vld [vmem:[%s7489 + $0x20] sm:$0xf]
        %v7499 = vld [vmem:[%s7489 + $0x24] sm:$0xf]
        %v7500 = vld [vmem:[%s7489 + $0x28] sm:$0xf]
        %v7501 = vld [vmem:[%s7489 + $0x2c] sm:$0xf]
        %v7502 = vld [vmem:[%s7489 + $0x30] sm:$0xf]
        %v7503 = vld [vmem:[%s7489 + $0x34] sm:$0xf]
        %v7504 = vld [vmem:[%s7489 + $0x38] sm:$0xf]
        %v7505 = vld [vmem:[%s7489 + $0x3c] sm:$0xf]
        %v7506 = vunpack.c.l.b16 %v7118
        %v7507 = vunpack.c.l.b16 %v7128
        %v7508 = vunpack.c.l.b16 %v7142
        %v7509 = vunpack.c.l.b16 %v7152
        %v7510 = vunpack.c.l.b16 %v7166
        %v7511 = vunpack.c.l.b16 %v7176
        %v7512 = vunpack.c.l.b16 %v7190
        %v7513 = vunpack.c.l.b16 %v7200
        %v7514 = vunpack.c.l.b16 %v7214
        %v7515 = vunpack.c.l.b16 %v7224
        %v7516 = vunpack.c.l.b16 %v7238
        %v7517 = vunpack.c.l.b16 %v7248
        %v7518 = vunpack.c.l.b16 %v7262
        %v7519 = vunpack.c.l.b16 %v7272
        %v7520 = vunpack.c.l.b16 %v7286
        %v7521 = vunpack.c.l.b16 %v7296
        %v7522 = vunpack.c.l.b16 %v7310
        %v7523 = vunpack.c.l.b16 %v7320
        %v7524 = vunpack.c.l.b16 %v7334
        %v7525 = vunpack.c.l.b16 %v7344
        %v7526 = vunpack.c.l.b16 %v7358
        %v7527 = vunpack.c.l.b16 %v7368
        %v7528 = vunpack.c.l.b16 %v7382
        %v7529 = vunpack.c.l.b16 %v7392
        %v7530 = vunpack.c.l.b16 %v7406
        %v7531 = vunpack.c.l.b16 %v7416
        %v7532 = vunpack.c.l.b16 %v7430
        %v7533 = vunpack.c.l.b16 %v7440
        %v7534 = vunpack.c.l.b16 %v7454
        %v7535 = vunpack.c.l.b16 %v7464
        %v7536 = vunpack.c.l.b16 %v7478
        %v7537 = vunpack.c.l.b16 %v7488
        %v7538 = vpack.c.b16 %v7507, %v7506
        %v7539 = vpack.c.b16 %v7509, %v7508
        %v7540 = vpack.c.b16 %v7511, %v7510
        %v7541 = vpack.c.b16 %v7513, %v7512
        %v7542 = vpack.c.b16 %v7515, %v7514
        %v7543 = vpack.c.b16 %v7517, %v7516
        %v7544 = vpack.c.b16 %v7519, %v7518
        %v7545 = vpack.c.b16 %v7521, %v7520
        %v7546 = vpack.c.b16 %v7523, %v7522
        %v7547 = vpack.c.b16 %v7525, %v7524
        %v7548 = vpack.c.b16 %v7527, %v7526
        %v7549 = vpack.c.b16 %v7529, %v7528
        %v7550 = vpack.c.b16 %v7531, %v7530
        %v7551 = vpack.c.b16 %v7533, %v7532
        %v7552 = vpack.c.b16 %v7535, %v7534
        %v7553 = vpack.c.b16 %v7537, %v7536
        %v7586 = vunpack.c.l.b16 %v7490
        %v7587 = vunpack.c.l.b16 %v7491
        %v7588 = vunpack.c.l.b16 %v7492
        %v7589 = vunpack.c.l.b16 %v7493
        %v7590 = vunpack.c.l.b16 %v7494
        %v7591 = vunpack.c.l.b16 %v7495
        %v7592 = vunpack.c.l.b16 %v7496
        %v7593 = vunpack.c.l.b16 %v7497
        %v7594 = vunpack.c.l.b16 %v7498
        %v7595 = vunpack.c.l.b16 %v7499
        %v7596 = vunpack.c.l.b16 %v7500
        %v7597 = vunpack.c.l.b16 %v7501
        %v7598 = vunpack.c.l.b16 %v7502
        %v7599 = vunpack.c.l.b16 %v7503
        %v7600 = vunpack.c.l.b16 %v7504
        %v7601 = vunpack.c.l.b16 %v7505
        %v7602 = vpack.c.b16 %v7587, %v7586
        %v7603 = vpack.c.b16 %v7589, %v7588
        %v7604 = vpack.c.b16 %v7591, %v7590
        %v7605 = vpack.c.b16 %v7593, %v7592
        %v7606 = vpack.c.b16 %v7595, %v7594
        %v7607 = vpack.c.b16 %v7597, %v7596
        %v7608 = vpack.c.b16 %v7599, %v7598
        %v7609 = vpack.c.b16 %v7601, %v7600
        %7618 = vmatprep.subr.bf16.mxu0 0
        %7619 = vmatpush1.bf16.msra.mxu0 %v7602
        %7620 = vmatprep.subr.bf16.mxu0 0
        %7621 = vmatpush1.bf16.msra.mxu0 %v7603
        %7622 = vmatprep.subr.bf16.mxu0 0
        %7623 = vmatpush1.bf16.msra.mxu0 %v7604
        %7624 = vmatprep.subr.bf16.mxu0 0
        %7625 = vmatpush1.bf16.msra.mxu0 %v7605
        %7626 = vmatprep.subr.bf16.mxu0 0
        %7627 = vmatpush1.bf16.msra.mxu0 %v7606
        %7628 = vmatprep.subr.bf16.mxu0 0
        %7629 = vmatpush1.bf16.msra.mxu0 %v7607
        %7630 = vmatprep.subr.bf16.mxu0 0
        %7631 = vmatpush1.bf16.msra.mxu0 %v7608
        %7632 = vmatprep.subr.bf16.mxu0 0
        %7633 = vmatpush1.bf16.msra.mxu0 %v7609
        %7634 = vmatprep.subr.bf16.mxu0 0
        %7635 = vmatpush1.bf16.msra.mxu0 0
        %7636 = vmatprep.subr.bf16.mxu0 0
        %7637 = vmatpush1.bf16.msra.mxu0 0
        %7638 = vmatprep.subr.bf16.mxu0 0
        %7639 = vmatpush1.bf16.msra.mxu0 0
        %7640 = vmatprep.subr.bf16.mxu0 0
        %7641 = vmatpush1.bf16.msra.mxu0 0
        %7642 = vmatprep.subr.bf16.mxu0 0
        %7643 = vmatpush1.bf16.msra.mxu0 0
        %7644 = vmatprep.subr.bf16.mxu0 0
        %7645 = vmatpush1.bf16.msra.mxu0 0
        %7646 = vmatprep.subr.bf16.mxu0 0
        %7647 = vmatpush1.bf16.msra.mxu0 0
        %7648 = vmatprep.subr.bf16.mxu0 0
        %7649 = vmatpush1.bf16.msra.mxu0 0
        %7650 = vmatprep.mubr.bf16.mxu0 0
        %7651 = vmatmul.mubr.bf16.gmra.mrb[0].mxu0 %v7538
        %v7652 = vpop.f32.mrb[0].mxu0
        %v7653 = vadd.f32 0.0, %v7652
        %v7654 = vpop.f32.mrb[0].mxu0
        %v7655 = vpop.f32.mrb[0].mxu0
        %v7656 = vadd.f32 0.0, %v7655
        %v7657 = vpop.f32.mrb[0].mxu0
        %7658 = vmatprep.mubr.bf16.mxu0 0
        %7659 = vmatmul.mubr.bf16.gmra.mrb[0].mxu0 %v7539
        %v7660 = vpop.f32.mrb[0].mxu0
        %v7661 = vadd.f32 0.0, %v7660
        %v7662 = vpop.f32.mrb[0].mxu0
        %v7663 = vpop.f32.mrb[0].mxu0
        %v7664 = vadd.f32 0.0, %v7663
        %v7665 = vpop.f32.mrb[0].mxu0
        %7666 = vmatprep.mubr.bf16.mxu0 0
        %7667 = vmatmul.mubr.bf16.gmra.mrb[0].mxu0 %v7540
        %v7668 = vpop.f32.mrb[0].mxu0
        %v7669 = vadd.f32 0.0, %v7668
        %v7670 = vpop.f32.mrb[0].mxu0
        %v7671 = vpop.f32.mrb[0].mxu0
        %v7672 = vadd.f32 0.0, %v7671
        %v7673 = vpop.f32.mrb[0].mxu0
        %7674 = vmatprep.mubr.bf16.mxu0 0
        %7675 = vmatmul.mubr.bf16.gmra.mrb[0].mxu0 %v7541
        %v7676 = vpop.f32.mrb[0].mxu0
        %v7677 = vadd.f32 0.0, %v7676
        %v7678 = vpop.f32.mrb[0].mxu0
        %v7679 = vpop.f32.mrb[0].mxu0
        %v7680 = vadd.f32 0.0, %v7679
        %v7681 = vpop.f32.mrb[0].mxu0
        %7682 = vmatprep.mubr.bf16.mxu0 0
        %7683 = vmatmul.mubr.bf16.gmra.mrb[0].mxu0 %v7542
        %v7684 = vpop.f32.mrb[0].mxu0
        %v7685 = vadd.f32 0.0, %v7684
        %v7686 = vpop.f32.mrb[0].mxu0
        %v7687 = vpop.f32.mrb[0].mxu0
        %v7688 = vadd.f32 0.0, %v7687
        %v7689 = vpop.f32.mrb[0].mxu0
        %7690 = vmatprep.mubr.bf16.mxu0 0
        %7691 = vmatmul.mubr.bf16.gmra.mrb[0].mxu0 %v7543
        %v7692 = vpop.f32.mrb[0].mxu0
        %v7693 = vadd.f32 0.0, %v7692
        %v7694 = vpop.f32.mrb[0].mxu0
        %v7695 = vpop.f32.mrb[0].mxu0
        %v7696 = vadd.f32 0.0, %v7695
        %v7697 = vpop.f32.mrb[0].mxu0
        %7698 = vmatprep.mubr.bf16.mxu0 0
        %7699 = vmatmul.mubr.bf16.gmra.mrb[0].mxu0 %v7544
        %v7700 = vpop.f32.mrb[0].mxu0
        %v7701 = vadd.f32 0.0, %v7700
        %v7702 = vpop.f32.mrb[0].mxu0
        %v7703 = vpop.f32.mrb[0].mxu0
        %v7704 = vadd.f32 0.0, %v7703
        %v7705 = vpop.f32.mrb[0].mxu0
        %7706 = vmatprep.mubr.bf16.mxu0 0
        %7707 = vmatmul.mubr.bf16.gmra.mrb[0].mxu0 %v7545
        %v7708 = vpop.f32.mrb[0].mxu0
        %v7709 = vadd.f32 0.0, %v7708
        %v7710 = vpop.f32.mrb[0].mxu0
        %v7711 = vpop.f32.mrb[0].mxu0
        %v7712 = vadd.f32 0.0, %v7711
        %v7713 = vpop.f32.mrb[0].mxu0
        %7714 = vmatprep.mubr.bf16.mxu0 0
        %7715 = vmatmul.mubr.bf16.gmra.mrb[0].mxu0 %v7546
        %v7716 = vpop.f32.mrb[0].mxu0
        %v7717 = vadd.f32 0.0, %v7716
        %v7718 = vpop.f32.mrb[0].mxu0
        %v7719 = vpop.f32.mrb[0].mxu0
        %v7720 = vadd.f32 0.0, %v7719
        %v7721 = vpop.f32.mrb[0].mxu0
        %7722 = vmatprep.mubr.bf16.mxu0 0
        %7723 = vmatmul.mubr.bf16.gmra.mrb[0].mxu0 %v7547
        %v7724 = vpop.f32.mrb[0].mxu0
        %v7725 = vadd.f32 0.0, %v7724
        %v7726 = vpop.f32.mrb[0].mxu0
        %v7727 = vpop.f32.mrb[0].mxu0
        %v7728 = vadd.f32 0.0, %v7727
        %v7729 = vpop.f32.mrb[0].mxu0
        %7730 = vmatprep.mubr.bf16.mxu0 0
        %7731 = vmatmul.mubr.bf16.gmra.mrb[0].mxu0 %v7548
        %v7732 = vpop.f32.mrb[0].mxu0
        %v7733 = vadd.f32 0.0, %v7732
        %v7734 = vpop.f32.mrb[0].mxu0
        %v7735 = vpop.f32.mrb[0].mxu0
        %v7736 = vadd.f32 0.0, %v7735
        %v7737 = vpop.f32.mrb[0].mxu0
        %7738 = vmatprep.mubr.bf16.mxu0 0
        %7739 = vmatmul.mubr.bf16.gmra.mrb[0].mxu0 %v7549
        %v7740 = vpop.f32.mrb[0].mxu0
        %v7741 = vadd.f32 0.0, %v7740
        %v7742 = vpop.f32.mrb[0].mxu0
        %v7743 = vpop.f32.mrb[0].mxu0
        %v7744 = vadd.f32 0.0, %v7743
        %v7745 = vpop.f32.mrb[0].mxu0
        %7746 = vmatprep.mubr.bf16.mxu0 0
        %7747 = vmatmul.mubr.bf16.gmra.mrb[0].mxu0 %v7550
        %v7748 = vpop.f32.mrb[0].mxu0
        %v7749 = vadd.f32 0.0, %v7748
        %v7750 = vpop.f32.mrb[0].mxu0
        %v7751 = vpop.f32.mrb[0].mxu0
        %v7752 = vadd.f32 0.0, %v7751
        %v7753 = vpop.f32.mrb[0].mxu0
        %7754 = vmatprep.mubr.bf16.mxu0 0
        %7755 = vmatmul.mubr.bf16.gmra.mrb[0].mxu0 %v7551
        %v7756 = vpop.f32.mrb[0].mxu0
        %v7757 = vadd.f32 0.0, %v7756
        %v7758 = vpop.f32.mrb[0].mxu0
        %v7759 = vpop.f32.mrb[0].mxu0
        %v7760 = vadd.f32 0.0, %v7759
        %v7761 = vpop.f32.mrb[0].mxu0
        %7762 = vmatprep.mubr.bf16.mxu0 0
        %7763 = vmatmul.mubr.bf16.gmra.mrb[0].mxu0 %v7552
        %v7764 = vpop.f32.mrb[0].mxu0
        %v7765 = vadd.f32 0.0, %v7764
        %v7766 = vpop.f32.mrb[0].mxu0
        %v7767 = vpop.f32.mrb[0].mxu0
        %v7768 = vadd.f32 0.0, %v7767
        %v7769 = vpop.f32.mrb[0].mxu0
        %7770 = vmatprep.mubr.bf16.mxu0 0
        %7771 = vmatmul.mubr.bf16.gmra.mrb[0].mxu0 %v7553
        %v7772 = vpop.f32.mrb[0].mxu0
        %v7773 = vadd.f32 0.0, %v7772
        %v7774 = vpop.f32.mrb[0].mxu0
        %v7775 = vpop.f32.mrb[0].mxu0
        %v7776 = vadd.f32 0.0, %v7775
        %v7777 = vpop.f32.mrb[0].mxu0
        %7778 = vdwg.mxu0
        %v7811 = vunpack.c.l.b16 %v7041
        %v7812 = vunpack.c.l.b16 %v7042
        %v7813 = vunpack.c.l.b16 %v7043
        %v7814 = vunpack.c.l.b16 %v7044
        %v7815 = vunpack.c.l.b16 %v7045
        %v7816 = vunpack.c.l.b16 %v7046
        %v7817 = vunpack.c.l.b16 %v7047
        %v7818 = vunpack.c.l.b16 %v7048
        %v7819 = vunpack.c.l.b16 %v7049
        %v7820 = vunpack.c.l.b16 %v7050
        %v7821 = vunpack.c.l.b16 %v7051
        %v7822 = vunpack.c.l.b16 %v7052
        %v7823 = vunpack.c.l.b16 %v7053
        %v7824 = vunpack.c.l.b16 %v7054
        %v7825 = vunpack.c.l.b16 %v7055
        %v7826 = vunpack.c.l.b16 %v7056
        %v7827 = vunpack.c.l.b16 %v7057
        %v7828 = vunpack.c.l.b16 %v7058
        %v7829 = vunpack.c.l.b16 %v7059
        %v7830 = vunpack.c.l.b16 %v7060
        %v7831 = vunpack.c.l.b16 %v7061
        %v7832 = vunpack.c.l.b16 %v7062
        %v7833 = vunpack.c.l.b16 %v7063
        %v7834 = vunpack.c.l.b16 %v7064
        %v7835 = vunpack.c.l.b16 %v7065
        %v7836 = vunpack.c.l.b16 %v7066
        %v7837 = vunpack.c.l.b16 %v7067
        %v7838 = vunpack.c.l.b16 %v7068
        %v7839 = vunpack.c.l.b16 %v7069
        %v7840 = vunpack.c.l.b16 %v7070
        %v7841 = vunpack.c.l.b16 %v7071
        %v7842 = vunpack.c.l.b16 %v7072
        %v7843 = vpack.c.b16 %v7812, %v7811
        %v7844 = vpack.c.b16 %v7814, %v7813
        %v7845 = vpack.c.b16 %v7816, %v7815
        %v7846 = vpack.c.b16 %v7818, %v7817
        %v7847 = vpack.c.b16 %v7820, %v7819
        %v7848 = vpack.c.b16 %v7822, %v7821
        %v7849 = vpack.c.b16 %v7824, %v7823
        %v7850 = vpack.c.b16 %v7826, %v7825
        %v7851 = vpack.c.b16 %v7828, %v7827
        %v7852 = vpack.c.b16 %v7830, %v7829
        %v7853 = vpack.c.b16 %v7832, %v7831
        %v7854 = vpack.c.b16 %v7834, %v7833
        %v7855 = vpack.c.b16 %v7836, %v7835
        %v7856 = vpack.c.b16 %v7838, %v7837
        %v7857 = vpack.c.b16 %v7840, %v7839
        %v7858 = vpack.c.b16 %v7842, %v7841
        %v7891 = vunpack.c.l.b16 %v7073
        %v7892 = vunpack.c.l.b16 %v7074
        %v7893 = vunpack.c.l.b16 %v7075
        %v7894 = vunpack.c.l.b16 %v7076
        %v7895 = vunpack.c.l.b16 %v7077
        %v7896 = vunpack.c.l.b16 %v7078
        %v7897 = vunpack.c.l.b16 %v7079
        %v7898 = vunpack.c.l.b16 %v7080
        %v7899 = vunpack.c.l.b16 %v7081
        %v7900 = vunpack.c.l.b16 %v7082
        %v7901 = vunpack.c.l.b16 %v7083
        %v7902 = vunpack.c.l.b16 %v7084
        %v7903 = vunpack.c.l.b16 %v7085
        %v7904 = vunpack.c.l.b16 %v7086
        %v7905 = vunpack.c.l.b16 %v7087
        %v7906 = vunpack.c.l.b16 %v7088
        %v7907 = vpack.c.b16 %v7892, %v7891
        %v7908 = vpack.c.b16 %v7894, %v7893
        %v7909 = vpack.c.b16 %v7896, %v7895
        %v7910 = vpack.c.b16 %v7898, %v7897
        %v7911 = vpack.c.b16 %v7900, %v7899
        %v7912 = vpack.c.b16 %v7902, %v7901
        %v7913 = vpack.c.b16 %v7904, %v7903
        %v7914 = vpack.c.b16 %v7906, %v7905
        %7923 = vmatprep.subr.bf16.mxu0 0
        %7924 = vmatpush1.bf16.msra.mxu0 %v7907
        %7925 = vmatprep.subr.bf16.mxu0 0
        %7926 = vmatpush1.bf16.msra.mxu0 %v7908
        %7927 = vmatprep.subr.bf16.mxu0 0
        %7928 = vmatpush1.bf16.msra.mxu0 %v7909
        %7929 = vmatprep.subr.bf16.mxu0 0
        %7930 = vmatpush1.bf16.msra.mxu0 %v7910
        %7931 = vmatprep.subr.bf16.mxu0 0
        %7932 = vmatpush1.bf16.msra.mxu0 %v7911
        %7933 = vmatprep.subr.bf16.mxu0 0
        %7934 = vmatpush1.bf16.msra.mxu0 %v7912
        %7935 = vmatprep.subr.bf16.mxu0 0
        %7936 = vmatpush1.bf16.msra.mxu0 %v7913
        %7937 = vmatprep.subr.bf16.mxu0 0
        %7938 = vmatpush1.bf16.msra.mxu0 %v7914
        %7939 = vmatprep.subr.bf16.mxu0 0
        %7940 = vmatpush1.bf16.msra.mxu0 0
        %7941 = vmatprep.subr.bf16.mxu0 0
        %7942 = vmatpush1.bf16.msra.mxu0 0
        %7943 = vmatprep.subr.bf16.mxu0 0
        %7944 = vmatpush1.bf16.msra.mxu0 0
        %7945 = vmatprep.subr.bf16.mxu0 0
        %7946 = vmatpush1.bf16.msra.mxu0 0
        %7947 = vmatprep.subr.bf16.mxu0 0
        %7948 = vmatpush1.bf16.msra.mxu0 0
        %7949 = vmatprep.subr.bf16.mxu0 0
        %7950 = vmatpush1.bf16.msra.mxu0 0
        %7951 = vmatprep.subr.bf16.mxu0 0
        %7952 = vmatpush1.bf16.msra.mxu0 0
        %7953 = vmatprep.subr.bf16.mxu0 0
        %7954 = vmatpush1.bf16.msra.mxu0 0
        %7955 = vmatprep.mubr.bf16.mxu0 0
        %7956 = vmatmul.mubr.bf16.gmra.mrb[0].mxu0 %v7843
        %v7957 = vpop.f32.mrb[0].mxu0
        %v7958 = vadd.f32 %v7653, %v7957
        %v7959 = vpop.f32.mrb[0].mxu0
        %v7960 = vpop.f32.mrb[0].mxu0
        %v7961 = vadd.f32 %v7656, %v7960
        %v7962 = vpop.f32.mrb[0].mxu0
        %7963 = vmatprep.mubr.bf16.mxu0 0
        %7964 = vmatmul.mubr.bf16.gmra.mrb[0].mxu0 %v7844
        %v7965 = vpop.f32.mrb[0].mxu0
        %v7966 = vadd.f32 %v7661, %v7965
        %v7967 = vpop.f32.mrb[0].mxu0
        %v7968 = vpop.f32.mrb[0].mxu0
        %v7969 = vadd.f32 %v7664, %v7968
        %v7970 = vpop.f32.mrb[0].mxu0
        %7971 = vmatprep.mubr.bf16.mxu0 0
        %7972 = vmatmul.mubr.bf16.gmra.mrb[0].mxu0 %v7845
        %v7973 = vpop.f32.mrb[0].mxu0
        %v7974 = vadd.f32 %v7669, %v7973
        %v7975 = vpop.f32.mrb[0].mxu0
        %v7976 = vpop.f32.mrb[0].mxu0
        %v7977 = vadd.f32 %v7672, %v7976
        %v7978 = vpop.f32.mrb[0].mxu0
        %7979 = vmatprep.mubr.bf16.mxu0 0
        %7980 = vmatmul.mubr.bf16.gmra.mrb[0].mxu0 %v7846
        %v7981 = vpop.f32.mrb[0].mxu0
        %v7982 = vadd.f32 %v7677, %v7981
        %v7983 = vpop.f32.mrb[0].mxu0
        %v7984 = vpop.f32.mrb[0].mxu0
        %v7985 = vadd.f32 %v7680, %v7984
        %v7986 = vpop.f32.mrb[0].mxu0
        %7987 = vmatprep.mubr.bf16.mxu0 0
        %7988 = vmatmul.mubr.bf16.gmra.mrb[0].mxu0 %v7847
        %v7989 = vpop.f32.mrb[0].mxu0
        %v7990 = vadd.f32 %v7685, %v7989
        %v7991 = vpop.f32.mrb[0].mxu0
        %v7992 = vpop.f32.mrb[0].mxu0
        %v7993 = vadd.f32 %v7688, %v7992
        %v7994 = vpop.f32.mrb[0].mxu0
        %7995 = vmatprep.mubr.bf16.mxu0 0
        %7996 = vmatmul.mubr.bf16.gmra.mrb[0].mxu0 %v7848
        %v7997 = vpop.f32.mrb[0].mxu0
        %v7998 = vadd.f32 %v7693, %v7997
        %v7999 = vpop.f32.mrb[0].mxu0
        %v8000 = vpop.f32.mrb[0].mxu0
        %v8001 = vadd.f32 %v7696, %v8000
        %v8002 = vpop.f32.mrb[0].mxu0
        %8003 = vmatprep.mubr.bf16.mxu0 0
        %8004 = vmatmul.mubr.bf16.gmra.mrb[0].mxu0 %v7849
        %v8005 = vpop.f32.mrb[0].mxu0
        %v8006 = vadd.f32 %v7701, %v8005
        %v8007 = vpop.f32.mrb[0].mxu0
        %v8008 = vpop.f32.mrb[0].mxu0
        %v8009 = vadd.f32 %v7704, %v8008
        %v8010 = vpop.f32.mrb[0].mxu0
        %8011 = vmatprep.mubr.bf16.mxu0 0
        %8012 = vmatmul.mubr.bf16.gmra.mrb[0].mxu0 %v7850
        %v8013 = vpop.f32.mrb[0].mxu0
        %v8014 = vadd.f32 %v7709, %v8013
        %v8015 = vpop.f32.mrb[0].mxu0
        %v8016 = vpop.f32.mrb[0].mxu0
        %v8017 = vadd.f32 %v7712, %v8016
        %v8018 = vpop.f32.mrb[0].mxu0
        %8019 = vmatprep.mubr.bf16.mxu0 0
        %8020 = vmatmul.mubr.bf16.gmra.mrb[0].mxu0 %v7851
        %v8021 = vpop.f32.mrb[0].mxu0
        %v8022 = vadd.f32 %v7717, %v8021
        %v8023 = vpop.f32.mrb[0].mxu0
        %v8024 = vpop.f32.mrb[0].mxu0
        %v8025 = vadd.f32 %v7720, %v8024
        %v8026 = vpop.f32.mrb[0].mxu0
        %8027 = vmatprep.mubr.bf16.mxu0 0
        %8028 = vmatmul.mubr.bf16.gmra.mrb[0].mxu0 %v7852
        %v8029 = vpop.f32.mrb[0].mxu0
        %v8030 = vadd.f32 %v7725, %v8029
        %v8031 = vpop.f32.mrb[0].mxu0
        %v8032 = vpop.f32.mrb[0].mxu0
        %v8033 = vadd.f32 %v7728, %v8032
        %v8034 = vpop.f32.mrb[0].mxu0
        %8035 = vmatprep.mubr.bf16.mxu0 0
        %8036 = vmatmul.mubr.bf16.gmra.mrb[0].mxu0 %v7853
        %v8037 = vpop.f32.mrb[0].mxu0
        %v8038 = vadd.f32 %v7733, %v8037
        %v8039 = vpop.f32.mrb[0].mxu0
        %v8040 = vpop.f32.mrb[0].mxu0
        %v8041 = vadd.f32 %v7736, %v8040
        %v8042 = vpop.f32.mrb[0].mxu0
        %8043 = vmatprep.mubr.bf16.mxu0 0
        %8044 = vmatmul.mubr.bf16.gmra.mrb[0].mxu0 %v7854
        %v8045 = vpop.f32.mrb[0].mxu0
        %v8046 = vadd.f32 %v7741, %v8045
        %v8047 = vpop.f32.mrb[0].mxu0
        %v8048 = vpop.f32.mrb[0].mxu0
        %v8049 = vadd.f32 %v7744, %v8048
        %v8050 = vpop.f32.mrb[0].mxu0
        %8051 = vmatprep.mubr.bf16.mxu0 0
        %8052 = vmatmul.mubr.bf16.gmra.mrb[0].mxu0 %v7855
        %v8053 = vpop.f32.mrb[0].mxu0
        %v8054 = vadd.f32 %v7749, %v8053
        %v8055 = vpop.f32.mrb[0].mxu0
        %v8056 = vpop.f32.mrb[0].mxu0
        %v8057 = vadd.f32 %v7752, %v8056
        %v8058 = vpop.f32.mrb[0].mxu0
        %8059 = vmatprep.mubr.bf16.mxu0 0
        %8060 = vmatmul.mubr.bf16.gmra.mrb[0].mxu0 %v7856
        %v8061 = vpop.f32.mrb[0].mxu0
        %v8062 = vadd.f32 %v7757, %v8061
        %v8063 = vpop.f32.mrb[0].mxu0
        %v8064 = vpop.f32.mrb[0].mxu0
        %v8065 = vadd.f32 %v7760, %v8064
        %v8066 = vpop.f32.mrb[0].mxu0
        %8067 = vmatprep.mubr.bf16.mxu0 0
        %8068 = vmatmul.mubr.bf16.gmra.mrb[0].mxu0 %v7857
        %v8069 = vpop.f32.mrb[0].mxu0
        %v8070 = vadd.f32 %v7765, %v8069
        %v8071 = vpop.f32.mrb[0].mxu0
        %v8072 = vpop.f32.mrb[0].mxu0
        %v8073 = vadd.f32 %v7768, %v8072
        %v8074 = vpop.f32.mrb[0].mxu0
        %8075 = vmatprep.mubr.bf16.mxu0 0
        %8076 = vmatmul.mubr.bf16.gmra.mrb[0].mxu0 %v7858
        %v8077 = vpop.f32.mrb[0].mxu0
        %v8078 = vadd.f32 %v7773, %v8077
        %v8079 = vpop.f32.mrb[0].mxu0
        %v8080 = vpop.f32.mrb[0].mxu0
        %v8081 = vadd.f32 %v7776, %v8080
        %v8082 = vpop.f32.mrb[0].mxu0
        %8083 = vdwg.mxu0
        %v8084 = vld [vmem:[#allocation3] sm:$0xe]
        %v8085 = vld [vmem:[#allocation3 + $0xc] sm:$0xe]
        %v8086 = vld [vmem:[#allocation3 + $0x18] sm:$0xe]
        %v8087 = vld [vmem:[#allocation3 + $0x24] sm:$0xe]
        %v8088 = vld [vmem:[#allocation3 + $0x30] sm:$0xe]
        %v8089 = vld [vmem:[#allocation3 + $0x3c] sm:$0xe]
        %v8090 = vld [vmem:[#allocation3 + $0x48] sm:$0xe]
        %v8091 = vld [vmem:[#allocation3 + $0x54] sm:$0xe]
        %v8092 = vld [vmem:[#allocation3 + $0x60] sm:$0xe]
        %v8093 = vld [vmem:[#allocation3 + $0x6c] sm:$0xe]
        %v8094 = vld [vmem:[#allocation3 + $0x78] sm:$0xe]
        %v8095 = vld [vmem:[#allocation3 + $0x84] sm:$0xe]
        %v8096 = vld [vmem:[#allocation3 + $0x90] sm:$0xe]
        %v8097 = vld [vmem:[#allocation3 + $0x9c] sm:$0xe]
        %v8098 = vld [vmem:[#allocation3 + $0xa8] sm:$0xe]
        %v8099 = vld [vmem:[#allocation3 + $0xb4] sm:$0xe]
        %v8132 = vrot.slane %v8084, 5
        %v8133 = vrot.slane %v8132, 4
        %v8134 = vrot.slane %v7042, 5
        %v8135 = vsel %vm2690, %v8133, %v8134
        %v8136 = vrot.slane %v8134, 4
        %v8137 = vrot.slane %v7089, 5
        %v8138 = vsel %vm2690, %v8136, %v8137
        %v8139 = vrot.slane %v8085, 5
        %v8140 = vrot.slane %v8139, 4
        %v8141 = vrot.slane %v7044, 5
        %v8142 = vsel %vm2690, %v8140, %v8141
        %v8143 = vrot.slane %v8141, 4
        %v8144 = vrot.slane %v7090, 5
        %v8145 = vsel %vm2690, %v8143, %v8144
        %v8146 = vrot.slane %v8086, 5
        %v8147 = vrot.slane %v8146, 4
        %v8148 = vrot.slane %v7046, 5
        %v8149 = vsel %vm2690, %v8147, %v8148
        %v8150 = vrot.slane %v8148, 4
        %v8151 = vrot.slane %v7091, 5
        %v8152 = vsel %vm2690, %v8150, %v8151
        %v8153 = vrot.slane %v8087, 5
        %v8154 = vrot.slane %v8153, 4
        %v8155 = vrot.slane %v7048, 5
        %v8156 = vsel %vm2690, %v8154, %v8155
        %v8157 = vrot.slane %v8155, 4
        %v8158 = vrot.slane %v7092, 5
        %v8159 = vsel %vm2690, %v8157, %v8158
        %v8160 = vrot.slane %v8088, 5
        %v8161 = vrot.slane %v8160, 4
        %v8162 = vrot.slane %v7050, 5
        %v8163 = vsel %vm2690, %v8161, %v8162
        %v8164 = vrot.slane %v8162, 4
        %v8165 = vrot.slane %v7093, 5
        %v8166 = vsel %vm2690, %v8164, %v8165
        %v8167 = vrot.slane %v8089, 5
        %v8168 = vrot.slane %v8167, 4
        %v8169 = vrot.slane %v7052, 5
        %v8170 = vsel %vm2690, %v8168, %v8169
        %v8171 = vrot.slane %v8169, 4
        %v8172 = vrot.slane %v7094, 5
        %v8173 = vsel %vm2690, %v8171, %v8172
        %v8174 = vrot.slane %v8090, 5
        %v8175 = vrot.slane %v8174, 4
        %v8176 = vrot.slane %v7054, 5
        %v8177 = vsel %vm2690, %v8175, %v8176
        %v8178 = vrot.slane %v8176, 4
        %v8179 = vrot.slane %v7095, 5
        %v8180 = vsel %vm2690, %v8178, %v8179
        %v8181 = vrot.slane %v8091, 5
        %v8182 = vrot.slane %v8181, 4
        %v8183 = vrot.slane %v7056, 5
        %v8184 = vsel %vm2690, %v8182, %v8183
        %v8185 = vrot.slane %v8183, 4
        %v8186 = vrot.slane %v7096, 5
        %v8187 = vsel %vm2690, %v8185, %v8186
        %v8188 = vrot.slane %v8092, 5
        %v8189 = vrot.slane %v8188, 4
        %v8190 = vrot.slane %v7058, 5
        %v8191 = vsel %vm2690, %v8189, %v8190
        %v8192 = vrot.slane %v8190, 4
        %v8193 = vrot.slane %v7097, 5
        %v8194 = vsel %vm2690, %v8192, %v8193
        %v8195 = vrot.slane %v8093, 5
        %v8196 = vrot.slane %v8195, 4
        %v8197 = vrot.slane %v7060, 5
        %v8198 = vsel %vm2690, %v8196, %v8197
        %v8199 = vrot.slane %v8197, 4
        %v8200 = vrot.slane %v7098, 5
        %v8201 = vsel %vm2690, %v8199, %v8200
        %v8202 = vrot.slane %v8094, 5
        %v8203 = vrot.slane %v8202, 4
        %v8204 = vrot.slane %v7062, 5
        %v8205 = vsel %vm2690, %v8203, %v8204
        %v8206 = vrot.slane %v8204, 4
        %v8207 = vrot.slane %v7099, 5
        %v8208 = vsel %vm2690, %v8206, %v8207
        %v8209 = vrot.slane %v8095, 5
        %v8210 = vrot.slane %v8209, 4
        %v8211 = vrot.slane %v7064, 5
        %v8212 = vsel %vm2690, %v8210, %v8211
        %v8213 = vrot.slane %v8211, 4
        %v8214 = vrot.slane %v7100, 5
        %v8215 = vsel %vm2690, %v8213, %v8214
        %v8216 = vrot.slane %v8096, 5
        %v8217 = vrot.slane %v8216, 4
        %v8218 = vrot.slane %v7066, 5
        %v8219 = vsel %vm2690, %v8217, %v8218
        %v8220 = vrot.slane %v8218, 4
        %v8221 = vrot.slane %v7101, 5
        %v8222 = vsel %vm2690, %v8220, %v8221
        %v8223 = vrot.slane %v8097, 5
        %v8224 = vrot.slane %v8223, 4
        %v8225 = vrot.slane %v7068, 5
        %v8226 = vsel %vm2690, %v8224, %v8225
        %v8227 = vrot.slane %v8225, 4
        %v8228 = vrot.slane %v7102, 5
        %v8229 = vsel %vm2690, %v8227, %v8228
        %v8230 = vrot.slane %v8098, 5
        %v8231 = vrot.slane %v8230, 4
        %v8232 = vrot.slane %v7070, 5
        %v8233 = vsel %vm2690, %v8231, %v8232
        %v8234 = vrot.slane %v8232, 4
        %v8235 = vrot.slane %v7103, 5
        %v8236 = vsel %vm2690, %v8234, %v8235
        %v8237 = vrot.slane %v8099, 5
        %v8238 = vrot.slane %v8237, 4
        %v8239 = vrot.slane %v7072, 5
        %v8240 = vsel %vm2690, %v8238, %v8239
        %v8241 = vrot.slane %v8239, 4
        %v8242 = vrot.slane %v7104, 5
        %v8243 = vsel %vm2690, %v8241, %v8242
        %s8244 = scalar_lea.vmem [#allocation15], 128
        %v8245 = vld [vmem:[%s8244] sm:$0xf]
        %v8246 = vld [vmem:[%s8244 + $0x4] sm:$0xf]
        %v8247 = vld [vmem:[%s8244 + $0x8] sm:$0xf]
        %v8248 = vld [vmem:[%s8244 + $0xc] sm:$0xf]
        %v8249 = vld [vmem:[%s8244 + $0x10] sm:$0xf]
        %v8250 = vld [vmem:[%s8244 + $0x14] sm:$0xf]
        %v8251 = vld [vmem:[%s8244 + $0x18] sm:$0xf]
        %v8252 = vld [vmem:[%s8244 + $0x1c] sm:$0xf]
        %v8253 = vld [vmem:[%s8244 + $0x20] sm:$0xf]
        %v8254 = vld [vmem:[%s8244 + $0x24] sm:$0xf]
        %v8255 = vld [vmem:[%s8244 + $0x28] sm:$0xf]
        %v8256 = vld [vmem:[%s8244 + $0x2c] sm:$0xf]
        %v8257 = vld [vmem:[%s8244 + $0x30] sm:$0xf]
        %v8258 = vld [vmem:[%s8244 + $0x34] sm:$0xf]
        %v8259 = vld [vmem:[%s8244 + $0x38] sm:$0xf]
        %v8260 = vld [vmem:[%s8244 + $0x3c] sm:$0xf]
        %v8261 = vunpack.c.l.b16 %v8135
        %v8262 = vunpack.c.l.b16 %v8138
        %v8263 = vunpack.c.l.b16 %v8142
        %v8264 = vunpack.c.l.b16 %v8145
        %v8265 = vunpack.c.l.b16 %v8149
        %v8266 = vunpack.c.l.b16 %v8152
        %v8267 = vunpack.c.l.b16 %v8156
        %v8268 = vunpack.c.l.b16 %v8159
        %v8269 = vunpack.c.l.b16 %v8163
        %v8270 = vunpack.c.l.b16 %v8166
        %v8271 = vunpack.c.l.b16 %v8170
        %v8272 = vunpack.c.l.b16 %v8173
        %v8273 = vunpack.c.l.b16 %v8177
        %v8274 = vunpack.c.l.b16 %v8180
        %v8275 = vunpack.c.l.b16 %v8184
        %v8276 = vunpack.c.l.b16 %v8187
        %v8277 = vunpack.c.l.b16 %v8191
        %v8278 = vunpack.c.l.b16 %v8194
        %v8279 = vunpack.c.l.b16 %v8198
        %v8280 = vunpack.c.l.b16 %v8201
        %v8281 = vunpack.c.l.b16 %v8205
        %v8282 = vunpack.c.l.b16 %v8208
        %v8283 = vunpack.c.l.b16 %v8212
        %v8284 = vunpack.c.l.b16 %v8215
        %v8285 = vunpack.c.l.b16 %v8219
        %v8286 = vunpack.c.l.b16 %v8222
        %v8287 = vunpack.c.l.b16 %v8226
        %v8288 = vunpack.c.l.b16 %v8229
        %v8289 = vunpack.c.l.b16 %v8233
        %v8290 = vunpack.c.l.b16 %v8236
        %v8291 = vunpack.c.l.b16 %v8240
        %v8292 = vunpack.c.l.b16 %v8243
        %v8293 = vpack.c.b16 %v8262, %v8261
        %v8294 = vpack.c.b16 %v8264, %v8263
        %v8295 = vpack.c.b16 %v8266, %v8265
        %v8296 = vpack.c.b16 %v8268, %v8267
        %v8297 = vpack.c.b16 %v8270, %v8269
        %v8298 = vpack.c.b16 %v8272, %v8271
        %v8299 = vpack.c.b16 %v8274, %v8273
        %v8300 = vpack.c.b16 %v8276, %v8275
        %v8301 = vpack.c.b16 %v8278, %v8277
        %v8302 = vpack.c.b16 %v8280, %v8279
        %v8303 = vpack.c.b16 %v8282, %v8281
        %v8304 = vpack.c.b16 %v8284, %v8283
        %v8305 = vpack.c.b16 %v8286, %v8285
        %v8306 = vpack.c.b16 %v8288, %v8287
        %v8307 = vpack.c.b16 %v8290, %v8289
        %v8308 = vpack.c.b16 %v8292, %v8291
        %v8341 = vunpack.c.l.b16 %v8245
        %v8342 = vunpack.c.l.b16 %v8246
        %v8343 = vunpack.c.l.b16 %v8247
        %v8344 = vunpack.c.l.b16 %v8248
        %v8345 = vunpack.c.l.b16 %v8249
        %v8346 = vunpack.c.l.b16 %v8250
        %v8347 = vunpack.c.l.b16 %v8251
        %v8348 = vunpack.c.l.b16 %v8252
        %v8349 = vunpack.c.l.b16 %v8253
        %v8350 = vunpack.c.l.b16 %v8254
        %v8351 = vunpack.c.l.b16 %v8255
        %v8352 = vunpack.c.l.b16 %v8256
        %v8353 = vunpack.c.l.b16 %v8257
        %v8354 = vunpack.c.l.b16 %v8258
        %v8355 = vunpack.c.l.b16 %v8259
        %v8356 = vunpack.c.l.b16 %v8260
        %v8357 = vpack.c.b16 %v8342, %v8341
        %v8358 = vpack.c.b16 %v8344, %v8343
        %v8359 = vpack.c.b16 %v8346, %v8345
        %v8360 = vpack.c.b16 %v8348, %v8347
        %v8361 = vpack.c.b16 %v8350, %v8349
        %v8362 = vpack.c.b16 %v8352, %v8351
        %v8363 = vpack.c.b16 %v8354, %v8353
        %v8364 = vpack.c.b16 %v8356, %v8355
        %8373 = vmatprep.subr.bf16.mxu0 0
        %8374 = vmatpush1.bf16.msra.mxu0 %v8357
        %8375 = vmatprep.subr.bf16.mxu0 0
        %8376 = vmatpush1.bf16.msra.mxu0 %v8358
        %8377 = vmatprep.subr.bf16.mxu0 0
        %8378 = vmatpush1.bf16.msra.mxu0 %v8359
        %8379 = vmatprep.subr.bf16.mxu0 0
        %8380 = vmatpush1.bf16.msra.mxu0 %v8360
        %8381 = vmatprep.subr.bf16.mxu0 0
        %8382 = vmatpush1.bf16.msra.mxu0 %v8361
        %8383 = vmatprep.subr.bf16.mxu0 0
        %8384 = vmatpush1.bf16.msra.mxu0 %v8362
        %8385 = vmatprep.subr.bf16.mxu0 0
        %8386 = vmatpush1.bf16.msra.mxu0 %v8363
        %8387 = vmatprep.subr.bf16.mxu0 0
        %8388 = vmatpush1.bf16.msra.mxu0 %v8364
        %8389 = vmatprep.subr.bf16.mxu0 0
        %8390 = vmatpush1.bf16.msra.mxu0 0
        %8391 = vmatprep.subr.bf16.mxu0 0
        %8392 = vmatpush1.bf16.msra.mxu0 0
        %8393 = vmatprep.subr.bf16.mxu0 0
        %8394 = vmatpush1.bf16.msra.mxu0 0
        %8395 = vmatprep.subr.bf16.mxu0 0
        %8396 = vmatpush1.bf16.msra.mxu0 0
        %8397 = vmatprep.subr.bf16.mxu0 0
        %8398 = vmatpush1.bf16.msra.mxu0 0
        %8399 = vmatprep.subr.bf16.mxu0 0
        %8400 = vmatpush1.bf16.msra.mxu0 0
        %8401 = vmatprep.subr.bf16.mxu0 0
        %8402 = vmatpush1.bf16.msra.mxu0 0
        %8403 = vmatprep.subr.bf16.mxu0 0
        %8404 = vmatpush1.bf16.msra.mxu0 0
        %8405 = vmatprep.mubr.bf16.mxu0 0
        %8406 = vmatmul.mubr.bf16.gmra.mrb[0].mxu0 %v8293
        %v8407 = vpop.f32.mrb[0].mxu0
        %v8408 = vadd.f32 0.0, %v8407
        %v8409 = vpop.f32.mrb[0].mxu0
        %v8410 = vpop.f32.mrb[0].mxu0
        %v8411 = vadd.f32 0.0, %v8410
        %v8412 = vpop.f32.mrb[0].mxu0
        %8413 = vmatprep.mubr.bf16.mxu0 0
        %8414 = vmatmul.mubr.bf16.gmra.mrb[0].mxu0 %v8294
        %v8415 = vpop.f32.mrb[0].mxu0
        %v8416 = vadd.f32 0.0, %v8415
        %v8417 = vpop.f32.mrb[0].mxu0
        %v8418 = vpop.f32.mrb[0].mxu0
        %v8419 = vadd.f32 0.0, %v8418
        %v8420 = vpop.f32.mrb[0].mxu0
        %8421 = vmatprep.mubr.bf16.mxu0 0
        %8422 = vmatmul.mubr.bf16.gmra.mrb[0].mxu0 %v8295
        %v8423 = vpop.f32.mrb[0].mxu0
        %v8424 = vadd.f32 0.0, %v8423
        %v8425 = vpop.f32.mrb[0].mxu0
        %v8426 = vpop.f32.mrb[0].mxu0
        %v8427 = vadd.f32 0.0, %v8426
        %v8428 = vpop.f32.mrb[0].mxu0
        %8429 = vmatprep.mubr.bf16.mxu0 0
        %8430 = vmatmul.mubr.bf16.gmra.mrb[0].mxu0 %v8296
        %v8431 = vpop.f32.mrb[0].mxu0
        %v8432 = vadd.f32 0.0, %v8431
        %v8433 = vpop.f32.mrb[0].mxu0
        %v8434 = vpop.f32.mrb[0].mxu0
        %v8435 = vadd.f32 0.0, %v8434
        %v8436 = vpop.f32.mrb[0].mxu0
        %8437 = vmatprep.mubr.bf16.mxu0 0
        %8438 = vmatmul.mubr.bf16.gmra.mrb[0].mxu0 %v8297
        %v8439 = vpop.f32.mrb[0].mxu0
        %v8440 = vadd.f32 0.0, %v8439
        %v8441 = vpop.f32.mrb[0].mxu0
        %v8442 = vpop.f32.mrb[0].mxu0
        %v8443 = vadd.f32 0.0, %v8442
        %v8444 = vpop.f32.mrb[0].mxu0
        %8445 = vmatprep.mubr.bf16.mxu0 0
        %8446 = vmatmul.mubr.bf16.gmra.mrb[0].mxu0 %v8298
        %v8447 = vpop.f32.mrb[0].mxu0
        %v8448 = vadd.f32 0.0, %v8447
        %v8449 = vpop.f32.mrb[0].mxu0
        %v8450 = vpop.f32.mrb[0].mxu0
        %v8451 = vadd.f32 0.0, %v8450
        %v8452 = vpop.f32.mrb[0].mxu0
        %8453 = vmatprep.mubr.bf16.mxu0 0
        %8454 = vmatmul.mubr.bf16.gmra.mrb[0].mxu0 %v8299
        %v8455 = vpop.f32.mrb[0].mxu0
        %v8456 = vadd.f32 0.0, %v8455
        %v8457 = vpop.f32.mrb[0].mxu0
        %v8458 = vpop.f32.mrb[0].mxu0
        %v8459 = vadd.f32 0.0, %v8458
        %v8460 = vpop.f32.mrb[0].mxu0
        %8461 = vmatprep.mubr.bf16.mxu0 0
        %8462 = vmatmul.mubr.bf16.gmra.mrb[0].mxu0 %v8300
        %v8463 = vpop.f32.mrb[0].mxu0
        %v8464 = vadd.f32 0.0, %v8463
        %v8465 = vpop.f32.mrb[0].mxu0
        %v8466 = vpop.f32.mrb[0].mxu0
        %v8467 = vadd.f32 0.0, %v8466
        %v8468 = vpop.f32.mrb[0].mxu0
        %8469 = vmatprep.mubr.bf16.mxu0 0
        %8470 = vmatmul.mubr.bf16.gmra.mrb[0].mxu0 %v8301
        %v8471 = vpop.f32.mrb[0].mxu0
        %v8472 = vadd.f32 0.0, %v8471
        %v8473 = vpop.f32.mrb[0].mxu0
        %v8474 = vpop.f32.mrb[0].mxu0
        %v8475 = vadd.f32 0.0, %v8474
        %v8476 = vpop.f32.mrb[0].mxu0
        %8477 = vmatprep.mubr.bf16.mxu0 0
        %8478 = vmatmul.mubr.bf16.gmra.mrb[0].mxu0 %v8302
        %v8479 = vpop.f32.mrb[0].mxu0
        %v8480 = vadd.f32 0.0, %v8479
        %v8481 = vpop.f32.mrb[0].mxu0
        %v8482 = vpop.f32.mrb[0].mxu0
        %v8483 = vadd.f32 0.0, %v8482
        %v8484 = vpop.f32.mrb[0].mxu0
        %8485 = vmatprep.mubr.bf16.mxu0 0
        %8486 = vmatmul.mubr.bf16.gmra.mrb[0].mxu0 %v8303
        %v8487 = vpop.f32.mrb[0].mxu0
        %v8488 = vadd.f32 0.0, %v8487
        %v8489 = vpop.f32.mrb[0].mxu0
        %v8490 = vpop.f32.mrb[0].mxu0
        %v8491 = vadd.f32 0.0, %v8490
        %v8492 = vpop.f32.mrb[0].mxu0
        %8493 = vmatprep.mubr.bf16.mxu0 0
        %8494 = vmatmul.mubr.bf16.gmra.mrb[0].mxu0 %v8304
        %v8495 = vpop.f32.mrb[0].mxu0
        %v8496 = vadd.f32 0.0, %v8495
        %v8497 = vpop.f32.mrb[0].mxu0
        %v8498 = vpop.f32.mrb[0].mxu0
        %v8499 = vadd.f32 0.0, %v8498
        %v8500 = vpop.f32.mrb[0].mxu0
        %8501 = vmatprep.mubr.bf16.mxu0 0
        %8502 = vmatmul.mubr.bf16.gmra.mrb[0].mxu0 %v8305
        %v8503 = vpop.f32.mrb[0].mxu0
        %v8504 = vadd.f32 0.0, %v8503
        %v8505 = vpop.f32.mrb[0].mxu0
        %v8506 = vpop.f32.mrb[0].mxu0
        %v8507 = vadd.f32 0.0, %v8506
        %v8508 = vpop.f32.mrb[0].mxu0
        %8509 = vmatprep.mubr.bf16.mxu0 0
        %8510 = vmatmul.mubr.bf16.gmra.mrb[0].mxu0 %v8306
        %v8511 = vpop.f32.mrb[0].mxu0
        %v8512 = vadd.f32 0.0, %v8511
        %v8513 = vpop.f32.mrb[0].mxu0
        %v8514 = vpop.f32.mrb[0].mxu0
        %v8515 = vadd.f32 0.0, %v8514
        %v8516 = vpop.f32.mrb[0].mxu0
        %8517 = vmatprep.mubr.bf16.mxu0 0
        %8518 = vmatmul.mubr.bf16.gmra.mrb[0].mxu0 %v8307
        %v8519 = vpop.f32.mrb[0].mxu0
        %v8520 = vadd.f32 0.0, %v8519
        %v8521 = vpop.f32.mrb[0].mxu0
        %v8522 = vpop.f32.mrb[0].mxu0
        %v8523 = vadd.f32 0.0, %v8522
        %v8524 = vpop.f32.mrb[0].mxu0
        %8525 = vmatprep.mubr.bf16.mxu0 0
        %8526 = vmatmul.mubr.bf16.gmra.mrb[0].mxu0 %v8308
        %v8527 = vpop.f32.mrb[0].mxu0
        %v8528 = vadd.f32 0.0, %v8527
        %v8529 = vpop.f32.mrb[0].mxu0
        %v8530 = vpop.f32.mrb[0].mxu0
        %v8531 = vadd.f32 0.0, %v8530
        %v8532 = vpop.f32.mrb[0].mxu0
        %8533 = vdwg.mxu0
        %v8534 = vadd.f32 %v7958, %v8408
        %v8535 = vadd.f32 %v7961, %v8411
        %v8536 = vadd.f32 %v7966, %v8416
        %v8537 = vadd.f32 %v7969, %v8419
        %v8538 = vadd.f32 %v7974, %v8424
        %v8539 = vadd.f32 %v7977, %v8427
        %v8540 = vadd.f32 %v7982, %v8432
        %v8541 = vadd.f32 %v7985, %v8435
        %v8542 = vadd.f32 %v7990, %v8440
        %v8543 = vadd.f32 %v7993, %v8443
        %v8544 = vadd.f32 %v7998, %v8448
        %v8545 = vadd.f32 %v8001, %v8451
        %v8546 = vadd.f32 %v8006, %v8456
        %v8547 = vadd.f32 %v8009, %v8459
        %v8548 = vadd.f32 %v8014, %v8464
        %v8549 = vadd.f32 %v8017, %v8467
        %v8550 = vadd.f32 %v8022, %v8472
        %v8551 = vadd.f32 %v8025, %v8475
        %v8552 = vadd.f32 %v8030, %v8480
        %v8553 = vadd.f32 %v8033, %v8483
        %v8554 = vadd.f32 %v8038, %v8488
        %v8555 = vadd.f32 %v8041, %v8491
        %v8556 = vadd.f32 %v8046, %v8496
        %v8557 = vadd.f32 %v8049, %v8499
        %v8558 = vadd.f32 %v8054, %v8504
        %v8559 = vadd.f32 %v8057, %v8507
        %v8560 = vadd.f32 %v8062, %v8512
        %v8561 = vadd.f32 %v8065, %v8515
        %v8562 = vadd.f32 %v8070, %v8520
        %v8563 = vadd.f32 %v8073, %v8523
        %v8564 = vadd.f32 %v8078, %v8528
        %v8565 = vadd.f32 %v8081, %v8531
        %v8566 = vld [vmem:[%s6928] sm:$0xf]
        %v8567 = vld [vmem:[%s6928 + $0x4] sm:$0xf]
        %v8568 = vld [vmem:[%s6928 + $0xc] sm:$0xf]
        %v8569 = vld [vmem:[%s6928 + $0x10] sm:$0xf]
        %v8570 = vld [vmem:[%s6928 + $0x18] sm:$0xf]
        %v8571 = vld [vmem:[%s6928 + $0x1c] sm:$0xf]
        %v8572 = vld [vmem:[%s6928 + $0x24] sm:$0xf]
        %v8573 = vld [vmem:[%s6928 + $0x28] sm:$0xf]
        %v8574 = vld [vmem:[%s6928 + $0x30] sm:$0xf]
        %v8575 = vld [vmem:[%s6928 + $0x34] sm:$0xf]
        %v8576 = vld [vmem:[%s6928 + $0x3c] sm:$0xf]
        %v8577 = vld [vmem:[%s6928 + $0x40] sm:$0xf]
        %v8578 = vld [vmem:[%s6928 + $0x48] sm:$0xf]
        %v8579 = vld [vmem:[%s6928 + $0x4c] sm:$0xf]
        %v8580 = vld [vmem:[%s6928 + $0x54] sm:$0xf]
        %v8581 = vld [vmem:[%s6928 + $0x58] sm:$0xf]
        %v8582 = vld [vmem:[%s6928 + $0x60] sm:$0xf]
        %v8583 = vld [vmem:[%s6928 + $0x64] sm:$0xf]
        %v8584 = vld [vmem:[%s6928 + $0x6c] sm:$0xf]
        %v8585 = vld [vmem:[%s6928 + $0x70] sm:$0xf]
        %v8586 = vld [vmem:[%s6928 + $0x78] sm:$0xf]
        %v8587 = vld [vmem:[%s6928 + $0x7c] sm:$0xf]
        %v8588 = vld [vmem:[%s6928 + $0x84] sm:$0xf]
        %v8589 = vld [vmem:[%s6928 + $0x88] sm:$0xf]
        %v8590 = vld [vmem:[%s6928 + $0x90] sm:$0xf]
        %v8591 = vld [vmem:[%s6928 + $0x94] sm:$0xf]
        %v8592 = vld [vmem:[%s6928 + $0x9c] sm:$0xf]
        %v8593 = vld [vmem:[%s6928 + $0xa0] sm:$0xf]
        %v8594 = vld [vmem:[%s6928 + $0xa8] sm:$0xf]
        %v8595 = vld [vmem:[%s6928 + $0xac] sm:$0xf]
        %v8596 = vld [vmem:[%s6928 + $0xb4] sm:$0xf]
        %v8597 = vld [vmem:[%s6928 + $0xb8] sm:$0xf]
        %s8598 = scalar_lea.vmem [#allocation15], 192
        %v8599 = vld [vmem:[%s8598] sm:$0xf]
        %v8600 = vld [vmem:[%s8598 + $0x4] sm:$0xf]
        %v8601 = vld [vmem:[%s8598 + $0x8] sm:$0xf]
        %v8602 = vld [vmem:[%s8598 + $0xc] sm:$0xf]
        %v8603 = vld [vmem:[%s8598 + $0x10] sm:$0xf]
        %v8604 = vld [vmem:[%s8598 + $0x14] sm:$0xf]
        %v8605 = vld [vmem:[%s8598 + $0x18] sm:$0xf]
        %v8606 = vld [vmem:[%s8598 + $0x1c] sm:$0xf]
        %v8607 = vld [vmem:[%s8598 + $0x20] sm:$0xf]
        %v8608 = vld [vmem:[%s8598 + $0x24] sm:$0xf]
        %v8609 = vld [vmem:[%s8598 + $0x28] sm:$0xf]
        %v8610 = vld [vmem:[%s8598 + $0x2c] sm:$0xf]
        %v8611 = vld [vmem:[%s8598 + $0x30] sm:$0xf]
        %v8612 = vld [vmem:[%s8598 + $0x34] sm:$0xf]
        %v8613 = vld [vmem:[%s8598 + $0x38] sm:$0xf]
        %v8614 = vld [vmem:[%s8598 + $0x3c] sm:$0xf]
        %v8647 = vunpack.c.l.b16 %v8566
        %v8648 = vunpack.c.l.b16 %v8567
        %v8649 = vunpack.c.l.b16 %v8568
        %v8650 = vunpack.c.l.b16 %v8569
        %v8651 = vunpack.c.l.b16 %v8570
        %v8652 = vunpack.c.l.b16 %v8571
        %v8653 = vunpack.c.l.b16 %v8572
        %v8654 = vunpack.c.l.b16 %v8573
        %v8655 = vunpack.c.l.b16 %v8574
        %v8656 = vunpack.c.l.b16 %v8575
        %v8657 = vunpack.c.l.b16 %v8576
        %v8658 = vunpack.c.l.b16 %v8577
        %v8659 = vunpack.c.l.b16 %v8578
        %v8660 = vunpack.c.l.b16 %v8579
        %v8661 = vunpack.c.l.b16 %v8580
        %v8662 = vunpack.c.l.b16 %v8581
        %v8663 = vunpack.c.l.b16 %v8582
        %v8664 = vunpack.c.l.b16 %v8583
        %v8665 = vunpack.c.l.b16 %v8584
        %v8666 = vunpack.c.l.b16 %v8585
        %v8667 = vunpack.c.l.b16 %v8586
        %v8668 = vunpack.c.l.b16 %v8587
        %v8669 = vunpack.c.l.b16 %v8588
        %v8670 = vunpack.c.l.b16 %v8589
        %v8671 = vunpack.c.l.b16 %v8590
        %v8672 = vunpack.c.l.b16 %v8591
        %v8673 = vunpack.c.l.b16 %v8592
        %v8674 = vunpack.c.l.b16 %v8593
        %v8675 = vunpack.c.l.b16 %v8594
        %v8676 = vunpack.c.l.b16 %v8595
        %v8677 = vunpack.c.l.b16 %v8596
        %v8678 = vunpack.c.l.b16 %v8597
        %v8679 = vpack.c.b16 %v8648, %v8647
        %v8680 = vpack.c.b16 %v8650, %v8649
        %v8681 = vpack.c.b16 %v8652, %v8651
        %v8682 = vpack.c.b16 %v8654, %v8653
        %v8683 = vpack.c.b16 %v8656, %v8655
        %v8684 = vpack.c.b16 %v8658, %v8657
        %v8685 = vpack.c.b16 %v8660, %v8659
        %v8686 = vpack.c.b16 %v8662, %v8661
        %v8687 = vpack.c.b16 %v8664, %v8663
        %v8688 = vpack.c.b16 %v8666, %v8665
        %v8689 = vpack.c.b16 %v8668, %v8667
        %v8690 = vpack.c.b16 %v8670, %v8669
        %v8691 = vpack.c.b16 %v8672, %v8671
        %v8692 = vpack.c.b16 %v8674, %v8673
        %v8693 = vpack.c.b16 %v8676, %v8675
        %v8694 = vpack.c.b16 %v8678, %v8677
        %v8727 = vunpack.c.l.b16 %v8599
        %v8728 = vunpack.c.l.b16 %v8600
        %v8729 = vunpack.c.l.b16 %v8601
        %v8730 = vunpack.c.l.b16 %v8602
        %v8731 = vunpack.c.l.b16 %v8603
        %v8732 = vunpack.c.l.b16 %v8604
        %v8733 = vunpack.c.l.b16 %v8605
        %v8734 = vunpack.c.l.b16 %v8606
        %v8735 = vunpack.c.l.b16 %v8607
        %v8736 = vunpack.c.l.b16 %v8608
        %v8737 = vunpack.c.l.b16 %v8609
        %v8738 = vunpack.c.l.b16 %v8610
        %v8739 = vunpack.c.l.b16 %v8611
        %v8740 = vunpack.c.l.b16 %v8612
        %v8741 = vunpack.c.l.b16 %v8613
        %v8742 = vunpack.c.l.b16 %v8614
        %v8743 = vpack.c.b16 %v8728, %v8727
        %v8744 = vpack.c.b16 %v8730, %v8729
        %v8745 = vpack.c.b16 %v8732, %v8731
        %v8746 = vpack.c.b16 %v8734, %v8733
        %v8747 = vpack.c.b16 %v8736, %v8735
        %v8748 = vpack.c.b16 %v8738, %v8737
        %v8749 = vpack.c.b16 %v8740, %v8739
        %v8750 = vpack.c.b16 %v8742, %v8741
        %8759 = vmatprep.subr.bf16.mxu0 0
        %8760 = vmatpush1.bf16.msra.mxu0 %v8743
        %8761 = vmatprep.subr.bf16.mxu0 0
        %8762 = vmatpush1.bf16.msra.mxu0 %v8744
        %8763 = vmatprep.subr.bf16.mxu0 0
        %8764 = vmatpush1.bf16.msra.mxu0 %v8745
        %8765 = vmatprep.subr.bf16.mxu0 0
        %8766 = vmatpush1.bf16.msra.mxu0 %v8746
        %8767 = vmatprep.subr.bf16.mxu0 0
        %8768 = vmatpush1.bf16.msra.mxu0 %v8747
        %8769 = vmatprep.subr.bf16.mxu0 0
        %8770 = vmatpush1.bf16.msra.mxu0 %v8748
        %8771 = vmatprep.subr.bf16.mxu0 0
        %8772 = vmatpush1.bf16.msra.mxu0 %v8749
        %8773 = vmatprep.subr.bf16.mxu0 0
        %8774 = vmatpush1.bf16.msra.mxu0 %v8750
        %8775 = vmatprep.subr.bf16.mxu0 0
        %8776 = vmatpush1.bf16.msra.mxu0 0
        %8777 = vmatprep.subr.bf16.mxu0 0
        %8778 = vmatpush1.bf16.msra.mxu0 0
        %8779 = vmatprep.subr.bf16.mxu0 0
        %8780 = vmatpush1.bf16.msra.mxu0 0
        %8781 = vmatprep.subr.bf16.mxu0 0
        %8782 = vmatpush1.bf16.msra.mxu0 0
        %8783 = vmatprep.subr.bf16.mxu0 0
        %8784 = vmatpush1.bf16.msra.mxu0 0
        %8785 = vmatprep.subr.bf16.mxu0 0
        %8786 = vmatpush1.bf16.msra.mxu0 0
        %8787 = vmatprep.subr.bf16.mxu0 0
        %8788 = vmatpush1.bf16.msra.mxu0 0
        %8789 = vmatprep.subr.bf16.mxu0 0
        %8790 = vmatpush1.bf16.msra.mxu0 0
        %8791 = vmatprep.mubr.bf16.mxu0 0
        %8792 = vmatmul.mubr.bf16.gmra.mrb[0].mxu0 %v8679
        %v8793 = vpop.f32.mrb[0].mxu0
        %v8794 = vadd.f32 0.0, %v8793
        %v8795 = vpop.f32.mrb[0].mxu0
        %v8796 = vpop.f32.mrb[0].mxu0
        %v8797 = vadd.f32 0.0, %v8796
        %v8798 = vpop.f32.mrb[0].mxu0
        %8799 = vmatprep.mubr.bf16.mxu0 0
        %8800 = vmatmul.mubr.bf16.gmra.mrb[0].mxu0 %v8680
        %v8801 = vpop.f32.mrb[0].mxu0
        %v8802 = vadd.f32 0.0, %v8801
        %v8803 = vpop.f32.mrb[0].mxu0
        %v8804 = vpop.f32.mrb[0].mxu0
        %v8805 = vadd.f32 0.0, %v8804
        %v8806 = vpop.f32.mrb[0].mxu0
        %8807 = vmatprep.mubr.bf16.mxu0 0
        %8808 = vmatmul.mubr.bf16.gmra.mrb[0].mxu0 %v8681
        %v8809 = vpop.f32.mrb[0].mxu0
        %v8810 = vadd.f32 0.0, %v8809
        %v8811 = vpop.f32.mrb[0].mxu0
        %v8812 = vpop.f32.mrb[0].mxu0
        %v8813 = vadd.f32 0.0, %v8812
        %v8814 = vpop.f32.mrb[0].mxu0
        %8815 = vmatprep.mubr.bf16.mxu0 0
        %8816 = vmatmul.mubr.bf16.gmra.mrb[0].mxu0 %v8682
        %v8817 = vpop.f32.mrb[0].mxu0
        %v8818 = vadd.f32 0.0, %v8817
        %v8819 = vpop.f32.mrb[0].mxu0
        %v8820 = vpop.f32.mrb[0].mxu0
        %v8821 = vadd.f32 0.0, %v8820
        %v8822 = vpop.f32.mrb[0].mxu0
        %8823 = vmatprep.mubr.bf16.mxu0 0
        %8824 = vmatmul.mubr.bf16.gmra.mrb[0].mxu0 %v8683
        %v8825 = vpop.f32.mrb[0].mxu0
        %v8826 = vadd.f32 0.0, %v8825
        %v8827 = vpop.f32.mrb[0].mxu0
        %v8828 = vpop.f32.mrb[0].mxu0
        %v8829 = vadd.f32 0.0, %v8828
        %v8830 = vpop.f32.mrb[0].mxu0
        %8831 = vmatprep.mubr.bf16.mxu0 0
        %8832 = vmatmul.mubr.bf16.gmra.mrb[0].mxu0 %v8684
        %v8833 = vpop.f32.mrb[0].mxu0
        %v8834 = vadd.f32 0.0, %v8833
        %v8835 = vpop.f32.mrb[0].mxu0
        %v8836 = vpop.f32.mrb[0].mxu0
        %v8837 = vadd.f32 0.0, %v8836
        %v8838 = vpop.f32.mrb[0].mxu0
        %8839 = vmatprep.mubr.bf16.mxu0 0
        %8840 = vmatmul.mubr.bf16.gmra.mrb[0].mxu0 %v8685
        %v8841 = vpop.f32.mrb[0].mxu0
        %v8842 = vadd.f32 0.0, %v8841
        %v8843 = vpop.f32.mrb[0].mxu0
        %v8844 = vpop.f32.mrb[0].mxu0
        %v8845 = vadd.f32 0.0, %v8844
        %v8846 = vpop.f32.mrb[0].mxu0
        %8847 = vmatprep.mubr.bf16.mxu0 0
        %8848 = vmatmul.mubr.bf16.gmra.mrb[0].mxu0 %v8686
        %v8849 = vpop.f32.mrb[0].mxu0
        %v8850 = vadd.f32 0.0, %v8849
        %v8851 = vpop.f32.mrb[0].mxu0
        %v8852 = vpop.f32.mrb[0].mxu0
        %v8853 = vadd.f32 0.0, %v8852
        %v8854 = vpop.f32.mrb[0].mxu0
        %8855 = vmatprep.mubr.bf16.mxu0 0
        %8856 = vmatmul.mubr.bf16.gmra.mrb[0].mxu0 %v8687
        %v8857 = vpop.f32.mrb[0].mxu0
        %v8858 = vadd.f32 0.0, %v8857
        %v8859 = vpop.f32.mrb[0].mxu0
        %v8860 = vpop.f32.mrb[0].mxu0
        %v8861 = vadd.f32 0.0, %v8860
        %v8862 = vpop.f32.mrb[0].mxu0
        %8863 = vmatprep.mubr.bf16.mxu0 0
        %8864 = vmatmul.mubr.bf16.gmra.mrb[0].mxu0 %v8688
        %v8865 = vpop.f32.mrb[0].mxu0
        %v8866 = vadd.f32 0.0, %v8865
        %v8867 = vpop.f32.mrb[0].mxu0
        %v8868 = vpop.f32.mrb[0].mxu0
        %v8869 = vadd.f32 0.0, %v8868
        %v8870 = vpop.f32.mrb[0].mxu0
        %8871 = vmatprep.mubr.bf16.mxu0 0
        %8872 = vmatmul.mubr.bf16.gmra.mrb[0].mxu0 %v8689
        %v8873 = vpop.f32.mrb[0].mxu0
        %v8874 = vadd.f32 0.0, %v8873
        %v8875 = vpop.f32.mrb[0].mxu0
        %v8876 = vpop.f32.mrb[0].mxu0
        %v8877 = vadd.f32 0.0, %v8876
        %v8878 = vpop.f32.mrb[0].mxu0
        %8879 = vmatprep.mubr.bf16.mxu0 0
        %8880 = vmatmul.mubr.bf16.gmra.mrb[0].mxu0 %v8690
        %v8881 = vpop.f32.mrb[0].mxu0
        %v8882 = vadd.f32 0.0, %v8881
        %v8883 = vpop.f32.mrb[0].mxu0
        %v8884 = vpop.f32.mrb[0].mxu0
        %v8885 = vadd.f32 0.0, %v8884
        %v8886 = vpop.f32.mrb[0].mxu0
        %8887 = vmatprep.mubr.bf16.mxu0 0
        %8888 = vmatmul.mubr.bf16.gmra.mrb[0].mxu0 %v8691
        %v8889 = vpop.f32.mrb[0].mxu0
        %v8890 = vadd.f32 0.0, %v8889
        %v8891 = vpop.f32.mrb[0].mxu0
        %v8892 = vpop.f32.mrb[0].mxu0
        %v8893 = vadd.f32 0.0, %v8892
        %v8894 = vpop.f32.mrb[0].mxu0
        %8895 = vmatprep.mubr.bf16.mxu0 0
        %8896 = vmatmul.mubr.bf16.gmra.mrb[0].mxu0 %v8692
        %v8897 = vpop.f32.mrb[0].mxu0
        %v8898 = vadd.f32 0.0, %v8897
        %v8899 = vpop.f32.mrb[0].mxu0
        %v8900 = vpop.f32.mrb[0].mxu0
        %v8901 = vadd.f32 0.0, %v8900
        %v8902 = vpop.f32.mrb[0].mxu0
        %8903 = vmatprep.mubr.bf16.mxu0 0
        %8904 = vmatmul.mubr.bf16.gmra.mrb[0].mxu0 %v8693
        %v8905 = vpop.f32.mrb[0].mxu0
        %v8906 = vadd.f32 0.0, %v8905
        %v8907 = vpop.f32.mrb[0].mxu0
        %v8908 = vpop.f32.mrb[0].mxu0
        %v8909 = vadd.f32 0.0, %v8908
        %v8910 = vpop.f32.mrb[0].mxu0
        %8911 = vmatprep.mubr.bf16.mxu0 0
        %8912 = vmatmul.mubr.bf16.gmra.mrb[0].mxu0 %v8694
        %v8913 = vpop.f32.mrb[0].mxu0
        %v8914 = vadd.f32 0.0, %v8913
        %v8915 = vpop.f32.mrb[0].mxu0
        %v8916 = vpop.f32.mrb[0].mxu0
        %v8917 = vadd.f32 0.0, %v8916
        %v8918 = vpop.f32.mrb[0].mxu0
        %8919 = vdwg.mxu0
        %v8920 = vadd.f32 %v8534, %v8794
        %v8921 = vadd.f32 %v8535, %v8797
        %v8922 = vadd.f32 %v8536, %v8802
        %v8923 = vadd.f32 %v8537, %v8805
        %v8924 = vadd.f32 %v8538, %v8810
        %v8925 = vadd.f32 %v8539, %v8813
        %v8926 = vadd.f32 %v8540, %v8818
        %v8927 = vadd.f32 %v8541, %v8821
        %v8928 = vadd.f32 %v8542, %v8826
        %v8929 = vadd.f32 %v8543, %v8829
        %v8930 = vadd.f32 %v8544, %v8834
        %v8931 = vadd.f32 %v8545, %v8837
        %v8932 = vadd.f32 %v8546, %v8842
        %v8933 = vadd.f32 %v8547, %v8845
        %v8934 = vadd.f32 %v8548, %v8850
        %v8935 = vadd.f32 %v8549, %v8853
        %v8936 = vadd.f32 %v8550, %v8858
        %v8937 = vadd.f32 %v8551, %v8861
        %v8938 = vadd.f32 %v8552, %v8866
        %v8939 = vadd.f32 %v8553, %v8869
        %v8940 = vadd.f32 %v8554, %v8874
        %v8941 = vadd.f32 %v8555, %v8877
        %v8942 = vadd.f32 %v8556, %v8882
        %v8943 = vadd.f32 %v8557, %v8885
        %v8944 = vadd.f32 %v8558, %v8890
        %v8945 = vadd.f32 %v8559, %v8893
        %v8946 = vadd.f32 %v8560, %v8898
        %v8947 = vadd.f32 %v8561, %v8901
        %v8948 = vadd.f32 %v8562, %v8906
        %v8949 = vadd.f32 %v8563, %v8909
        %v8950 = vadd.f32 %v8564, %v8914
        %v8951 = vadd.f32 %v8565, %v8917
        %v8952 = vld [vmem:[%s6928] sm:$0xf]
        %v8953 = vld [vmem:[%s6928 + $0x4] sm:$0xf]
        %v8954 = vld [vmem:[%s6928 + $0x8] sm:$0x1]
        %v8955 = vld [vmem:[%s6928 + $0xc] sm:$0xf]
        %v8956 = vld [vmem:[%s6928 + $0x10] sm:$0xf]
        %v8957 = vld [vmem:[%s6928 + $0x14] sm:$0x1]
        %v8958 = vld [vmem:[%s6928 + $0x18] sm:$0xf]
        %v8959 = vld [vmem:[%s6928 + $0x1c] sm:$0xf]
        %v8960 = vld [vmem:[%s6928 + $0x20] sm:$0x1]
        %v8961 = vld [vmem:[%s6928 + $0x24] sm:$0xf]
        %v8962 = vld [vmem:[%s6928 + $0x28] sm:$0xf]
        %v8963 = vld [vmem:[%s6928 + $0x2c] sm:$0x1]
        %v8964 = vld [vmem:[%s6928 + $0x30] sm:$0xf]
        %v8965 = vld [vmem:[%s6928 + $0x34] sm:$0xf]
        %v8966 = vld [vmem:[%s6928 + $0x38] sm:$0x1]
        %v8967 = vld [vmem:[%s6928 + $0x3c] sm:$0xf]
        %v8968 = vld [vmem:[%s6928 + $0x40] sm:$0xf]
        %v8969 = vld [vmem:[%s6928 + $0x44] sm:$0x1]
        %v8970 = vld [vmem:[%s6928 + $0x48] sm:$0xf]
        %v8971 = vld [vmem:[%s6928 + $0x4c] sm:$0xf]
        %v8972 = vld [vmem:[%s6928 + $0x50] sm:$0x1]
        %v8973 = vld [vmem:[%s6928 + $0x54] sm:$0xf]
        %v8974 = vld [vmem:[%s6928 + $0x58] sm:$0xf]
        %v8975 = vld [vmem:[%s6928 + $0x5c] sm:$0x1]
        %v8976 = vld [vmem:[%s6928 + $0x60] sm:$0xf]
        %v8977 = vld [vmem:[%s6928 + $0x64] sm:$0xf]
        %v8978 = vld [vmem:[%s6928 + $0x68] sm:$0x1]
        %v8979 = vld [vmem:[%s6928 + $0x6c] sm:$0xf]
        %v8980 = vld [vmem:[%s6928 + $0x70] sm:$0xf]
        %v8981 = vld [vmem:[%s6928 + $0x74] sm:$0x1]
        %v8982 = vld [vmem:[%s6928 + $0x78] sm:$0xf]
        %v8983 = vld [vmem:[%s6928 + $0x7c] sm:$0xf]
        %v8984 = vld [vmem:[%s6928 + $0x80] sm:$0x1]
        %v8985 = vld [vmem:[%s6928 + $0x84] sm:$0xf]
        %v8986 = vld [vmem:[%s6928 + $0x88] sm:$0xf]
        %v8987 = vld [vmem:[%s6928 + $0x8c] sm:$0x1]
        %v8988 = vld [vmem:[%s6928 + $0x90] sm:$0xf]
        %v8989 = vld [vmem:[%s6928 + $0x94] sm:$0xf]
        %v8990 = vld [vmem:[%s6928 + $0x98] sm:$0x1]
        %v8991 = vld [vmem:[%s6928 + $0x9c] sm:$0xf]
        %v8992 = vld [vmem:[%s6928 + $0xa0] sm:$0xf]
        %v8993 = vld [vmem:[%s6928 + $0xa4] sm:$0x1]
        %v8994 = vld [vmem:[%s6928 + $0xa8] sm:$0xf]
        %v8995 = vld [vmem:[%s6928 + $0xac] sm:$0xf]
        %v8996 = vld [vmem:[%s6928 + $0xb0] sm:$0x1]
        %v8997 = vld [vmem:[%s6928 + $0xb4] sm:$0xf]
        %v8998 = vld [vmem:[%s6928 + $0xb8] sm:$0xf]
        %v8999 = vld [vmem:[%s6928 + $0xbc] sm:$0x1]
        %v9001 = vshrl.u32 %v8952, 16
        %v9003 = vrot.slane %v9001, 4
        %v9004 = vshll.u32 %v8952, 16
        %v9006 = vrot.slane %v9004, 5
        %v9007 = vor.u32 %v9003, %v9006
        %v9008 = vrot.slane %v9007, 4
        %v9010 = vshll.u32 %v8953, 16
        %v9012 = vrot.slane %v9010, 5
        %v9013 = vsel %vm1660, %v9008, %v9012
        %v9014 = vshrl.u32 %v8953, 16
        %v9016 = vrot.slane %v9014, 4
        %v9017 = vor.u32 %v9016, %v9012
        %v9018 = vrot.slane %v9017, 4
        %v9020 = vshll.u32 %v8954, 16
        %v9022 = vrot.slane %v9020, 5
        %v9023 = vsel %vm1660, %v9018, %v9022
        %v9025 = vshrl.u32 %v8955, 16
        %v9027 = vrot.slane %v9025, 4
        %v9028 = vshll.u32 %v8955, 16
        %v9030 = vrot.slane %v9028, 5
        %v9031 = vor.u32 %v9027, %v9030
        %v9032 = vrot.slane %v9031, 4
        %v9034 = vshll.u32 %v8956, 16
        %v9036 = vrot.slane %v9034, 5
        %v9037 = vsel %vm1660, %v9032, %v9036
        %v9038 = vshrl.u32 %v8956, 16
        %v9040 = vrot.slane %v9038, 4
        %v9041 = vor.u32 %v9040, %v9036
        %v9042 = vrot.slane %v9041, 4
        %v9044 = vshll.u32 %v8957, 16
        %v9046 = vrot.slane %v9044, 5
        %v9047 = vsel %vm1660, %v9042, %v9046
        %v9049 = vshrl.u32 %v8958, 16
        %v9051 = vrot.slane %v9049, 4
        %v9052 = vshll.u32 %v8958, 16
        %v9054 = vrot.slane %v9052, 5
        %v9055 = vor.u32 %v9051, %v9054
        %v9056 = vrot.slane %v9055, 4
        %v9058 = vshll.u32 %v8959, 16
        %v9060 = vrot.slane %v9058, 5
        %v9061 = vsel %vm1660, %v9056, %v9060
        %v9062 = vshrl.u32 %v8959, 16
        %v9064 = vrot.slane %v9062, 4
        %v9065 = vor.u32 %v9064, %v9060
        %v9066 = vrot.slane %v9065, 4
        %v9068 = vshll.u32 %v8960, 16
        %v9070 = vrot.slane %v9068, 5
        %v9071 = vsel %vm1660, %v9066, %v9070
        %v9073 = vshrl.u32 %v8961, 16
        %v9075 = vrot.slane %v9073, 4
        %v9076 = vshll.u32 %v8961, 16
        %v9078 = vrot.slane %v9076, 5
        %v9079 = vor.u32 %v9075, %v9078
        %v9080 = vrot.slane %v9079, 4
        %v9082 = vshll.u32 %v8962, 16
        %v9084 = vrot.slane %v9082, 5
        %v9085 = vsel %vm1660, %v9080, %v9084
        %v9086 = vshrl.u32 %v8962, 16
        %v9088 = vrot.slane %v9086, 4
        %v9089 = vor.u32 %v9088, %v9084
        %v9090 = vrot.slane %v9089, 4
        %v9092 = vshll.u32 %v8963, 16
        %v9094 = vrot.slane %v9092, 5
        %v9095 = vsel %vm1660, %v9090, %v9094
        %v9097 = vshrl.u32 %v8964, 16
        %v9099 = vrot.slane %v9097, 4
        %v9100 = vshll.u32 %v8964, 16
        %v9102 = vrot.slane %v9100, 5
        %v9103 = vor.u32 %v9099, %v9102
        %v9104 = vrot.slane %v9103, 4
        %v9106 = vshll.u32 %v8965, 16
        %v9108 = vrot.slane %v9106, 5
        %v9109 = vsel %vm1660, %v9104, %v9108
        %v9110 = vshrl.u32 %v8965, 16
        %v9112 = vrot.slane %v9110, 4
        %v9113 = vor.u32 %v9112, %v9108
        %v9114 = vrot.slane %v9113, 4
        %v9116 = vshll.u32 %v8966, 16
        %v9118 = vrot.slane %v9116, 5
        %v9119 = vsel %vm1660, %v9114, %v9118
        %v9121 = vshrl.u32 %v8967, 16
        %v9123 = vrot.slane %v9121, 4
        %v9124 = vshll.u32 %v8967, 16
        %v9126 = vrot.slane %v9124, 5
        %v9127 = vor.u32 %v9123, %v9126
        %v9128 = vrot.slane %v9127, 4
        %v9130 = vshll.u32 %v8968, 16
        %v9132 = vrot.slane %v9130, 5
        %v9133 = vsel %vm1660, %v9128, %v9132
        %v9134 = vshrl.u32 %v8968, 16
        %v9136 = vrot.slane %v9134, 4
        %v9137 = vor.u32 %v9136, %v9132
        %v9138 = vrot.slane %v9137, 4
        %v9140 = vshll.u32 %v8969, 16
        %v9142 = vrot.slane %v9140, 5
        %v9143 = vsel %vm1660, %v9138, %v9142
        %v9145 = vshrl.u32 %v8970, 16
        %v9147 = vrot.slane %v9145, 4
        %v9148 = vshll.u32 %v8970, 16
        %v9150 = vrot.slane %v9148, 5
        %v9151 = vor.u32 %v9147, %v9150
        %v9152 = vrot.slane %v9151, 4
        %v9154 = vshll.u32 %v8971, 16
        %v9156 = vrot.slane %v9154, 5
        %v9157 = vsel %vm1660, %v9152, %v9156
        %v9158 = vshrl.u32 %v8971, 16
        %v9160 = vrot.slane %v9158, 4
        %v9161 = vor.u32 %v9160, %v9156
        %v9162 = vrot.slane %v9161, 4
        %v9164 = vshll.u32 %v8972, 16
        %v9166 = vrot.slane %v9164, 5
        %v9167 = vsel %vm1660, %v9162, %v9166
        %v9169 = vshrl.u32 %v8973, 16
        %v9171 = vrot.slane %v9169, 4
        %v9172 = vshll.u32 %v8973, 16
        %v9174 = vrot.slane %v9172, 5
        %v9175 = vor.u32 %v9171, %v9174
        %v9176 = vrot.slane %v9175, 4
        %v9178 = vshll.u32 %v8974, 16
        %v9180 = vrot.slane %v9178, 5
        %v9181 = vsel %vm1660, %v9176, %v9180
        %v9182 = vshrl.u32 %v8974, 16
        %v9184 = vrot.slane %v9182, 4
        %v9185 = vor.u32 %v9184, %v9180
        %v9186 = vrot.slane %v9185, 4
        %v9188 = vshll.u32 %v8975, 16
        %v9190 = vrot.slane %v9188, 5
        %v9191 = vsel %vm1660, %v9186, %v9190
        %v9193 = vshrl.u32 %v8976, 16
        %v9195 = vrot.slane %v9193, 4
        %v9196 = vshll.u32 %v8976, 16
        %v9198 = vrot.slane %v9196, 5
        %v9199 = vor.u32 %v9195, %v9198
        %v9200 = vrot.slane %v9199, 4
        %v9202 = vshll.u32 %v8977, 16
        %v9204 = vrot.slane %v9202, 5
        %v9205 = vsel %vm1660, %v9200, %v9204
        %v9206 = vshrl.u32 %v8977, 16
        %v9208 = vrot.slane %v9206, 4
        %v9209 = vor.u32 %v9208, %v9204
        %v9210 = vrot.slane %v9209, 4
        %v9212 = vshll.u32 %v8978, 16
        %v9214 = vrot.slane %v9212, 5
        %v9215 = vsel %vm1660, %v9210, %v9214
        %v9217 = vshrl.u32 %v8979, 16
        %v9219 = vrot.slane %v9217, 4
        %v9220 = vshll.u32 %v8979, 16
        %v9222 = vrot.slane %v9220, 5
        %v9223 = vor.u32 %v9219, %v9222
        %v9224 = vrot.slane %v9223, 4
        %v9226 = vshll.u32 %v8980, 16
        %v9228 = vrot.slane %v9226, 5
        %v9229 = vsel %vm1660, %v9224, %v9228
        %v9230 = vshrl.u32 %v8980, 16
        %v9232 = vrot.slane %v9230, 4
        %v9233 = vor.u32 %v9232, %v9228
        %v9234 = vrot.slane %v9233, 4
        %v9236 = vshll.u32 %v8981, 16
        %v9238 = vrot.slane %v9236, 5
        %v9239 = vsel %vm1660, %v9234, %v9238
        %v9241 = vshrl.u32 %v8982, 16
        %v9243 = vrot.slane %v9241, 4
        %v9244 = vshll.u32 %v8982, 16
        %v9246 = vrot.slane %v9244, 5
        %v9247 = vor.u32 %v9243, %v9246
        %v9248 = vrot.slane %v9247, 4
        %v9250 = vshll.u32 %v8983, 16
        %v9252 = vrot.slane %v9250, 5
        %v9253 = vsel %vm1660, %v9248, %v9252
        %v9254 = vshrl.u32 %v8983, 16
        %v9256 = vrot.slane %v9254, 4
        %v9257 = vor.u32 %v9256, %v9252
        %v9258 = vrot.slane %v9257, 4
        %v9260 = vshll.u32 %v8984, 16
        %v9262 = vrot.slane %v9260, 5
        %v9263 = vsel %vm1660, %v9258, %v9262
        %v9265 = vshrl.u32 %v8985, 16
        %v9267 = vrot.slane %v9265, 4
        %v9268 = vshll.u32 %v8985, 16
        %v9270 = vrot.slane %v9268, 5
        %v9271 = vor.u32 %v9267, %v9270
        %v9272 = vrot.slane %v9271, 4
        %v9274 = vshll.u32 %v8986, 16
        %v9276 = vrot.slane %v9274, 5
        %v9277 = vsel %vm1660, %v9272, %v9276
        %v9278 = vshrl.u32 %v8986, 16
        %v9280 = vrot.slane %v9278, 4
        %v9281 = vor.u32 %v9280, %v9276
        %v9282 = vrot.slane %v9281, 4
        %v9284 = vshll.u32 %v8987, 16
        %v9286 = vrot.slane %v9284, 5
        %v9287 = vsel %vm1660, %v9282, %v9286
        %v9289 = vshrl.u32 %v8988, 16
        %v9291 = vrot.slane %v9289, 4
        %v9292 = vshll.u32 %v8988, 16
        %v9294 = vrot.slane %v9292, 5
        %v9295 = vor.u32 %v9291, %v9294
        %v9296 = vrot.slane %v9295, 4
        %v9298 = vshll.u32 %v8989, 16
        %v9300 = vrot.slane %v9298, 5
        %v9301 = vsel %vm1660, %v9296, %v9300
        %v9302 = vshrl.u32 %v8989, 16
        %v9304 = vrot.slane %v9302, 4
        %v9305 = vor.u32 %v9304, %v9300
        %v9306 = vrot.slane %v9305, 4
        %v9308 = vshll.u32 %v8990, 16
        %v9310 = vrot.slane %v9308, 5
        %v9311 = vsel %vm1660, %v9306, %v9310
        %v9313 = vshrl.u32 %v8991, 16
        %v9315 = vrot.slane %v9313, 4
        %v9316 = vshll.u32 %v8991, 16
        %v9318 = vrot.slane %v9316, 5
        %v9319 = vor.u32 %v9315, %v9318
        %v9320 = vrot.slane %v9319, 4
        %v9322 = vshll.u32 %v8992, 16
        %v9324 = vrot.slane %v9322, 5
        %v9325 = vsel %vm1660, %v9320, %v9324
        %v9326 = vshrl.u32 %v8992, 16
        %v9328 = vrot.slane %v9326, 4
        %v9329 = vor.u32 %v9328, %v9324
        %v9330 = vrot.slane %v9329, 4
        %v9332 = vshll.u32 %v8993, 16
        %v9334 = vrot.slane %v9332, 5
        %v9335 = vsel %vm1660, %v9330, %v9334
        %v9337 = vshrl.u32 %v8994, 16
        %v9339 = vrot.slane %v9337, 4
        %v9340 = vshll.u32 %v8994, 16
        %v9342 = vrot.slane %v9340, 5
        %v9343 = vor.u32 %v9339, %v9342
        %v9344 = vrot.slane %v9343, 4
        %v9346 = vshll.u32 %v8995, 16
        %v9348 = vrot.slane %v9346, 5
        %v9349 = vsel %vm1660, %v9344, %v9348
        %v9350 = vshrl.u32 %v8995, 16
        %v9352 = vrot.slane %v9350, 4
        %v9353 = vor.u32 %v9352, %v9348
        %v9354 = vrot.slane %v9353, 4
        %v9356 = vshll.u32 %v8996, 16
        %v9358 = vrot.slane %v9356, 5
        %v9359 = vsel %vm1660, %v9354, %v9358
        %v9361 = vshrl.u32 %v8997, 16
        %v9363 = vrot.slane %v9361, 4
        %v9364 = vshll.u32 %v8997, 16
        %v9366 = vrot.slane %v9364, 5
        %v9367 = vor.u32 %v9363, %v9366
        %v9368 = vrot.slane %v9367, 4
        %v9370 = vshll.u32 %v8998, 16
        %v9372 = vrot.slane %v9370, 5
        %v9373 = vsel %vm1660, %v9368, %v9372
        %v9374 = vshrl.u32 %v8998, 16
        %v9376 = vrot.slane %v9374, 4
        %v9377 = vor.u32 %v9376, %v9372
        %v9378 = vrot.slane %v9377, 4
        %v9380 = vshll.u32 %v8999, 16
        %v9382 = vrot.slane %v9380, 5
        %v9383 = vsel %vm1660, %v9378, %v9382
        %s9384 = scalar_lea.vmem [#allocation15], 256
        %v9385 = vld [vmem:[%s9384] sm:$0xf]
        %v9386 = vld [vmem:[%s9384 + $0x4] sm:$0xf]
        %v9387 = vld [vmem:[%s9384 + $0x8] sm:$0xf]
        %v9388 = vld [vmem:[%s9384 + $0xc] sm:$0xf]
        %v9389 = vld [vmem:[%s9384 + $0x10] sm:$0xf]
        %v9390 = vld [vmem:[%s9384 + $0x14] sm:$0xf]
        %v9391 = vld [vmem:[%s9384 + $0x18] sm:$0xf]
        %v9392 = vld [vmem:[%s9384 + $0x1c] sm:$0xf]
        %v9393 = vld [vmem:[%s9384 + $0x20] sm:$0xf]
        %v9394 = vld [vmem:[%s9384 + $0x24] sm:$0xf]
        %v9395 = vld [vmem:[%s9384 + $0x28] sm:$0xf]
        %v9396 = vld [vmem:[%s9384 + $0x2c] sm:$0xf]
        %v9397 = vld [vmem:[%s9384 + $0x30] sm:$0xf]
        %v9398 = vld [vmem:[%s9384 + $0x34] sm:$0xf]
        %v9399 = vld [vmem:[%s9384 + $0x38] sm:$0xf]
        %v9400 = vld [vmem:[%s9384 + $0x3c] sm:$0xf]
        %v9401 = vunpack.c.l.b16 %v9013
        %v9402 = vunpack.c.l.b16 %v9023
        %v9403 = vunpack.c.l.b16 %v9037
        %v9404 = vunpack.c.l.b16 %v9047
        %v9405 = vunpack.c.l.b16 %v9061
        %v9406 = vunpack.c.l.b16 %v9071
        %v9407 = vunpack.c.l.b16 %v9085
        %v9408 = vunpack.c.l.b16 %v9095
        %v9409 = vunpack.c.l.b16 %v9109
        %v9410 = vunpack.c.l.b16 %v9119
        %v9411 = vunpack.c.l.b16 %v9133
        %v9412 = vunpack.c.l.b16 %v9143
        %v9413 = vunpack.c.l.b16 %v9157
        %v9414 = vunpack.c.l.b16 %v9167
        %v9415 = vunpack.c.l.b16 %v9181
        %v9416 = vunpack.c.l.b16 %v9191
        %v9417 = vunpack.c.l.b16 %v9205
        %v9418 = vunpack.c.l.b16 %v9215
        %v9419 = vunpack.c.l.b16 %v9229
        %v9420 = vunpack.c.l.b16 %v9239
        %v9421 = vunpack.c.l.b16 %v9253
        %v9422 = vunpack.c.l.b16 %v9263
        %v9423 = vunpack.c.l.b16 %v9277
        %v9424 = vunpack.c.l.b16 %v9287
        %v9425 = vunpack.c.l.b16 %v9301
        %v9426 = vunpack.c.l.b16 %v9311
        %v9427 = vunpack.c.l.b16 %v9325
        %v9428 = vunpack.c.l.b16 %v9335
        %v9429 = vunpack.c.l.b16 %v9349
        %v9430 = vunpack.c.l.b16 %v9359
        %v9431 = vunpack.c.l.b16 %v9373
        %v9432 = vunpack.c.l.b16 %v9383
        %v9433 = vpack.c.b16 %v9402, %v9401
        %v9434 = vpack.c.b16 %v9404, %v9403
        %v9435 = vpack.c.b16 %v9406, %v9405
        %v9436 = vpack.c.b16 %v9408, %v9407
        %v9437 = vpack.c.b16 %v9410, %v9409
        %v9438 = vpack.c.b16 %v9412, %v9411
        %v9439 = vpack.c.b16 %v9414, %v9413
        %v9440 = vpack.c.b16 %v9416, %v9415
        %v9441 = vpack.c.b16 %v9418, %v9417
        %v9442 = vpack.c.b16 %v9420, %v9419
        %v9443 = vpack.c.b16 %v9422, %v9421
        %v9444 = vpack.c.b16 %v9424, %v9423
        %v9445 = vpack.c.b16 %v9426, %v9425
        %v9446 = vpack.c.b16 %v9428, %v9427
        %v9447 = vpack.c.b16 %v9430, %v9429
        %v9448 = vpack.c.b16 %v9432, %v9431
        %v9481 = vunpack.c.l.b16 %v9385
        %v9482 = vunpack.c.l.b16 %v9386
        %v9483 = vunpack.c.l.b16 %v9387
        %v9484 = vunpack.c.l.b16 %v9388
        %v9485 = vunpack.c.l.b16 %v9389
        %v9486 = vunpack.c.l.b16 %v9390
        %v9487 = vunpack.c.l.b16 %v9391
        %v9488 = vunpack.c.l.b16 %v9392
        %v9489 = vunpack.c.l.b16 %v9393
        %v9490 = vunpack.c.l.b16 %v9394
        %v9491 = vunpack.c.l.b16 %v9395
        %v9492 = vunpack.c.l.b16 %v9396
        %v9493 = vunpack.c.l.b16 %v9397
        %v9494 = vunpack.c.l.b16 %v9398
        %v9495 = vunpack.c.l.b16 %v9399
        %v9496 = vunpack.c.l.b16 %v9400
        %v9497 = vpack.c.b16 %v9482, %v9481
        %v9498 = vpack.c.b16 %v9484, %v9483
        %v9499 = vpack.c.b16 %v9486, %v9485
        %v9500 = vpack.c.b16 %v9488, %v9487
        %v9501 = vpack.c.b16 %v9490, %v9489
        %v9502 = vpack.c.b16 %v9492, %v9491
        %v9503 = vpack.c.b16 %v9494, %v9493
        %v9504 = vpack.c.b16 %v9496, %v9495
        %9513 = vmatprep.subr.bf16.mxu0 0
        %9514 = vmatpush1.bf16.msra.mxu0 %v9497
        %9515 = vmatprep.subr.bf16.mxu0 0
        %9516 = vmatpush1.bf16.msra.mxu0 %v9498
        %9517 = vmatprep.subr.bf16.mxu0 0
        %9518 = vmatpush1.bf16.msra.mxu0 %v9499
        %9519 = vmatprep.subr.bf16.mxu0 0
        %9520 = vmatpush1.bf16.msra.mxu0 %v9500
        %9521 = vmatprep.subr.bf16.mxu0 0
        %9522 = vmatpush1.bf16.msra.mxu0 %v9501
        %9523 = vmatprep.subr.bf16.mxu0 0
        %9524 = vmatpush1.bf16.msra.mxu0 %v9502
        %9525 = vmatprep.subr.bf16.mxu0 0
        %9526 = vmatpush1.bf16.msra.mxu0 %v9503
        %9527 = vmatprep.subr.bf16.mxu0 0
        %9528 = vmatpush1.bf16.msra.mxu0 %v9504
        %9529 = vmatprep.subr.bf16.mxu0 0
        %9530 = vmatpush1.bf16.msra.mxu0 0
        %9531 = vmatprep.subr.bf16.mxu0 0
        %9532 = vmatpush1.bf16.msra.mxu0 0
        %9533 = vmatprep.subr.bf16.mxu0 0
        %9534 = vmatpush1.bf16.msra.mxu0 0
        %9535 = vmatprep.subr.bf16.mxu0 0
        %9536 = vmatpush1.bf16.msra.mxu0 0
        %9537 = vmatprep.subr.bf16.mxu0 0
        %9538 = vmatpush1.bf16.msra.mxu0 0
        %9539 = vmatprep.subr.bf16.mxu0 0
        %9540 = vmatpush1.bf16.msra.mxu0 0
        %9541 = vmatprep.subr.bf16.mxu0 0
        %9542 = vmatpush1.bf16.msra.mxu0 0
        %9543 = vmatprep.subr.bf16.mxu0 0
        %9544 = vmatpush1.bf16.msra.mxu0 0
        %9545 = vmatprep.mubr.bf16.mxu0 0
        %9546 = vmatmul.mubr.bf16.gmra.mrb[0].mxu0 %v9433
        %v9547 = vpop.f32.mrb[0].mxu0
        %v9548 = vadd.f32 0.0, %v9547
        %v9549 = vpop.f32.mrb[0].mxu0
        %v9550 = vpop.f32.mrb[0].mxu0
        %v9551 = vadd.f32 0.0, %v9550
        %v9552 = vpop.f32.mrb[0].mxu0
        %9553 = vmatprep.mubr.bf16.mxu0 0
        %9554 = vmatmul.mubr.bf16.gmra.mrb[0].mxu0 %v9434
        %v9555 = vpop.f32.mrb[0].mxu0
        %v9556 = vadd.f32 0.0, %v9555
        %v9557 = vpop.f32.mrb[0].mxu0
        %v9558 = vpop.f32.mrb[0].mxu0
        %v9559 = vadd.f32 0.0, %v9558
        %v9560 = vpop.f32.mrb[0].mxu0
        %9561 = vmatprep.mubr.bf16.mxu0 0
        %9562 = vmatmul.mubr.bf16.gmra.mrb[0].mxu0 %v9435
        %v9563 = vpop.f32.mrb[0].mxu0
        %v9564 = vadd.f32 0.0, %v9563
        %v9565 = vpop.f32.mrb[0].mxu0
        %v9566 = vpop.f32.mrb[0].mxu0
        %v9567 = vadd.f32 0.0, %v9566
        %v9568 = vpop.f32.mrb[0].mxu0
        %9569 = vmatprep.mubr.bf16.mxu0 0
        %9570 = vmatmul.mubr.bf16.gmra.mrb[0].mxu0 %v9436
        %v9571 = vpop.f32.mrb[0].mxu0
        %v9572 = vadd.f32 0.0, %v9571
        %v9573 = vpop.f32.mrb[0].mxu0
        %v9574 = vpop.f32.mrb[0].mxu0
        %v9575 = vadd.f32 0.0, %v9574
        %v9576 = vpop.f32.mrb[0].mxu0
        %9577 = vmatprep.mubr.bf16.mxu0 0
        %9578 = vmatmul.mubr.bf16.gmra.mrb[0].mxu0 %v9437
        %v9579 = vpop.f32.mrb[0].mxu0
        %v9580 = vadd.f32 0.0, %v9579
        %v9581 = vpop.f32.mrb[0].mxu0
        %v9582 = vpop.f32.mrb[0].mxu0
        %v9583 = vadd.f32 0.0, %v9582
        %v9584 = vpop.f32.mrb[0].mxu0
        %9585 = vmatprep.mubr.bf16.mxu0 0
        %9586 = vmatmul.mubr.bf16.gmra.mrb[0].mxu0 %v9438
        %v9587 = vpop.f32.mrb[0].mxu0
        %v9588 = vadd.f32 0.0, %v9587
        %v9589 = vpop.f32.mrb[0].mxu0
        %v9590 = vpop.f32.mrb[0].mxu0
        %v9591 = vadd.f32 0.0, %v9590
        %v9592 = vpop.f32.mrb[0].mxu0
        %9593 = vmatprep.mubr.bf16.mxu0 0
        %9594 = vmatmul.mubr.bf16.gmra.mrb[0].mxu0 %v9439
        %v9595 = vpop.f32.mrb[0].mxu0
        %v9596 = vadd.f32 0.0, %v9595
        %v9597 = vpop.f32.mrb[0].mxu0
        %v9598 = vpop.f32.mrb[0].mxu0
        %v9599 = vadd.f32 0.0, %v9598
        %v9600 = vpop.f32.mrb[0].mxu0
        %9601 = vmatprep.mubr.bf16.mxu0 0
        %9602 = vmatmul.mubr.bf16.gmra.mrb[0].mxu0 %v9440
        %v9603 = vpop.f32.mrb[0].mxu0
        %v9604 = vadd.f32 0.0, %v9603
        %v9605 = vpop.f32.mrb[0].mxu0
        %v9606 = vpop.f32.mrb[0].mxu0
        %v9607 = vadd.f32 0.0, %v9606
        %v9608 = vpop.f32.mrb[0].mxu0
        %9609 = vmatprep.mubr.bf16.mxu0 0
        %9610 = vmatmul.mubr.bf16.gmra.mrb[0].mxu0 %v9441
        %v9611 = vpop.f32.mrb[0].mxu0
        %v9612 = vadd.f32 0.0, %v9611
        %v9613 = vpop.f32.mrb[0].mxu0
        %v9614 = vpop.f32.mrb[0].mxu0
        %v9615 = vadd.f32 0.0, %v9614
        %v9616 = vpop.f32.mrb[0].mxu0
        %9617 = vmatprep.mubr.bf16.mxu0 0
        %9618 = vmatmul.mubr.bf16.gmra.mrb[0].mxu0 %v9442
        %v9619 = vpop.f32.mrb[0].mxu0
        %v9620 = vadd.f32 0.0, %v9619
        %v9621 = vpop.f32.mrb[0].mxu0
        %v9622 = vpop.f32.mrb[0].mxu0
        %v9623 = vadd.f32 0.0, %v9622
        %v9624 = vpop.f32.mrb[0].mxu0
        %9625 = vmatprep.mubr.bf16.mxu0 0
        %9626 = vmatmul.mubr.bf16.gmra.mrb[0].mxu0 %v9443
        %v9627 = vpop.f32.mrb[0].mxu0
        %v9628 = vadd.f32 0.0, %v9627
        %v9629 = vpop.f32.mrb[0].mxu0
        %v9630 = vpop.f32.mrb[0].mxu0
        %v9631 = vadd.f32 0.0, %v9630
        %v9632 = vpop.f32.mrb[0].mxu0
        %9633 = vmatprep.mubr.bf16.mxu0 0
        %9634 = vmatmul.mubr.bf16.gmra.mrb[0].mxu0 %v9444
        %v9635 = vpop.f32.mrb[0].mxu0
        %v9636 = vadd.f32 0.0, %v9635
        %v9637 = vpop.f32.mrb[0].mxu0
        %v9638 = vpop.f32.mrb[0].mxu0
        %v9639 = vadd.f32 0.0, %v9638
        %v9640 = vpop.f32.mrb[0].mxu0
        %9641 = vmatprep.mubr.bf16.mxu0 0
        %9642 = vmatmul.mubr.bf16.gmra.mrb[0].mxu0 %v9445
        %v9643 = vpop.f32.mrb[0].mxu0
        %v9644 = vadd.f32 0.0, %v9643
        %v9645 = vpop.f32.mrb[0].mxu0
        %v9646 = vpop.f32.mrb[0].mxu0
        %v9647 = vadd.f32 0.0, %v9646
        %v9648 = vpop.f32.mrb[0].mxu0
        %9649 = vmatprep.mubr.bf16.mxu0 0
        %9650 = vmatmul.mubr.bf16.gmra.mrb[0].mxu0 %v9446
        %v9651 = vpop.f32.mrb[0].mxu0
        %v9652 = vadd.f32 0.0, %v9651
        %v9653 = vpop.f32.mrb[0].mxu0
        %v9654 = vpop.f32.mrb[0].mxu0
        %v9655 = vadd.f32 0.0, %v9654
        %v9656 = vpop.f32.mrb[0].mxu0
        %9657 = vmatprep.mubr.bf16.mxu0 0
        %9658 = vmatmul.mubr.bf16.gmra.mrb[0].mxu0 %v9447
        %v9659 = vpop.f32.mrb[0].mxu0
        %v9660 = vadd.f32 0.0, %v9659
        %v9661 = vpop.f32.mrb[0].mxu0
        %v9662 = vpop.f32.mrb[0].mxu0
        %v9663 = vadd.f32 0.0, %v9662
        %v9664 = vpop.f32.mrb[0].mxu0
        %9665 = vmatprep.mubr.bf16.mxu0 0
        %9666 = vmatmul.mubr.bf16.gmra.mrb[0].mxu0 %v9448
        %v9667 = vpop.f32.mrb[0].mxu0
        %v9668 = vadd.f32 0.0, %v9667
        %v9669 = vpop.f32.mrb[0].mxu0
        %v9670 = vpop.f32.mrb[0].mxu0
        %v9671 = vadd.f32 0.0, %v9670
        %v9672 = vpop.f32.mrb[0].mxu0
        %9673 = vdwg.mxu0
        %v9674 = vadd.f32 %v8920, %v9548
        %v9675 = vadd.f32 %v8921, %v9551
        %v9676 = vadd.f32 %v8922, %v9556
        %v9677 = vadd.f32 %v8923, %v9559
        %v9678 = vadd.f32 %v8924, %v9564
        %v9679 = vadd.f32 %v8925, %v9567
        %v9680 = vadd.f32 %v8926, %v9572
        %v9681 = vadd.f32 %v8927, %v9575
        %v9682 = vadd.f32 %v8928, %v9580
        %v9683 = vadd.f32 %v8929, %v9583
        %v9684 = vadd.f32 %v8930, %v9588
        %v9685 = vadd.f32 %v8931, %v9591
        %v9686 = vadd.f32 %v8932, %v9596
        %v9687 = vadd.f32 %v8933, %v9599
        %v9688 = vadd.f32 %v8934, %v9604
        %v9689 = vadd.f32 %v8935, %v9607
        %v9690 = vadd.f32 %v8936, %v9612
        %v9691 = vadd.f32 %v8937, %v9615
        %v9692 = vadd.f32 %v8938, %v9620
        %v9693 = vadd.f32 %v8939, %v9623
        %v9694 = vadd.f32 %v8940, %v9628
        %v9695 = vadd.f32 %v8941, %v9631
        %v9696 = vadd.f32 %v8942, %v9636
        %v9697 = vadd.f32 %v8943, %v9639
        %v9698 = vadd.f32 %v8944, %v9644
        %v9699 = vadd.f32 %v8945, %v9647
        %v9700 = vadd.f32 %v8946, %v9652
        %v9701 = vadd.f32 %v8947, %v9655
        %v9702 = vadd.f32 %v8948, %v9660
        %v9703 = vadd.f32 %v8949, %v9663
        %v9704 = vadd.f32 %v8950, %v9668
        %v9705 = vadd.f32 %v8951, %v9671
        %v9706 = vld [vmem:[%s6928] sm:$0xe]
        %v9707 = vld [vmem:[%s6928 + $0xc] sm:$0xe]
        %v9708 = vld [vmem:[%s6928 + $0x18] sm:$0xe]
        %v9709 = vld [vmem:[%s6928 + $0x24] sm:$0xe]
        %v9710 = vld [vmem:[%s6928 + $0x30] sm:$0xe]
        %v9711 = vld [vmem:[%s6928 + $0x3c] sm:$0xe]
        %v9712 = vld [vmem:[%s6928 + $0x48] sm:$0xe]
        %v9713 = vld [vmem:[%s6928 + $0x54] sm:$0xe]
        %v9714 = vld [vmem:[%s6928 + $0x60] sm:$0xe]
        %v9715 = vld [vmem:[%s6928 + $0x6c] sm:$0xe]
        %v9716 = vld [vmem:[%s6928 + $0x78] sm:$0xe]
        %v9717 = vld [vmem:[%s6928 + $0x84] sm:$0xe]
        %v9718 = vld [vmem:[%s6928 + $0x90] sm:$0xe]
        %v9719 = vld [vmem:[%s6928 + $0x9c] sm:$0xe]
        %v9720 = vld [vmem:[%s6928 + $0xa8] sm:$0xe]
        %v9721 = vld [vmem:[%s6928 + $0xb4] sm:$0xe]
        %v9770 = vrot.slane %v9706, 5
        %v9771 = vrot.slane %v9770, 4
        %v9772 = vrot.slane %v8953, 5
        %v9773 = vsel %vm2690, %v9771, %v9772
        %v9774 = vrot.slane %v9772, 4
        %v9775 = vrot.slane %v8954, 5
        %v9776 = vsel %vm2690, %v9774, %v9775
        %v9777 = vrot.slane %v9707, 5
        %v9778 = vrot.slane %v9777, 4
        %v9779 = vrot.slane %v8956, 5
        %v9780 = vsel %vm2690, %v9778, %v9779
        %v9781 = vrot.slane %v9779, 4
        %v9782 = vrot.slane %v8957, 5
        %v9783 = vsel %vm2690, %v9781, %v9782
        %v9784 = vrot.slane %v9708, 5
        %v9785 = vrot.slane %v9784, 4
        %v9786 = vrot.slane %v8959, 5
        %v9787 = vsel %vm2690, %v9785, %v9786
        %v9788 = vrot.slane %v9786, 4
        %v9789 = vrot.slane %v8960, 5
        %v9790 = vsel %vm2690, %v9788, %v9789
        %v9791 = vrot.slane %v9709, 5
        %v9792 = vrot.slane %v9791, 4
        %v9793 = vrot.slane %v8962, 5
        %v9794 = vsel %vm2690, %v9792, %v9793
        %v9795 = vrot.slane %v9793, 4
        %v9796 = vrot.slane %v8963, 5
        %v9797 = vsel %vm2690, %v9795, %v9796
        %v9798 = vrot.slane %v9710, 5
        %v9799 = vrot.slane %v9798, 4
        %v9800 = vrot.slane %v8965, 5
        %v9801 = vsel %vm2690, %v9799, %v9800
        %v9802 = vrot.slane %v9800, 4
        %v9803 = vrot.slane %v8966, 5
        %v9804 = vsel %vm2690, %v9802, %v9803
        %v9805 = vrot.slane %v9711, 5
        %v9806 = vrot.slane %v9805, 4
        %v9807 = vrot.slane %v8968, 5
        %v9808 = vsel %vm2690, %v9806, %v9807
        %v9809 = vrot.slane %v9807, 4
        %v9810 = vrot.slane %v8969, 5
        %v9811 = vsel %vm2690, %v9809, %v9810
        %v9812 = vrot.slane %v9712, 5
        %v9813 = vrot.slane %v9812, 4
        %v9814 = vrot.slane %v8971, 5
        %v9815 = vsel %vm2690, %v9813, %v9814
        %v9816 = vrot.slane %v9814, 4
        %v9817 = vrot.slane %v8972, 5
        %v9818 = vsel %vm2690, %v9816, %v9817
        %v9819 = vrot.slane %v9713, 5
        %v9820 = vrot.slane %v9819, 4
        %v9821 = vrot.slane %v8974, 5
        %v9822 = vsel %vm2690, %v9820, %v9821
        %v9823 = vrot.slane %v9821, 4
        %v9824 = vrot.slane %v8975, 5
        %v9825 = vsel %vm2690, %v9823, %v9824
        %v9826 = vrot.slane %v9714, 5
        %v9827 = vrot.slane %v9826, 4
        %v9828 = vrot.slane %v8977, 5
        %v9829 = vsel %vm2690, %v9827, %v9828
        %v9830 = vrot.slane %v9828, 4
        %v9831 = vrot.slane %v8978, 5
        %v9832 = vsel %vm2690, %v9830, %v9831
        %v9833 = vrot.slane %v9715, 5
        %v9834 = vrot.slane %v9833, 4
        %v9835 = vrot.slane %v8980, 5
        %v9836 = vsel %vm2690, %v9834, %v9835
        %v9837 = vrot.slane %v9835, 4
        %v9838 = vrot.slane %v8981, 5
        %v9839 = vsel %vm2690, %v9837, %v9838
        %v9840 = vrot.slane %v9716, 5
        %v9841 = vrot.slane %v9840, 4
        %v9842 = vrot.slane %v8983, 5
        %v9843 = vsel %vm2690, %v9841, %v9842
        %v9844 = vrot.slane %v9842, 4
        %v9845 = vrot.slane %v8984, 5
        %v9846 = vsel %vm2690, %v9844, %v9845
        %v9847 = vrot.slane %v9717, 5
        %v9848 = vrot.slane %v9847, 4
        %v9849 = vrot.slane %v8986, 5
        %v9850 = vsel %vm2690, %v9848, %v9849
        %v9851 = vrot.slane %v9849, 4
        %v9852 = vrot.slane %v8987, 5
        %v9853 = vsel %vm2690, %v9851, %v9852
        %v9854 = vrot.slane %v9718, 5
        %v9855 = vrot.slane %v9854, 4
        %v9856 = vrot.slane %v8989, 5
        %v9857 = vsel %vm2690, %v9855, %v9856
        %v9858 = vrot.slane %v9856, 4
        %v9859 = vrot.slane %v8990, 5
        %v9860 = vsel %vm2690, %v9858, %v9859
        %v9861 = vrot.slane %v9719, 5
        %v9862 = vrot.slane %v9861, 4
        %v9863 = vrot.slane %v8992, 5
        %v9864 = vsel %vm2690, %v9862, %v9863
        %v9865 = vrot.slane %v9863, 4
        %v9866 = vrot.slane %v8993, 5
        %v9867 = vsel %vm2690, %v9865, %v9866
        %v9868 = vrot.slane %v9720, 5
        %v9869 = vrot.slane %v9868, 4
        %v9870 = vrot.slane %v8995, 5
        %v9871 = vsel %vm2690, %v9869, %v9870
        %v9872 = vrot.slane %v9870, 4
        %v9873 = vrot.slane %v8996, 5
        %v9874 = vsel %vm2690, %v9872, %v9873
        %v9875 = vrot.slane %v9721, 5
        %v9876 = vrot.slane %v9875, 4
        %v9877 = vrot.slane %v8998, 5
        %v9878 = vsel %vm2690, %v9876, %v9877
        %v9879 = vrot.slane %v9877, 4
        %v9880 = vrot.slane %v8999, 5
        %v9881 = vsel %vm2690, %v9879, %v9880
        %s9882 = scalar_lea.vmem [#allocation15], 320
        %v9883 = vld [vmem:[%s9882] sm:$0xf]
        %v9884 = vld [vmem:[%s9882 + $0x4] sm:$0xf]
        %v9885 = vld [vmem:[%s9882 + $0x8] sm:$0xf]
        %v9886 = vld [vmem:[%s9882 + $0xc] sm:$0xf]
        %v9887 = vld [vmem:[%s9882 + $0x10] sm:$0xf]
        %v9888 = vld [vmem:[%s9882 + $0x14] sm:$0xf]
        %v9889 = vld [vmem:[%s9882 + $0x18] sm:$0xf]
        %v9890 = vld [vmem:[%s9882 + $0x1c] sm:$0xf]
        %v9891 = vld [vmem:[%s9882 + $0x20] sm:$0xf]
        %v9892 = vld [vmem:[%s9882 + $0x24] sm:$0xf]
        %v9893 = vld [vmem:[%s9882 + $0x28] sm:$0xf]
        %v9894 = vld [vmem:[%s9882 + $0x2c] sm:$0xf]
        %v9895 = vld [vmem:[%s9882 + $0x30] sm:$0xf]
        %v9896 = vld [vmem:[%s9882 + $0x34] sm:$0xf]
        %v9897 = vld [vmem:[%s9882 + $0x38] sm:$0xf]
        %v9898 = vld [vmem:[%s9882 + $0x3c] sm:$0xf]
        %v9899 = vunpack.c.l.b16 %v9773
        %v9900 = vunpack.c.l.b16 %v9776
        %v9901 = vunpack.c.l.b16 %v9780
        %v9902 = vunpack.c.l.b16 %v9783
        %v9903 = vunpack.c.l.b16 %v9787
        %v9904 = vunpack.c.l.b16 %v9790
        %v9905 = vunpack.c.l.b16 %v9794
        %v9906 = vunpack.c.l.b16 %v9797
        %v9907 = vunpack.c.l.b16 %v9801
        %v9908 = vunpack.c.l.b16 %v9804
        %v9909 = vunpack.c.l.b16 %v9808
        %v9910 = vunpack.c.l.b16 %v9811
        %v9911 = vunpack.c.l.b16 %v9815
        %v9912 = vunpack.c.l.b16 %v9818
        %v9913 = vunpack.c.l.b16 %v9822
        %v9914 = vunpack.c.l.b16 %v9825
        %v9915 = vunpack.c.l.b16 %v9829
        %v9916 = vunpack.c.l.b16 %v9832
        %v9917 = vunpack.c.l.b16 %v9836
        %v9918 = vunpack.c.l.b16 %v9839
        %v9919 = vunpack.c.l.b16 %v9843
        %v9920 = vunpack.c.l.b16 %v9846
        %v9921 = vunpack.c.l.b16 %v9850
        %v9922 = vunpack.c.l.b16 %v9853
        %v9923 = vunpack.c.l.b16 %v9857
        %v9924 = vunpack.c.l.b16 %v9860
        %v9925 = vunpack.c.l.b16 %v9864
        %v9926 = vunpack.c.l.b16 %v9867
        %v9927 = vunpack.c.l.b16 %v9871
        %v9928 = vunpack.c.l.b16 %v9874
        %v9929 = vunpack.c.l.b16 %v9878
        %v9930 = vunpack.c.l.b16 %v9881
        %v9931 = vpack.c.b16 %v9900, %v9899
        %v9932 = vpack.c.b16 %v9902, %v9901
        %v9933 = vpack.c.b16 %v9904, %v9903
        %v9934 = vpack.c.b16 %v9906, %v9905
        %v9935 = vpack.c.b16 %v9908, %v9907
        %v9936 = vpack.c.b16 %v9910, %v9909
        %v9937 = vpack.c.b16 %v9912, %v9911
        %v9938 = vpack.c.b16 %v9914, %v9913
        %v9939 = vpack.c.b16 %v9916, %v9915
        %v9940 = vpack.c.b16 %v9918, %v9917
        %v9941 = vpack.c.b16 %v9920, %v9919
        %v9942 = vpack.c.b16 %v9922, %v9921
        %v9943 = vpack.c.b16 %v9924, %v9923
        %v9944 = vpack.c.b16 %v9926, %v9925
        %v9945 = vpack.c.b16 %v9928, %v9927
        %v9946 = vpack.c.b16 %v9930, %v9929
        %v9979 = vunpack.c.l.b16 %v9883
        %v9980 = vunpack.c.l.b16 %v9884
        %v9981 = vunpack.c.l.b16 %v9885
        %v9982 = vunpack.c.l.b16 %v9886
        %v9983 = vunpack.c.l.b16 %v9887
        %v9984 = vunpack.c.l.b16 %v9888
        %v9985 = vunpack.c.l.b16 %v9889
        %v9986 = vunpack.c.l.b16 %v9890
        %v9987 = vunpack.c.l.b16 %v9891
        %v9988 = vunpack.c.l.b16 %v9892
        %v9989 = vunpack.c.l.b16 %v9893
        %v9990 = vunpack.c.l.b16 %v9894
        %v9991 = vunpack.c.l.b16 %v9895
        %v9992 = vunpack.c.l.b16 %v9896
        %v9993 = vunpack.c.l.b16 %v9897
        %v9994 = vunpack.c.l.b16 %v9898
        %v9995 = vpack.c.b16 %v9980, %v9979
        %v9996 = vpack.c.b16 %v9982, %v9981
        %v9997 = vpack.c.b16 %v9984, %v9983
        %v9998 = vpack.c.b16 %v9986, %v9985
        %v9999 = vpack.c.b16 %v9988, %v9987
        %v10000 = vpack.c.b16 %v9990, %v9989
        %v10001 = vpack.c.b16 %v9992, %v9991
        %v10002 = vpack.c.b16 %v9994, %v9993
        %10011 = vmatprep.subr.bf16.mxu0 0
        %10012 = vmatpush1.bf16.msra.mxu0 %v9995
        %10013 = vmatprep.subr.bf16.mxu0 0
        %10014 = vmatpush1.bf16.msra.mxu0 %v9996
        %10015 = vmatprep.subr.bf16.mxu0 0
        %10016 = vmatpush1.bf16.msra.mxu0 %v9997
        %10017 = vmatprep.subr.bf16.mxu0 0
        %10018 = vmatpush1.bf16.msra.mxu0 %v9998
        %10019 = vmatprep.subr.bf16.mxu0 0
        %10020 = vmatpush1.bf16.msra.mxu0 %v9999
        %10021 = vmatprep.subr.bf16.mxu0 0
        %10022 = vmatpush1.bf16.msra.mxu0 %v10000
        %10023 = vmatprep.subr.bf16.mxu0 0
        %10024 = vmatpush1.bf16.msra.mxu0 %v10001
        %10025 = vmatprep.subr.bf16.mxu0 0
        %10026 = vmatpush1.bf16.msra.mxu0 %v10002
        %10027 = vmatprep.subr.bf16.mxu0 0
        %10028 = vmatpush1.bf16.msra.mxu0 0
        %10029 = vmatprep.subr.bf16.mxu0 0
        %10030 = vmatpush1.bf16.msra.mxu0 0
        %10031 = vmatprep.subr.bf16.mxu0 0
        %10032 = vmatpush1.bf16.msra.mxu0 0
        %10033 = vmatprep.subr.bf16.mxu0 0
        %10034 = vmatpush1.bf16.msra.mxu0 0
        %10035 = vmatprep.subr.bf16.mxu0 0
        %10036 = vmatpush1.bf16.msra.mxu0 0
        %10037 = vmatprep.subr.bf16.mxu0 0
        %10038 = vmatpush1.bf16.msra.mxu0 0
        %10039 = vmatprep.subr.bf16.mxu0 0
        %10040 = vmatpush1.bf16.msra.mxu0 0
        %10041 = vmatprep.subr.bf16.mxu0 0
        %10042 = vmatpush1.bf16.msra.mxu0 0
        %10043 = vmatprep.mubr.bf16.mxu0 0
        %10044 = vmatmul.mubr.bf16.gmra.mrb[0].mxu0 %v9931
        %v10045 = vpop.f32.mrb[0].mxu0
        %v10046 = vadd.f32 0.0, %v10045
        %v10047 = vpop.f32.mrb[0].mxu0
        %v10048 = vpop.f32.mrb[0].mxu0
        %v10049 = vadd.f32 0.0, %v10048
        %v10050 = vpop.f32.mrb[0].mxu0
        %10051 = vmatprep.mubr.bf16.mxu0 0
        %10052 = vmatmul.mubr.bf16.gmra.mrb[0].mxu0 %v9932
        %v10053 = vpop.f32.mrb[0].mxu0
        %v10054 = vadd.f32 0.0, %v10053
        %v10055 = vpop.f32.mrb[0].mxu0
        %v10056 = vpop.f32.mrb[0].mxu0
        %v10057 = vadd.f32 0.0, %v10056
        %v10058 = vpop.f32.mrb[0].mxu0
        %10059 = vmatprep.mubr.bf16.mxu0 0
        %10060 = vmatmul.mubr.bf16.gmra.mrb[0].mxu0 %v9933
        %v10061 = vpop.f32.mrb[0].mxu0
        %v10062 = vadd.f32 0.0, %v10061
        %v10063 = vpop.f32.mrb[0].mxu0
        %v10064 = vpop.f32.mrb[0].mxu0
        %v10065 = vadd.f32 0.0, %v10064
        %v10066 = vpop.f32.mrb[0].mxu0
        %10067 = vmatprep.mubr.bf16.mxu0 0
        %10068 = vmatmul.mubr.bf16.gmra.mrb[0].mxu0 %v9934
        %v10069 = vpop.f32.mrb[0].mxu0
        %v10070 = vadd.f32 0.0, %v10069
        %v10071 = vpop.f32.mrb[0].mxu0
        %v10072 = vpop.f32.mrb[0].mxu0
        %v10073 = vadd.f32 0.0, %v10072
        %v10074 = vpop.f32.mrb[0].mxu0
        %10075 = vmatprep.mubr.bf16.mxu0 0
        %10076 = vmatmul.mubr.bf16.gmra.mrb[0].mxu0 %v9935
        %v10077 = vpop.f32.mrb[0].mxu0
        %v10078 = vadd.f32 0.0, %v10077
        %v10079 = vpop.f32.mrb[0].mxu0
        %v10080 = vpop.f32.mrb[0].mxu0
        %v10081 = vadd.f32 0.0, %v10080
        %v10082 = vpop.f32.mrb[0].mxu0
        %10083 = vmatprep.mubr.bf16.mxu0 0
        %10084 = vmatmul.mubr.bf16.gmra.mrb[0].mxu0 %v9936
        %v10085 = vpop.f32.mrb[0].mxu0
        %v10086 = vadd.f32 0.0, %v10085
        %v10087 = vpop.f32.mrb[0].mxu0
        %v10088 = vpop.f32.mrb[0].mxu0
        %v10089 = vadd.f32 0.0, %v10088
        %v10090 = vpop.f32.mrb[0].mxu0
        %10091 = vmatprep.mubr.bf16.mxu0 0
        %10092 = vmatmul.mubr.bf16.gmra.mrb[0].mxu0 %v9937
        %v10093 = vpop.f32.mrb[0].mxu0
        %v10094 = vadd.f32 0.0, %v10093
        %v10095 = vpop.f32.mrb[0].mxu0
        %v10096 = vpop.f32.mrb[0].mxu0
        %v10097 = vadd.f32 0.0, %v10096
        %v10098 = vpop.f32.mrb[0].mxu0
        %10099 = vmatprep.mubr.bf16.mxu0 0
        %10100 = vmatmul.mubr.bf16.gmra.mrb[0].mxu0 %v9938
        %v10101 = vpop.f32.mrb[0].mxu0
        %v10102 = vadd.f32 0.0, %v10101
        %v10103 = vpop.f32.mrb[0].mxu0
        %v10104 = vpop.f32.mrb[0].mxu0
        %v10105 = vadd.f32 0.0, %v10104
        %v10106 = vpop.f32.mrb[0].mxu0
        %10107 = vmatprep.mubr.bf16.mxu0 0
        %10108 = vmatmul.mubr.bf16.gmra.mrb[0].mxu0 %v9939
        %v10109 = vpop.f32.mrb[0].mxu0
        %v10110 = vadd.f32 0.0, %v10109
        %v10111 = vpop.f32.mrb[0].mxu0
        %v10112 = vpop.f32.mrb[0].mxu0
        %v10113 = vadd.f32 0.0, %v10112
        %v10114 = vpop.f32.mrb[0].mxu0
        %10115 = vmatprep.mubr.bf16.mxu0 0
        %10116 = vmatmul.mubr.bf16.gmra.mrb[0].mxu0 %v9940
        %v10117 = vpop.f32.mrb[0].mxu0
        %v10118 = vadd.f32 0.0, %v10117
        %v10119 = vpop.f32.mrb[0].mxu0
        %v10120 = vpop.f32.mrb[0].mxu0
        %v10121 = vadd.f32 0.0, %v10120
        %v10122 = vpop.f32.mrb[0].mxu0
        %10123 = vmatprep.mubr.bf16.mxu0 0
        %10124 = vmatmul.mubr.bf16.gmra.mrb[0].mxu0 %v9941
        %v10125 = vpop.f32.mrb[0].mxu0
        %v10126 = vadd.f32 0.0, %v10125
        %v10127 = vpop.f32.mrb[0].mxu0
        %v10128 = vpop.f32.mrb[0].mxu0
        %v10129 = vadd.f32 0.0, %v10128
        %v10130 = vpop.f32.mrb[0].mxu0
        %10131 = vmatprep.mubr.bf16.mxu0 0
        %10132 = vmatmul.mubr.bf16.gmra.mrb[0].mxu0 %v9942
        %v10133 = vpop.f32.mrb[0].mxu0
        %v10134 = vadd.f32 0.0, %v10133
        %v10135 = vpop.f32.mrb[0].mxu0
        %v10136 = vpop.f32.mrb[0].mxu0
        %v10137 = vadd.f32 0.0, %v10136
        %v10138 = vpop.f32.mrb[0].mxu0
        %10139 = vmatprep.mubr.bf16.mxu0 0
        %10140 = vmatmul.mubr.bf16.gmra.mrb[0].mxu0 %v9943
        %v10141 = vpop.f32.mrb[0].mxu0
        %v10142 = vadd.f32 0.0, %v10141
        %v10143 = vpop.f32.mrb[0].mxu0
        %v10144 = vpop.f32.mrb[0].mxu0
        %v10145 = vadd.f32 0.0, %v10144
        %v10146 = vpop.f32.mrb[0].mxu0
        %10147 = vmatprep.mubr.bf16.mxu0 0
        %10148 = vmatmul.mubr.bf16.gmra.mrb[0].mxu0 %v9944
        %v10149 = vpop.f32.mrb[0].mxu0
        %v10150 = vadd.f32 0.0, %v10149
        %v10151 = vpop.f32.mrb[0].mxu0
        %v10152 = vpop.f32.mrb[0].mxu0
        %v10153 = vadd.f32 0.0, %v10152
        %v10154 = vpop.f32.mrb[0].mxu0
        %10155 = vmatprep.mubr.bf16.mxu0 0
        %10156 = vmatmul.mubr.bf16.gmra.mrb[0].mxu0 %v9945
        %v10157 = vpop.f32.mrb[0].mxu0
        %v10158 = vadd.f32 0.0, %v10157
        %v10159 = vpop.f32.mrb[0].mxu0
        %v10160 = vpop.f32.mrb[0].mxu0
        %v10161 = vadd.f32 0.0, %v10160
        %v10162 = vpop.f32.mrb[0].mxu0
        %10163 = vmatprep.mubr.bf16.mxu0 0
        %10164 = vmatmul.mubr.bf16.gmra.mrb[0].mxu0 %v9946
        %v10165 = vpop.f32.mrb[0].mxu0
        %v10166 = vadd.f32 0.0, %v10165
        %v10167 = vpop.f32.mrb[0].mxu0
        %v10168 = vpop.f32.mrb[0].mxu0
        %v10169 = vadd.f32 0.0, %v10168
        %v10170 = vpop.f32.mrb[0].mxu0
        %10171 = vdwg.mxu0
        %v10172 = vadd.f32 %v9674, %v10046
        %v10173 = vadd.f32 %v9675, %v10049
        %v10174 = vadd.f32 %v9676, %v10054
        %v10175 = vadd.f32 %v9677, %v10057
        %v10176 = vadd.f32 %v9678, %v10062
        %v10177 = vadd.f32 %v9679, %v10065
        %v10178 = vadd.f32 %v9680, %v10070
        %v10179 = vadd.f32 %v9681, %v10073
        %v10180 = vadd.f32 %v9682, %v10078
        %v10181 = vadd.f32 %v9683, %v10081
        %v10182 = vadd.f32 %v9684, %v10086
        %v10183 = vadd.f32 %v9685, %v10089
        %v10184 = vadd.f32 %v9686, %v10094
        %v10185 = vadd.f32 %v9687, %v10097
        %v10186 = vadd.f32 %v9688, %v10102
        %v10187 = vadd.f32 %v9689, %v10105
        %v10188 = vadd.f32 %v9690, %v10110
        %v10189 = vadd.f32 %v9691, %v10113
        %v10190 = vadd.f32 %v9692, %v10118
        %v10191 = vadd.f32 %v9693, %v10121
        %v10192 = vadd.f32 %v9694, %v10126
        %v10193 = vadd.f32 %v9695, %v10129
        %v10194 = vadd.f32 %v9696, %v10134
        %v10195 = vadd.f32 %v9697, %v10137
        %v10196 = vadd.f32 %v9698, %v10142
        %v10197 = vadd.f32 %v9699, %v10145
        %v10198 = vadd.f32 %v9700, %v10150
        %v10199 = vadd.f32 %v9701, %v10153
        %v10200 = vadd.f32 %v9702, %v10158
        %v10201 = vadd.f32 %v9703, %v10161
        %v10202 = vadd.f32 %v9704, %v10166
        %v10203 = vadd.f32 %v9705, %v10169
        %s10204 = scalar_lea.vmem [#allocation3], 24
        %v10205 = vld [vmem:[%s10204] sm:$0xf]
        %v10206 = vld [vmem:[%s10204 + $0x4] sm:$0xf]
        %v10207 = vld [vmem:[%s10204 + $0xc] sm:$0xf]
        %v10208 = vld [vmem:[%s10204 + $0x10] sm:$0xf]
        %v10209 = vld [vmem:[%s10204 + $0x18] sm:$0xf]
        %v10210 = vld [vmem:[%s10204 + $0x1c] sm:$0xf]
        %v10211 = vld [vmem:[%s10204 + $0x24] sm:$0xf]
        %v10212 = vld [vmem:[%s10204 + $0x28] sm:$0xf]
        %v10213 = vld [vmem:[%s10204 + $0x30] sm:$0xf]
        %v10214 = vld [vmem:[%s10204 + $0x34] sm:$0xf]
        %v10215 = vld [vmem:[%s10204 + $0x3c] sm:$0xf]
        %v10216 = vld [vmem:[%s10204 + $0x40] sm:$0xf]
        %v10217 = vld [vmem:[%s10204 + $0x48] sm:$0xf]
        %v10218 = vld [vmem:[%s10204 + $0x4c] sm:$0xf]
        %v10219 = vld [vmem:[%s10204 + $0x54] sm:$0xf]
        %v10220 = vld [vmem:[%s10204 + $0x58] sm:$0xf]
        %v10221 = vld [vmem:[%s10204 + $0x60] sm:$0xf]
        %v10222 = vld [vmem:[%s10204 + $0x64] sm:$0xf]
        %v10223 = vld [vmem:[%s10204 + $0x6c] sm:$0xf]
        %v10224 = vld [vmem:[%s10204 + $0x70] sm:$0xf]
        %v10225 = vld [vmem:[%s10204 + $0x78] sm:$0xf]
        %v10226 = vld [vmem:[%s10204 + $0x7c] sm:$0xf]
        %v10227 = vld [vmem:[%s10204 + $0x84] sm:$0xf]
        %v10228 = vld [vmem:[%s10204 + $0x88] sm:$0xf]
        %v10229 = vld [vmem:[%s10204 + $0x90] sm:$0xf]
        %v10230 = vld [vmem:[%s10204 + $0x94] sm:$0xf]
        %v10231 = vld [vmem:[%s10204 + $0x9c] sm:$0xf]
        %v10232 = vld [vmem:[%s10204 + $0xa0] sm:$0xf]
        %v10233 = vld [vmem:[%s10204 + $0xa8] sm:$0xf]
        %v10234 = vld [vmem:[%s10204 + $0xac] sm:$0xf]
        %v10235 = vld [vmem:[%s10204 + $0xb4] sm:$0xf]
        %v10236 = vld [vmem:[%s10204 + $0xb8] sm:$0xf]
        %s10237 = scalar_lea.vmem [#allocation15], 384
        %v10238 = vld [vmem:[%s10237] sm:$0xf]
        %v10239 = vld [vmem:[%s10237 + $0x4] sm:$0xf]
        %v10240 = vld [vmem:[%s10237 + $0x8] sm:$0xf]
        %v10241 = vld [vmem:[%s10237 + $0xc] sm:$0xf]
        %v10242 = vld [vmem:[%s10237 + $0x10] sm:$0xf]
        %v10243 = vld [vmem:[%s10237 + $0x14] sm:$0xf]
        %v10244 = vld [vmem:[%s10237 + $0x18] sm:$0xf]
        %v10245 = vld [vmem:[%s10237 + $0x1c] sm:$0xf]
        %v10246 = vld [vmem:[%s10237 + $0x20] sm:$0xf]
        %v10247 = vld [vmem:[%s10237 + $0x24] sm:$0xf]
        %v10248 = vld [vmem:[%s10237 + $0x28] sm:$0xf]
        %v10249 = vld [vmem:[%s10237 + $0x2c] sm:$0xf]
        %v10250 = vld [vmem:[%s10237 + $0x30] sm:$0xf]
        %v10251 = vld [vmem:[%s10237 + $0x34] sm:$0xf]
        %v10252 = vld [vmem:[%s10237 + $0x38] sm:$0xf]
        %v10253 = vld [vmem:[%s10237 + $0x3c] sm:$0xf]
        %v10286 = vunpack.c.l.b16 %v10205
        %v10287 = vunpack.c.l.b16 %v10206
        %v10288 = vunpack.c.l.b16 %v10207
        %v10289 = vunpack.c.l.b16 %v10208
        %v10290 = vunpack.c.l.b16 %v10209
        %v10291 = vunpack.c.l.b16 %v10210
        %v10292 = vunpack.c.l.b16 %v10211
        %v10293 = vunpack.c.l.b16 %v10212
        %v10294 = vunpack.c.l.b16 %v10213
        %v10295 = vunpack.c.l.b16 %v10214
        %v10296 = vunpack.c.l.b16 %v10215
        %v10297 = vunpack.c.l.b16 %v10216
        %v10298 = vunpack.c.l.b16 %v10217
        %v10299 = vunpack.c.l.b16 %v10218
        %v10300 = vunpack.c.l.b16 %v10219
        %v10301 = vunpack.c.l.b16 %v10220
        %v10302 = vunpack.c.l.b16 %v10221
        %v10303 = vunpack.c.l.b16 %v10222
        %v10304 = vunpack.c.l.b16 %v10223
        %v10305 = vunpack.c.l.b16 %v10224
        %v10306 = vunpack.c.l.b16 %v10225
        %v10307 = vunpack.c.l.b16 %v10226
        %v10308 = vunpack.c.l.b16 %v10227
        %v10309 = vunpack.c.l.b16 %v10228
        %v10310 = vunpack.c.l.b16 %v10229
        %v10311 = vunpack.c.l.b16 %v10230
        %v10312 = vunpack.c.l.b16 %v10231
        %v10313 = vunpack.c.l.b16 %v10232
        %v10314 = vunpack.c.l.b16 %v10233
        %v10315 = vunpack.c.l.b16 %v10234
        %v10316 = vunpack.c.l.b16 %v10235
        %v10317 = vunpack.c.l.b16 %v10236
        %v10318 = vpack.c.b16 %v10287, %v10286
        %v10319 = vpack.c.b16 %v10289, %v10288
        %v10320 = vpack.c.b16 %v10291, %v10290
        %v10321 = vpack.c.b16 %v10293, %v10292
        %v10322 = vpack.c.b16 %v10295, %v10294
        %v10323 = vpack.c.b16 %v10297, %v10296
        %v10324 = vpack.c.b16 %v10299, %v10298
        %v10325 = vpack.c.b16 %v10301, %v10300
        %v10326 = vpack.c.b16 %v10303, %v10302
        %v10327 = vpack.c.b16 %v10305, %v10304
        %v10328 = vpack.c.b16 %v10307, %v10306
        %v10329 = vpack.c.b16 %v10309, %v10308
        %v10330 = vpack.c.b16 %v10311, %v10310
        %v10331 = vpack.c.b16 %v10313, %v10312
        %v10332 = vpack.c.b16 %v10315, %v10314
        %v10333 = vpack.c.b16 %v10317, %v10316
        %v10366 = vunpack.c.l.b16 %v10238
        %v10367 = vunpack.c.l.b16 %v10239
        %v10368 = vunpack.c.l.b16 %v10240
        %v10369 = vunpack.c.l.b16 %v10241
        %v10370 = vunpack.c.l.b16 %v10242
        %v10371 = vunpack.c.l.b16 %v10243
        %v10372 = vunpack.c.l.b16 %v10244
        %v10373 = vunpack.c.l.b16 %v10245
        %v10374 = vunpack.c.l.b16 %v10246
        %v10375 = vunpack.c.l.b16 %v10247
        %v10376 = vunpack.c.l.b16 %v10248
        %v10377 = vunpack.c.l.b16 %v10249
        %v10378 = vunpack.c.l.b16 %v10250
        %v10379 = vunpack.c.l.b16 %v10251
        %v10380 = vunpack.c.l.b16 %v10252
        %v10381 = vunpack.c.l.b16 %v10253
        %v10382 = vpack.c.b16 %v10367, %v10366
        %v10383 = vpack.c.b16 %v10369, %v10368
        %v10384 = vpack.c.b16 %v10371, %v10370
        %v10385 = vpack.c.b16 %v10373, %v10372
        %v10386 = vpack.c.b16 %v10375, %v10374
        %v10387 = vpack.c.b16 %v10377, %v10376
        %v10388 = vpack.c.b16 %v10379, %v10378
        %v10389 = vpack.c.b16 %v10381, %v10380
        %10398 = vmatprep.subr.bf16.mxu0 0
        %10399 = vmatpush1.bf16.msra.mxu0 %v10382
        %10400 = vmatprep.subr.bf16.mxu0 0
        %10401 = vmatpush1.bf16.msra.mxu0 %v10383
        %10402 = vmatprep.subr.bf16.mxu0 0
        %10403 = vmatpush1.bf16.msra.mxu0 %v10384
        %10404 = vmatprep.subr.bf16.mxu0 0
        %10405 = vmatpush1.bf16.msra.mxu0 %v10385
        %10406 = vmatprep.subr.bf16.mxu0 0
        %10407 = vmatpush1.bf16.msra.mxu0 %v10386
        %10408 = vmatprep.subr.bf16.mxu0 0
        %10409 = vmatpush1.bf16.msra.mxu0 %v10387
        %10410 = vmatprep.subr.bf16.mxu0 0
        %10411 = vmatpush1.bf16.msra.mxu0 %v10388
        %10412 = vmatprep.subr.bf16.mxu0 0
        %10413 = vmatpush1.bf16.msra.mxu0 %v10389
        %10414 = vmatprep.subr.bf16.mxu0 0
        %10415 = vmatpush1.bf16.msra.mxu0 0
        %10416 = vmatprep.subr.bf16.mxu0 0
        %10417 = vmatpush1.bf16.msra.mxu0 0
        %10418 = vmatprep.subr.bf16.mxu0 0
        %10419 = vmatpush1.bf16.msra.mxu0 0
        %10420 = vmatprep.subr.bf16.mxu0 0
        %10421 = vmatpush1.bf16.msra.mxu0 0
        %10422 = vmatprep.subr.bf16.mxu0 0
        %10423 = vmatpush1.bf16.msra.mxu0 0
        %10424 = vmatprep.subr.bf16.mxu0 0
        %10425 = vmatpush1.bf16.msra.mxu0 0
        %10426 = vmatprep.subr.bf16.mxu0 0
        %10427 = vmatpush1.bf16.msra.mxu0 0
        %10428 = vmatprep.subr.bf16.mxu0 0
        %10429 = vmatpush1.bf16.msra.mxu0 0
        %10430 = vmatprep.mubr.bf16.mxu0 0
        %10431 = vmatmul.mubr.bf16.gmra.mrb[0].mxu0 %v10318
        %v10432 = vpop.f32.mrb[0].mxu0
        %v10433 = vadd.f32 0.0, %v10432
        %v10434 = vpop.f32.mrb[0].mxu0
        %v10435 = vpop.f32.mrb[0].mxu0
        %v10436 = vadd.f32 0.0, %v10435
        %v10437 = vpop.f32.mrb[0].mxu0
        %10438 = vmatprep.mubr.bf16.mxu0 0
        %10439 = vmatmul.mubr.bf16.gmra.mrb[0].mxu0 %v10319
        %v10440 = vpop.f32.mrb[0].mxu0
        %v10441 = vadd.f32 0.0, %v10440
        %v10442 = vpop.f32.mrb[0].mxu0
        %v10443 = vpop.f32.mrb[0].mxu0
        %v10444 = vadd.f32 0.0, %v10443
        %v10445 = vpop.f32.mrb[0].mxu0
        %10446 = vmatprep.mubr.bf16.mxu0 0
        %10447 = vmatmul.mubr.bf16.gmra.mrb[0].mxu0 %v10320
        %v10448 = vpop.f32.mrb[0].mxu0
        %v10449 = vadd.f32 0.0, %v10448
        %v10450 = vpop.f32.mrb[0].mxu0
        %v10451 = vpop.f32.mrb[0].mxu0
        %v10452 = vadd.f32 0.0, %v10451
        %v10453 = vpop.f32.mrb[0].mxu0
        %10454 = vmatprep.mubr.bf16.mxu0 0
        %10455 = vmatmul.mubr.bf16.gmra.mrb[0].mxu0 %v10321
        %v10456 = vpop.f32.mrb[0].mxu0
        %v10457 = vadd.f32 0.0, %v10456
        %v10458 = vpop.f32.mrb[0].mxu0
        %v10459 = vpop.f32.mrb[0].mxu0
        %v10460 = vadd.f32 0.0, %v10459
        %v10461 = vpop.f32.mrb[0].mxu0
        %10462 = vmatprep.mubr.bf16.mxu0 0
        %10463 = vmatmul.mubr.bf16.gmra.mrb[0].mxu0 %v10322
        %v10464 = vpop.f32.mrb[0].mxu0
        %v10465 = vadd.f32 0.0, %v10464
        %v10466 = vpop.f32.mrb[0].mxu0
        %v10467 = vpop.f32.mrb[0].mxu0
        %v10468 = vadd.f32 0.0, %v10467
        %v10469 = vpop.f32.mrb[0].mxu0
        %10470 = vmatprep.mubr.bf16.mxu0 0
        %10471 = vmatmul.mubr.bf16.gmra.mrb[0].mxu0 %v10323
        %v10472 = vpop.f32.mrb[0].mxu0
        %v10473 = vadd.f32 0.0, %v10472
        %v10474 = vpop.f32.mrb[0].mxu0
        %v10475 = vpop.f32.mrb[0].mxu0
        %v10476 = vadd.f32 0.0, %v10475
        %v10477 = vpop.f32.mrb[0].mxu0
        %10478 = vmatprep.mubr.bf16.mxu0 0
        %10479 = vmatmul.mubr.bf16.gmra.mrb[0].mxu0 %v10324
        %v10480 = vpop.f32.mrb[0].mxu0
        %v10481 = vadd.f32 0.0, %v10480
        %v10482 = vpop.f32.mrb[0].mxu0
        %v10483 = vpop.f32.mrb[0].mxu0
        %v10484 = vadd.f32 0.0, %v10483
        %v10485 = vpop.f32.mrb[0].mxu0
        %10486 = vmatprep.mubr.bf16.mxu0 0
        %10487 = vmatmul.mubr.bf16.gmra.mrb[0].mxu0 %v10325
        %v10488 = vpop.f32.mrb[0].mxu0
        %v10489 = vadd.f32 0.0, %v10488
        %v10490 = vpop.f32.mrb[0].mxu0
        %v10491 = vpop.f32.mrb[0].mxu0
        %v10492 = vadd.f32 0.0, %v10491
        %v10493 = vpop.f32.mrb[0].mxu0
        %10494 = vmatprep.mubr.bf16.mxu0 0
        %10495 = vmatmul.mubr.bf16.gmra.mrb[0].mxu0 %v10326
        %v10496 = vpop.f32.mrb[0].mxu0
        %v10497 = vadd.f32 0.0, %v10496
        %v10498 = vpop.f32.mrb[0].mxu0
        %v10499 = vpop.f32.mrb[0].mxu0
        %v10500 = vadd.f32 0.0, %v10499
        %v10501 = vpop.f32.mrb[0].mxu0
        %10502 = vmatprep.mubr.bf16.mxu0 0
        %10503 = vmatmul.mubr.bf16.gmra.mrb[0].mxu0 %v10327
        %v10504 = vpop.f32.mrb[0].mxu0
        %v10505 = vadd.f32 0.0, %v10504
        %v10506 = vpop.f32.mrb[0].mxu0
        %v10507 = vpop.f32.mrb[0].mxu0
        %v10508 = vadd.f32 0.0, %v10507
        %v10509 = vpop.f32.mrb[0].mxu0
        %10510 = vmatprep.mubr.bf16.mxu0 0
        %10511 = vmatmul.mubr.bf16.gmra.mrb[0].mxu0 %v10328
        %v10512 = vpop.f32.mrb[0].mxu0
        %v10513 = vadd.f32 0.0, %v10512
        %v10514 = vpop.f32.mrb[0].mxu0
        %v10515 = vpop.f32.mrb[0].mxu0
        %v10516 = vadd.f32 0.0, %v10515
        %v10517 = vpop.f32.mrb[0].mxu0
        %10518 = vmatprep.mubr.bf16.mxu0 0
        %10519 = vmatmul.mubr.bf16.gmra.mrb[0].mxu0 %v10329
        %v10520 = vpop.f32.mrb[0].mxu0
        %v10521 = vadd.f32 0.0, %v10520
        %v10522 = vpop.f32.mrb[0].mxu0
        %v10523 = vpop.f32.mrb[0].mxu0
        %v10524 = vadd.f32 0.0, %v10523
        %v10525 = vpop.f32.mrb[0].mxu0
        %10526 = vmatprep.mubr.bf16.mxu0 0
        %10527 = vmatmul.mubr.bf16.gmra.mrb[0].mxu0 %v10330
        %v10528 = vpop.f32.mrb[0].mxu0
        %v10529 = vadd.f32 0.0, %v10528
        %v10530 = vpop.f32.mrb[0].mxu0
        %v10531 = vpop.f32.mrb[0].mxu0
        %v10532 = vadd.f32 0.0, %v10531
        %v10533 = vpop.f32.mrb[0].mxu0
        %10534 = vmatprep.mubr.bf16.mxu0 0
        %10535 = vmatmul.mubr.bf16.gmra.mrb[0].mxu0 %v10331
        %v10536 = vpop.f32.mrb[0].mxu0
        %v10537 = vadd.f32 0.0, %v10536
        %v10538 = vpop.f32.mrb[0].mxu0
        %v10539 = vpop.f32.mrb[0].mxu0
        %v10540 = vadd.f32 0.0, %v10539
        %v10541 = vpop.f32.mrb[0].mxu0
        %10542 = vmatprep.mubr.bf16.mxu0 0
        %10543 = vmatmul.mubr.bf16.gmra.mrb[0].mxu0 %v10332
        %v10544 = vpop.f32.mrb[0].mxu0
        %v10545 = vadd.f32 0.0, %v10544
        %v10546 = vpop.f32.mrb[0].mxu0
        %v10547 = vpop.f32.mrb[0].mxu0
        %v10548 = vadd.f32 0.0, %v10547
        %v10549 = vpop.f32.mrb[0].mxu0
        %10550 = vmatprep.mubr.bf16.mxu0 0
        %10551 = vmatmul.mubr.bf16.gmra.mrb[0].mxu0 %v10333
        %v10552 = vpop.f32.mrb[0].mxu0
        %v10553 = vadd.f32 0.0, %v10552
        %v10554 = vpop.f32.mrb[0].mxu0
        %v10555 = vpop.f32.mrb[0].mxu0
        %v10556 = vadd.f32 0.0, %v10555
        %v10557 = vpop.f32.mrb[0].mxu0
        %10558 = vdwg.mxu0
        %v10559 = vadd.f32 %v10172, %v10433
        %v10560 = vadd.f32 %v10173, %v10436
        %v10561 = vadd.f32 %v10174, %v10441
        %v10562 = vadd.f32 %v10175, %v10444
        %v10563 = vadd.f32 %v10176, %v10449
        %v10564 = vadd.f32 %v10177, %v10452
        %v10565 = vadd.f32 %v10178, %v10457
        %v10566 = vadd.f32 %v10179, %v10460
        %v10567 = vadd.f32 %v10180, %v10465
        %v10568 = vadd.f32 %v10181, %v10468
        %v10569 = vadd.f32 %v10182, %v10473
        %v10570 = vadd.f32 %v10183, %v10476
        %v10571 = vadd.f32 %v10184, %v10481
        %v10572 = vadd.f32 %v10185, %v10484
        %v10573 = vadd.f32 %v10186, %v10489
        %v10574 = vadd.f32 %v10187, %v10492
        %v10575 = vadd.f32 %v10188, %v10497
        %v10576 = vadd.f32 %v10189, %v10500
        %v10577 = vadd.f32 %v10190, %v10505
        %v10578 = vadd.f32 %v10191, %v10508
        %v10579 = vadd.f32 %v10192, %v10513
        %v10580 = vadd.f32 %v10193, %v10516
        %v10581 = vadd.f32 %v10194, %v10521
        %v10582 = vadd.f32 %v10195, %v10524
        %v10583 = vadd.f32 %v10196, %v10529
        %v10584 = vadd.f32 %v10197, %v10532
        %v10585 = vadd.f32 %v10198, %v10537
        %v10586 = vadd.f32 %v10199, %v10540
        %v10587 = vadd.f32 %v10200, %v10545
        %v10588 = vadd.f32 %v10201, %v10548
        %v10589 = vadd.f32 %v10202, %v10553
        %v10590 = vadd.f32 %v10203, %v10556
        %v10591 = vld [vmem:[%s10204] sm:$0xf]
        %v10592 = vld [vmem:[%s10204 + $0x4] sm:$0xf]
        %v10593 = vld [vmem:[%s10204 + $0x8] sm:$0x1]
        %v10594 = vld [vmem:[%s10204 + $0xc] sm:$0xf]
        %v10595 = vld [vmem:[%s10204 + $0x10] sm:$0xf]
        %v10596 = vld [vmem:[%s10204 + $0x14] sm:$0x1]
        %v10597 = vld [vmem:[%s10204 + $0x18] sm:$0xf]
        %v10598 = vld [vmem:[%s10204 + $0x1c] sm:$0xf]
        %v10599 = vld [vmem:[%s10204 + $0x20] sm:$0x1]
        %v10600 = vld [vmem:[%s10204 + $0x24] sm:$0xf]
        %v10601 = vld [vmem:[%s10204 + $0x28] sm:$0xf]
        %v10602 = vld [vmem:[%s10204 + $0x2c] sm:$0x1]
        %v10603 = vld [vmem:[%s10204 + $0x30] sm:$0xf]
        %v10604 = vld [vmem:[%s10204 + $0x34] sm:$0xf]
        %v10605 = vld [vmem:[%s10204 + $0x38] sm:$0x1]
        %v10606 = vld [vmem:[%s10204 + $0x3c] sm:$0xf]
        %v10607 = vld [vmem:[%s10204 + $0x40] sm:$0xf]
        %v10608 = vld [vmem:[%s10204 + $0x44] sm:$0x1]
        %v10609 = vld [vmem:[%s10204 + $0x48] sm:$0xf]
        %v10610 = vld [vmem:[%s10204 + $0x4c] sm:$0xf]
        %v10611 = vld [vmem:[%s10204 + $0x50] sm:$0x1]
        %v10612 = vld [vmem:[%s10204 + $0x54] sm:$0xf]
        %v10613 = vld [vmem:[%s10204 + $0x58] sm:$0xf]
        %v10614 = vld [vmem:[%s10204 + $0x5c] sm:$0x1]
        %v10615 = vld [vmem:[%s10204 + $0x60] sm:$0xf]
        %v10616 = vld [vmem:[%s10204 + $0x64] sm:$0xf]
        %v10617 = vld [vmem:[%s10204 + $0x68] sm:$0x1]
        %v10618 = vld [vmem:[%s10204 + $0x6c] sm:$0xf]
        %v10619 = vld [vmem:[%s10204 + $0x70] sm:$0xf]
        %v10620 = vld [vmem:[%s10204 + $0x74] sm:$0x1]
        %v10621 = vld [vmem:[%s10204 + $0x78] sm:$0xf]
        %v10622 = vld [vmem:[%s10204 + $0x7c] sm:$0xf]
        %v10623 = vld [vmem:[%s10204 + $0x80] sm:$0x1]
        %v10624 = vld [vmem:[%s10204 + $0x84] sm:$0xf]
        %v10625 = vld [vmem:[%s10204 + $0x88] sm:$0xf]
        %v10626 = vld [vmem:[%s10204 + $0x8c] sm:$0x1]
        %v10627 = vld [vmem:[%s10204 + $0x90] sm:$0xf]
        %v10628 = vld [vmem:[%s10204 + $0x94] sm:$0xf]
        %v10629 = vld [vmem:[%s10204 + $0x98] sm:$0x1]
        %v10630 = vld [vmem:[%s10204 + $0x9c] sm:$0xf]
        %v10631 = vld [vmem:[%s10204 + $0xa0] sm:$0xf]
        %v10632 = vld [vmem:[%s10204 + $0xa4] sm:$0x1]
        %v10633 = vld [vmem:[%s10204 + $0xa8] sm:$0xf]
        %v10634 = vld [vmem:[%s10204 + $0xac] sm:$0xf]
        %v10635 = vld [vmem:[%s10204 + $0xb0] sm:$0x1]
        %v10636 = vld [vmem:[%s10204 + $0xb4] sm:$0xf]
        %v10637 = vld [vmem:[%s10204 + $0xb8] sm:$0xf]
        %v10638 = vld [vmem:[%s10204 + $0xbc] sm:$0x1]
        %v10640 = vshrl.u32 %v10591, 16
        %v10642 = vrot.slane %v10640, 4
        %v10643 = vshll.u32 %v10591, 16
        %v10645 = vrot.slane %v10643, 5
        %v10646 = vor.u32 %v10642, %v10645
        %v10647 = vrot.slane %v10646, 4
        %v10649 = vshll.u32 %v10592, 16
        %v10651 = vrot.slane %v10649, 5
        %v10652 = vsel %vm1660, %v10647, %v10651
        %v10653 = vshrl.u32 %v10592, 16
        %v10655 = vrot.slane %v10653, 4
        %v10656 = vor.u32 %v10655, %v10651
        %v10657 = vrot.slane %v10656, 4
        %v10659 = vshll.u32 %v10593, 16
        %v10661 = vrot.slane %v10659, 5
        %v10662 = vsel %vm1660, %v10657, %v10661
        %v10664 = vshrl.u32 %v10594, 16
        %v10666 = vrot.slane %v10664, 4
        %v10667 = vshll.u32 %v10594, 16
        %v10669 = vrot.slane %v10667, 5
        %v10670 = vor.u32 %v10666, %v10669
        %v10671 = vrot.slane %v10670, 4
        %v10673 = vshll.u32 %v10595, 16
        %v10675 = vrot.slane %v10673, 5
        %v10676 = vsel %vm1660, %v10671, %v10675
        %v10677 = vshrl.u32 %v10595, 16
        %v10679 = vrot.slane %v10677, 4
        %v10680 = vor.u32 %v10679, %v10675
        %v10681 = vrot.slane %v10680, 4
        %v10683 = vshll.u32 %v10596, 16
        %v10685 = vrot.slane %v10683, 5
        %v10686 = vsel %vm1660, %v10681, %v10685
        %v10688 = vshrl.u32 %v10597, 16
        %v10690 = vrot.slane %v10688, 4
        %v10691 = vshll.u32 %v10597, 16
        %v10693 = vrot.slane %v10691, 5
        %v10694 = vor.u32 %v10690, %v10693
        %v10695 = vrot.slane %v10694, 4
        %v10697 = vshll.u32 %v10598, 16
        %v10699 = vrot.slane %v10697, 5
        %v10700 = vsel %vm1660, %v10695, %v10699
        %v10701 = vshrl.u32 %v10598, 16
        %v10703 = vrot.slane %v10701, 4
        %v10704 = vor.u32 %v10703, %v10699
        %v10705 = vrot.slane %v10704, 4
        %v10707 = vshll.u32 %v10599, 16
        %v10709 = vrot.slane %v10707, 5
        %v10710 = vsel %vm1660, %v10705, %v10709
        %v10712 = vshrl.u32 %v10600, 16
        %v10714 = vrot.slane %v10712, 4
        %v10715 = vshll.u32 %v10600, 16
        %v10717 = vrot.slane %v10715, 5
        %v10718 = vor.u32 %v10714, %v10717
        %v10719 = vrot.slane %v10718, 4
        %v10721 = vshll.u32 %v10601, 16
        %v10723 = vrot.slane %v10721, 5
        %v10724 = vsel %vm1660, %v10719, %v10723
        %v10725 = vshrl.u32 %v10601, 16
        %v10727 = vrot.slane %v10725, 4
        %v10728 = vor.u32 %v10727, %v10723
        %v10729 = vrot.slane %v10728, 4
        %v10731 = vshll.u32 %v10602, 16
        %v10733 = vrot.slane %v10731, 5
        %v10734 = vsel %vm1660, %v10729, %v10733
        %v10736 = vshrl.u32 %v10603, 16
        %v10738 = vrot.slane %v10736, 4
        %v10739 = vshll.u32 %v10603, 16
        %v10741 = vrot.slane %v10739, 5
        %v10742 = vor.u32 %v10738, %v10741
        %v10743 = vrot.slane %v10742, 4
        %v10745 = vshll.u32 %v10604, 16
        %v10747 = vrot.slane %v10745, 5
        %v10748 = vsel %vm1660, %v10743, %v10747
        %v10749 = vshrl.u32 %v10604, 16
        %v10751 = vrot.slane %v10749, 4
        %v10752 = vor.u32 %v10751, %v10747
        %v10753 = vrot.slane %v10752, 4
        %v10755 = vshll.u32 %v10605, 16
        %v10757 = vrot.slane %v10755, 5
        %v10758 = vsel %vm1660, %v10753, %v10757
        %v10760 = vshrl.u32 %v10606, 16
        %v10762 = vrot.slane %v10760, 4
        %v10763 = vshll.u32 %v10606, 16
        %v10765 = vrot.slane %v10763, 5
        %v10766 = vor.u32 %v10762, %v10765
        %v10767 = vrot.slane %v10766, 4
        %v10769 = vshll.u32 %v10607, 16
        %v10771 = vrot.slane %v10769, 5
        %v10772 = vsel %vm1660, %v10767, %v10771
        %v10773 = vshrl.u32 %v10607, 16
        %v10775 = vrot.slane %v10773, 4
        %v10776 = vor.u32 %v10775, %v10771
        %v10777 = vrot.slane %v10776, 4
        %v10779 = vshll.u32 %v10608, 16
        %v10781 = vrot.slane %v10779, 5
        %v10782 = vsel %vm1660, %v10777, %v10781
        %v10784 = vshrl.u32 %v10609, 16
        %v10786 = vrot.slane %v10784, 4
        %v10787 = vshll.u32 %v10609, 16
        %v10789 = vrot.slane %v10787, 5
        %v10790 = vor.u32 %v10786, %v10789
        %v10791 = vrot.slane %v10790, 4
        %v10793 = vshll.u32 %v10610, 16
        %v10795 = vrot.slane %v10793, 5
        %v10796 = vsel %vm1660, %v10791, %v10795
        %v10797 = vshrl.u32 %v10610, 16
        %v10799 = vrot.slane %v10797, 4
        %v10800 = vor.u32 %v10799, %v10795
        %v10801 = vrot.slane %v10800, 4
        %v10803 = vshll.u32 %v10611, 16
        %v10805 = vrot.slane %v10803, 5
        %v10806 = vsel %vm1660, %v10801, %v10805
        %v10808 = vshrl.u32 %v10612, 16
        %v10810 = vrot.slane %v10808, 4
        %v10811 = vshll.u32 %v10612, 16
        %v10813 = vrot.slane %v10811, 5
        %v10814 = vor.u32 %v10810, %v10813
        %v10815 = vrot.slane %v10814, 4
        %v10817 = vshll.u32 %v10613, 16
        %v10819 = vrot.slane %v10817, 5
        %v10820 = vsel %vm1660, %v10815, %v10819
        %v10821 = vshrl.u32 %v10613, 16
        %v10823 = vrot.slane %v10821, 4
        %v10824 = vor.u32 %v10823, %v10819
        %v10825 = vrot.slane %v10824, 4
        %v10827 = vshll.u32 %v10614, 16
        %v10829 = vrot.slane %v10827, 5
        %v10830 = vsel %vm1660, %v10825, %v10829
        %v10832 = vshrl.u32 %v10615, 16
        %v10834 = vrot.slane %v10832, 4
        %v10835 = vshll.u32 %v10615, 16
        %v10837 = vrot.slane %v10835, 5
        %v10838 = vor.u32 %v10834, %v10837
        %v10839 = vrot.slane %v10838, 4
        %v10841 = vshll.u32 %v10616, 16
        %v10843 = vrot.slane %v10841, 5
        %v10844 = vsel %vm1660, %v10839, %v10843
        %v10845 = vshrl.u32 %v10616, 16
        %v10847 = vrot.slane %v10845, 4
        %v10848 = vor.u32 %v10847, %v10843
        %v10849 = vrot.slane %v10848, 4
        %v10851 = vshll.u32 %v10617, 16
        %v10853 = vrot.slane %v10851, 5
        %v10854 = vsel %vm1660, %v10849, %v10853
        %v10856 = vshrl.u32 %v10618, 16
        %v10858 = vrot.slane %v10856, 4
        %v10859 = vshll.u32 %v10618, 16
        %v10861 = vrot.slane %v10859, 5
        %v10862 = vor.u32 %v10858, %v10861
        %v10863 = vrot.slane %v10862, 4
        %v10865 = vshll.u32 %v10619, 16
        %v10867 = vrot.slane %v10865, 5
        %v10868 = vsel %vm1660, %v10863, %v10867
        %v10869 = vshrl.u32 %v10619, 16
        %v10871 = vrot.slane %v10869, 4
        %v10872 = vor.u32 %v10871, %v10867
        %v10873 = vrot.slane %v10872, 4
        %v10875 = vshll.u32 %v10620, 16
        %v10877 = vrot.slane %v10875, 5
        %v10878 = vsel %vm1660, %v10873, %v10877
        %v10880 = vshrl.u32 %v10621, 16
        %v10882 = vrot.slane %v10880, 4
        %v10883 = vshll.u32 %v10621, 16
        %v10885 = vrot.slane %v10883, 5
        %v10886 = vor.u32 %v10882, %v10885
        %v10887 = vrot.slane %v10886, 4
        %v10889 = vshll.u32 %v10622, 16
        %v10891 = vrot.slane %v10889, 5
        %v10892 = vsel %vm1660, %v10887, %v10891
        %v10893 = vshrl.u32 %v10622, 16
        %v10895 = vrot.slane %v10893, 4
        %v10896 = vor.u32 %v10895, %v10891
        %v10897 = vrot.slane %v10896, 4
        %v10899 = vshll.u32 %v10623, 16
        %v10901 = vrot.slane %v10899, 5
        %v10902 = vsel %vm1660, %v10897, %v10901
        %v10904 = vshrl.u32 %v10624, 16
        %v10906 = vrot.slane %v10904, 4
        %v10907 = vshll.u32 %v10624, 16
        %v10909 = vrot.slane %v10907, 5
        %v10910 = vor.u32 %v10906, %v10909
        %v10911 = vrot.slane %v10910, 4
        %v10913 = vshll.u32 %v10625, 16
        %v10915 = vrot.slane %v10913, 5
        %v10916 = vsel %vm1660, %v10911, %v10915
        %v10917 = vshrl.u32 %v10625, 16
        %v10919 = vrot.slane %v10917, 4
        %v10920 = vor.u32 %v10919, %v10915
        %v10921 = vrot.slane %v10920, 4
        %v10923 = vshll.u32 %v10626, 16
        %v10925 = vrot.slane %v10923, 5
        %v10926 = vsel %vm1660, %v10921, %v10925
        %v10928 = vshrl.u32 %v10627, 16
        %v10930 = vrot.slane %v10928, 4
        %v10931 = vshll.u32 %v10627, 16
        %v10933 = vrot.slane %v10931, 5
        %v10934 = vor.u32 %v10930, %v10933
        %v10935 = vrot.slane %v10934, 4
        %v10937 = vshll.u32 %v10628, 16
        %v10939 = vrot.slane %v10937, 5
        %v10940 = vsel %vm1660, %v10935, %v10939
        %v10941 = vshrl.u32 %v10628, 16
        %v10943 = vrot.slane %v10941, 4
        %v10944 = vor.u32 %v10943, %v10939
        %v10945 = vrot.slane %v10944, 4
        %v10947 = vshll.u32 %v10629, 16
        %v10949 = vrot.slane %v10947, 5
        %v10950 = vsel %vm1660, %v10945, %v10949
        %v10952 = vshrl.u32 %v10630, 16
        %v10954 = vrot.slane %v10952, 4
        %v10955 = vshll.u32 %v10630, 16
        %v10957 = vrot.slane %v10955, 5
        %v10958 = vor.u32 %v10954, %v10957
        %v10959 = vrot.slane %v10958, 4
        %v10961 = vshll.u32 %v10631, 16
        %v10963 = vrot.slane %v10961, 5
        %v10964 = vsel %vm1660, %v10959, %v10963
        %v10965 = vshrl.u32 %v10631, 16
        %v10967 = vrot.slane %v10965, 4
        %v10968 = vor.u32 %v10967, %v10963
        %v10969 = vrot.slane %v10968, 4
        %v10971 = vshll.u32 %v10632, 16
        %v10973 = vrot.slane %v10971, 5
        %v10974 = vsel %vm1660, %v10969, %v10973
        %v10976 = vshrl.u32 %v10633, 16
        %v10978 = vrot.slane %v10976, 4
        %v10979 = vshll.u32 %v10633, 16
        %v10981 = vrot.slane %v10979, 5
        %v10982 = vor.u32 %v10978, %v10981
        %v10983 = vrot.slane %v10982, 4
        %v10985 = vshll.u32 %v10634, 16
        %v10987 = vrot.slane %v10985, 5
        %v10988 = vsel %vm1660, %v10983, %v10987
        %v10989 = vshrl.u32 %v10634, 16
        %v10991 = vrot.slane %v10989, 4
        %v10992 = vor.u32 %v10991, %v10987
        %v10993 = vrot.slane %v10992, 4
        %v10995 = vshll.u32 %v10635, 16
        %v10997 = vrot.slane %v10995, 5
        %v10998 = vsel %vm1660, %v10993, %v10997
        %v11000 = vshrl.u32 %v10636, 16
        %v11002 = vrot.slane %v11000, 4
        %v11003 = vshll.u32 %v10636, 16
        %v11005 = vrot.slane %v11003, 5
        %v11006 = vor.u32 %v11002, %v11005
        %v11007 = vrot.slane %v11006, 4
        %v11009 = vshll.u32 %v10637, 16
        %v11011 = vrot.slane %v11009, 5
        %v11012 = vsel %vm1660, %v11007, %v11011
        %v11013 = vshrl.u32 %v10637, 16
        %v11015 = vrot.slane %v11013, 4
        %v11016 = vor.u32 %v11015, %v11011
        %v11017 = vrot.slane %v11016, 4
        %v11019 = vshll.u32 %v10638, 16
        %v11021 = vrot.slane %v11019, 5
        %v11022 = vsel %vm1660, %v11017, %v11021
        %s11023 = scalar_lea.vmem [#allocation15], 448
        %v11024 = vld [vmem:[%s11023] sm:$0xf]
        %v11025 = vld [vmem:[%s11023 + $0x4] sm:$0xf]
        %v11026 = vld [vmem:[%s11023 + $0x8] sm:$0xf]
        %v11027 = vld [vmem:[%s11023 + $0xc] sm:$0xf]
        %v11028 = vld [vmem:[%s11023 + $0x10] sm:$0xf]
        %v11029 = vld [vmem:[%s11023 + $0x14] sm:$0xf]
        %v11030 = vld [vmem:[%s11023 + $0x18] sm:$0xf]
        %v11031 = vld [vmem:[%s11023 + $0x1c] sm:$0xf]
        %v11032 = vld [vmem:[%s11023 + $0x20] sm:$0xf]
        %v11033 = vld [vmem:[%s11023 + $0x24] sm:$0xf]
        %v11034 = vld [vmem:[%s11023 + $0x28] sm:$0xf]
        %v11035 = vld [vmem:[%s11023 + $0x2c] sm:$0xf]
        %v11036 = vld [vmem:[%s11023 + $0x30] sm:$0xf]
        %v11037 = vld [vmem:[%s11023 + $0x34] sm:$0xf]
        %v11038 = vld [vmem:[%s11023 + $0x38] sm:$0xf]
        %v11039 = vld [vmem:[%s11023 + $0x3c] sm:$0xf]
        %v11040 = vunpack.c.l.b16 %v10652
        %v11041 = vunpack.c.l.b16 %v10662
        %v11042 = vunpack.c.l.b16 %v10676
        %v11043 = vunpack.c.l.b16 %v10686
        %v11044 = vunpack.c.l.b16 %v10700
        %v11045 = vunpack.c.l.b16 %v10710
        %v11046 = vunpack.c.l.b16 %v10724
        %v11047 = vunpack.c.l.b16 %v10734
        %v11048 = vunpack.c.l.b16 %v10748
        %v11049 = vunpack.c.l.b16 %v10758
        %v11050 = vunpack.c.l.b16 %v10772
        %v11051 = vunpack.c.l.b16 %v10782
        %v11052 = vunpack.c.l.b16 %v10796
        %v11053 = vunpack.c.l.b16 %v10806
        %v11054 = vunpack.c.l.b16 %v10820
        %v11055 = vunpack.c.l.b16 %v10830
        %v11056 = vunpack.c.l.b16 %v10844
        %v11057 = vunpack.c.l.b16 %v10854
        %v11058 = vunpack.c.l.b16 %v10868
        %v11059 = vunpack.c.l.b16 %v10878
        %v11060 = vunpack.c.l.b16 %v10892
        %v11061 = vunpack.c.l.b16 %v10902
        %v11062 = vunpack.c.l.b16 %v10916
        %v11063 = vunpack.c.l.b16 %v10926
        %v11064 = vunpack.c.l.b16 %v10940
        %v11065 = vunpack.c.l.b16 %v10950
        %v11066 = vunpack.c.l.b16 %v10964
        %v11067 = vunpack.c.l.b16 %v10974
        %v11068 = vunpack.c.l.b16 %v10988
        %v11069 = vunpack.c.l.b16 %v10998
        %v11070 = vunpack.c.l.b16 %v11012
        %v11071 = vunpack.c.l.b16 %v11022
        %v11072 = vpack.c.b16 %v11041, %v11040
        %v11073 = vpack.c.b16 %v11043, %v11042
        %v11074 = vpack.c.b16 %v11045, %v11044
        %v11075 = vpack.c.b16 %v11047, %v11046
        %v11076 = vpack.c.b16 %v11049, %v11048
        %v11077 = vpack.c.b16 %v11051, %v11050
        %v11078 = vpack.c.b16 %v11053, %v11052
        %v11079 = vpack.c.b16 %v11055, %v11054
        %v11080 = vpack.c.b16 %v11057, %v11056
        %v11081 = vpack.c.b16 %v11059, %v11058
        %v11082 = vpack.c.b16 %v11061, %v11060
        %v11083 = vpack.c.b16 %v11063, %v11062
        %v11084 = vpack.c.b16 %v11065, %v11064
        %v11085 = vpack.c.b16 %v11067, %v11066
        %v11086 = vpack.c.b16 %v11069, %v11068
        %v11087 = vpack.c.b16 %v11071, %v11070
        %v11120 = vunpack.c.l.b16 %v11024
        %v11121 = vunpack.c.l.b16 %v11025
        %v11122 = vunpack.c.l.b16 %v11026
        %v11123 = vunpack.c.l.b16 %v11027
        %v11124 = vunpack.c.l.b16 %v11028
        %v11125 = vunpack.c.l.b16 %v11029
        %v11126 = vunpack.c.l.b16 %v11030
        %v11127 = vunpack.c.l.b16 %v11031
        %v11128 = vunpack.c.l.b16 %v11032
        %v11129 = vunpack.c.l.b16 %v11033
        %v11130 = vunpack.c.l.b16 %v11034
        %v11131 = vunpack.c.l.b16 %v11035
        %v11132 = vunpack.c.l.b16 %v11036
        %v11133 = vunpack.c.l.b16 %v11037
        %v11134 = vunpack.c.l.b16 %v11038
        %v11135 = vunpack.c.l.b16 %v11039
        %v11136 = vpack.c.b16 %v11121, %v11120
        %v11137 = vpack.c.b16 %v11123, %v11122
        %v11138 = vpack.c.b16 %v11125, %v11124
        %v11139 = vpack.c.b16 %v11127, %v11126
        %v11140 = vpack.c.b16 %v11129, %v11128
        %v11141 = vpack.c.b16 %v11131, %v11130
        %v11142 = vpack.c.b16 %v11133, %v11132
        %v11143 = vpack.c.b16 %v11135, %v11134
        %11152 = vmatprep.subr.bf16.mxu0 0
        %11153 = vmatpush1.bf16.msra.mxu0 %v11136
        %11154 = vmatprep.subr.bf16.mxu0 0
        %11155 = vmatpush1.bf16.msra.mxu0 %v11137
        %11156 = vmatprep.subr.bf16.mxu0 0
        %11157 = vmatpush1.bf16.msra.mxu0 %v11138
        %11158 = vmatprep.subr.bf16.mxu0 0
        %11159 = vmatpush1.bf16.msra.mxu0 %v11139
        %11160 = vmatprep.subr.bf16.mxu0 0
        %11161 = vmatpush1.bf16.msra.mxu0 %v11140
        %11162 = vmatprep.subr.bf16.mxu0 0
        %11163 = vmatpush1.bf16.msra.mxu0 %v11141
        %11164 = vmatprep.subr.bf16.mxu0 0
        %11165 = vmatpush1.bf16.msra.mxu0 %v11142
        %11166 = vmatprep.subr.bf16.mxu0 0
        %11167 = vmatpush1.bf16.msra.mxu0 %v11143
        %11168 = vmatprep.subr.bf16.mxu0 0
        %11169 = vmatpush1.bf16.msra.mxu0 0
        %11170 = vmatprep.subr.bf16.mxu0 0
        %11171 = vmatpush1.bf16.msra.mxu0 0
        %11172 = vmatprep.subr.bf16.mxu0 0
        %11173 = vmatpush1.bf16.msra.mxu0 0
        %11174 = vmatprep.subr.bf16.mxu0 0
        %11175 = vmatpush1.bf16.msra.mxu0 0
        %11176 = vmatprep.subr.bf16.mxu0 0
        %11177 = vmatpush1.bf16.msra.mxu0 0
        %11178 = vmatprep.subr.bf16.mxu0 0
        %11179 = vmatpush1.bf16.msra.mxu0 0
        %11180 = vmatprep.subr.bf16.mxu0 0
        %11181 = vmatpush1.bf16.msra.mxu0 0
        %11182 = vmatprep.subr.bf16.mxu0 0
        %11183 = vmatpush1.bf16.msra.mxu0 0
        %11184 = vmatprep.mubr.bf16.mxu0 0
        %11185 = vmatmul.mubr.bf16.gmra.mrb[0].mxu0 %v11072
        %v11186 = vpop.f32.mrb[0].mxu0
        %v11187 = vadd.f32 0.0, %v11186
        %v11188 = vpop.f32.mrb[0].mxu0
        %v11189 = vpop.f32.mrb[0].mxu0
        %v11190 = vadd.f32 0.0, %v11189
        %v11191 = vpop.f32.mrb[0].mxu0
        %11192 = vmatprep.mubr.bf16.mxu0 0
        %11193 = vmatmul.mubr.bf16.gmra.mrb[0].mxu0 %v11073
        %v11194 = vpop.f32.mrb[0].mxu0
        %v11195 = vadd.f32 0.0, %v11194
        %v11196 = vpop.f32.mrb[0].mxu0
        %v11197 = vpop.f32.mrb[0].mxu0
        %v11198 = vadd.f32 0.0, %v11197
        %v11199 = vpop.f32.mrb[0].mxu0
        %11200 = vmatprep.mubr.bf16.mxu0 0
        %11201 = vmatmul.mubr.bf16.gmra.mrb[0].mxu0 %v11074
        %v11202 = vpop.f32.mrb[0].mxu0
        %v11203 = vadd.f32 0.0, %v11202
        %v11204 = vpop.f32.mrb[0].mxu0
        %v11205 = vpop.f32.mrb[0].mxu0
        %v11206 = vadd.f32 0.0, %v11205
        %v11207 = vpop.f32.mrb[0].mxu0
        %11208 = vmatprep.mubr.bf16.mxu0 0
        %11209 = vmatmul.mubr.bf16.gmra.mrb[0].mxu0 %v11075
        %v11210 = vpop.f32.mrb[0].mxu0
        %v11211 = vadd.f32 0.0, %v11210
        %v11212 = vpop.f32.mrb[0].mxu0
        %v11213 = vpop.f32.mrb[0].mxu0
        %v11214 = vadd.f32 0.0, %v11213
        %v11215 = vpop.f32.mrb[0].mxu0
        %11216 = vmatprep.mubr.bf16.mxu0 0
        %11217 = vmatmul.mubr.bf16.gmra.mrb[0].mxu0 %v11076
        %v11218 = vpop.f32.mrb[0].mxu0
        %v11219 = vadd.f32 0.0, %v11218
        %v11220 = vpop.f32.mrb[0].mxu0
        %v11221 = vpop.f32.mrb[0].mxu0
        %v11222 = vadd.f32 0.0, %v11221
        %v11223 = vpop.f32.mrb[0].mxu0
        %11224 = vmatprep.mubr.bf16.mxu0 0
        %11225 = vmatmul.mubr.bf16.gmra.mrb[0].mxu0 %v11077
        %v11226 = vpop.f32.mrb[0].mxu0
        %v11227 = vadd.f32 0.0, %v11226
        %v11228 = vpop.f32.mrb[0].mxu0
        %v11229 = vpop.f32.mrb[0].mxu0
        %v11230 = vadd.f32 0.0, %v11229
        %v11231 = vpop.f32.mrb[0].mxu0
        %11232 = vmatprep.mubr.bf16.mxu0 0
        %11233 = vmatmul.mubr.bf16.gmra.mrb[0].mxu0 %v11078
        %v11234 = vpop.f32.mrb[0].mxu0
        %v11235 = vadd.f32 0.0, %v11234
        %v11236 = vpop.f32.mrb[0].mxu0
        %v11237 = vpop.f32.mrb[0].mxu0
        %v11238 = vadd.f32 0.0, %v11237
        %v11239 = vpop.f32.mrb[0].mxu0
        %11240 = vmatprep.mubr.bf16.mxu0 0
        %11241 = vmatmul.mubr.bf16.gmra.mrb[0].mxu0 %v11079
        %v11242 = vpop.f32.mrb[0].mxu0
        %v11243 = vadd.f32 0.0, %v11242
        %v11244 = vpop.f32.mrb[0].mxu0
        %v11245 = vpop.f32.mrb[0].mxu0
        %v11246 = vadd.f32 0.0, %v11245
        %v11247 = vpop.f32.mrb[0].mxu0
        %11248 = vmatprep.mubr.bf16.mxu0 0
        %11249 = vmatmul.mubr.bf16.gmra.mrb[0].mxu0 %v11080
        %v11250 = vpop.f32.mrb[0].mxu0
        %v11251 = vadd.f32 0.0, %v11250
        %v11252 = vpop.f32.mrb[0].mxu0
        %v11253 = vpop.f32.mrb[0].mxu0
        %v11254 = vadd.f32 0.0, %v11253
        %v11255 = vpop.f32.mrb[0].mxu0
        %11256 = vmatprep.mubr.bf16.mxu0 0
        %11257 = vmatmul.mubr.bf16.gmra.mrb[0].mxu0 %v11081
        %v11258 = vpop.f32.mrb[0].mxu0
        %v11259 = vadd.f32 0.0, %v11258
        %v11260 = vpop.f32.mrb[0].mxu0
        %v11261 = vpop.f32.mrb[0].mxu0
        %v11262 = vadd.f32 0.0, %v11261
        %v11263 = vpop.f32.mrb[0].mxu0
        %11264 = vmatprep.mubr.bf16.mxu0 0
        %11265 = vmatmul.mubr.bf16.gmra.mrb[0].mxu0 %v11082
        %v11266 = vpop.f32.mrb[0].mxu0
        %v11267 = vadd.f32 0.0, %v11266
        %v11268 = vpop.f32.mrb[0].mxu0
        %v11269 = vpop.f32.mrb[0].mxu0
        %v11270 = vadd.f32 0.0, %v11269
        %v11271 = vpop.f32.mrb[0].mxu0
        %11272 = vmatprep.mubr.bf16.mxu0 0
        %11273 = vmatmul.mubr.bf16.gmra.mrb[0].mxu0 %v11083
        %v11274 = vpop.f32.mrb[0].mxu0
        %v11275 = vadd.f32 0.0, %v11274
        %v11276 = vpop.f32.mrb[0].mxu0
        %v11277 = vpop.f32.mrb[0].mxu0
        %v11278 = vadd.f32 0.0, %v11277
        %v11279 = vpop.f32.mrb[0].mxu0
        %11280 = vmatprep.mubr.bf16.mxu0 0
        %11281 = vmatmul.mubr.bf16.gmra.mrb[0].mxu0 %v11084
        %v11282 = vpop.f32.mrb[0].mxu0
        %v11283 = vadd.f32 0.0, %v11282
        %v11284 = vpop.f32.mrb[0].mxu0
        %v11285 = vpop.f32.mrb[0].mxu0
        %v11286 = vadd.f32 0.0, %v11285
        %v11287 = vpop.f32.mrb[0].mxu0
        %11288 = vmatprep.mubr.bf16.mxu0 0
        %11289 = vmatmul.mubr.bf16.gmra.mrb[0].mxu0 %v11085
        %v11290 = vpop.f32.mrb[0].mxu0
        %v11291 = vadd.f32 0.0, %v11290
        %v11292 = vpop.f32.mrb[0].mxu0
        %v11293 = vpop.f32.mrb[0].mxu0
        %v11294 = vadd.f32 0.0, %v11293
        %v11295 = vpop.f32.mrb[0].mxu0
        %11296 = vmatprep.mubr.bf16.mxu0 0
        %11297 = vmatmul.mubr.bf16.gmra.mrb[0].mxu0 %v11086
        %v11298 = vpop.f32.mrb[0].mxu0
        %v11299 = vadd.f32 0.0, %v11298
        %v11300 = vpop.f32.mrb[0].mxu0
        %v11301 = vpop.f32.mrb[0].mxu0
        %v11302 = vadd.f32 0.0, %v11301
        %v11303 = vpop.f32.mrb[0].mxu0
        %11304 = vmatprep.mubr.bf16.mxu0 0
        %11305 = vmatmul.mubr.bf16.gmra.mrb[0].mxu0 %v11087
        %v11306 = vpop.f32.mrb[0].mxu0
        %v11307 = vadd.f32 0.0, %v11306
        %v11308 = vpop.f32.mrb[0].mxu0
        %v11309 = vpop.f32.mrb[0].mxu0
        %v11310 = vadd.f32 0.0, %v11309
        %v11311 = vpop.f32.mrb[0].mxu0
        %11312 = vdwg.mxu0
        %v11313 = vadd.f32 %v10559, %v11187
        %v11314 = vadd.f32 %v10560, %v11190
        %v11315 = vadd.f32 %v10561, %v11195
        %v11316 = vadd.f32 %v10562, %v11198
        %v11317 = vadd.f32 %v10563, %v11203
        %v11318 = vadd.f32 %v10564, %v11206
        %v11319 = vadd.f32 %v10565, %v11211
        %v11320 = vadd.f32 %v10566, %v11214
        %v11321 = vadd.f32 %v10567, %v11219
        %v11322 = vadd.f32 %v10568, %v11222
        %v11323 = vadd.f32 %v10569, %v11227
        %v11324 = vadd.f32 %v10570, %v11230
        %v11325 = vadd.f32 %v10571, %v11235
        %v11326 = vadd.f32 %v10572, %v11238
        %v11327 = vadd.f32 %v10573, %v11243
        %v11328 = vadd.f32 %v10574, %v11246
        %v11329 = vadd.f32 %v10575, %v11251
        %v11330 = vadd.f32 %v10576, %v11254
        %v11331 = vadd.f32 %v10577, %v11259
        %v11332 = vadd.f32 %v10578, %v11262
        %v11333 = vadd.f32 %v10579, %v11267
        %v11334 = vadd.f32 %v10580, %v11270
        %v11335 = vadd.f32 %v10581, %v11275
        %v11336 = vadd.f32 %v10582, %v11278
        %v11337 = vadd.f32 %v10583, %v11283
        %v11338 = vadd.f32 %v10584, %v11286
        %v11339 = vadd.f32 %v10585, %v11291
        %v11340 = vadd.f32 %v10586, %v11294
        %v11341 = vadd.f32 %v10587, %v11299
        %v11342 = vadd.f32 %v10588, %v11302
        %v11343 = vadd.f32 %v10589, %v11307
        %v11344 = vadd.f32 %v10590, %v11310
        %v11345 = vld [vmem:[%s10204] sm:$0xe]
        %v11346 = vld [vmem:[%s10204 + $0xc] sm:$0xe]
        %v11347 = vld [vmem:[%s10204 + $0x18] sm:$0xe]
        %v11348 = vld [vmem:[%s10204 + $0x24] sm:$0xe]
        %v11349 = vld [vmem:[%s10204 + $0x30] sm:$0xe]
        %v11350 = vld [vmem:[%s10204 + $0x3c] sm:$0xe]
        %v11351 = vld [vmem:[%s10204 + $0x48] sm:$0xe]
        %v11352 = vld [vmem:[%s10204 + $0x54] sm:$0xe]
        %v11353 = vld [vmem:[%s10204 + $0x60] sm:$0xe]
        %v11354 = vld [vmem:[%s10204 + $0x6c] sm:$0xe]
        %v11355 = vld [vmem:[%s10204 + $0x78] sm:$0xe]
        %v11356 = vld [vmem:[%s10204 + $0x84] sm:$0xe]
        %v11357 = vld [vmem:[%s10204 + $0x90] sm:$0xe]
        %v11358 = vld [vmem:[%s10204 + $0x9c] sm:$0xe]
        %v11359 = vld [vmem:[%s10204 + $0xa8] sm:$0xe]
        %v11360 = vld [vmem:[%s10204 + $0xb4] sm:$0xe]
        %v11409 = vrot.slane %v11345, 5
        %v11410 = vrot.slane %v11409, 4
        %v11411 = vrot.slane %v10592, 5
        %v11412 = vsel %vm2690, %v11410, %v11411
        %v11413 = vrot.slane %v11411, 4
        %v11414 = vrot.slane %v10593, 5
        %v11415 = vsel %vm2690, %v11413, %v11414
        %v11416 = vrot.slane %v11346, 5
        %v11417 = vrot.slane %v11416, 4
        %v11418 = vrot.slane %v10595, 5
        %v11419 = vsel %vm2690, %v11417, %v11418
        %v11420 = vrot.slane %v11418, 4
        %v11421 = vrot.slane %v10596, 5
        %v11422 = vsel %vm2690, %v11420, %v11421
        %v11423 = vrot.slane %v11347, 5
        %v11424 = vrot.slane %v11423, 4
        %v11425 = vrot.slane %v10598, 5
        %v11426 = vsel %vm2690, %v11424, %v11425
        %v11427 = vrot.slane %v11425, 4
        %v11428 = vrot.slane %v10599, 5
        %v11429 = vsel %vm2690, %v11427, %v11428
        %v11430 = vrot.slane %v11348, 5
        %v11431 = vrot.slane %v11430, 4
        %v11432 = vrot.slane %v10601, 5
        %v11433 = vsel %vm2690, %v11431, %v11432
        %v11434 = vrot.slane %v11432, 4
        %v11435 = vrot.slane %v10602, 5
        %v11436 = vsel %vm2690, %v11434, %v11435
        %v11437 = vrot.slane %v11349, 5
        %v11438 = vrot.slane %v11437, 4
        %v11439 = vrot.slane %v10604, 5
        %v11440 = vsel %vm2690, %v11438, %v11439
        %v11441 = vrot.slane %v11439, 4
        %v11442 = vrot.slane %v10605, 5
        %v11443 = vsel %vm2690, %v11441, %v11442
        %v11444 = vrot.slane %v11350, 5
        %v11445 = vrot.slane %v11444, 4
        %v11446 = vrot.slane %v10607, 5
        %v11447 = vsel %vm2690, %v11445, %v11446
        %v11448 = vrot.slane %v11446, 4
        %v11449 = vrot.slane %v10608, 5
        %v11450 = vsel %vm2690, %v11448, %v11449
        %v11451 = vrot.slane %v11351, 5
        %v11452 = vrot.slane %v11451, 4
        %v11453 = vrot.slane %v10610, 5
        %v11454 = vsel %vm2690, %v11452, %v11453
        %v11455 = vrot.slane %v11453, 4
        %v11456 = vrot.slane %v10611, 5
        %v11457 = vsel %vm2690, %v11455, %v11456
        %v11458 = vrot.slane %v11352, 5
        %v11459 = vrot.slane %v11458, 4
        %v11460 = vrot.slane %v10613, 5
        %v11461 = vsel %vm2690, %v11459, %v11460
        %v11462 = vrot.slane %v11460, 4
        %v11463 = vrot.slane %v10614, 5
        %v11464 = vsel %vm2690, %v11462, %v11463
        %v11465 = vrot.slane %v11353, 5
        %v11466 = vrot.slane %v11465, 4
        %v11467 = vrot.slane %v10616, 5
        %v11468 = vsel %vm2690, %v11466, %v11467
        %v11469 = vrot.slane %v11467, 4
        %v11470 = vrot.slane %v10617, 5
        %v11471 = vsel %vm2690, %v11469, %v11470
        %v11472 = vrot.slane %v11354, 5
        %v11473 = vrot.slane %v11472, 4
        %v11474 = vrot.slane %v10619, 5
        %v11475 = vsel %vm2690, %v11473, %v11474
        %v11476 = vrot.slane %v11474, 4
        %v11477 = vrot.slane %v10620, 5
        %v11478 = vsel %vm2690, %v11476, %v11477
        %v11479 = vrot.slane %v11355, 5
        %v11480 = vrot.slane %v11479, 4
        %v11481 = vrot.slane %v10622, 5
        %v11482 = vsel %vm2690, %v11480, %v11481
        %v11483 = vrot.slane %v11481, 4
        %v11484 = vrot.slane %v10623, 5
        %v11485 = vsel %vm2690, %v11483, %v11484
        %v11486 = vrot.slane %v11356, 5
        %v11487 = vrot.slane %v11486, 4
        %v11488 = vrot.slane %v10625, 5
        %v11489 = vsel %vm2690, %v11487, %v11488
        %v11490 = vrot.slane %v11488, 4
        %v11491 = vrot.slane %v10626, 5
        %v11492 = vsel %vm2690, %v11490, %v11491
        %v11493 = vrot.slane %v11357, 5
        %v11494 = vrot.slane %v11493, 4
        %v11495 = vrot.slane %v10628, 5
        %v11496 = vsel %vm2690, %v11494, %v11495
        %v11497 = vrot.slane %v11495, 4
        %v11498 = vrot.slane %v10629, 5
        %v11499 = vsel %vm2690, %v11497, %v11498
        %v11500 = vrot.slane %v11358, 5
        %v11501 = vrot.slane %v11500, 4
        %v11502 = vrot.slane %v10631, 5
        %v11503 = vsel %vm2690, %v11501, %v11502
        %v11504 = vrot.slane %v11502, 4
        %v11505 = vrot.slane %v10632, 5
        %v11506 = vsel %vm2690, %v11504, %v11505
        %v11507 = vrot.slane %v11359, 5
        %v11508 = vrot.slane %v11507, 4
        %v11509 = vrot.slane %v10634, 5
        %v11510 = vsel %vm2690, %v11508, %v11509
        %v11511 = vrot.slane %v11509, 4
        %v11512 = vrot.slane %v10635, 5
        %v11513 = vsel %vm2690, %v11511, %v11512
        %v11514 = vrot.slane %v11360, 5
        %v11515 = vrot.slane %v11514, 4
        %v11516 = vrot.slane %v10637, 5
        %v11517 = vsel %vm2690, %v11515, %v11516
        %v11518 = vrot.slane %v11516, 4
        %v11519 = vrot.slane %v10638, 5
        %v11520 = vsel %vm2690, %v11518, %v11519
        %s11521 = scalar_lea.vmem [#allocation15], 512
        %v11522 = vld [vmem:[%s11521] sm:$0xf]
        %v11523 = vld [vmem:[%s11521 + $0x4] sm:$0xf]
        %v11524 = vld [vmem:[%s11521 + $0x8] sm:$0xf]
        %v11525 = vld [vmem:[%s11521 + $0xc] sm:$0xf]
        %v11526 = vld [vmem:[%s11521 + $0x10] sm:$0xf]
        %v11527 = vld [vmem:[%s11521 + $0x14] sm:$0xf]
        %v11528 = vld [vmem:[%s11521 + $0x18] sm:$0xf]
        %v11529 = vld [vmem:[%s11521 + $0x1c] sm:$0xf]
        %v11530 = vld [vmem:[%s11521 + $0x20] sm:$0xf]
        %v11531 = vld [vmem:[%s11521 + $0x24] sm:$0xf]
        %v11532 = vld [vmem:[%s11521 + $0x28] sm:$0xf]
        %v11533 = vld [vmem:[%s11521 + $0x2c] sm:$0xf]
        %v11534 = vld [vmem:[%s11521 + $0x30] sm:$0xf]
        %v11535 = vld [vmem:[%s11521 + $0x34] sm:$0xf]
        %v11536 = vld [vmem:[%s11521 + $0x38] sm:$0xf]
        %v11537 = vld [vmem:[%s11521 + $0x3c] sm:$0xf]
        %v11538 = vunpack.c.l.b16 %v11412
        %v11539 = vunpack.c.l.b16 %v11415
        %v11540 = vunpack.c.l.b16 %v11419
        %v11541 = vunpack.c.l.b16 %v11422
        %v11542 = vunpack.c.l.b16 %v11426
        %v11543 = vunpack.c.l.b16 %v11429
        %v11544 = vunpack.c.l.b16 %v11433
        %v11545 = vunpack.c.l.b16 %v11436
        %v11546 = vunpack.c.l.b16 %v11440
        %v11547 = vunpack.c.l.b16 %v11443
        %v11548 = vunpack.c.l.b16 %v11447
        %v11549 = vunpack.c.l.b16 %v11450
        %v11550 = vunpack.c.l.b16 %v11454
        %v11551 = vunpack.c.l.b16 %v11457
        %v11552 = vunpack.c.l.b16 %v11461
        %v11553 = vunpack.c.l.b16 %v11464
        %v11554 = vunpack.c.l.b16 %v11468
        %v11555 = vunpack.c.l.b16 %v11471
        %v11556 = vunpack.c.l.b16 %v11475
        %v11557 = vunpack.c.l.b16 %v11478
        %v11558 = vunpack.c.l.b16 %v11482
        %v11559 = vunpack.c.l.b16 %v11485
        %v11560 = vunpack.c.l.b16 %v11489
        %v11561 = vunpack.c.l.b16 %v11492
        %v11562 = vunpack.c.l.b16 %v11496
        %v11563 = vunpack.c.l.b16 %v11499
        %v11564 = vunpack.c.l.b16 %v11503
        %v11565 = vunpack.c.l.b16 %v11506
        %v11566 = vunpack.c.l.b16 %v11510
        %v11567 = vunpack.c.l.b16 %v11513
        %v11568 = vunpack.c.l.b16 %v11517
        %v11569 = vunpack.c.l.b16 %v11520
        %v11570 = vpack.c.b16 %v11539, %v11538
        %v11571 = vpack.c.b16 %v11541, %v11540
        %v11572 = vpack.c.b16 %v11543, %v11542
        %v11573 = vpack.c.b16 %v11545, %v11544
        %v11574 = vpack.c.b16 %v11547, %v11546
        %v11575 = vpack.c.b16 %v11549, %v11548
        %v11576 = vpack.c.b16 %v11551, %v11550
        %v11577 = vpack.c.b16 %v11553, %v11552
        %v11578 = vpack.c.b16 %v11555, %v11554
        %v11579 = vpack.c.b16 %v11557, %v11556
        %v11580 = vpack.c.b16 %v11559, %v11558
        %v11581 = vpack.c.b16 %v11561, %v11560
        %v11582 = vpack.c.b16 %v11563, %v11562
        %v11583 = vpack.c.b16 %v11565, %v11564
        %v11584 = vpack.c.b16 %v11567, %v11566
        %v11585 = vpack.c.b16 %v11569, %v11568
        %v11618 = vunpack.c.l.b16 %v11522
        %v11619 = vunpack.c.l.b16 %v11523
        %v11620 = vunpack.c.l.b16 %v11524
        %v11621 = vunpack.c.l.b16 %v11525
        %v11622 = vunpack.c.l.b16 %v11526
        %v11623 = vunpack.c.l.b16 %v11527
        %v11624 = vunpack.c.l.b16 %v11528
        %v11625 = vunpack.c.l.b16 %v11529
        %v11626 = vunpack.c.l.b16 %v11530
        %v11627 = vunpack.c.l.b16 %v11531
        %v11628 = vunpack.c.l.b16 %v11532
        %v11629 = vunpack.c.l.b16 %v11533
        %v11630 = vunpack.c.l.b16 %v11534
        %v11631 = vunpack.c.l.b16 %v11535
        %v11632 = vunpack.c.l.b16 %v11536
        %v11633 = vunpack.c.l.b16 %v11537
        %v11634 = vpack.c.b16 %v11619, %v11618
        %v11635 = vpack.c.b16 %v11621, %v11620
        %v11636 = vpack.c.b16 %v11623, %v11622
        %v11637 = vpack.c.b16 %v11625, %v11624
        %v11638 = vpack.c.b16 %v11627, %v11626
        %v11639 = vpack.c.b16 %v11629, %v11628
        %v11640 = vpack.c.b16 %v11631, %v11630
        %v11641 = vpack.c.b16 %v11633, %v11632
        %11650 = vmatprep.subr.bf16.mxu0 0
        %11651 = vmatpush1.bf16.msra.mxu0 %v11634
        %11652 = vmatprep.subr.bf16.mxu0 0
        %11653 = vmatpush1.bf16.msra.mxu0 %v11635
        %11654 = vmatprep.subr.bf16.mxu0 0
        %11655 = vmatpush1.bf16.msra.mxu0 %v11636
        %11656 = vmatprep.subr.bf16.mxu0 0
        %11657 = vmatpush1.bf16.msra.mxu0 %v11637
        %11658 = vmatprep.subr.bf16.mxu0 0
        %11659 = vmatpush1.bf16.msra.mxu0 %v11638
        %11660 = vmatprep.subr.bf16.mxu0 0
        %11661 = vmatpush1.bf16.msra.mxu0 %v11639
        %11662 = vmatprep.subr.bf16.mxu0 0
        %11663 = vmatpush1.bf16.msra.mxu0 %v11640
        %11664 = vmatprep.subr.bf16.mxu0 0
        %11665 = vmatpush1.bf16.msra.mxu0 %v11641
        %11666 = vmatprep.subr.bf16.mxu0 0
        %11667 = vmatpush1.bf16.msra.mxu0 0
        %11668 = vmatprep.subr.bf16.mxu0 0
        %11669 = vmatpush1.bf16.msra.mxu0 0
        %11670 = vmatprep.subr.bf16.mxu0 0
        %11671 = vmatpush1.bf16.msra.mxu0 0
        %11672 = vmatprep.subr.bf16.mxu0 0
        %11673 = vmatpush1.bf16.msra.mxu0 0
        %11674 = vmatprep.subr.bf16.mxu0 0
        %11675 = vmatpush1.bf16.msra.mxu0 0
        %11676 = vmatprep.subr.bf16.mxu0 0
        %11677 = vmatpush1.bf16.msra.mxu0 0
        %11678 = vmatprep.subr.bf16.mxu0 0
        %11679 = vmatpush1.bf16.msra.mxu0 0
        %11680 = vmatprep.subr.bf16.mxu0 0
        %11681 = vmatpush1.bf16.msra.mxu0 0
        %11682 = vmatprep.mubr.bf16.mxu0 0
        %11683 = vmatmul.mubr.bf16.gmra.mrb[0].mxu0 %v11570
        %v11684 = vpop.f32.mrb[0].mxu0
        %v11685 = vadd.f32 0.0, %v11684
        %v11686 = vpop.f32.mrb[0].mxu0
        %v11687 = vpop.f32.mrb[0].mxu0
        %v11688 = vadd.f32 0.0, %v11687
        %v11689 = vpop.f32.mrb[0].mxu0
        %11690 = vmatprep.mubr.bf16.mxu0 0
        %11691 = vmatmul.mubr.bf16.gmra.mrb[0].mxu0 %v11571
        %v11692 = vpop.f32.mrb[0].mxu0
        %v11693 = vadd.f32 0.0, %v11692
        %v11694 = vpop.f32.mrb[0].mxu0
        %v11695 = vpop.f32.mrb[0].mxu0
        %v11696 = vadd.f32 0.0, %v11695
        %v11697 = vpop.f32.mrb[0].mxu0
        %11698 = vmatprep.mubr.bf16.mxu0 0
        %11699 = vmatmul.mubr.bf16.gmra.mrb[0].mxu0 %v11572
        %v11700 = vpop.f32.mrb[0].mxu0
        %v11701 = vadd.f32 0.0, %v11700
        %v11702 = vpop.f32.mrb[0].mxu0
        %v11703 = vpop.f32.mrb[0].mxu0
        %v11704 = vadd.f32 0.0, %v11703
        %v11705 = vpop.f32.mrb[0].mxu0
        %11706 = vmatprep.mubr.bf16.mxu0 0
        %11707 = vmatmul.mubr.bf16.gmra.mrb[0].mxu0 %v11573
        %v11708 = vpop.f32.mrb[0].mxu0
        %v11709 = vadd.f32 0.0, %v11708
        %v11710 = vpop.f32.mrb[0].mxu0
        %v11711 = vpop.f32.mrb[0].mxu0
        %v11712 = vadd.f32 0.0, %v11711
        %v11713 = vpop.f32.mrb[0].mxu0
        %11714 = vmatprep.mubr.bf16.mxu0 0
        %11715 = vmatmul.mubr.bf16.gmra.mrb[0].mxu0 %v11574
        %v11716 = vpop.f32.mrb[0].mxu0
        %v11717 = vadd.f32 0.0, %v11716
        %v11718 = vpop.f32.mrb[0].mxu0
        %v11719 = vpop.f32.mrb[0].mxu0
        %v11720 = vadd.f32 0.0, %v11719
        %v11721 = vpop.f32.mrb[0].mxu0
        %11722 = vmatprep.mubr.bf16.mxu0 0
        %11723 = vmatmul.mubr.bf16.gmra.mrb[0].mxu0 %v11575
        %v11724 = vpop.f32.mrb[0].mxu0
        %v11725 = vadd.f32 0.0, %v11724
        %v11726 = vpop.f32.mrb[0].mxu0
        %v11727 = vpop.f32.mrb[0].mxu0
        %v11728 = vadd.f32 0.0, %v11727
        %v11729 = vpop.f32.mrb[0].mxu0
        %11730 = vmatprep.mubr.bf16.mxu0 0
        %11731 = vmatmul.mubr.bf16.gmra.mrb[0].mxu0 %v11576
        %v11732 = vpop.f32.mrb[0].mxu0
        %v11733 = vadd.f32 0.0, %v11732
        %v11734 = vpop.f32.mrb[0].mxu0
        %v11735 = vpop.f32.mrb[0].mxu0
        %v11736 = vadd.f32 0.0, %v11735
        %v11737 = vpop.f32.mrb[0].mxu0
        %11738 = vmatprep.mubr.bf16.mxu0 0
        %11739 = vmatmul.mubr.bf16.gmra.mrb[0].mxu0 %v11577
        %v11740 = vpop.f32.mrb[0].mxu0
        %v11741 = vadd.f32 0.0, %v11740
        %v11742 = vpop.f32.mrb[0].mxu0
        %v11743 = vpop.f32.mrb[0].mxu0
        %v11744 = vadd.f32 0.0, %v11743
        %v11745 = vpop.f32.mrb[0].mxu0
        %11746 = vmatprep.mubr.bf16.mxu0 0
        %11747 = vmatmul.mubr.bf16.gmra.mrb[0].mxu0 %v11578
        %v11748 = vpop.f32.mrb[0].mxu0
        %v11749 = vadd.f32 0.0, %v11748
        %v11750 = vpop.f32.mrb[0].mxu0
        %v11751 = vpop.f32.mrb[0].mxu0
        %v11752 = vadd.f32 0.0, %v11751
        %v11753 = vpop.f32.mrb[0].mxu0
        %11754 = vmatprep.mubr.bf16.mxu0 0
        %11755 = vmatmul.mubr.bf16.gmra.mrb[0].mxu0 %v11579
        %v11756 = vpop.f32.mrb[0].mxu0
        %v11757 = vadd.f32 0.0, %v11756
        %v11758 = vpop.f32.mrb[0].mxu0
        %v11759 = vpop.f32.mrb[0].mxu0
        %v11760 = vadd.f32 0.0, %v11759
        %v11761 = vpop.f32.mrb[0].mxu0
        %11762 = vmatprep.mubr.bf16.mxu0 0
        %11763 = vmatmul.mubr.bf16.gmra.mrb[0].mxu0 %v11580
        %v11764 = vpop.f32.mrb[0].mxu0
        %v11765 = vadd.f32 0.0, %v11764
        %v11766 = vpop.f32.mrb[0].mxu0
        %v11767 = vpop.f32.mrb[0].mxu0
        %v11768 = vadd.f32 0.0, %v11767
        %v11769 = vpop.f32.mrb[0].mxu0
        %11770 = vmatprep.mubr.bf16.mxu0 0
        %11771 = vmatmul.mubr.bf16.gmra.mrb[0].mxu0 %v11581
        %v11772 = vpop.f32.mrb[0].mxu0
        %v11773 = vadd.f32 0.0, %v11772
        %v11774 = vpop.f32.mrb[0].mxu0
        %v11775 = vpop.f32.mrb[0].mxu0
        %v11776 = vadd.f32 0.0, %v11775
        %v11777 = vpop.f32.mrb[0].mxu0
        %11778 = vmatprep.mubr.bf16.mxu0 0
        %11779 = vmatmul.mubr.bf16.gmra.mrb[0].mxu0 %v11582
        %v11780 = vpop.f32.mrb[0].mxu0
        %v11781 = vadd.f32 0.0, %v11780
        %v11782 = vpop.f32.mrb[0].mxu0
        %v11783 = vpop.f32.mrb[0].mxu0
        %v11784 = vadd.f32 0.0, %v11783
        %v11785 = vpop.f32.mrb[0].mxu0
        %11786 = vmatprep.mubr.bf16.mxu0 0
        %11787 = vmatmul.mubr.bf16.gmra.mrb[0].mxu0 %v11583
        %v11788 = vpop.f32.mrb[0].mxu0
        %v11789 = vadd.f32 0.0, %v11788
        %v11790 = vpop.f32.mrb[0].mxu0
        %v11791 = vpop.f32.mrb[0].mxu0
        %v11792 = vadd.f32 0.0, %v11791
        %v11793 = vpop.f32.mrb[0].mxu0
        %11794 = vmatprep.mubr.bf16.mxu0 0
        %11795 = vmatmul.mubr.bf16.gmra.mrb[0].mxu0 %v11584
        %v11796 = vpop.f32.mrb[0].mxu0
        %v11797 = vadd.f32 0.0, %v11796
        %v11798 = vpop.f32.mrb[0].mxu0
        %v11799 = vpop.f32.mrb[0].mxu0
        %v11800 = vadd.f32 0.0, %v11799
        %v11801 = vpop.f32.mrb[0].mxu0
        %11802 = vmatprep.mubr.bf16.mxu0 0
        %11803 = vmatmul.mubr.bf16.gmra.mrb[0].mxu0 %v11585
        %v11804 = vpop.f32.mrb[0].mxu0
        %v11805 = vadd.f32 0.0, %v11804
        %v11806 = vpop.f32.mrb[0].mxu0
        %v11807 = vpop.f32.mrb[0].mxu0
        %v11808 = vadd.f32 0.0, %v11807
        %v11809 = vpop.f32.mrb[0].mxu0
        %11810 = vdwg.mxu0
        %v11811 = vadd.f32 %v11313, %v11685
        %v11812 = vadd.f32 %v11314, %v11688
        %v11813 = vadd.f32 %v11315, %v11693
        %v11814 = vadd.f32 %v11316, %v11696
        %v11815 = vadd.f32 %v11317, %v11701
        %v11816 = vadd.f32 %v11318, %v11704
        %v11817 = vadd.f32 %v11319, %v11709
        %v11818 = vadd.f32 %v11320, %v11712
        %v11819 = vadd.f32 %v11321, %v11717
        %v11820 = vadd.f32 %v11322, %v11720
        %v11821 = vadd.f32 %v11323, %v11725
        %v11822 = vadd.f32 %v11324, %v11728
        %v11823 = vadd.f32 %v11325, %v11733
        %v11824 = vadd.f32 %v11326, %v11736
        %v11825 = vadd.f32 %v11327, %v11741
        %v11826 = vadd.f32 %v11328, %v11744
        %v11827 = vadd.f32 %v11329, %v11749
        %v11828 = vadd.f32 %v11330, %v11752
        %v11829 = vadd.f32 %v11331, %v11757
        %v11830 = vadd.f32 %v11332, %v11760
        %v11831 = vadd.f32 %v11333, %v11765
        %v11832 = vadd.f32 %v11334, %v11768
        %v11833 = vadd.f32 %v11335, %v11773
        %v11834 = vadd.f32 %v11336, %v11776
        %v11835 = vadd.f32 %v11337, %v11781
        %v11836 = vadd.f32 %v11338, %v11784
        %v11837 = vadd.f32 %v11339, %v11789
        %v11838 = vadd.f32 %v11340, %v11792
        %v11839 = vadd.f32 %v11341, %v11797
        %v11840 = vadd.f32 %v11342, %v11800
        %v11841 = vadd.f32 %v11343, %v11805
        %v11842 = vadd.f32 %v11344, %v11808
        %v11843 = vadd.f32 %v11811, %v1468
        %v11844 = vadd.f32 %v11812, %v1471
        %v11845 = vadd.f32 %v11813, %v1476
        %v11846 = vadd.f32 %v11814, %v1479
        %v11847 = vadd.f32 %v11815, %v1484
        %v11848 = vadd.f32 %v11816, %v1487
        %v11849 = vadd.f32 %v11817, %v1492
        %v11850 = vadd.f32 %v11818, %v1495
        %v11851 = vadd.f32 %v11819, %v1500
        %v11852 = vadd.f32 %v11820, %v1503
        %v11853 = vadd.f32 %v11821, %v1508
        %v11854 = vadd.f32 %v11822, %v1511
        %v11855 = vadd.f32 %v11823, %v1516
        %v11856 = vadd.f32 %v11824, %v1519
        %v11857 = vadd.f32 %v11825, %v1524
        %v11858 = vadd.f32 %v11826, %v1527
        %v11859 = vadd.f32 %v11827, %v1532
        %v11860 = vadd.f32 %v11828, %v1535
        %v11861 = vadd.f32 %v11829, %v1540
        %v11862 = vadd.f32 %v11830, %v1543
        %v11863 = vadd.f32 %v11831, %v1548
        %v11864 = vadd.f32 %v11832, %v1551
        %v11865 = vadd.f32 %v11833, %v1556
        %v11866 = vadd.f32 %v11834, %v1559
        %v11867 = vadd.f32 %v11835, %v1564
        %v11868 = vadd.f32 %v11836, %v1567
        %v11869 = vadd.f32 %v11837, %v1572
        %v11870 = vadd.f32 %v11838, %v1575
        %v11871 = vadd.f32 %v11839, %v1580
        %v11872 = vadd.f32 %v11840, %v1583
        %v11873 = vadd.f32 %v11841, %v1588
        %v11874 = vadd.f32 %v11842, %v1591
        %11875 = vst [vmem:[%s417] sm:$0xff] %v11843
        %11876 = vst [vmem:[%s417 + $0x8] sm:$0xff] %v11844
        %11877 = vst [vmem:[%s417 + $0x10] sm:$0xff] %v11845
        %11878 = vst [vmem:[%s417 + $0x18] sm:$0xff] %v11846
        %11879 = vst [vmem:[%s417 + $0x20] sm:$0xff] %v11847
        %11880 = vst [vmem:[%s417 + $0x28] sm:$0xff] %v11848
        %11881 = vst [vmem:[%s417 + $0x30] sm:$0xff] %v11849
        %11882 = vst [vmem:[%s417 + $0x38] sm:$0xff] %v11850
        %11883 = vst [vmem:[%s417 + $0x40] sm:$0xff] %v11851
        %11884 = vst [vmem:[%s417 + $0x48] sm:$0xff] %v11852
        %11885 = vst [vmem:[%s417 + $0x50] sm:$0xff] %v11853
        %11886 = vst [vmem:[%s417 + $0x58] sm:$0xff] %v11854
        %11887 = vst [vmem:[%s417 + $0x60] sm:$0xff] %v11855
        %11888 = vst [vmem:[%s417 + $0x68] sm:$0xff] %v11856
        %11889 = vst [vmem:[%s417 + $0x70] sm:$0xff] %v11857
        %11890 = vst [vmem:[%s417 + $0x78] sm:$0xff] %v11858
        %11891 = vst [vmem:[%s417 + $0x80] sm:$0xff] %v11859
        %11892 = vst [vmem:[%s417 + $0x88] sm:$0xff] %v11860
        %11893 = vst [vmem:[%s417 + $0x90] sm:$0xff] %v11861
        %11894 = vst [vmem:[%s417 + $0x98] sm:$0xff] %v11862
        %11895 = vst [vmem:[%s417 + $0xa0] sm:$0xff] %v11863
        %11896 = vst [vmem:[%s417 + $0xa8] sm:$0xff] %v11864
        %11897 = vst [vmem:[%s417 + $0xb0] sm:$0xff] %v11865
        %11898 = vst [vmem:[%s417 + $0xb8] sm:$0xff] %v11866
        %11899 = vst [vmem:[%s417 + $0xc0] sm:$0xff] %v11867
        %11900 = vst [vmem:[%s417 + $0xc8] sm:$0xff] %v11868
        %11901 = vst [vmem:[%s417 + $0xd0] sm:$0xff] %v11869
        %11902 = vst [vmem:[%s417 + $0xd8] sm:$0xff] %v11870
        %11903 = vst [vmem:[%s417 + $0xe0] sm:$0xff] %v11871
        %11904 = vst [vmem:[%s417 + $0xe8] sm:$0xff] %v11872
        %11905 = vst [vmem:[%s417 + $0xf0] sm:$0xff] %v11873
        %11906 = vst [vmem:[%s417 + $0xf8] sm:$0xff] %v11874
        %s11907 = sand.u32 %s210, 1
        %s11908 = scalar_lea.sflag [#allocation6], %s11907
        %s11909 = sand.u32 %s210, 1
        %s11910 = smul.addr %s11909, 256
        %s11911 = scalar_lea.vmem [#allocation18], %s11910
        // Predicated region
        $region89: #{tpu_custom_call.1} parent=51 // pred_check
          %p11912 = pneg %p220
        $region90: #{tpu_custom_call.1} parent=51 // pred_check_branch
          %11914 = sbr.rel (%p11912) target = $region92
        $region91: #{tpu_custom_call.1} parent=51 // pred_region
          %s11916 = ssub.s32 4096, 4096
          %11917 = vsyncadd %s11908, %s11916
          %s11918 = smul.addr %s29, 32
          %s11919 = smul.addr %s11918, 128
          %s11920 = scalar_lea.hbm %s8, %s11919
          %s11921 = sshll.u32 %s11911, 4
          %s11922 = int_to_ptr.vmem [resolvable:$true] %s11921
          %11927 = dma.vmem_to_hbm [thread:$0]  %s11922, 4096, %s11920, %s11908, 128, 128, 8
        $region92: #{tpu_custom_call.1} parent=51 // pred_fallthru
          _
      $region52: #{tpu_custom_call.1} parent=5 // pred_fallthru
        _
      %p11928 = scmp.le.s32.totalorder 2, %s24
      // Predicated region
      $region93: #{tpu_custom_call.1} parent=5 // pred_check
        %p11929 = pneg %p11928
      $region94: #{tpu_custom_call.1} parent=5 // pred_check_branch
        %11931 = sbr.rel (%p11929) target = $region96
      $region95: #{tpu_custom_call.1} parent=5 // pred_region
        %s11932 = ssub.s32 %s24, 2
        // Predicated region
        $region97: #{tpu_custom_call.1} parent=95 // pred_check
          %p11933 = pneg %p226
        $region98: #{tpu_custom_call.1} parent=95 // pred_check_branch
          %11935 = sbr.rel (%p11933) target = $region100
        $region99: #{tpu_custom_call.1} parent=95 // pred_region
          %s11936 = sand.u32 %s211, 1
          %s11937 = scalar_lea.sflag [#allocation6], %s11936
          %s11938 = sand.u32 %s211, 1
          %s11939 = smul.addr %s11938, 256
          %s11940 = scalar_lea.vmem [#allocation18], %s11939
          %11941 = dma.done %s11937, 4096
        $region100: #{tpu_custom_call.1} parent=95 // pred_fallthru
          _
      $region96: #{tpu_custom_call.1} parent=5 // pred_fallthru
        _
    $region6: #{tpu_custom_call.1} parent=1 // loop_footer
      %s28 = sadd.s32 1, %s24
    $region7: #{tpu_custom_call.1} parent=1 // loop_footer_branch
      %23 = sbr.rel target = $region3
    $region8: #{tpu_custom_call.1} parent=1 // loop_exit
      _
    %11942 = vsyncpa [#allocation5], 1
    %s11943 = scalar_lea.sflag [#allocation5], 1
    %11944 = vsyncpa %s11943, 1
    %11945 = vsyncpa [#allocation8], 1
    %11946 = vsyncpa [#allocation11], 1
    %11947 = vsyncpa [#allocation14], 1
    %11948 = vsyncpa [#allocation17], 1
    %11949 = vsyncpa [#allocation6], 1
    %s11950 = scalar_lea.sflag [#allocation6], 1
    %11951 = vsyncpa %s11950, 1

</llo_original>
